<compile_context>
chip_gen: v5e
topology: v5e:2x2
jax: 0.10.0
libtpu: 0.0.40
codegen_flags: <defaults>
</compile_context>

<pallas_src>
import functools

import jax
import jax.numpy as jnp
from jax.experimental import pallas as pl
from jax.experimental.pallas import tpu as pltpu

ORIGINAL_DIM = 384
DIM = 48
DIM_PAD = 128                      # lane-dense padded channel width
NUM_HEADS = 4
HEAD_DIM = DIM // NUM_HEADS        # 12 (real)
HEAD_PAD = DIM_PAD // NUM_HEADS    # 32 (padded per-head width)
MLP_HIDDEN = 4 * DIM               # 192 (real)
MLP_PAD = 256                      # padded MLP hidden width
QKV_WIDTH = 3 * DIM_PAD            # 384
NUM_ENC_LAYERS = 2
NUM_DEC_LAYERS = 1
LN_EPS = 1e-5


# ------------------------------------------------------------------ fused kernel
def _swintrack_kernel(z_ref, x_ref, in_w_ref, qkv_w_ref, proj_w_ref,
                      mlp1_w_ref, mlp2_w_ref, ln_ref, bias_ref, o_ref,
                      *, bg, lz, lx):
    f32 = jnp.float32
    bf16 = jnp.bfloat16
    l_tok = lz + lx
    m = bg * l_tok                 # flattened rows this step
    mz = bg * lz                   # number of template (z) rows
    scale = f32(float(HEAD_DIM) ** -0.5)
    inv_n = f32(1.0 / DIM)

    # mask of the 48 real channels (padded lanes stay exactly zero everywhere)
    lane = jax.lax.broadcasted_iota(jnp.int32, (1, DIM_PAD), 1)
    ch_mask = (lane < DIM).astype(f32)

    ln = ln_ref[...]               # (16, 128) f32: all LayerNorm gammas/betas
    bias = bias_ref[...]           # (16, 384) f32: all linear biases

    def g_of(r):
        return ln[r:r + 1]

    def b128(r):
        return bias[r:r + 1, :DIM_PAD]

    def b256(r):
        return bias[r:r + 1, :MLP_PAD]

    def b384(r):
        return bias[r:r + 1, :]

    def mmb(a, w):                 # bf16 MXU operands, f32 accumulation
        return jnp.dot(a.astype(bf16), w.astype(bf16),
                       preferred_element_type=jnp.float32)

    def layernorm(v, g, b):        # f32 vector math; relies on zero pad lanes
        mean = jnp.sum(v, axis=-1, keepdims=True) * inv_n
        d = (v - mean) * ch_mask
        var = jnp.sum(d * d, axis=-1, keepdims=True) * inv_n
        return d * jax.lax.rsqrt(var + LN_EPS) * g + b

    def gelu(v):                   # exact erf GELU (torch.nn.GELU default), f32
        return 0.5 * v * (1.0 + jax.lax.erf(v * f32(0.7071067811865475)))

    # ---- block-diagonal attention bias: rows only attend within their own batch ----
    if bg > 1:
        ridx = jax.lax.broadcasted_iota(jnp.int32, (m, m), 0)
        cidx = jax.lax.broadcasted_iota(jnp.int32, (m, m), 1)

        def batch_id(idx):
            zid = jnp.zeros(idx.shape, jnp.int32)
            xid = jnp.zeros(idx.shape, jnp.int32)
            for b in range(1, bg):
                zid = zid + (idx >= b * lz).astype(jnp.int32)
                xid = xid + (idx >= mz + b * lx).astype(jnp.int32)
            return jnp.where(idx < mz, zid, xid)

        same = batch_id(ridx) == batch_id(cidx)
        bias_blk = jnp.where(same, f32(0.0), f32(-1e30))
        attn_bias = jnp.concatenate([bias_blk] * NUM_HEADS, axis=0)    # (4m, m)
    else:
        attn_bias = None

    def attention(q, k, v, wo, bo):
        # q/k/v: (m, 128) per-head-padded (head h real in lanes [32h, 32h+12)).
        kt = jnp.transpose(k)                                  # one transpose / attention
        scs = []
        for h in range(NUM_HEADS):
            band = slice(h * HEAD_PAD, (h + 1) * HEAD_PAD)
            scs.append(mmb(q[:, band], kt[band, :]))           # (m, m), plain NN matmul
        s = jnp.concatenate(scs, axis=0) * scale               # (4m, m): heads on sublanes
        if attn_bias is not None:
            s = s + attn_bias
        s = s - jnp.max(s, axis=-1, keepdims=True)             # single merged softmax
        p = jnp.exp(s)
        p = p * pl.reciprocal(jnp.sum(p, axis=-1, keepdims=True), approx=True)
        outs = []
        for h in range(NUM_HEADS):
            band = slice(h * HEAD_PAD, (h + 1) * HEAD_PAD)
            outs.append(mmb(p[h * m:(h + 1) * m, :], v[:, band]))
        o = jnp.concatenate(outs, axis=1)                      # (m, 128) lane-banded heads
        return mmb(o, wo) + bo                                 # single K=128 out-proj

    def mlp(v, w1, b1, w2, b2):
        hid = gelu(mmb(v, w1) + b1)
        return mmb(hid, w2) + b2

    # ---- input projections (linear1 / linear2), batch flattened into rows ----
    zf = mmb(z_ref[...], in_w_ref[0]) + b128(0)                # (bg*lz, 128)
    xf = mmb(x_ref[...], in_w_ref[1]) + b128(1)                # (bg*lx, 128)
    c = jnp.concatenate([zf, xf], axis=0)                      # (m, 128): [all z | all x]

    # ---- encoder: pre-norm self-attention + MLP blocks over concat(z, x) ----
    for l in range(NUM_ENC_LAYERS):
        lb, bb = 4 * l, 2 + 4 * l
        n1 = layernorm(c, g_of(lb), g_of(lb + 1))
        qkv = mmb(n1, qkv_w_ref[l]) + b384(bb)                 # fused QKV, (m, 384)
        c = c + attention(qkv[:, :DIM_PAD], qkv[:, DIM_PAD:2 * DIM_PAD],
                          qkv[:, 2 * DIM_PAD:], proj_w_ref[l], b128(bb + 1))
        n2 = layernorm(c, g_of(lb + 2), g_of(lb + 3))
        c = c + mlp(n2, mlp1_w_ref[l], b256(bb + 2), mlp2_w_ref[l], b128(bb + 3))

    # ---- decoder: pre-norm cross-attention (queries = x rows; the extra z-query rows
    #      are computed too and simply discarded by the wrapper — cheaper than slicing) ----
    nq = layernorm(c, g_of(8), g_of(9))
    nkv = layernorm(c, g_of(10), g_of(11))
    wqkv_d = qkv_w_ref[NUM_ENC_LAYERS]
    q_d = mmb(nq, wqkv_d[:, :DIM_PAD]) + bias[10:11, :DIM_PAD]
    kv_d = mmb(nkv, wqkv_d[:, DIM_PAD:]) + bias[10:11, DIM_PAD:]
    dec = c + attention(q_d, kv_d[:, :DIM_PAD], kv_d[:, DIM_PAD:],
                        proj_w_ref[NUM_ENC_LAYERS], b128(11))
    n2 = layernorm(dec, g_of(12), g_of(13))
    dec = dec + mlp(n2, mlp1_w_ref[NUM_ENC_LAYERS], b256(12),
                    mlp2_w_ref[NUM_ENC_LAYERS], b128(13))

    # ---- head: out_norm + cls_linear (lane-dense 128-wide output, column 0 real) ----
    dec = layernorm(dec, g_of(14), g_of(15))
    cls = mmb(dec, proj_w_ref[NUM_ENC_LAYERS + 1]) + b128(14)
    o_ref[...] = cls.astype(o_ref.dtype)


# ------------------------------------------------------------------ parameter packing
def pack_params(params):
    """Pad / re-layout torch-style params once into 7 lane-dense slabs (weights in bf16)."""
    def pad2(w, rows, cols):
        out = jnp.zeros((rows, cols), jnp.float32)
        return out.at[:w.shape[0], :w.shape[1]].set(w)

    def padvec(v, n):
        out = jnp.zeros((n,), jnp.float32)
        return out.at[:v.shape[0]].set(v)

    def head_pad_cols(w):   # (K, DIM) -> (K, DIM_PAD): head h real at cols [32h, 32h+12)
        out = jnp.zeros((w.shape[0], DIM_PAD), jnp.float32)
        for h in range(NUM_HEADS):
            out = out.at[:, h * HEAD_PAD:h * HEAD_PAD + HEAD_DIM].set(
                w[:, h * HEAD_DIM:(h + 1) * HEAD_DIM])
        return out

    def head_pad_rows(w):   # (DIM, N) -> (DIM_PAD, N)
        out = jnp.zeros((DIM_PAD, w.shape[1]), jnp.float32)
        for h in range(NUM_HEADS):
            out = out.at[h * HEAD_PAD:h * HEAD_PAD + HEAD_DIM, :].set(
                w[h * HEAD_DIM:(h + 1) * HEAD_DIM, :])
        return out

    def head_pad_vec(b):    # (DIM,) -> (DIM_PAD,)
        out = jnp.zeros((DIM_PAD,), jnp.float32)
        for h in range(NUM_HEADS):
            out = out.at[h * HEAD_PAD:h * HEAD_PAD + HEAD_DIM].set(
                b[h * HEAD_DIM:(h + 1) * HEAD_DIM])
        return out

    def attn_mats(p):
        wqkv = jnp.concatenate(
            [pad2(head_pad_cols(p["w" + n]), DIM_PAD, DIM_PAD) for n in ("q", "k", "v")],
            axis=1)                                                   # (128, 384)
        bqkv = jnp.concatenate([head_pad_vec(p["b" + n]) for n in ("q", "k", "v")])
        wo = pad2(head_pad_rows(p["wo"]), DIM_PAD, DIM_PAD)           # (128, 128)
        return wqkv, bqkv, wo, p["bo"]

    blocks = list(params["encoder"]) + list(params["decoder"])       # enc0, enc1, dec

    qkv_w, proj_w, mlp1_w, mlp2_w = [], [], [], []
    bias_rows = [padvec(params["linear1"]["b"], QKV_WIDTH),          # row 0
                 padvec(params["linear2"]["b"], QKV_WIDTH)]          # row 1
    for blk in blocks:                                               # rows 2-13
        wqkv, bqkv, wo, bo = attn_mats(blk["attn"])
        qkv_w.append(wqkv)
        proj_w.append(wo)
        mlp1_w.append(pad2(blk["mlp"]["fc1"]["w"], DIM_PAD, MLP_PAD))
        mlp2_w.append(pad2(blk["mlp"]["fc2"]["w"], MLP_PAD, DIM_PAD))
        bias_rows += [bqkv, padvec(bo, QKV_WIDTH),
                      padvec(blk["mlp"]["fc1"]["b"], QKV_WIDTH),
                      padvec(blk["mlp"]["fc2"]["b"], QKV_WIDTH)]
    proj_w.append(pad2(params["cls"]["w"], DIM_PAD, DIM_PAD))        # cls_w (col 0 real)
    bias_rows.append(padvec(params["cls"]["b"], QKV_WIDTH))          # row 14
    bias_rows.append(jnp.zeros((QKV_WIDTH,), jnp.float32))           # row 15 (pad)

    ln_rows = []
    for layer in params["encoder"]:                                  # rows 0-7
        ln_rows += [padvec(layer["norm1"]["g"], DIM_PAD), padvec(layer["norm1"]["b"], DIM_PAD),
                    padvec(layer["norm2"]["g"], DIM_PAD), padvec(layer["norm2"]["b"], DIM_PAD)]
    decp = params["decoder"][0]                                      # rows 8-13
    ln_rows += [padvec(decp["norm_q"]["g"], DIM_PAD), padvec(decp["norm_q"]["b"], DIM_PAD),
                padvec(decp["norm_kv"]["g"], DIM_PAD), padvec(decp["norm_kv"]["b"], DIM_PAD),
                padvec(decp["norm2"]["g"], DIM_PAD), padvec(decp["norm2"]["b"], DIM_PAD)]
    ln_rows += [padvec(params["out_norm"]["g"], DIM_PAD),            # rows 14-15
                padvec(params["out_norm"]["b"], DIM_PAD)]

    bf16 = jnp.bfloat16
    return dict(
        in_w=jnp.stack([pad2(params["linear1"]["w"], ORIGINAL_DIM, DIM_PAD),
                        pad2(params["linear2"]["w"], ORIGINAL_DIM, DIM_PAD)]).astype(bf16),
        qkv_w=jnp.stack(qkv_w).astype(bf16),      # (3, 128, 384)
        proj_w=jnp.stack(proj_w).astype(bf16),    # (4, 128, 128)  enc0.wo, enc1.wo, dec.wo, cls
        mlp1_w=jnp.stack(mlp1_w).astype(bf16),    # (3, 128, 256)
        mlp2_w=jnp.stack(mlp2_w).astype(bf16),    # (3, 256, 128)
        ln_w=jnp.stack(ln_rows),                  # (16, 128) f32
        bias_w=jnp.stack(bias_rows),              # (16, 384) f32
    )


_WEIGHT_ORDER = ("in_w", "qkv_w", "proj_w", "mlp1_w", "mlp2_w", "ln_w", "bias_w")


# ------------------------------------------------------------------ forward
def _pick_group_size(batch, tokens_per_item, target_rows):
    """Largest divisor of `batch` whose flattened row count stays near target_rows."""
    cap = max(1, target_rows // tokens_per_item)
    best = 1
    for d in range(1, batch + 1):
        if batch % d == 0 and d <= cap:
            best = d
    return best


def swintrack_forward(packed, z, x, *, target_rows=128, core_parallel=False):
    B, Lz, cz = z.shape
    Bx, Lx, cx = x.shape
    assert B == Bx and cz == ORIGINAL_DIM and cx == ORIGINAL_DIM
    # Token counts must be sublane (8) aligned so the flattened-row layout stays tiled.
    # TODO(synk): pad/mask ragged token counts (e.g. 7x7=49 template tokens) if ever needed.
    assert Lz % 8 == 0 and Lx % 8 == 0

    L = Lz + Lx
    bg = _pick_group_size(B, L, target_rows)    # batches flattened per grid step
    G = B // bg
    M = bg * L

    z2 = z.reshape(B * Lz, ORIGINAL_DIM)
    x2 = x.reshape(B * Lx, ORIGINAL_DIM)
    weights = [packed[k] for k in _WEIGHT_ORDER]

    def const_spec(shape):
        zeros = (0,) * len(shape)
        return pl.BlockSpec(shape, lambda g, _z=zeros: _z)

    # v7x: set core_parallel=True so the batch-group axis genuinely splits across the 2 TCs.
    sem = (pltpu.CORE_PARALLEL,) if core_parallel else ("parallel",)

    out = pl.pallas_call(
        functools.partial(_swintrack_kernel, bg=bg, lz=Lz, lx=Lx),
        out_shape=jax.ShapeDtypeStruct((G * M, DIM_PAD), jnp.float32),
        grid=(G,),
        in_specs=[pl.BlockSpec((bg * Lz, ORIGINAL_DIM), lambda g: (g, 0)),
                  pl.BlockSpec((bg * Lx, ORIGINAL_DIM), lambda g: (g, 0))]
                 + [const_spec(w.shape) for w in weights],
        out_specs=pl.BlockSpec((M, DIM_PAD), lambda g: (g, 0)),
        compiler_params=pltpu.CompilerParams(
            dimension_semantics=sem,
            vmem_limit_bytes=32 * 1024 * 1024),
    )(z2, x2, *weights)

    # rows per group: [all z rows | all x rows]; keep x rows, real cls channel is lane 0.
    out = out.reshape(G, M, DIM_PAD)[:, bg * Lz:, :]
    return out.reshape(B, Lx, DIM_PAD)[:, :, :1]


# ------------------------------------------------------------------ init (torch layout)
def init_params(key):
    keys = list(jax.random.split(key, 64))
    it = iter(keys)

    def lin(fan_in, fan_out):
        # torch: trunc_normal_(weight, std=0.02) clipped at +-2 std; bias = 0
        w = 0.02 * jax.random.truncated_normal(
            next(it), -2.0, 2.0, (fan_in, fan_out), jnp.float32)
        return {"w": w, "b": jnp.zeros((fan_out,), jnp.float32)}

    def ln():
        return {"g": jnp.ones((DIM,), jnp.float32), "b": jnp.zeros((DIM,), jnp.float32)}

    def attn_params():
        p = {}
        for nm in ("q", "k", "v", "o"):
            l = lin(DIM, DIM)
            p["w" + nm] = l["w"]
            p["b" + nm] = l["b"]
        return p

    def mlp_params():
        return {"fc1": lin(DIM, MLP_HIDDEN), "fc2": lin(MLP_HIDDEN, DIM)}

    return {
        "linear1": lin(ORIGINAL_DIM, DIM),
        "linear2": lin(ORIGINAL_DIM, DIM),
        "encoder": [
            {"norm1": ln(), "attn": attn_params(), "norm2": ln(), "mlp": mlp_params()}
            for _ in range(NUM_ENC_LAYERS)
        ],
        "decoder": [
            {"norm_q": ln(), "norm_kv": ln(), "attn": attn_params(),
             "norm2": ln(), "mlp": mlp_params()}
            for _ in range(NUM_DEC_LAYERS)
        ],
        "out_norm": ln(),
        "cls": lin(DIM, 1),
        # TODO(synk): loc_linear exists in __init__ but is unused in forward(); omitted.
    }


if __name__ == "__main__":
    key = jax.random.PRNGKey(0)
    kp, kz, kx = jax.random.split(key, 3)
    params = init_params(kp)
    packed = pack_params(params)           # one-time pad / re-layout / bf16 cast

    # z: template tokens, x: search tokens (B, L, 384)
    z = jax.random.normal(kz, (2, 8, ORIGINAL_DIM), jnp.float32)
    x = jax.random.normal(kx, (2, 16, ORIGINAL_DIM), jnp.float32)

    cls_feat = jax.jit(swintrack_forward)(packed, z, x)
    jax.block_until_ready(cls_feat)
    assert cls_feat.shape == (2, 16, 1), cls_feat.shape
    assert bool(jnp.all(jnp.isfinite(cls_feat)))
    print("KERNEL_OK")
</pallas_src>

<mosaic_0001>
module attributes {stable_mosaic.version = 11 : i64} {
  func.func @_swintrack_kernel(%arg0: i32, %arg1: memref<16x384xf32, #tpu.memory_space<vmem>>, %arg2: memref<32x384xf32, #tpu.memory_space<vmem>>, %arg3: memref<2x384x128xbf16, #tpu.memory_space<vmem>>, %arg4: memref<3x128x384xbf16, #tpu.memory_space<vmem>>, %arg5: memref<4x128x128xbf16, #tpu.memory_space<vmem>>, %arg6: memref<3x128x256xbf16, #tpu.memory_space<vmem>>, %arg7: memref<3x256x128xbf16, #tpu.memory_space<vmem>>, %arg8: memref<16x128xf32, #tpu.memory_space<vmem>>, %arg9: memref<16x384xf32, #tpu.memory_space<vmem>>, %arg10: memref<48x128xf32, #tpu.memory_space<vmem>>) attributes {dimension_semantics = [#tpu.dimension_semantics<parallel>], iteration_bounds = array<i64: 1>, scalar_prefetch = 0 : i64, scratch_operands = 0 : i64, tpu.core_type = #tpu.core_type<tc>, window_params = [{transform_indices = @transform_0, window_bounds = array<i64: 16, 384>}, {transform_indices = @transform_1, window_bounds = array<i64: 32, 384>}, {pipeline_mode = #tpu.pipeline_mode<synchronous>, transform_indices = @transform_2, window_bounds = array<i64: 2, 384, 128>}, {pipeline_mode = #tpu.pipeline_mode<synchronous>, transform_indices = @transform_3, window_bounds = array<i64: 3, 128, 384>}, {pipeline_mode = #tpu.pipeline_mode<synchronous>, transform_indices = @transform_4, window_bounds = array<i64: 4, 128, 128>}, {pipeline_mode = #tpu.pipeline_mode<synchronous>, transform_indices = @transform_5, window_bounds = array<i64: 3, 128, 256>}, {pipeline_mode = #tpu.pipeline_mode<synchronous>, transform_indices = @transform_6, window_bounds = array<i64: 3, 256, 128>}, {pipeline_mode = #tpu.pipeline_mode<synchronous>, transform_indices = @transform_7, window_bounds = array<i64: 16, 128>}, {pipeline_mode = #tpu.pipeline_mode<synchronous>, transform_indices = @transform_8, window_bounds = array<i64: 16, 384>}, {transform_indices = @transform_9, window_bounds = array<i64: 48, 128>}]} {
    %0 = tpu.iota {dimensions = array<i32: 1>} : vector<1x128xi32>
    %c48_i32 = arith.constant 48 : i32
    %1 = vector.broadcast %c48_i32 : i32 to vector<1x128xi32>
    %2 = arith.cmpi slt, %0, %1 : vector<1x128xi32>
    %3 = arith.extui %2 : vector<1x128xi1> to vector<1x128xi32>
    %4 = arith.sitofp %3 : vector<1x128xi32> to vector<1x128xf32>
    %c0 = arith.constant 0 : index
    %c0_0 = arith.constant 0 : index
    %5 = vector.load %arg8[%c0, %c0_0] : memref<16x128xf32, #tpu.memory_space<vmem>>, vector<16x128xf32>
    %c0_1 = arith.constant 0 : index
    %c0_2 = arith.constant 0 : index
    %6 = vector.load %arg9[%c0_1, %c0_2] : memref<16x384xf32, #tpu.memory_space<vmem>>, vector<16x384xf32>
    %7 = tpu.iota {dimensions = array<i32: 0>} : vector<48x48xi32>
    %8 = tpu.iota {dimensions = array<i32: 1>} : vector<48x48xi32>
    %c0_i32 = arith.constant 0 : i32
    %9 = vector.broadcast %c0_i32 : i32 to vector<48x48xi32>
    %c0_i32_3 = arith.constant 0 : i32
    %10 = vector.broadcast %c0_i32_3 : i32 to vector<48x48xi32>
    %c8_i32 = arith.constant 8 : i32
    %11 = vector.broadcast %c8_i32 : i32 to vector<48x48xi32>
    %12 = arith.cmpi sge, %7, %11 : vector<48x48xi32>
    %13 = arith.extui %12 : vector<48x48xi1> to vector<48x48xi32>
    %14 = arith.addi %9, %13 : vector<48x48xi32>
    %c32_i32 = arith.constant 32 : i32
    %15 = vector.broadcast %c32_i32 : i32 to vector<48x48xi32>
    %16 = arith.cmpi sge, %7, %15 : vector<48x48xi32>
    %17 = arith.extui %16 : vector<48x48xi1> to vector<48x48xi32>
    %18 = arith.addi %10, %17 : vector<48x48xi32>
    %c16_i32 = arith.constant 16 : i32
    %19 = vector.broadcast %c16_i32 : i32 to vector<48x48xi32>
    %20 = arith.cmpi slt, %7, %19 : vector<48x48xi32>
    %21 = arith.select %20, %14, %18 : vector<48x48xi1>, vector<48x48xi32>
    %c0_i32_4 = arith.constant 0 : i32
    %22 = vector.broadcast %c0_i32_4 : i32 to vector<48x48xi32>
    %c0_i32_5 = arith.constant 0 : i32
    %23 = vector.broadcast %c0_i32_5 : i32 to vector<48x48xi32>
    %c8_i32_6 = arith.constant 8 : i32
    %24 = vector.broadcast %c8_i32_6 : i32 to vector<48x48xi32>
    %25 = arith.cmpi sge, %8, %24 : vector<48x48xi32>
    %26 = arith.extui %25 : vector<48x48xi1> to vector<48x48xi32>
    %27 = arith.addi %22, %26 : vector<48x48xi32>
    %c32_i32_7 = arith.constant 32 : i32
    %28 = vector.broadcast %c32_i32_7 : i32 to vector<48x48xi32>
    %29 = arith.cmpi sge, %8, %28 : vector<48x48xi32>
    %30 = arith.extui %29 : vector<48x48xi1> to vector<48x48xi32>
    %31 = arith.addi %23, %30 : vector<48x48xi32>
    %c16_i32_8 = arith.constant 16 : i32
    %32 = vector.broadcast %c16_i32_8 : i32 to vector<48x48xi32>
    %33 = arith.cmpi slt, %8, %32 : vector<48x48xi32>
    %34 = arith.select %33, %27, %31 : vector<48x48xi1>, vector<48x48xi32>
    %35 = arith.cmpi eq, %21, %34 : vector<48x48xi32>
    %cst = arith.constant 0.000000e+00 : f32
    %cst_9 = arith.constant -1.000000e+30 : f32
    %36 = vector.broadcast %cst : f32 to vector<48x48xf32>
    %37 = vector.broadcast %cst_9 : f32 to vector<48x48xf32>
    %38 = arith.select %35, %36, %37 : vector<48x48xi1>, vector<48x48xf32>
    %39 = tpu.concatenate %38, %38, %38, %38 in 0 : vector<48x48xf32>, vector<48x48xf32>, vector<48x48xf32>, vector<48x48xf32> -> vector<192x48xf32>
    %c0_10 = arith.constant 0 : index
    %c0_11 = arith.constant 0 : index
    %40 = vector.load %arg1[%c0_10, %c0_11] : memref<16x384xf32, #tpu.memory_space<vmem>>, vector<16x384xf32>
    %c0_12 = arith.constant 0 : index
    %c0_13 = arith.constant 0 : index
    %c0_14 = arith.constant 0 : index
    %41 = vector.load %arg3[%c0_12, %c0_13, %c0_14] : memref<2x384x128xbf16, #tpu.memory_space<vmem>>, vector<1x384x128xbf16>
    %42 = vector.shape_cast %41 : vector<1x384x128xbf16> to vector<384x128xbf16>
    %43 = arith.truncf %40 : vector<16x384xf32> to vector<16x384xbf16>
    %cst_15 = arith.constant dense<0.000000e+00> : vector<16x128xf32>
    %44 = tpu.matmul %43, %42, %cst_15 {dimension_numbers = #tpu.dot_dimension_numbers<[1], [0], [0], [1], [0, 0, 1, 1], [], []>} : vector<16x384xbf16>, vector<384x128xbf16>, vector<16x128xf32> -> vector<16x128xf32>
    %45 = vector.extract_strided_slice %6 {offsets = [0, 0], sizes = [1, 128], strides = [1, 1]} : vector<16x384xf32> to vector<1x128xf32>
    %46 = vector.broadcast %45 : vector<1x128xf32> to vector<16x128xf32>
    %47 = arith.addf %44, %46 : vector<16x128xf32>
    %c0_16 = arith.constant 0 : index
    %c0_17 = arith.constant 0 : index
    %48 = vector.load %arg2[%c0_16, %c0_17] : memref<32x384xf32, #tpu.memory_space<vmem>>, vector<32x384xf32>
    %c1 = arith.constant 1 : index
    %c0_18 = arith.constant 0 : index
    %c0_19 = arith.constant 0 : index
    %49 = vector.load %arg3[%c1, %c0_18, %c0_19] : memref<2x384x128xbf16, #tpu.memory_space<vmem>>, vector<1x384x128xbf16>
    %50 = vector.shape_cast %49 : vector<1x384x128xbf16> to vector<384x128xbf16>
    %51 = arith.truncf %48 : vector<32x384xf32> to vector<32x384xbf16>
    %cst_20 = arith.constant dense<0.000000e+00> : vector<32x128xf32>
    %52 = tpu.matmul %51, %50, %cst_20 {dimension_numbers = #tpu.dot_dimension_numbers<[1], [0], [0], [1], [0, 0, 1, 1], [], []>} : vector<32x384xbf16>, vector<384x128xbf16>, vector<32x128xf32> -> vector<32x128xf32>
    %53 = vector.extract_strided_slice %6 {offsets = [1, 0], sizes = [1, 128], strides = [1, 1]} : vector<16x384xf32> to vector<1x128xf32>
    %54 = vector.broadcast %53 : vector<1x128xf32> to vector<32x128xf32>
    %55 = arith.addf %52, %54 : vector<32x128xf32>
    %56 = tpu.concatenate %47, %55 in 0 : vector<16x128xf32>, vector<32x128xf32> -> vector<48x128xf32>
    %57 = vector.extract_strided_slice %5 {offsets = [0, 0], sizes = [1, 128], strides = [1, 1]} : vector<16x128xf32> to vector<1x128xf32>
    %58 = vector.extract_strided_slice %5 {offsets = [1, 0], sizes = [1, 128], strides = [1, 1]} : vector<16x128xf32> to vector<1x128xf32>
    %cst_21 = arith.constant dense<0.000000e+00> : vector<48xf32>
    %59 = vector.multi_reduction <add>, %56, %cst_21 [1] : vector<48x128xf32> to vector<48xf32>
    %60 = vector.shape_cast %59 : vector<48xf32> to vector<48x1xf32>
    %cst_22 = arith.constant 0.020833334 : f32
    %61 = vector.broadcast %cst_22 : f32 to vector<48x1xf32>
    %62 = arith.mulf %60, %61 : vector<48x1xf32>
    %63 = vector.broadcast %62 : vector<48x1xf32> to vector<48x128xf32>
    %64 = arith.subf %56, %63 : vector<48x128xf32>
    %65 = vector.broadcast %4 : vector<1x128xf32> to vector<48x128xf32>
    %66 = arith.mulf %64, %65 : vector<48x128xf32>
    %67 = arith.mulf %66, %66 : vector<48x128xf32>
    %cst_23 = arith.constant dense<0.000000e+00> : vector<48xf32>
    %68 = vector.multi_reduction <add>, %67, %cst_23 [1] : vector<48x128xf32> to vector<48xf32>
    %69 = vector.shape_cast %68 : vector<48xf32> to vector<48x1xf32>
    %cst_24 = arith.constant 0.020833334 : f32
    %70 = vector.broadcast %cst_24 : f32 to vector<48x1xf32>
    %71 = arith.mulf %69, %70 : vector<48x1xf32>
    %cst_25 = arith.constant 9.99999974E-6 : f32
    %72 = vector.broadcast %cst_25 : f32 to vector<48x1xf32>
    %73 = arith.addf %71, %72 : vector<48x1xf32>
    %74 = math.rsqrt %73 : vector<48x1xf32>
    %75 = vector.broadcast %74 : vector<48x1xf32> to vector<48x128xf32>
    %76 = arith.mulf %66, %75 : vector<48x128xf32>
    %77 = vector.broadcast %57 : vector<1x128xf32> to vector<48x128xf32>
    %78 = arith.mulf %76, %77 : vector<48x128xf32>
    %79 = vector.broadcast %58 : vector<1x128xf32> to vector<48x128xf32>
    %80 = arith.addf %78, %79 : vector<48x128xf32>
    %c0_26 = arith.constant 0 : index
    %c0_27 = arith.constant 0 : index
    %c0_28 = arith.constant 0 : index
    %81 = vector.load %arg4[%c0_26, %c0_27, %c0_28] : memref<3x128x384xbf16, #tpu.memory_space<vmem>>, vector<1x128x384xbf16>
    %82 = vector.shape_cast %81 : vector<1x128x384xbf16> to vector<128x384xbf16>
    %83 = arith.truncf %80 : vector<48x128xf32> to vector<48x128xbf16>
    %cst_29 = arith.constant dense<0.000000e+00> : vector<48x384xf32>
    %84 = tpu.matmul %83, %82, %cst_29 {dimension_numbers = #tpu.dot_dimension_numbers<[1], [0], [0], [1], [0, 0, 1, 1], [], []>} : vector<48x128xbf16>, vector<128x384xbf16>, vector<48x384xf32> -> vector<48x384xf32>
    %85 = vector.extract_strided_slice %6 {offsets = [2, 0], sizes = [1, 384], strides = [1, 1]} : vector<16x384xf32> to vector<1x384xf32>
    %86 = vector.broadcast %85 : vector<1x384xf32> to vector<48x384xf32>
    %87 = arith.addf %84, %86 : vector<48x384xf32>
    %88 = vector.extract_strided_slice %87 {offsets = [0, 0], sizes = [48, 128], strides = [1, 1]} : vector<48x384xf32> to vector<48x128xf32>
    %89 = vector.extract_strided_slice %87 {offsets = [0, 128], sizes = [48, 128], strides = [1, 1]} : vector<48x384xf32> to vector<48x128xf32>
    %90 = vector.extract_strided_slice %87 {offsets = [0, 256], sizes = [48, 128], strides = [1, 1]} : vector<48x384xf32> to vector<48x128xf32>
    %c0_30 = arith.constant 0 : index
    %c0_31 = arith.constant 0 : index
    %c0_32 = arith.constant 0 : index
    %91 = vector.load %arg5[%c0_30, %c0_31, %c0_32] : memref<4x128x128xbf16, #tpu.memory_space<vmem>>, vector<1x128x128xbf16>
    %92 = vector.shape_cast %91 : vector<1x128x128xbf16> to vector<128x128xbf16>
    %93 = vector.extract_strided_slice %6 {offsets = [3, 0], sizes = [1, 128], strides = [1, 1]} : vector<16x384xf32> to vector<1x128xf32>
    %94 = tpu.transpose %89, [1, 0] : vector<48x128xf32> -> vector<128x48xf32>
    %95 = vector.extract_strided_slice %88 {offsets = [0, 0], sizes = [48, 32], strides = [1, 1]} : vector<48x128xf32> to vector<48x32xf32>
    %96 = vector.extract_strided_slice %94 {offsets = [0, 0], sizes = [32, 48], strides = [1, 1]} : vector<128x48xf32> to vector<32x48xf32>
    %97 = arith.truncf %95 : vector<48x32xf32> to vector<48x32xbf16>
    %98 = arith.truncf %96 : vector<32x48xf32> to vector<32x48xbf16>
    %cst_33 = arith.constant dense<0.000000e+00> : vector<48x48xf32>
    %99 = tpu.matmul %97, %98, %cst_33 {dimension_numbers = #tpu.dot_dimension_numbers<[1], [0], [0], [1], [0, 0, 1, 1], [], []>} : vector<48x32xbf16>, vector<32x48xbf16>, vector<48x48xf32> -> vector<48x48xf32>
    %100 = vector.extract_strided_slice %88 {offsets = [0, 32], sizes = [48, 32], strides = [1, 1]} : vector<48x128xf32> to vector<48x32xf32>
    %101 = vector.extract_strided_slice %94 {offsets = [32, 0], sizes = [32, 48], strides = [1, 1]} : vector<128x48xf32> to vector<32x48xf32>
    %102 = arith.truncf %100 : vector<48x32xf32> to vector<48x32xbf16>
    %103 = arith.truncf %101 : vector<32x48xf32> to vector<32x48xbf16>
    %cst_34 = arith.constant dense<0.000000e+00> : vector<48x48xf32>
    %104 = tpu.matmul %102, %103, %cst_34 {dimension_numbers = #tpu.dot_dimension_numbers<[1], [0], [0], [1], [0, 0, 1, 1], [], []>} : vector<48x32xbf16>, vector<32x48xbf16>, vector<48x48xf32> -> vector<48x48xf32>
    %105 = vector.extract_strided_slice %88 {offsets = [0, 64], sizes = [48, 32], strides = [1, 1]} : vector<48x128xf32> to vector<48x32xf32>
    %106 = vector.extract_strided_slice %94 {offsets = [64, 0], sizes = [32, 48], strides = [1, 1]} : vector<128x48xf32> to vector<32x48xf32>
    %107 = arith.truncf %105 : vector<48x32xf32> to vector<48x32xbf16>
    %108 = arith.truncf %106 : vector<32x48xf32> to vector<32x48xbf16>
    %cst_35 = arith.constant dense<0.000000e+00> : vector<48x48xf32>
    %109 = tpu.matmul %107, %108, %cst_35 {dimension_numbers = #tpu.dot_dimension_numbers<[1], [0], [0], [1], [0, 0, 1, 1], [], []>} : vector<48x32xbf16>, vector<32x48xbf16>, vector<48x48xf32> -> vector<48x48xf32>
    %110 = vector.extract_strided_slice %88 {offsets = [0, 96], sizes = [48, 32], strides = [1, 1]} : vector<48x128xf32> to vector<48x32xf32>
    %111 = vector.extract_strided_slice %94 {offsets = [96, 0], sizes = [32, 48], strides = [1, 1]} : vector<128x48xf32> to vector<32x48xf32>
    %112 = arith.truncf %110 : vector<48x32xf32> to vector<48x32xbf16>
    %113 = arith.truncf %111 : vector<32x48xf32> to vector<32x48xbf16>
    %cst_36 = arith.constant dense<0.000000e+00> : vector<48x48xf32>
    %114 = tpu.matmul %112, %113, %cst_36 {dimension_numbers = #tpu.dot_dimension_numbers<[1], [0], [0], [1], [0, 0, 1, 1], [], []>} : vector<48x32xbf16>, vector<32x48xbf16>, vector<48x48xf32> -> vector<48x48xf32>
    %115 = tpu.concatenate %99, %104, %109, %114 in 0 : vector<48x48xf32>, vector<48x48xf32>, vector<48x48xf32>, vector<48x48xf32> -> vector<192x48xf32>
    %cst_37 = arith.constant 0.288675129 : f32
    %116 = vector.broadcast %cst_37 : f32 to vector<192x48xf32>
    %117 = arith.mulf %115, %116 : vector<192x48xf32>
    %118 = arith.addf %117, %39 : vector<192x48xf32>
    %cst_38 = arith.constant dense<0xFF800000> : vector<192xf32>
    %119 = vector.multi_reduction <maximumf>, %118, %cst_38 [1] : vector<192x48xf32> to vector<192xf32>
    %120 = vector.shape_cast %119 : vector<192xf32> to vector<192x1xf32>
    %121 = vector.broadcast %120 : vector<192x1xf32> to vector<192x48xf32>
    %122 = arith.subf %118, %121 : vector<192x48xf32>
    %123 = math.exp %122 : vector<192x48xf32>
    %cst_39 = arith.constant dense<0.000000e+00> : vector<192xf32>
    %124 = vector.multi_reduction <add>, %123, %cst_39 [1] : vector<192x48xf32> to vector<192xf32>
    %125 = vector.shape_cast %124 : vector<192xf32> to vector<192x1xf32>
    %126 = tpu.reciprocal %125 {approx = true} : vector<192x1xf32> -> vector<192x1xf32>
    %127 = vector.broadcast %126 : vector<192x1xf32> to vector<192x48xf32>
    %128 = arith.mulf %123, %127 : vector<192x48xf32>
    %129 = vector.extract_strided_slice %128 {offsets = [0, 0], sizes = [48, 48], strides = [1, 1]} : vector<192x48xf32> to vector<48x48xf32>
    %130 = vector.extract_strided_slice %90 {offsets = [0, 0], sizes = [48, 32], strides = [1, 1]} : vector<48x128xf32> to vector<48x32xf32>
    %131 = arith.truncf %129 : vector<48x48xf32> to vector<48x48xbf16>
    %132 = arith.truncf %130 : vector<48x32xf32> to vector<48x32xbf16>
    %cst_40 = arith.constant dense<0.000000e+00> : vector<48x32xf32>
    %133 = tpu.matmul %131, %132, %cst_40 {dimension_numbers = #tpu.dot_dimension_numbers<[1], [0], [0], [1], [0, 0, 1, 1], [], []>} : vector<48x48xbf16>, vector<48x32xbf16>, vector<48x32xf32> -> vector<48x32xf32>
    %134 = vector.extract_strided_slice %128 {offsets = [48, 0], sizes = [48, 48], strides = [1, 1]} : vector<192x48xf32> to vector<48x48xf32>
    %135 = vector.extract_strided_slice %90 {offsets = [0, 32], sizes = [48, 32], strides = [1, 1]} : vector<48x128xf32> to vector<48x32xf32>
    %136 = arith.truncf %134 : vector<48x48xf32> to vector<48x48xbf16>
    %137 = arith.truncf %135 : vector<48x32xf32> to vector<48x32xbf16>
    %cst_41 = arith.constant dense<0.000000e+00> : vector<48x32xf32>
    %138 = tpu.matmul %136, %137, %cst_41 {dimension_numbers = #tpu.dot_dimension_numbers<[1], [0], [0], [1], [0, 0, 1, 1], [], []>} : vector<48x48xbf16>, vector<48x32xbf16>, vector<48x32xf32> -> vector<48x32xf32>
    %139 = vector.extract_strided_slice %128 {offsets = [96, 0], sizes = [48, 48], strides = [1, 1]} : vector<192x48xf32> to vector<48x48xf32>
    %140 = vector.extract_strided_slice %90 {offsets = [0, 64], sizes = [48, 32], strides = [1, 1]} : vector<48x128xf32> to vector<48x32xf32>
    %141 = arith.truncf %139 : vector<48x48xf32> to vector<48x48xbf16>
    %142 = arith.truncf %140 : vector<48x32xf32> to vector<48x32xbf16>
    %cst_42 = arith.constant dense<0.000000e+00> : vector<48x32xf32>
    %143 = tpu.matmul %141, %142, %cst_42 {dimension_numbers = #tpu.dot_dimension_numbers<[1], [0], [0], [1], [0, 0, 1, 1], [], []>} : vector<48x48xbf16>, vector<48x32xbf16>, vector<48x32xf32> -> vector<48x32xf32>
    %144 = vector.extract_strided_slice %128 {offsets = [144, 0], sizes = [48, 48], strides = [1, 1]} : vector<192x48xf32> to vector<48x48xf32>
    %145 = vector.extract_strided_slice %90 {offsets = [0, 96], sizes = [48, 32], strides = [1, 1]} : vector<48x128xf32> to vector<48x32xf32>
    %146 = arith.truncf %144 : vector<48x48xf32> to vector<48x48xbf16>
    %147 = arith.truncf %145 : vector<48x32xf32> to vector<48x32xbf16>
    %cst_43 = arith.constant dense<0.000000e+00> : vector<48x32xf32>
    %148 = tpu.matmul %146, %147, %cst_43 {dimension_numbers = #tpu.dot_dimension_numbers<[1], [0], [0], [1], [0, 0, 1, 1], [], []>} : vector<48x48xbf16>, vector<48x32xbf16>, vector<48x32xf32> -> vector<48x32xf32>
    %149 = tpu.concatenate %133, %138, %143, %148 in 1 : vector<48x32xf32>, vector<48x32xf32>, vector<48x32xf32>, vector<48x32xf32> -> vector<48x128xf32>
    %150 = arith.truncf %149 : vector<48x128xf32> to vector<48x128xbf16>
    %cst_44 = arith.constant dense<0.000000e+00> : vector<48x128xf32>
    %151 = tpu.matmul %150, %92, %cst_44 {dimension_numbers = #tpu.dot_dimension_numbers<[1], [0], [0], [1], [0, 0, 1, 1], [], []>} : vector<48x128xbf16>, vector<128x128xbf16>, vector<48x128xf32> -> vector<48x128xf32>
    %152 = vector.broadcast %93 : vector<1x128xf32> to vector<48x128xf32>
    %153 = arith.addf %151, %152 : vector<48x128xf32>
    %154 = arith.addf %56, %153 : vector<48x128xf32>
    %155 = vector.extract_strided_slice %5 {offsets = [2, 0], sizes = [1, 128], strides = [1, 1]} : vector<16x128xf32> to vector<1x128xf32>
    %156 = vector.extract_strided_slice %5 {offsets = [3, 0], sizes = [1, 128], strides = [1, 1]} : vector<16x128xf32> to vector<1x128xf32>
    %cst_45 = arith.constant dense<0.000000e+00> : vector<48xf32>
    %157 = vector.multi_reduction <add>, %154, %cst_45 [1] : vector<48x128xf32> to vector<48xf32>
    %158 = vector.shape_cast %157 : vector<48xf32> to vector<48x1xf32>
    %cst_46 = arith.constant 0.020833334 : f32
    %159 = vector.broadcast %cst_46 : f32 to vector<48x1xf32>
    %160 = arith.mulf %158, %159 : vector<48x1xf32>
    %161 = vector.broadcast %160 : vector<48x1xf32> to vector<48x128xf32>
    %162 = arith.subf %154, %161 : vector<48x128xf32>
    %163 = vector.broadcast %4 : vector<1x128xf32> to vector<48x128xf32>
    %164 = arith.mulf %162, %163 : vector<48x128xf32>
    %165 = arith.mulf %164, %164 : vector<48x128xf32>
    %cst_47 = arith.constant dense<0.000000e+00> : vector<48xf32>
    %166 = vector.multi_reduction <add>, %165, %cst_47 [1] : vector<48x128xf32> to vector<48xf32>
    %167 = vector.shape_cast %166 : vector<48xf32> to vector<48x1xf32>
    %cst_48 = arith.constant 0.020833334 : f32
    %168 = vector.broadcast %cst_48 : f32 to vector<48x1xf32>
    %169 = arith.mulf %167, %168 : vector<48x1xf32>
    %cst_49 = arith.constant 9.99999974E-6 : f32
    %170 = vector.broadcast %cst_49 : f32 to vector<48x1xf32>
    %171 = arith.addf %169, %170 : vector<48x1xf32>
    %172 = math.rsqrt %171 : vector<48x1xf32>
    %173 = vector.broadcast %172 : vector<48x1xf32> to vector<48x128xf32>
    %174 = arith.mulf %164, %173 : vector<48x128xf32>
    %175 = vector.broadcast %155 : vector<1x128xf32> to vector<48x128xf32>
    %176 = arith.mulf %174, %175 : vector<48x128xf32>
    %177 = vector.broadcast %156 : vector<1x128xf32> to vector<48x128xf32>
    %178 = arith.addf %176, %177 : vector<48x128xf32>
    %c0_50 = arith.constant 0 : index
    %c0_51 = arith.constant 0 : index
    %c0_52 = arith.constant 0 : index
    %179 = vector.load %arg6[%c0_50, %c0_51, %c0_52] : memref<3x128x256xbf16, #tpu.memory_space<vmem>>, vector<1x128x256xbf16>
    %180 = vector.shape_cast %179 : vector<1x128x256xbf16> to vector<128x256xbf16>
    %181 = vector.extract_strided_slice %6 {offsets = [4, 0], sizes = [1, 256], strides = [1, 1]} : vector<16x384xf32> to vector<1x256xf32>
    %c0_53 = arith.constant 0 : index
    %c0_54 = arith.constant 0 : index
    %c0_55 = arith.constant 0 : index
    %182 = vector.load %arg7[%c0_53, %c0_54, %c0_55] : memref<3x256x128xbf16, #tpu.memory_space<vmem>>, vector<1x256x128xbf16>
    %183 = vector.shape_cast %182 : vector<1x256x128xbf16> to vector<256x128xbf16>
    %184 = vector.extract_strided_slice %6 {offsets = [5, 0], sizes = [1, 128], strides = [1, 1]} : vector<16x384xf32> to vector<1x128xf32>
    %185 = arith.truncf %178 : vector<48x128xf32> to vector<48x128xbf16>
    %cst_56 = arith.constant dense<0.000000e+00> : vector<48x256xf32>
    %186 = tpu.matmul %185, %180, %cst_56 {dimension_numbers = #tpu.dot_dimension_numbers<[1], [0], [0], [1], [0, 0, 1, 1], [], []>} : vector<48x128xbf16>, vector<128x256xbf16>, vector<48x256xf32> -> vector<48x256xf32>
    %187 = vector.broadcast %181 : vector<1x256xf32> to vector<48x256xf32>
    %188 = arith.addf %186, %187 : vector<48x256xf32>
    %cst_57 = arith.constant 5.000000e-01 : f32
    %189 = vector.broadcast %cst_57 : f32 to vector<48x256xf32>
    %190 = arith.mulf %189, %188 : vector<48x256xf32>
    %cst_58 = arith.constant 0.707106769 : f32
    %191 = vector.broadcast %cst_58 : f32 to vector<48x256xf32>
    %192 = arith.mulf %188, %191 : vector<48x256xf32>
    %193 = math.erf %192 : vector<48x256xf32>
    %cst_59 = arith.constant 1.000000e+00 : f32
    %194 = vector.broadcast %cst_59 : f32 to vector<48x256xf32>
    %195 = arith.addf %194, %193 : vector<48x256xf32>
    %196 = arith.mulf %190, %195 : vector<48x256xf32>
    %197 = arith.truncf %196 : vector<48x256xf32> to vector<48x256xbf16>
    %cst_60 = arith.constant dense<0.000000e+00> : vector<48x128xf32>
    %198 = tpu.matmul %197, %183, %cst_60 {dimension_numbers = #tpu.dot_dimension_numbers<[1], [0], [0], [1], [0, 0, 1, 1], [], []>} : vector<48x256xbf16>, vector<256x128xbf16>, vector<48x128xf32> -> vector<48x128xf32>
    %199 = vector.broadcast %184 : vector<1x128xf32> to vector<48x128xf32>
    %200 = arith.addf %198, %199 : vector<48x128xf32>
    %201 = arith.addf %154, %200 : vector<48x128xf32>
    %202 = vector.extract_strided_slice %5 {offsets = [4, 0], sizes = [1, 128], strides = [1, 1]} : vector<16x128xf32> to vector<1x128xf32>
    %203 = vector.extract_strided_slice %5 {offsets = [5, 0], sizes = [1, 128], strides = [1, 1]} : vector<16x128xf32> to vector<1x128xf32>
    %cst_61 = arith.constant dense<0.000000e+00> : vector<48xf32>
    %204 = vector.multi_reduction <add>, %201, %cst_61 [1] : vector<48x128xf32> to vector<48xf32>
    %205 = vector.shape_cast %204 : vector<48xf32> to vector<48x1xf32>
    %cst_62 = arith.constant 0.020833334 : f32
    %206 = vector.broadcast %cst_62 : f32 to vector<48x1xf32>
    %207 = arith.mulf %205, %206 : vector<48x1xf32>
    %208 = vector.broadcast %207 : vector<48x1xf32> to vector<48x128xf32>
    %209 = arith.subf %201, %208 : vector<48x128xf32>
    %210 = vector.broadcast %4 : vector<1x128xf32> to vector<48x128xf32>
    %211 = arith.mulf %209, %210 : vector<48x128xf32>
    %212 = arith.mulf %211, %211 : vector<48x128xf32>
    %cst_63 = arith.constant dense<0.000000e+00> : vector<48xf32>
    %213 = vector.multi_reduction <add>, %212, %cst_63 [1] : vector<48x128xf32> to vector<48xf32>
    %214 = vector.shape_cast %213 : vector<48xf32> to vector<48x1xf32>
    %cst_64 = arith.constant 0.020833334 : f32
    %215 = vector.broadcast %cst_64 : f32 to vector<48x1xf32>
    %216 = arith.mulf %214, %215 : vector<48x1xf32>
    %cst_65 = arith.constant 9.99999974E-6 : f32
    %217 = vector.broadcast %cst_65 : f32 to vector<48x1xf32>
    %218 = arith.addf %216, %217 : vector<48x1xf32>
    %219 = math.rsqrt %218 : vector<48x1xf32>
    %220 = vector.broadcast %219 : vector<48x1xf32> to vector<48x128xf32>
    %221 = arith.mulf %211, %220 : vector<48x128xf32>
    %222 = vector.broadcast %202 : vector<1x128xf32> to vector<48x128xf32>
    %223 = arith.mulf %221, %222 : vector<48x128xf32>
    %224 = vector.broadcast %203 : vector<1x128xf32> to vector<48x128xf32>
    %225 = arith.addf %223, %224 : vector<48x128xf32>
    %c1_66 = arith.constant 1 : index
    %c0_67 = arith.constant 0 : index
    %c0_68 = arith.constant 0 : index
    %226 = vector.load %arg4[%c1_66, %c0_67, %c0_68] : memref<3x128x384xbf16, #tpu.memory_space<vmem>>, vector<1x128x384xbf16>
    %227 = vector.shape_cast %226 : vector<1x128x384xbf16> to vector<128x384xbf16>
    %228 = arith.truncf %225 : vector<48x128xf32> to vector<48x128xbf16>
    %cst_69 = arith.constant dense<0.000000e+00> : vector<48x384xf32>
    %229 = tpu.matmul %228, %227, %cst_69 {dimension_numbers = #tpu.dot_dimension_numbers<[1], [0], [0], [1], [0, 0, 1, 1], [], []>} : vector<48x128xbf16>, vector<128x384xbf16>, vector<48x384xf32> -> vector<48x384xf32>
    %230 = vector.extract_strided_slice %6 {offsets = [6, 0], sizes = [1, 384], strides = [1, 1]} : vector<16x384xf32> to vector<1x384xf32>
    %231 = vector.broadcast %230 : vector<1x384xf32> to vector<48x384xf32>
    %232 = arith.addf %229, %231 : vector<48x384xf32>
    %233 = vector.extract_strided_slice %232 {offsets = [0, 0], sizes = [48, 128], strides = [1, 1]} : vector<48x384xf32> to vector<48x128xf32>
    %234 = vector.extract_strided_slice %232 {offsets = [0, 128], sizes = [48, 128], strides = [1, 1]} : vector<48x384xf32> to vector<48x128xf32>
    %235 = vector.extract_strided_slice %232 {offsets = [0, 256], sizes = [48, 128], strides = [1, 1]} : vector<48x384xf32> to vector<48x128xf32>
    %c1_70 = arith.constant 1 : index
    %c0_71 = arith.constant 0 : index
    %c0_72 = arith.constant 0 : index
    %236 = vector.load %arg5[%c1_70, %c0_71, %c0_72] : memref<4x128x128xbf16, #tpu.memory_space<vmem>>, vector<1x128x128xbf16>
    %237 = vector.shape_cast %236 : vector<1x128x128xbf16> to vector<128x128xbf16>
    %238 = vector.extract_strided_slice %6 {offsets = [7, 0], sizes = [1, 128], strides = [1, 1]} : vector<16x384xf32> to vector<1x128xf32>
    %239 = tpu.transpose %234, [1, 0] : vector<48x128xf32> -> vector<128x48xf32>
    %240 = vector.extract_strided_slice %233 {offsets = [0, 0], sizes = [48, 32], strides = [1, 1]} : vector<48x128xf32> to vector<48x32xf32>
    %241 = vector.extract_strided_slice %239 {offsets = [0, 0], sizes = [32, 48], strides = [1, 1]} : vector<128x48xf32> to vector<32x48xf32>
    %242 = arith.truncf %240 : vector<48x32xf32> to vector<48x32xbf16>
    %243 = arith.truncf %241 : vector<32x48xf32> to vector<32x48xbf16>
    %cst_73 = arith.constant dense<0.000000e+00> : vector<48x48xf32>
    %244 = tpu.matmul %242, %243, %cst_73 {dimension_numbers = #tpu.dot_dimension_numbers<[1], [0], [0], [1], [0, 0, 1, 1], [], []>} : vector<48x32xbf16>, vector<32x48xbf16>, vector<48x48xf32> -> vector<48x48xf32>
    %245 = vector.extract_strided_slice %233 {offsets = [0, 32], sizes = [48, 32], strides = [1, 1]} : vector<48x128xf32> to vector<48x32xf32>
    %246 = vector.extract_strided_slice %239 {offsets = [32, 0], sizes = [32, 48], strides = [1, 1]} : vector<128x48xf32> to vector<32x48xf32>
    %247 = arith.truncf %245 : vector<48x32xf32> to vector<48x32xbf16>
    %248 = arith.truncf %246 : vector<32x48xf32> to vector<32x48xbf16>
    %cst_74 = arith.constant dense<0.000000e+00> : vector<48x48xf32>
    %249 = tpu.matmul %247, %248, %cst_74 {dimension_numbers = #tpu.dot_dimension_numbers<[1], [0], [0], [1], [0, 0, 1, 1], [], []>} : vector<48x32xbf16>, vector<32x48xbf16>, vector<48x48xf32> -> vector<48x48xf32>
    %250 = vector.extract_strided_slice %233 {offsets = [0, 64], sizes = [48, 32], strides = [1, 1]} : vector<48x128xf32> to vector<48x32xf32>
    %251 = vector.extract_strided_slice %239 {offsets = [64, 0], sizes = [32, 48], strides = [1, 1]} : vector<128x48xf32> to vector<32x48xf32>
    %252 = arith.truncf %250 : vector<48x32xf32> to vector<48x32xbf16>
    %253 = arith.truncf %251 : vector<32x48xf32> to vector<32x48xbf16>
    %cst_75 = arith.constant dense<0.000000e+00> : vector<48x48xf32>
    %254 = tpu.matmul %252, %253, %cst_75 {dimension_numbers = #tpu.dot_dimension_numbers<[1], [0], [0], [1], [0, 0, 1, 1], [], []>} : vector<48x32xbf16>, vector<32x48xbf16>, vector<48x48xf32> -> vector<48x48xf32>
    %255 = vector.extract_strided_slice %233 {offsets = [0, 96], sizes = [48, 32], strides = [1, 1]} : vector<48x128xf32> to vector<48x32xf32>
    %256 = vector.extract_strided_slice %239 {offsets = [96, 0], sizes = [32, 48], strides = [1, 1]} : vector<128x48xf32> to vector<32x48xf32>
    %257 = arith.truncf %255 : vector<48x32xf32> to vector<48x32xbf16>
    %258 = arith.truncf %256 : vector<32x48xf32> to vector<32x48xbf16>
    %cst_76 = arith.constant dense<0.000000e+00> : vector<48x48xf32>
    %259 = tpu.matmul %257, %258, %cst_76 {dimension_numbers = #tpu.dot_dimension_numbers<[1], [0], [0], [1], [0, 0, 1, 1], [], []>} : vector<48x32xbf16>, vector<32x48xbf16>, vector<48x48xf32> -> vector<48x48xf32>
    %260 = tpu.concatenate %244, %249, %254, %259 in 0 : vector<48x48xf32>, vector<48x48xf32>, vector<48x48xf32>, vector<48x48xf32> -> vector<192x48xf32>
    %cst_77 = arith.constant 0.288675129 : f32
    %261 = vector.broadcast %cst_77 : f32 to vector<192x48xf32>
    %262 = arith.mulf %260, %261 : vector<192x48xf32>
    %263 = arith.addf %262, %39 : vector<192x48xf32>
    %cst_78 = arith.constant dense<0xFF800000> : vector<192xf32>
    %264 = vector.multi_reduction <maximumf>, %263, %cst_78 [1] : vector<192x48xf32> to vector<192xf32>
    %265 = vector.shape_cast %264 : vector<192xf32> to vector<192x1xf32>
    %266 = vector.broadcast %265 : vector<192x1xf32> to vector<192x48xf32>
    %267 = arith.subf %263, %266 : vector<192x48xf32>
    %268 = math.exp %267 : vector<192x48xf32>
    %cst_79 = arith.constant dense<0.000000e+00> : vector<192xf32>
    %269 = vector.multi_reduction <add>, %268, %cst_79 [1] : vector<192x48xf32> to vector<192xf32>
    %270 = vector.shape_cast %269 : vector<192xf32> to vector<192x1xf32>
    %271 = tpu.reciprocal %270 {approx = true} : vector<192x1xf32> -> vector<192x1xf32>
    %272 = vector.broadcast %271 : vector<192x1xf32> to vector<192x48xf32>
    %273 = arith.mulf %268, %272 : vector<192x48xf32>
    %274 = vector.extract_strided_slice %273 {offsets = [0, 0], sizes = [48, 48], strides = [1, 1]} : vector<192x48xf32> to vector<48x48xf32>
    %275 = vector.extract_strided_slice %235 {offsets = [0, 0], sizes = [48, 32], strides = [1, 1]} : vector<48x128xf32> to vector<48x32xf32>
    %276 = arith.truncf %274 : vector<48x48xf32> to vector<48x48xbf16>
    %277 = arith.truncf %275 : vector<48x32xf32> to vector<48x32xbf16>
    %cst_80 = arith.constant dense<0.000000e+00> : vector<48x32xf32>
    %278 = tpu.matmul %276, %277, %cst_80 {dimension_numbers = #tpu.dot_dimension_numbers<[1], [0], [0], [1], [0, 0, 1, 1], [], []>} : vector<48x48xbf16>, vector<48x32xbf16>, vector<48x32xf32> -> vector<48x32xf32>
    %279 = vector.extract_strided_slice %273 {offsets = [48, 0], sizes = [48, 48], strides = [1, 1]} : vector<192x48xf32> to vector<48x48xf32>
    %280 = vector.extract_strided_slice %235 {offsets = [0, 32], sizes = [48, 32], strides = [1, 1]} : vector<48x128xf32> to vector<48x32xf32>
    %281 = arith.truncf %279 : vector<48x48xf32> to vector<48x48xbf16>
    %282 = arith.truncf %280 : vector<48x32xf32> to vector<48x32xbf16>
    %cst_81 = arith.constant dense<0.000000e+00> : vector<48x32xf32>
    %283 = tpu.matmul %281, %282, %cst_81 {dimension_numbers = #tpu.dot_dimension_numbers<[1], [0], [0], [1], [0, 0, 1, 1], [], []>} : vector<48x48xbf16>, vector<48x32xbf16>, vector<48x32xf32> -> vector<48x32xf32>
    %284 = vector.extract_strided_slice %273 {offsets = [96, 0], sizes = [48, 48], strides = [1, 1]} : vector<192x48xf32> to vector<48x48xf32>
    %285 = vector.extract_strided_slice %235 {offsets = [0, 64], sizes = [48, 32], strides = [1, 1]} : vector<48x128xf32> to vector<48x32xf32>
    %286 = arith.truncf %284 : vector<48x48xf32> to vector<48x48xbf16>
    %287 = arith.truncf %285 : vector<48x32xf32> to vector<48x32xbf16>
    %cst_82 = arith.constant dense<0.000000e+00> : vector<48x32xf32>
    %288 = tpu.matmul %286, %287, %cst_82 {dimension_numbers = #tpu.dot_dimension_numbers<[1], [0], [0], [1], [0, 0, 1, 1], [], []>} : vector<48x48xbf16>, vector<48x32xbf16>, vector<48x32xf32> -> vector<48x32xf32>
    %289 = vector.extract_strided_slice %273 {offsets = [144, 0], sizes = [48, 48], strides = [1, 1]} : vector<192x48xf32> to vector<48x48xf32>
    %290 = vector.extract_strided_slice %235 {offsets = [0, 96], sizes = [48, 32], strides = [1, 1]} : vector<48x128xf32> to vector<48x32xf32>
    %291 = arith.truncf %289 : vector<48x48xf32> to vector<48x48xbf16>
    %292 = arith.truncf %290 : vector<48x32xf32> to vector<48x32xbf16>
    %cst_83 = arith.constant dense<0.000000e+00> : vector<48x32xf32>
    %293 = tpu.matmul %291, %292, %cst_83 {dimension_numbers = #tpu.dot_dimension_numbers<[1], [0], [0], [1], [0, 0, 1, 1], [], []>} : vector<48x48xbf16>, vector<48x32xbf16>, vector<48x32xf32> -> vector<48x32xf32>
    %294 = tpu.concatenate %278, %283, %288, %293 in 1 : vector<48x32xf32>, vector<48x32xf32>, vector<48x32xf32>, vector<48x32xf32> -> vector<48x128xf32>
    %295 = arith.truncf %294 : vector<48x128xf32> to vector<48x128xbf16>
    %cst_84 = arith.constant dense<0.000000e+00> : vector<48x128xf32>
    %296 = tpu.matmul %295, %237, %cst_84 {dimension_numbers = #tpu.dot_dimension_numbers<[1], [0], [0], [1], [0, 0, 1, 1], [], []>} : vector<48x128xbf16>, vector<128x128xbf16>, vector<48x128xf32> -> vector<48x128xf32>
    %297 = vector.broadcast %238 : vector<1x128xf32> to vector<48x128xf32>
    %298 = arith.addf %296, %297 : vector<48x128xf32>
    %299 = arith.addf %201, %298 : vector<48x128xf32>
    %300 = vector.extract_strided_slice %5 {offsets = [6, 0], sizes = [1, 128], strides = [1, 1]} : vector<16x128xf32> to vector<1x128xf32>
    %301 = vector.extract_strided_slice %5 {offsets = [7, 0], sizes = [1, 128], strides = [1, 1]} : vector<16x128xf32> to vector<1x128xf32>
    %cst_85 = arith.constant dense<0.000000e+00> : vector<48xf32>
    %302 = vector.multi_reduction <add>, %299, %cst_85 [1] : vector<48x128xf32> to vector<48xf32>
    %303 = vector.shape_cast %302 : vector<48xf32> to vector<48x1xf32>
    %cst_86 = arith.constant 0.020833334 : f32
    %304 = vector.broadcast %cst_86 : f32 to vector<48x1xf32>
    %305 = arith.mulf %303, %304 : vector<48x1xf32>
    %306 = vector.broadcast %305 : vector<48x1xf32> to vector<48x128xf32>
    %307 = arith.subf %299, %306 : vector<48x128xf32>
    %308 = vector.broadcast %4 : vector<1x128xf32> to vector<48x128xf32>
    %309 = arith.mulf %307, %308 : vector<48x128xf32>
    %310 = arith.mulf %309, %309 : vector<48x128xf32>
    %cst_87 = arith.constant dense<0.000000e+00> : vector<48xf32>
    %311 = vector.multi_reduction <add>, %310, %cst_87 [1] : vector<48x128xf32> to vector<48xf32>
    %312 = vector.shape_cast %311 : vector<48xf32> to vector<48x1xf32>
    %cst_88 = arith.constant 0.020833334 : f32
    %313 = vector.broadcast %cst_88 : f32 to vector<48x1xf32>
    %314 = arith.mulf %312, %313 : vector<48x1xf32>
    %cst_89 = arith.constant 9.99999974E-6 : f32
    %315 = vector.broadcast %cst_89 : f32 to vector<48x1xf32>
    %316 = arith.addf %314, %315 : vector<48x1xf32>
    %317 = math.rsqrt %316 : vector<48x1xf32>
    %318 = vector.broadcast %317 : vector<48x1xf32> to vector<48x128xf32>
    %319 = arith.mulf %309, %318 : vector<48x128xf32>
    %320 = vector.broadcast %300 : vector<1x128xf32> to vector<48x128xf32>
    %321 = arith.mulf %319, %320 : vector<48x128xf32>
    %322 = vector.broadcast %301 : vector<1x128xf32> to vector<48x128xf32>
    %323 = arith.addf %321, %322 : vector<48x128xf32>
    %c1_90 = arith.constant 1 : index
    %c0_91 = arith.constant 0 : index
    %c0_92 = arith.constant 0 : index
    %324 = vector.load %arg6[%c1_90, %c0_91, %c0_92] : memref<3x128x256xbf16, #tpu.memory_space<vmem>>, vector<1x128x256xbf16>
    %325 = vector.shape_cast %324 : vector<1x128x256xbf16> to vector<128x256xbf16>
    %326 = vector.extract_strided_slice %6 {offsets = [8, 0], sizes = [1, 256], strides = [1, 1]} : vector<16x384xf32> to vector<1x256xf32>
    %c1_93 = arith.constant 1 : index
    %c0_94 = arith.constant 0 : index
    %c0_95 = arith.constant 0 : index
    %327 = vector.load %arg7[%c1_93, %c0_94, %c0_95] : memref<3x256x128xbf16, #tpu.memory_space<vmem>>, vector<1x256x128xbf16>
    %328 = vector.shape_cast %327 : vector<1x256x128xbf16> to vector<256x128xbf16>
    %329 = vector.extract_strided_slice %6 {offsets = [9, 0], sizes = [1, 128], strides = [1, 1]} : vector<16x384xf32> to vector<1x128xf32>
    %330 = arith.truncf %323 : vector<48x128xf32> to vector<48x128xbf16>
    %cst_96 = arith.constant dense<0.000000e+00> : vector<48x256xf32>
    %331 = tpu.matmul %330, %325, %cst_96 {dimension_numbers = #tpu.dot_dimension_numbers<[1], [0], [0], [1], [0, 0, 1, 1], [], []>} : vector<48x128xbf16>, vector<128x256xbf16>, vector<48x256xf32> -> vector<48x256xf32>
    %332 = vector.broadcast %326 : vector<1x256xf32> to vector<48x256xf32>
    %333 = arith.addf %331, %332 : vector<48x256xf32>
    %cst_97 = arith.constant 5.000000e-01 : f32
    %334 = vector.broadcast %cst_97 : f32 to vector<48x256xf32>
    %335 = arith.mulf %334, %333 : vector<48x256xf32>
    %cst_98 = arith.constant 0.707106769 : f32
    %336 = vector.broadcast %cst_98 : f32 to vector<48x256xf32>
    %337 = arith.mulf %333, %336 : vector<48x256xf32>
    %338 = math.erf %337 : vector<48x256xf32>
    %cst_99 = arith.constant 1.000000e+00 : f32
    %339 = vector.broadcast %cst_99 : f32 to vector<48x256xf32>
    %340 = arith.addf %339, %338 : vector<48x256xf32>
    %341 = arith.mulf %335, %340 : vector<48x256xf32>
    %342 = arith.truncf %341 : vector<48x256xf32> to vector<48x256xbf16>
    %cst_100 = arith.constant dense<0.000000e+00> : vector<48x128xf32>
    %343 = tpu.matmul %342, %328, %cst_100 {dimension_numbers = #tpu.dot_dimension_numbers<[1], [0], [0], [1], [0, 0, 1, 1], [], []>} : vector<48x256xbf16>, vector<256x128xbf16>, vector<48x128xf32> -> vector<48x128xf32>
    %344 = vector.broadcast %329 : vector<1x128xf32> to vector<48x128xf32>
    %345 = arith.addf %343, %344 : vector<48x128xf32>
    %346 = arith.addf %299, %345 : vector<48x128xf32>
    %347 = vector.extract_strided_slice %5 {offsets = [8, 0], sizes = [1, 128], strides = [1, 1]} : vector<16x128xf32> to vector<1x128xf32>
    %348 = vector.extract_strided_slice %5 {offsets = [9, 0], sizes = [1, 128], strides = [1, 1]} : vector<16x128xf32> to vector<1x128xf32>
    %cst_101 = arith.constant dense<0.000000e+00> : vector<48xf32>
    %349 = vector.multi_reduction <add>, %346, %cst_101 [1] : vector<48x128xf32> to vector<48xf32>
    %350 = vector.shape_cast %349 : vector<48xf32> to vector<48x1xf32>
    %cst_102 = arith.constant 0.020833334 : f32
    %351 = vector.broadcast %cst_102 : f32 to vector<48x1xf32>
    %352 = arith.mulf %350, %351 : vector<48x1xf32>
    %353 = vector.broadcast %352 : vector<48x1xf32> to vector<48x128xf32>
    %354 = arith.subf %346, %353 : vector<48x128xf32>
    %355 = vector.broadcast %4 : vector<1x128xf32> to vector<48x128xf32>
    %356 = arith.mulf %354, %355 : vector<48x128xf32>
    %357 = arith.mulf %356, %356 : vector<48x128xf32>
    %cst_103 = arith.constant dense<0.000000e+00> : vector<48xf32>
    %358 = vector.multi_reduction <add>, %357, %cst_103 [1] : vector<48x128xf32> to vector<48xf32>
    %359 = vector.shape_cast %358 : vector<48xf32> to vector<48x1xf32>
    %cst_104 = arith.constant 0.020833334 : f32
    %360 = vector.broadcast %cst_104 : f32 to vector<48x1xf32>
    %361 = arith.mulf %359, %360 : vector<48x1xf32>
    %cst_105 = arith.constant 9.99999974E-6 : f32
    %362 = vector.broadcast %cst_105 : f32 to vector<48x1xf32>
    %363 = arith.addf %361, %362 : vector<48x1xf32>
    %364 = math.rsqrt %363 : vector<48x1xf32>
    %365 = vector.broadcast %364 : vector<48x1xf32> to vector<48x128xf32>
    %366 = arith.mulf %356, %365 : vector<48x128xf32>
    %367 = vector.broadcast %347 : vector<1x128xf32> to vector<48x128xf32>
    %368 = arith.mulf %366, %367 : vector<48x128xf32>
    %369 = vector.broadcast %348 : vector<1x128xf32> to vector<48x128xf32>
    %370 = arith.addf %368, %369 : vector<48x128xf32>
    %371 = vector.extract_strided_slice %5 {offsets = [10, 0], sizes = [1, 128], strides = [1, 1]} : vector<16x128xf32> to vector<1x128xf32>
    %372 = vector.extract_strided_slice %5 {offsets = [11, 0], sizes = [1, 128], strides = [1, 1]} : vector<16x128xf32> to vector<1x128xf32>
    %cst_106 = arith.constant dense<0.000000e+00> : vector<48xf32>
    %373 = vector.multi_reduction <add>, %346, %cst_106 [1] : vector<48x128xf32> to vector<48xf32>
    %374 = vector.shape_cast %373 : vector<48xf32> to vector<48x1xf32>
    %cst_107 = arith.constant 0.020833334 : f32
    %375 = vector.broadcast %cst_107 : f32 to vector<48x1xf32>
    %376 = arith.mulf %374, %375 : vector<48x1xf32>
    %377 = vector.broadcast %376 : vector<48x1xf32> to vector<48x128xf32>
    %378 = arith.subf %346, %377 : vector<48x128xf32>
    %379 = vector.broadcast %4 : vector<1x128xf32> to vector<48x128xf32>
    %380 = arith.mulf %378, %379 : vector<48x128xf32>
    %381 = arith.mulf %380, %380 : vector<48x128xf32>
    %cst_108 = arith.constant dense<0.000000e+00> : vector<48xf32>
    %382 = vector.multi_reduction <add>, %381, %cst_108 [1] : vector<48x128xf32> to vector<48xf32>
    %383 = vector.shape_cast %382 : vector<48xf32> to vector<48x1xf32>
    %cst_109 = arith.constant 0.020833334 : f32
    %384 = vector.broadcast %cst_109 : f32 to vector<48x1xf32>
    %385 = arith.mulf %383, %384 : vector<48x1xf32>
    %cst_110 = arith.constant 9.99999974E-6 : f32
    %386 = vector.broadcast %cst_110 : f32 to vector<48x1xf32>
    %387 = arith.addf %385, %386 : vector<48x1xf32>
    %388 = math.rsqrt %387 : vector<48x1xf32>
    %389 = vector.broadcast %388 : vector<48x1xf32> to vector<48x128xf32>
    %390 = arith.mulf %380, %389 : vector<48x128xf32>
    %391 = vector.broadcast %371 : vector<1x128xf32> to vector<48x128xf32>
    %392 = arith.mulf %390, %391 : vector<48x128xf32>
    %393 = vector.broadcast %372 : vector<1x128xf32> to vector<48x128xf32>
    %394 = arith.addf %392, %393 : vector<48x128xf32>
    %c2 = arith.constant 2 : index
    %c0_111 = arith.constant 0 : index
    %c0_112 = arith.constant 0 : index
    %395 = vector.load %arg4[%c2, %c0_111, %c0_112] : memref<3x128x384xbf16, #tpu.memory_space<vmem>>, vector<1x128x384xbf16>
    %396 = vector.shape_cast %395 : vector<1x128x384xbf16> to vector<128x384xbf16>
    %397 = vector.extract_strided_slice %396 {offsets = [0, 0], sizes = [128, 128], strides = [1, 1]} : vector<128x384xbf16> to vector<128x128xbf16>
    %398 = arith.truncf %370 : vector<48x128xf32> to vector<48x128xbf16>
    %cst_113 = arith.constant dense<0.000000e+00> : vector<48x128xf32>
    %399 = tpu.matmul %398, %397, %cst_113 {dimension_numbers = #tpu.dot_dimension_numbers<[1], [0], [0], [1], [0, 0, 1, 1], [], []>} : vector<48x128xbf16>, vector<128x128xbf16>, vector<48x128xf32> -> vector<48x128xf32>
    %400 = vector.extract_strided_slice %6 {offsets = [10, 0], sizes = [1, 128], strides = [1, 1]} : vector<16x384xf32> to vector<1x128xf32>
    %401 = vector.broadcast %400 : vector<1x128xf32> to vector<48x128xf32>
    %402 = arith.addf %399, %401 : vector<48x128xf32>
    %403 = vector.extract_strided_slice %396 {offsets = [0, 128], sizes = [128, 256], strides = [1, 1]} : vector<128x384xbf16> to vector<128x256xbf16>
    %404 = arith.truncf %394 : vector<48x128xf32> to vector<48x128xbf16>
    %cst_114 = arith.constant dense<0.000000e+00> : vector<48x256xf32>
    %405 = tpu.matmul %404, %403, %cst_114 {dimension_numbers = #tpu.dot_dimension_numbers<[1], [0], [0], [1], [0, 0, 1, 1], [], []>} : vector<48x128xbf16>, vector<128x256xbf16>, vector<48x256xf32> -> vector<48x256xf32>
    %406 = vector.extract_strided_slice %6 {offsets = [10, 128], sizes = [1, 256], strides = [1, 1]} : vector<16x384xf32> to vector<1x256xf32>
    %407 = vector.broadcast %406 : vector<1x256xf32> to vector<48x256xf32>
    %408 = arith.addf %405, %407 : vector<48x256xf32>
    %409 = vector.extract_strided_slice %408 {offsets = [0, 0], sizes = [48, 128], strides = [1, 1]} : vector<48x256xf32> to vector<48x128xf32>
    %410 = vector.extract_strided_slice %408 {offsets = [0, 128], sizes = [48, 128], strides = [1, 1]} : vector<48x256xf32> to vector<48x128xf32>
    %c2_115 = arith.constant 2 : index
    %c0_116 = arith.constant 0 : index
    %c0_117 = arith.constant 0 : index
    %411 = vector.load %arg5[%c2_115, %c0_116, %c0_117] : memref<4x128x128xbf16, #tpu.memory_space<vmem>>, vector<1x128x128xbf16>
    %412 = vector.shape_cast %411 : vector<1x128x128xbf16> to vector<128x128xbf16>
    %413 = vector.extract_strided_slice %6 {offsets = [11, 0], sizes = [1, 128], strides = [1, 1]} : vector<16x384xf32> to vector<1x128xf32>
    %414 = tpu.transpose %409, [1, 0] : vector<48x128xf32> -> vector<128x48xf32>
    %415 = vector.extract_strided_slice %402 {offsets = [0, 0], sizes = [48, 32], strides = [1, 1]} : vector<48x128xf32> to vector<48x32xf32>
    %416 = vector.extract_strided_slice %414 {offsets = [0, 0], sizes = [32, 48], strides = [1, 1]} : vector<128x48xf32> to vector<32x48xf32>
    %417 = arith.truncf %415 : vector<48x32xf32> to vector<48x32xbf16>
    %418 = arith.truncf %416 : vector<32x48xf32> to vector<32x48xbf16>
    %cst_118 = arith.constant dense<0.000000e+00> : vector<48x48xf32>
    %419 = tpu.matmul %417, %418, %cst_118 {dimension_numbers = #tpu.dot_dimension_numbers<[1], [0], [0], [1], [0, 0, 1, 1], [], []>} : vector<48x32xbf16>, vector<32x48xbf16>, vector<48x48xf32> -> vector<48x48xf32>
    %420 = vector.extract_strided_slice %402 {offsets = [0, 32], sizes = [48, 32], strides = [1, 1]} : vector<48x128xf32> to vector<48x32xf32>
    %421 = vector.extract_strided_slice %414 {offsets = [32, 0], sizes = [32, 48], strides = [1, 1]} : vector<128x48xf32> to vector<32x48xf32>
    %422 = arith.truncf %420 : vector<48x32xf32> to vector<48x32xbf16>
    %423 = arith.truncf %421 : vector<32x48xf32> to vector<32x48xbf16>
    %cst_119 = arith.constant dense<0.000000e+00> : vector<48x48xf32>
    %424 = tpu.matmul %422, %423, %cst_119 {dimension_numbers = #tpu.dot_dimension_numbers<[1], [0], [0], [1], [0, 0, 1, 1], [], []>} : vector<48x32xbf16>, vector<32x48xbf16>, vector<48x48xf32> -> vector<48x48xf32>
    %425 = vector.extract_strided_slice %402 {offsets = [0, 64], sizes = [48, 32], strides = [1, 1]} : vector<48x128xf32> to vector<48x32xf32>
    %426 = vector.extract_strided_slice %414 {offsets = [64, 0], sizes = [32, 48], strides = [1, 1]} : vector<128x48xf32> to vector<32x48xf32>
    %427 = arith.truncf %425 : vector<48x32xf32> to vector<48x32xbf16>
    %428 = arith.truncf %426 : vector<32x48xf32> to vector<32x48xbf16>
    %cst_120 = arith.constant dense<0.000000e+00> : vector<48x48xf32>
    %429 = tpu.matmul %427, %428, %cst_120 {dimension_numbers = #tpu.dot_dimension_numbers<[1], [0], [0], [1], [0, 0, 1, 1], [], []>} : vector<48x32xbf16>, vector<32x48xbf16>, vector<48x48xf32> -> vector<48x48xf32>
    %430 = vector.extract_strided_slice %402 {offsets = [0, 96], sizes = [48, 32], strides = [1, 1]} : vector<48x128xf32> to vector<48x32xf32>
    %431 = vector.extract_strided_slice %414 {offsets = [96, 0], sizes = [32, 48], strides = [1, 1]} : vector<128x48xf32> to vector<32x48xf32>
    %432 = arith.truncf %430 : vector<48x32xf32> to vector<48x32xbf16>
    %433 = arith.truncf %431 : vector<32x48xf32> to vector<32x48xbf16>
    %cst_121 = arith.constant dense<0.000000e+00> : vector<48x48xf32>
    %434 = tpu.matmul %432, %433, %cst_121 {dimension_numbers = #tpu.dot_dimension_numbers<[1], [0], [0], [1], [0, 0, 1, 1], [], []>} : vector<48x32xbf16>, vector<32x48xbf16>, vector<48x48xf32> -> vector<48x48xf32>
    %435 = tpu.concatenate %419, %424, %429, %434 in 0 : vector<48x48xf32>, vector<48x48xf32>, vector<48x48xf32>, vector<48x48xf32> -> vector<192x48xf32>
    %cst_122 = arith.constant 0.288675129 : f32
    %436 = vector.broadcast %cst_122 : f32 to vector<192x48xf32>
    %437 = arith.mulf %435, %436 : vector<192x48xf32>
    %438 = arith.addf %437, %39 : vector<192x48xf32>
    %cst_123 = arith.constant dense<0xFF800000> : vector<192xf32>
    %439 = vector.multi_reduction <maximumf>, %438, %cst_123 [1] : vector<192x48xf32> to vector<192xf32>
    %440 = vector.shape_cast %439 : vector<192xf32> to vector<192x1xf32>
    %441 = vector.broadcast %440 : vector<192x1xf32> to vector<192x48xf32>
    %442 = arith.subf %438, %441 : vector<192x48xf32>
    %443 = math.exp %442 : vector<192x48xf32>
    %cst_124 = arith.constant dense<0.000000e+00> : vector<192xf32>
    %444 = vector.multi_reduction <add>, %443, %cst_124 [1] : vector<192x48xf32> to vector<192xf32>
    %445 = vector.shape_cast %444 : vector<192xf32> to vector<192x1xf32>
    %446 = tpu.reciprocal %445 {approx = true} : vector<192x1xf32> -> vector<192x1xf32>
    %447 = vector.broadcast %446 : vector<192x1xf32> to vector<192x48xf32>
    %448 = arith.mulf %443, %447 : vector<192x48xf32>
    %449 = vector.extract_strided_slice %448 {offsets = [0, 0], sizes = [48, 48], strides = [1, 1]} : vector<192x48xf32> to vector<48x48xf32>
    %450 = vector.extract_strided_slice %410 {offsets = [0, 0], sizes = [48, 32], strides = [1, 1]} : vector<48x128xf32> to vector<48x32xf32>
    %451 = arith.truncf %449 : vector<48x48xf32> to vector<48x48xbf16>
    %452 = arith.truncf %450 : vector<48x32xf32> to vector<48x32xbf16>
    %cst_125 = arith.constant dense<0.000000e+00> : vector<48x32xf32>
    %453 = tpu.matmul %451, %452, %cst_125 {dimension_numbers = #tpu.dot_dimension_numbers<[1], [0], [0], [1], [0, 0, 1, 1], [], []>} : vector<48x48xbf16>, vector<48x32xbf16>, vector<48x32xf32> -> vector<48x32xf32>
    %454 = vector.extract_strided_slice %448 {offsets = [48, 0], sizes = [48, 48], strides = [1, 1]} : vector<192x48xf32> to vector<48x48xf32>
    %455 = vector.extract_strided_slice %410 {offsets = [0, 32], sizes = [48, 32], strides = [1, 1]} : vector<48x128xf32> to vector<48x32xf32>
    %456 = arith.truncf %454 : vector<48x48xf32> to vector<48x48xbf16>
    %457 = arith.truncf %455 : vector<48x32xf32> to vector<48x32xbf16>
    %cst_126 = arith.constant dense<0.000000e+00> : vector<48x32xf32>
    %458 = tpu.matmul %456, %457, %cst_126 {dimension_numbers = #tpu.dot_dimension_numbers<[1], [0], [0], [1], [0, 0, 1, 1], [], []>} : vector<48x48xbf16>, vector<48x32xbf16>, vector<48x32xf32> -> vector<48x32xf32>
    %459 = vector.extract_strided_slice %448 {offsets = [96, 0], sizes = [48, 48], strides = [1, 1]} : vector<192x48xf32> to vector<48x48xf32>
    %460 = vector.extract_strided_slice %410 {offsets = [0, 64], sizes = [48, 32], strides = [1, 1]} : vector<48x128xf32> to vector<48x32xf32>
    %461 = arith.truncf %459 : vector<48x48xf32> to vector<48x48xbf16>
    %462 = arith.truncf %460 : vector<48x32xf32> to vector<48x32xbf16>
    %cst_127 = arith.constant dense<0.000000e+00> : vector<48x32xf32>
    %463 = tpu.matmul %461, %462, %cst_127 {dimension_numbers = #tpu.dot_dimension_numbers<[1], [0], [0], [1], [0, 0, 1, 1], [], []>} : vector<48x48xbf16>, vector<48x32xbf16>, vector<48x32xf32> -> vector<48x32xf32>
    %464 = vector.extract_strided_slice %448 {offsets = [144, 0], sizes = [48, 48], strides = [1, 1]} : vector<192x48xf32> to vector<48x48xf32>
    %465 = vector.extract_strided_slice %410 {offsets = [0, 96], sizes = [48, 32], strides = [1, 1]} : vector<48x128xf32> to vector<48x32xf32>
    %466 = arith.truncf %464 : vector<48x48xf32> to vector<48x48xbf16>
    %467 = arith.truncf %465 : vector<48x32xf32> to vector<48x32xbf16>
    %cst_128 = arith.constant dense<0.000000e+00> : vector<48x32xf32>
    %468 = tpu.matmul %466, %467, %cst_128 {dimension_numbers = #tpu.dot_dimension_numbers<[1], [0], [0], [1], [0, 0, 1, 1], [], []>} : vector<48x48xbf16>, vector<48x32xbf16>, vector<48x32xf32> -> vector<48x32xf32>
    %469 = tpu.concatenate %453, %458, %463, %468 in 1 : vector<48x32xf32>, vector<48x32xf32>, vector<48x32xf32>, vector<48x32xf32> -> vector<48x128xf32>
    %470 = arith.truncf %469 : vector<48x128xf32> to vector<48x128xbf16>
    %cst_129 = arith.constant dense<0.000000e+00> : vector<48x128xf32>
    %471 = tpu.matmul %470, %412, %cst_129 {dimension_numbers = #tpu.dot_dimension_numbers<[1], [0], [0], [1], [0, 0, 1, 1], [], []>} : vector<48x128xbf16>, vector<128x128xbf16>, vector<48x128xf32> -> vector<48x128xf32>
    %472 = vector.broadcast %413 : vector<1x128xf32> to vector<48x128xf32>
    %473 = arith.addf %471, %472 : vector<48x128xf32>
    %474 = arith.addf %346, %473 : vector<48x128xf32>
    %475 = vector.extract_strided_slice %5 {offsets = [12, 0], sizes = [1, 128], strides = [1, 1]} : vector<16x128xf32> to vector<1x128xf32>
    %476 = vector.extract_strided_slice %5 {offsets = [13, 0], sizes = [1, 128], strides = [1, 1]} : vector<16x128xf32> to vector<1x128xf32>
    %cst_130 = arith.constant dense<0.000000e+00> : vector<48xf32>
    %477 = vector.multi_reduction <add>, %474, %cst_130 [1] : vector<48x128xf32> to vector<48xf32>
    %478 = vector.shape_cast %477 : vector<48xf32> to vector<48x1xf32>
    %cst_131 = arith.constant 0.020833334 : f32
    %479 = vector.broadcast %cst_131 : f32 to vector<48x1xf32>
    %480 = arith.mulf %478, %479 : vector<48x1xf32>
    %481 = vector.broadcast %480 : vector<48x1xf32> to vector<48x128xf32>
    %482 = arith.subf %474, %481 : vector<48x128xf32>
    %483 = vector.broadcast %4 : vector<1x128xf32> to vector<48x128xf32>
    %484 = arith.mulf %482, %483 : vector<48x128xf32>
    %485 = arith.mulf %484, %484 : vector<48x128xf32>
    %cst_132 = arith.constant dense<0.000000e+00> : vector<48xf32>
    %486 = vector.multi_reduction <add>, %485, %cst_132 [1] : vector<48x128xf32> to vector<48xf32>
    %487 = vector.shape_cast %486 : vector<48xf32> to vector<48x1xf32>
    %cst_133 = arith.constant 0.020833334 : f32
    %488 = vector.broadcast %cst_133 : f32 to vector<48x1xf32>
    %489 = arith.mulf %487, %488 : vector<48x1xf32>
    %cst_134 = arith.constant 9.99999974E-6 : f32
    %490 = vector.broadcast %cst_134 : f32 to vector<48x1xf32>
    %491 = arith.addf %489, %490 : vector<48x1xf32>
    %492 = math.rsqrt %491 : vector<48x1xf32>
    %493 = vector.broadcast %492 : vector<48x1xf32> to vector<48x128xf32>
    %494 = arith.mulf %484, %493 : vector<48x128xf32>
    %495 = vector.broadcast %475 : vector<1x128xf32> to vector<48x128xf32>
    %496 = arith.mulf %494, %495 : vector<48x128xf32>
    %497 = vector.broadcast %476 : vector<1x128xf32> to vector<48x128xf32>
    %498 = arith.addf %496, %497 : vector<48x128xf32>
    %c2_135 = arith.constant 2 : index
    %c0_136 = arith.constant 0 : index
    %c0_137 = arith.constant 0 : index
    %499 = vector.load %arg6[%c2_135, %c0_136, %c0_137] : memref<3x128x256xbf16, #tpu.memory_space<vmem>>, vector<1x128x256xbf16>
    %500 = vector.shape_cast %499 : vector<1x128x256xbf16> to vector<128x256xbf16>
    %501 = vector.extract_strided_slice %6 {offsets = [12, 0], sizes = [1, 256], strides = [1, 1]} : vector<16x384xf32> to vector<1x256xf32>
    %c2_138 = arith.constant 2 : index
    %c0_139 = arith.constant 0 : index
    %c0_140 = arith.constant 0 : index
    %502 = vector.load %arg7[%c2_138, %c0_139, %c0_140] : memref<3x256x128xbf16, #tpu.memory_space<vmem>>, vector<1x256x128xbf16>
    %503 = vector.shape_cast %502 : vector<1x256x128xbf16> to vector<256x128xbf16>
    %504 = vector.extract_strided_slice %6 {offsets = [13, 0], sizes = [1, 128], strides = [1, 1]} : vector<16x384xf32> to vector<1x128xf32>
    %505 = arith.truncf %498 : vector<48x128xf32> to vector<48x128xbf16>
    %cst_141 = arith.constant dense<0.000000e+00> : vector<48x256xf32>
    %506 = tpu.matmul %505, %500, %cst_141 {dimension_numbers = #tpu.dot_dimension_numbers<[1], [0], [0], [1], [0, 0, 1, 1], [], []>} : vector<48x128xbf16>, vector<128x256xbf16>, vector<48x256xf32> -> vector<48x256xf32>
    %507 = vector.broadcast %501 : vector<1x256xf32> to vector<48x256xf32>
    %508 = arith.addf %506, %507 : vector<48x256xf32>
    %cst_142 = arith.constant 5.000000e-01 : f32
    %509 = vector.broadcast %cst_142 : f32 to vector<48x256xf32>
    %510 = arith.mulf %509, %508 : vector<48x256xf32>
    %cst_143 = arith.constant 0.707106769 : f32
    %511 = vector.broadcast %cst_143 : f32 to vector<48x256xf32>
    %512 = arith.mulf %508, %511 : vector<48x256xf32>
    %513 = math.erf %512 : vector<48x256xf32>
    %cst_144 = arith.constant 1.000000e+00 : f32
    %514 = vector.broadcast %cst_144 : f32 to vector<48x256xf32>
    %515 = arith.addf %514, %513 : vector<48x256xf32>
    %516 = arith.mulf %510, %515 : vector<48x256xf32>
    %517 = arith.truncf %516 : vector<48x256xf32> to vector<48x256xbf16>
    %cst_145 = arith.constant dense<0.000000e+00> : vector<48x128xf32>
    %518 = tpu.matmul %517, %503, %cst_145 {dimension_numbers = #tpu.dot_dimension_numbers<[1], [0], [0], [1], [0, 0, 1, 1], [], []>} : vector<48x256xbf16>, vector<256x128xbf16>, vector<48x128xf32> -> vector<48x128xf32>
    %519 = vector.broadcast %504 : vector<1x128xf32> to vector<48x128xf32>
    %520 = arith.addf %518, %519 : vector<48x128xf32>
    %521 = arith.addf %474, %520 : vector<48x128xf32>
    %522 = vector.extract_strided_slice %5 {offsets = [14, 0], sizes = [1, 128], strides = [1, 1]} : vector<16x128xf32> to vector<1x128xf32>
    %523 = vector.extract_strided_slice %5 {offsets = [15, 0], sizes = [1, 128], strides = [1, 1]} : vector<16x128xf32> to vector<1x128xf32>
    %cst_146 = arith.constant dense<0.000000e+00> : vector<48xf32>
    %524 = vector.multi_reduction <add>, %521, %cst_146 [1] : vector<48x128xf32> to vector<48xf32>
    %525 = vector.shape_cast %524 : vector<48xf32> to vector<48x1xf32>
    %cst_147 = arith.constant 0.020833334 : f32
    %526 = vector.broadcast %cst_147 : f32 to vector<48x1xf32>
    %527 = arith.mulf %525, %526 : vector<48x1xf32>
    %528 = vector.broadcast %527 : vector<48x1xf32> to vector<48x128xf32>
    %529 = arith.subf %521, %528 : vector<48x128xf32>
    %530 = vector.broadcast %4 : vector<1x128xf32> to vector<48x128xf32>
    %531 = arith.mulf %529, %530 : vector<48x128xf32>
    %532 = arith.mulf %531, %531 : vector<48x128xf32>
    %cst_148 = arith.constant dense<0.000000e+00> : vector<48xf32>
    %533 = vector.multi_reduction <add>, %532, %cst_148 [1] : vector<48x128xf32> to vector<48xf32>
    %534 = vector.shape_cast %533 : vector<48xf32> to vector<48x1xf32>
    %cst_149 = arith.constant 0.020833334 : f32
    %535 = vector.broadcast %cst_149 : f32 to vector<48x1xf32>
    %536 = arith.mulf %534, %535 : vector<48x1xf32>
    %cst_150 = arith.constant 9.99999974E-6 : f32
    %537 = vector.broadcast %cst_150 : f32 to vector<48x1xf32>
    %538 = arith.addf %536, %537 : vector<48x1xf32>
    %539 = math.rsqrt %538 : vector<48x1xf32>
    %540 = vector.broadcast %539 : vector<48x1xf32> to vector<48x128xf32>
    %541 = arith.mulf %531, %540 : vector<48x128xf32>
    %542 = vector.broadcast %522 : vector<1x128xf32> to vector<48x128xf32>
    %543 = arith.mulf %541, %542 : vector<48x128xf32>
    %544 = vector.broadcast %523 : vector<1x128xf32> to vector<48x128xf32>
    %545 = arith.addf %543, %544 : vector<48x128xf32>
    %c3 = arith.constant 3 : index
    %c0_151 = arith.constant 0 : index
    %c0_152 = arith.constant 0 : index
    %546 = vector.load %arg5[%c3, %c0_151, %c0_152] : memref<4x128x128xbf16, #tpu.memory_space<vmem>>, vector<1x128x128xbf16>
    %547 = vector.shape_cast %546 : vector<1x128x128xbf16> to vector<128x128xbf16>
    %548 = arith.truncf %545 : vector<48x128xf32> to vector<48x128xbf16>
    %cst_153 = arith.constant dense<0.000000e+00> : vector<48x128xf32>
    %549 = tpu.matmul %548, %547, %cst_153 {dimension_numbers = #tpu.dot_dimension_numbers<[1], [0], [0], [1], [0, 0, 1, 1], [], []>} : vector<48x128xbf16>, vector<128x128xbf16>, vector<48x128xf32> -> vector<48x128xf32>
    %550 = vector.extract_strided_slice %6 {offsets = [14, 0], sizes = [1, 128], strides = [1, 1]} : vector<16x384xf32> to vector<1x128xf32>
    %551 = vector.broadcast %550 : vector<1x128xf32> to vector<48x128xf32>
    %552 = arith.addf %549, %551 : vector<48x128xf32>
    %c0_154 = arith.constant 0 : index
    %c0_155 = arith.constant 0 : index
    %553 = vector.load %arg10[%c0_154, %c0_155] : memref<48x128xf32, #tpu.memory_space<vmem>>, vector<48x128xf32>
    tpu.vector_store %arg10[%c0_154, %c0_155], %552 {strides = array<i32>} : memref<48x128xf32, #tpu.memory_space<vmem>>, vector<48x128xf32>,
    return
  }
  func.func @transform_0(%arg0: i32) -> (i32, i32) {
    %c0_i32 = arith.constant 0 : i32
    %c0_i32_0 = arith.constant 0 : i32
    return %arg0, %c0_i32 : i32, i32
  }
  func.func @transform_1(%arg0: i32) -> (i32, i32) {
    %c0_i32 = arith.constant 0 : i32
    %c0_i32_0 = arith.constant 0 : i32
    return %arg0, %c0_i32 : i32, i32
  }
  func.func @transform_2(%arg0: i32) -> (i32, i32, i32) {
    %c0_i32 = arith.constant 0 : i32
    %c0_i32_0 = arith.constant 0 : i32
    %c0_i32_1 = arith.constant 0 : i32
    %c0_i32_2 = arith.constant 0 : i32
    return %c0_i32, %c0_i32_0, %c0_i32_1 : i32, i32, i32
  }
  func.func @transform_3(%arg0: i32) -> (i32, i32, i32) {
    %c0_i32 = arith.constant 0 : i32
    %c0_i32_0 = arith.constant 0 : i32
    %c0_i32_1 = arith.constant 0 : i32
    %c0_i32_2 = arith.constant 0 : i32
    return %c0_i32, %c0_i32_0, %c0_i32_1 : i32, i32, i32
  }
  func.func @transform_4(%arg0: i32) -> (i32, i32, i32) {
    %c0_i32 = arith.constant 0 : i32
    %c0_i32_0 = arith.constant 0 : i32
    %c0_i32_1 = arith.constant 0 : i32
    %c0_i32_2 = arith.constant 0 : i32
    return %c0_i32, %c0_i32_0, %c0_i32_1 : i32, i32, i32
  }
  func.func @transform_5(%arg0: i32) -> (i32, i32, i32) {
    %c0_i32 = arith.constant 0 : i32
    %c0_i32_0 = arith.constant 0 : i32
    %c0_i32_1 = arith.constant 0 : i32
    %c0_i32_2 = arith.constant 0 : i32
    return %c0_i32, %c0_i32_0, %c0_i32_1 : i32, i32, i32
  }
  func.func @transform_6(%arg0: i32) -> (i32, i32, i32) {
    %c0_i32 = arith.constant 0 : i32
    %c0_i32_0 = arith.constant 0 : i32
    %c0_i32_1 = arith.constant 0 : i32
    %c0_i32_2 = arith.constant 0 : i32
    return %c0_i32, %c0_i32_0, %c0_i32_1 : i32, i32, i32
  }
  func.func @transform_7(%arg0: i32) -> (i32, i32) {
    %c0_i32 = arith.constant 0 : i32
    %c0_i32_0 = arith.constant 0 : i32
    %c0_i32_1 = arith.constant 0 : i32
    return %c0_i32, %c0_i32_0 : i32, i32
  }
  func.func @transform_8(%arg0: i32) -> (i32, i32) {
    %c0_i32 = arith.constant 0 : i32
    %c0_i32_0 = arith.constant 0 : i32
    %c0_i32_1 = arith.constant 0 : i32
    return %c0_i32, %c0_i32_0 : i32, i32
  }
  func.func @transform_9(%arg0: i32) -> (i32, i32) {
    %c0_i32 = arith.constant 0 : i32
    %c0_i32_0 = arith.constant 0 : i32
    return %arg0, %c0_i32 : i32, i32
  }
}

</mosaic_0001>

<llo_original>
// kernel: swintrack_forward.1
$region0: #{swintrack_forward.1}
  #allocation0 [shape = 'u32[]', space=smem, size = 0x4, offset = 0x4, fixed_abs, tag = 'smem constant byte address 0x4 - core index']
  #allocation1 [shape = 'u32[72,128]{1,0:T(1,128)}', space=vmem, size = 0x9000, scoped, tag = 'internal scratch']
  %s0 = inlined_call_operand.hbm [shape: f32[16,384], index: 0, kind: input, shape index: {}]
  %s1 = inlined_call_operand.hbm [shape: f32[32,384], index: 1, kind: input, shape index: {}]
  %s2 = inlined_call_operand.hbm [shape: bf16[2,384,128], index: 2, kind: input, shape index: {}]
  %s3 = inlined_call_operand.hbm [shape: bf16[3,128,384], index: 3, kind: input, shape index: {}]
  %s4 = inlined_call_operand.hbm [shape: bf16[4,128,128], index: 4, kind: input, shape index: {}]
  %s5 = inlined_call_operand.hbm [shape: bf16[3,128,256], index: 5, kind: input, shape index: {}]
  %s6 = inlined_call_operand.hbm [shape: bf16[3,256,128], index: 6, kind: input, shape index: {}]
  %s7 = inlined_call_operand.hbm [shape: f32[16,128], index: 7, kind: input, shape index: {}]
  %s8 = inlined_call_operand.hbm [shape: f32[16,384], index: 8, kind: input, shape index: {}]
  %s9 = inlined_call_operand.vmem [shape: f32[48,128], index: 9, kind: output, shape index: {}]
  %s10 = sld [smem:[#allocation0]]
  $region82: #{swintrack_forward.1} parent=0
    _
  %s12 = ssub.s32 1, %s10
  %s13 = scalar_select 0, %s12, %s10
  $region1: #{swintrack_forward.1} parent=0
    #allocation2 [shape = 'u8[24576]{0}', space=vmem, size = 0x6000, scoped, tag = 'input window, operand 0, single buffered']
    #allocation3 [shape = 's32[1]{0}', space=sflag, size = 0x4, scoped, tag = 'scoped memory for swintrack_forward.1']
    #allocation4 [shape = 'u8[49152]{0}', space=vmem, size = 0xc000, scoped, tag = 'input window, operand 1, single buffered']
    #allocation5 [shape = 's32[1]{0}', space=sflag, size = 0x4, scoped, tag = 'scoped memory for swintrack_forward.1']
    #allocation6 [shape = 'u8[196608]{0}', space=vmem, size = 0x30000, scoped, tag = 'input window, operand 2, single buffered']
    #allocation7 [shape = 'u8[294912]{0}', space=vmem, size = 0x48000, scoped, tag = 'input window, operand 3, single buffered']
    #allocation8 [shape = 's32[1]{0}', space=sflag, size = 0x4, scoped, tag = 'scoped memory for swintrack_forward.1']
    #allocation9 [shape = 'u8[131072]{0}', space=vmem, size = 0x20000, scoped, tag = 'input window, operand 4, single buffered']
    #allocation10 [shape = 'u8[196608]{0}', space=vmem, size = 0x30000, scoped, tag = 'input window, operand 5, single buffered']
    #allocation11 [shape = 's32[1]{0}', space=sflag, size = 0x4, scoped, tag = 'scoped memory for swintrack_forward.1']
    #allocation12 [shape = 'u8[196608]{0}', space=vmem, size = 0x30000, scoped, tag = 'input window, operand 6, single buffered']
    #allocation13 [shape = 'u8[8192]{0}', space=vmem, size = 0x2000, scoped, tag = 'input window, operand 7, single buffered']
    #allocation14 [shape = 's32[1]{0}', space=sflag, size = 0x4, scoped, tag = 'scoped memory for swintrack_forward.1']
    #allocation15 [shape = 'u8[24576]{0}', space=vmem, size = 0x6000, scoped, tag = 'input window, operand 8, single buffered']
    %14 = vsyncpa [#allocation3], 0
    %15 = vsyncpa [#allocation5], 0
    %16 = vsyncpa [#allocation8], 0
    %17 = vsyncpa [#allocation11], 0
    %18 = vsyncpa [#allocation14], 0
    // Predicated region
    $region2: #{swintrack_forward.1} parent=1 // pred_check
      _
    $region3: #{swintrack_forward.1} parent=1 // pred_check_branch
      %20 = sbr.rel (0) target = $region5
    $region4: #{swintrack_forward.1} parent=1 // pred_region
      %22 = vsyncadd [#allocation3], 0
      %s23 = sshll.u32 %s0, 4
      %s24 = int_to_ptr.hbm [resolvable:$true] %s23
      %s25 = sshll.u32 [#allocation2], 4
      %s26 = int_to_ptr.vmem [resolvable:$true] %s25
      %31 = dma.hbm_to_vmem [thread:$0]  %s24, 768, %s26, [#allocation3], 384, 384, 24
    $region5: #{swintrack_forward.1} parent=1 // pred_fallthru
      _
    // Predicated region
    $region6: #{swintrack_forward.1} parent=1 // pred_check
      _
    $region7: #{swintrack_forward.1} parent=1 // pred_check_branch
      %33 = sbr.rel (0) target = $region9
    $region8: #{swintrack_forward.1} parent=1 // pred_region
      %35 = vsyncadd [#allocation5], 0
      %s36 = sshll.u32 %s1, 4
      %s37 = int_to_ptr.hbm [resolvable:$true] %s36
      %s38 = sshll.u32 [#allocation4], 4
      %s39 = int_to_ptr.vmem [resolvable:$true] %s38
      %44 = dma.hbm_to_vmem [thread:$0]  %s37, 1536, %s39, [#allocation5], 384, 384, 24
    $region9: #{swintrack_forward.1} parent=1 // pred_fallthru
      _
    // Predicated region
    $region10: #{swintrack_forward.1} parent=1 // pred_check
      _
    $region11: #{swintrack_forward.1} parent=1 // pred_check_branch
      %46 = sbr.rel (0) target = $region13
    $region12: #{swintrack_forward.1} parent=1 // pred_region
      %48 = vsyncadd [#allocation5], 0
      %s49 = sshll.u32 %s2, 4
      %s50 = int_to_ptr.hbm [resolvable:$true] %s49
      %s51 = sshll.u32 [#allocation6], 4
      %s52 = int_to_ptr.vmem [resolvable:$true] %s51
      %57 = dma.hbm_to_vmem [thread:$0]  %s50, 6144, %s52, [#allocation5], 64, 64, 4
    $region13: #{swintrack_forward.1} parent=1 // pred_fallthru
      _
    // Predicated region
    $region14: #{swintrack_forward.1} parent=1 // pred_check
      _
    $region15: #{swintrack_forward.1} parent=1 // pred_check_branch
      %59 = sbr.rel (0) target = $region17
    $region16: #{swintrack_forward.1} parent=1 // pred_region
      %61 = vsyncadd [#allocation8], 0
      %s62 = sshll.u32 %s3, 4
      %s63 = int_to_ptr.hbm [resolvable:$true] %s62
      %s64 = sshll.u32 [#allocation7], 4
      %s65 = int_to_ptr.vmem [resolvable:$true] %s64
      %70 = dma.hbm_to_vmem [thread:$0]  %s63, 9216, %s65, [#allocation8], 192, 192, 12
    $region17: #{swintrack_forward.1} parent=1 // pred_fallthru
      _
    // Predicated region
    $region18: #{swintrack_forward.1} parent=1 // pred_check
      _
    $region19: #{swintrack_forward.1} parent=1 // pred_check_branch
      %72 = sbr.rel (0) target = $region21
    $region20: #{swintrack_forward.1} parent=1 // pred_region
      %74 = vsyncadd [#allocation8], 0
      %s75 = sshll.u32 %s4, 4
      %s76 = int_to_ptr.hbm [resolvable:$true] %s75
      %s77 = sshll.u32 [#allocation9], 4
      %s78 = int_to_ptr.vmem [resolvable:$true] %s77
      %83 = dma.hbm_to_vmem [thread:$0]  %s76, 4096, %s78, [#allocation8], 64, 64, 4
    $region21: #{swintrack_forward.1} parent=1 // pred_fallthru
      _
    // Predicated region
    $region22: #{swintrack_forward.1} parent=1 // pred_check
      _
    $region23: #{swintrack_forward.1} parent=1 // pred_check_branch
      %85 = sbr.rel (0) target = $region25
    $region24: #{swintrack_forward.1} parent=1 // pred_region
      %87 = vsyncadd [#allocation11], 0
      %s88 = sshll.u32 %s5, 4
      %s89 = int_to_ptr.hbm [resolvable:$true] %s88
      %s90 = sshll.u32 [#allocation10], 4
      %s91 = int_to_ptr.vmem [resolvable:$true] %s90
      %96 = dma.hbm_to_vmem [thread:$0]  %s89, 6144, %s91, [#allocation11], 128, 128, 8
    $region25: #{swintrack_forward.1} parent=1 // pred_fallthru
      _
    // Predicated region
    $region26: #{swintrack_forward.1} parent=1 // pred_check
      _
    $region27: #{swintrack_forward.1} parent=1 // pred_check_branch
      %98 = sbr.rel (0) target = $region29
    $region28: #{swintrack_forward.1} parent=1 // pred_region
      %100 = vsyncadd [#allocation11], 0
      %s101 = sshll.u32 %s6, 4
      %s102 = int_to_ptr.hbm [resolvable:$true] %s101
      %s103 = sshll.u32 [#allocation12], 4
      %s104 = int_to_ptr.vmem [resolvable:$true] %s103
      %109 = dma.hbm_to_vmem [thread:$0]  %s102, 6144, %s104, [#allocation11], 64, 64, 4
    $region29: #{swintrack_forward.1} parent=1 // pred_fallthru
      _
    // Predicated region
    $region30: #{swintrack_forward.1} parent=1 // pred_check
      _
    $region31: #{swintrack_forward.1} parent=1 // pred_check_branch
      %111 = sbr.rel (0) target = $region33
    $region32: #{swintrack_forward.1} parent=1 // pred_region
      %113 = vsyncadd [#allocation14], 0
      %s114 = sshll.u32 %s7, 4
      %s115 = int_to_ptr.hbm [resolvable:$true] %s114
      %s116 = sshll.u32 [#allocation13], 4
      %s117 = int_to_ptr.vmem [resolvable:$true] %s116
      %122 = dma.hbm_to_vmem [thread:$0]  %s115, 256, %s117, [#allocation14], 128, 128, 8
    $region33: #{swintrack_forward.1} parent=1 // pred_fallthru
      _
    // Predicated region
    $region34: #{swintrack_forward.1} parent=1 // pred_check
      _
    $region35: #{swintrack_forward.1} parent=1 // pred_check_branch
      %124 = sbr.rel (0) target = $region37
    $region36: #{swintrack_forward.1} parent=1 // pred_region
      %126 = vsyncadd [#allocation14], 0
      %s127 = sshll.u32 %s8, 4
      %s128 = int_to_ptr.hbm [resolvable:$true] %s127
      %s129 = sshll.u32 [#allocation15], 4
      %s130 = int_to_ptr.vmem [resolvable:$true] %s129
      %135 = dma.hbm_to_vmem [thread:$0]  %s128, 768, %s130, [#allocation14], 384, 384, 24
    $region37: #{swintrack_forward.1} parent=1 // pred_fallthru
      _
    // Predicated region
    $region38: #{swintrack_forward.1} parent=1 // pred_check
      _
    $region39: #{swintrack_forward.1} parent=1 // pred_check_branch
      %137 = sbr.rel (0) target = $region41
    $region40: #{swintrack_forward.1} parent=1 // pred_region
      %139 = dma.done [#allocation3], 768
    $region41: #{swintrack_forward.1} parent=1 // pred_fallthru
      _
    // Predicated region
    $region42: #{swintrack_forward.1} parent=1 // pred_check
      _
    $region43: #{swintrack_forward.1} parent=1 // pred_check_branch
      %141 = sbr.rel (0) target = $region45
    $region44: #{swintrack_forward.1} parent=1 // pred_region
      %143 = dma.done [#allocation5], 1536
    $region45: #{swintrack_forward.1} parent=1 // pred_fallthru
      _
    // Predicated region
    $region46: #{swintrack_forward.1} parent=1 // pred_check
      _
    $region47: #{swintrack_forward.1} parent=1 // pred_check_branch
      %145 = sbr.rel (0) target = $region49
    $region48: #{swintrack_forward.1} parent=1 // pred_region
      %147 = dma.done [#allocation5], 6144
    $region49: #{swintrack_forward.1} parent=1 // pred_fallthru
      _
    // Predicated region
    $region50: #{swintrack_forward.1} parent=1 // pred_check
      _
    $region51: #{swintrack_forward.1} parent=1 // pred_check_branch
      %149 = sbr.rel (0) target = $region53
    $region52: #{swintrack_forward.1} parent=1 // pred_region
      %151 = dma.done [#allocation8], 9216
    $region53: #{swintrack_forward.1} parent=1 // pred_fallthru
      _
    // Predicated region
    $region54: #{swintrack_forward.1} parent=1 // pred_check
      _
    $region55: #{swintrack_forward.1} parent=1 // pred_check_branch
      %153 = sbr.rel (0) target = $region57
    $region56: #{swintrack_forward.1} parent=1 // pred_region
      %155 = dma.done [#allocation8], 4096
    $region57: #{swintrack_forward.1} parent=1 // pred_fallthru
      _
    // Predicated region
    $region58: #{swintrack_forward.1} parent=1 // pred_check
      _
    $region59: #{swintrack_forward.1} parent=1 // pred_check_branch
      %157 = sbr.rel (0) target = $region61
    $region60: #{swintrack_forward.1} parent=1 // pred_region
      %159 = dma.done [#allocation11], 6144
    $region61: #{swintrack_forward.1} parent=1 // pred_fallthru
      _
    // Predicated region
    $region62: #{swintrack_forward.1} parent=1 // pred_check
      _
    $region63: #{swintrack_forward.1} parent=1 // pred_check_branch
      %161 = sbr.rel (0) target = $region65
    $region64: #{swintrack_forward.1} parent=1 // pred_region
      %163 = dma.done [#allocation11], 6144
    $region65: #{swintrack_forward.1} parent=1 // pred_fallthru
      _
    // Predicated region
    $region66: #{swintrack_forward.1} parent=1 // pred_check
      _
    $region67: #{swintrack_forward.1} parent=1 // pred_check_branch
      %165 = sbr.rel (0) target = $region69
    $region68: #{swintrack_forward.1} parent=1 // pred_region
      %167 = dma.done [#allocation14], 256
    $region69: #{swintrack_forward.1} parent=1 // pred_fallthru
      _
    // Predicated region
    $region70: #{swintrack_forward.1} parent=1 // pred_check
      _
    $region71: #{swintrack_forward.1} parent=1 // pred_check_branch
      %169 = sbr.rel (0) target = $region73
    $region72: #{swintrack_forward.1} parent=1 // pred_region
      %171 = dma.done [#allocation14], 768
    $region73: #{swintrack_forward.1} parent=1 // pred_fallthru
      _
    %v173 = vlaneseq
    %v174 = vand.u32 %v173, 127
    %vm175 = vcmp.lt.s32.totalorder %v174, 48
    %v176 = vsel %vm175, 1, 0
    %v177 = vcvt.s32.f32 %v176
    %v178 = vld [vmem:[#allocation13] sm:$0xff]
    %v179 = vld [vmem:[#allocation13 + $0x8] sm:$0xff]
    %v180 = vld [vmem:[#allocation15] sm:$0xff]
    %v181 = vld [vmem:[#allocation15 + $0x8] sm:$0xff]
    %v182 = vld [vmem:[#allocation15 + $0x10] sm:$0xff]
    %v183 = vld [vmem:[#allocation15 + $0x18] sm:$0xff]
    %v184 = vld [vmem:[#allocation15 + $0x20] sm:$0xff]
    %v185 = vld [vmem:[#allocation15 + $0x28] sm:$0xff]
    %v186 = vlaneseq
    %v187 = vshrl.u32 %v186, 7
    %v188 = vadd.s32 %v187, 8
    %v189 = vadd.s32 %v187, 16
    %v190 = vadd.s32 %v187, 24
    %v191 = vadd.s32 %v187, 32
    %v192 = vadd.s32 %v187, 40
    %vm193 = vcmp.ge.s32.totalorder %v187, 8
    %vm194 = vcmp.ge.s32.totalorder %v188, 8
    %vm195 = vcmp.ge.s32.totalorder %v189, 8
    %vm196 = vcmp.ge.s32.totalorder %v190, 8
    %vm197 = vcmp.ge.s32.totalorder %v191, 8
    %vm198 = vcmp.ge.s32.totalorder %v192, 8
    %v199 = vsel %vm193, 1, 0
    %v200 = vsel %vm194, 1, 0
    %v201 = vsel %vm195, 1, 0
    %v202 = vsel %vm196, 1, 0
    %v203 = vsel %vm197, 1, 0
    %v204 = vsel %vm198, 1, 0
    %vm205 = vcmp.ge.s32.totalorder %v187, 32
    %vm206 = vcmp.ge.s32.totalorder %v188, 32
    %vm207 = vcmp.ge.s32.totalorder %v189, 32
    %vm208 = vcmp.ge.s32.totalorder %v190, 32
    %vm209 = vcmp.ge.s32.totalorder %v191, 32
    %vm210 = vcmp.ge.s32.totalorder %v192, 32
    %v211 = vsel %vm205, 1, 0
    %v212 = vsel %vm206, 1, 0
    %v213 = vsel %vm207, 1, 0
    %v214 = vsel %vm208, 1, 0
    %v215 = vsel %vm209, 1, 0
    %v216 = vsel %vm210, 1, 0
    %vm217 = vcmp.lt.s32.totalorder %v187, 16
    %vm218 = vcmp.lt.s32.totalorder %v188, 16
    %vm219 = vcmp.lt.s32.totalorder %v189, 16
    %vm220 = vcmp.lt.s32.totalorder %v190, 16
    %vm221 = vcmp.lt.s32.totalorder %v191, 16
    %vm222 = vcmp.lt.s32.totalorder %v192, 16
    %v223 = vsel %vm217, %v199, %v211
    %v224 = vsel %vm218, %v200, %v212
    %v225 = vsel %vm219, %v201, %v213
    %v226 = vsel %vm220, %v202, %v214
    %v227 = vsel %vm221, %v203, %v215
    %v228 = vsel %vm222, %v204, %v216
    %vm229 = vcmp.ge.s32.totalorder %v174, 8
    %v230 = vsel %vm229, 1, 0
    %vm231 = vcmp.ge.s32.totalorder %v174, 32
    %v232 = vsel %vm231, 1, 0
    %vm233 = vcmp.lt.s32.totalorder %v174, 16
    %v234 = vsel %vm233, %v230, %v232
    %vm235 = vcmp.eq.s32.totalorder %v223, %v234
    %vm236 = vcmp.eq.s32.totalorder %v224, %v234
    %vm237 = vcmp.eq.s32.totalorder %v225, %v234
    %vm238 = vcmp.eq.s32.totalorder %v226, %v234
    %vm239 = vcmp.eq.s32.totalorder %v227, %v234
    %vm240 = vcmp.eq.s32.totalorder %v228, %v234
    %v241 = vsel %vm235, 0.0, -1e+30
    %v242 = vsel %vm236, 0.0, -1e+30
    %v243 = vsel %vm237, 0.0, -1e+30
    %v244 = vsel %vm238, 0.0, -1e+30
    %v245 = vsel %vm239, 0.0, -1e+30
    %v246 = vsel %vm240, 0.0, -1e+30
    %v247 = vld [vmem:[#allocation2] sm:$0xff]
    %v248 = vld [vmem:[#allocation2 + $0x8] sm:$0xff]
    %v249 = vld [vmem:[#allocation2 + $0x10] sm:$0xff]
    %v250 = vld [vmem:[#allocation2 + $0x18] sm:$0xff]
    %v251 = vld [vmem:[#allocation2 + $0x20] sm:$0xff]
    %v252 = vld [vmem:[#allocation2 + $0x28] sm:$0xff]
    %v253 = vld [vmem:[#allocation6] sm:$0xf]
    %v254 = vld [vmem:[#allocation6 + $0x4] sm:$0xf]
    %v255 = vld [vmem:[#allocation6 + $0x8] sm:$0xf]
    %v256 = vld [vmem:[#allocation6 + $0xc] sm:$0xf]
    %v257 = vld [vmem:[#allocation6 + $0x10] sm:$0xf]
    %v258 = vld [vmem:[#allocation6 + $0x14] sm:$0xf]
    %v259 = vld [vmem:[#allocation6 + $0x18] sm:$0xf]
    %v260 = vld [vmem:[#allocation6 + $0x1c] sm:$0xf]
    %v261 = vld [vmem:[#allocation6 + $0x20] sm:$0xf]
    %v262 = vld [vmem:[#allocation6 + $0x24] sm:$0xf]
    %v263 = vld [vmem:[#allocation6 + $0x28] sm:$0xf]
    %v264 = vld [vmem:[#allocation6 + $0x2c] sm:$0xf]
    %v265 = vld [vmem:[#allocation6 + $0x30] sm:$0xf]
    %v266 = vld [vmem:[#allocation6 + $0x34] sm:$0xf]
    %v267 = vld [vmem:[#allocation6 + $0x38] sm:$0xf]
    %v268 = vld [vmem:[#allocation6 + $0x3c] sm:$0xf]
    %v269 = vld [vmem:[#allocation6 + $0x40] sm:$0xf]
    %v270 = vld [vmem:[#allocation6 + $0x44] sm:$0xf]
    %v271 = vld [vmem:[#allocation6 + $0x48] sm:$0xf]
    %v272 = vld [vmem:[#allocation6 + $0x4c] sm:$0xf]
    %v273 = vld [vmem:[#allocation6 + $0x50] sm:$0xf]
    %v274 = vld [vmem:[#allocation6 + $0x54] sm:$0xf]
    %v275 = vld [vmem:[#allocation6 + $0x58] sm:$0xf]
    %v276 = vld [vmem:[#allocation6 + $0x5c] sm:$0xf]
    %v277 = vld [vmem:[#allocation6 + $0x60] sm:$0xf]
    %v278 = vld [vmem:[#allocation6 + $0x64] sm:$0xf]
    %v279 = vld [vmem:[#allocation6 + $0x68] sm:$0xf]
    %v280 = vld [vmem:[#allocation6 + $0x6c] sm:$0xf]
    %v281 = vld [vmem:[#allocation6 + $0x70] sm:$0xf]
    %v282 = vld [vmem:[#allocation6 + $0x74] sm:$0xf]
    %v283 = vld [vmem:[#allocation6 + $0x78] sm:$0xf]
    %v284 = vld [vmem:[#allocation6 + $0x7c] sm:$0xf]
    %v285 = vld [vmem:[#allocation6 + $0x80] sm:$0xf]
    %v286 = vld [vmem:[#allocation6 + $0x84] sm:$0xf]
    %v287 = vld [vmem:[#allocation6 + $0x88] sm:$0xf]
    %v288 = vld [vmem:[#allocation6 + $0x8c] sm:$0xf]
    %v289 = vld [vmem:[#allocation6 + $0x90] sm:$0xf]
    %v290 = vld [vmem:[#allocation6 + $0x94] sm:$0xf]
    %v291 = vld [vmem:[#allocation6 + $0x98] sm:$0xf]
    %v292 = vld [vmem:[#allocation6 + $0x9c] sm:$0xf]
    %v293 = vld [vmem:[#allocation6 + $0xa0] sm:$0xf]
    %v294 = vld [vmem:[#allocation6 + $0xa4] sm:$0xf]
    %v295 = vld [vmem:[#allocation6 + $0xa8] sm:$0xf]
    %v296 = vld [vmem:[#allocation6 + $0xac] sm:$0xf]
    %v297 = vld [vmem:[#allocation6 + $0xb0] sm:$0xf]
    %v298 = vld [vmem:[#allocation6 + $0xb4] sm:$0xf]
    %v299 = vld [vmem:[#allocation6 + $0xb8] sm:$0xf]
    %v300 = vld [vmem:[#allocation6 + $0xbc] sm:$0xf]
    %v301 = vpack.c.bf16 %v250, %v247
    %v302 = vpack.c.bf16 %v251, %v248
    %v303 = vpack.c.bf16 %v252, %v249
    %v304 = vperm.slane %v180, 0
    %v353 = vunpack.c.l.b16 %v253
    %v354 = vunpack.c.l.b16 %v254
    %v355 = vunpack.c.l.b16 %v255
    %v356 = vunpack.c.l.b16 %v256
    %v357 = vunpack.c.l.b16 %v257
    %v358 = vunpack.c.l.b16 %v258
    %v359 = vunpack.c.l.b16 %v259
    %v360 = vunpack.c.l.b16 %v260
    %v361 = vunpack.c.l.b16 %v261
    %v362 = vunpack.c.l.b16 %v262
    %v363 = vunpack.c.l.b16 %v263
    %v364 = vunpack.c.l.b16 %v264
    %v365 = vunpack.c.l.b16 %v265
    %v366 = vunpack.c.l.b16 %v266
    %v367 = vunpack.c.l.b16 %v267
    %v368 = vunpack.c.l.b16 %v268
    %v369 = vunpack.c.l.b16 %v269
    %v370 = vunpack.c.l.b16 %v270
    %v371 = vunpack.c.l.b16 %v271
    %v372 = vunpack.c.l.b16 %v272
    %v373 = vunpack.c.l.b16 %v273
    %v374 = vunpack.c.l.b16 %v274
    %v375 = vunpack.c.l.b16 %v275
    %v376 = vunpack.c.l.b16 %v276
    %v377 = vunpack.c.l.b16 %v277
    %v378 = vunpack.c.l.b16 %v278
    %v379 = vunpack.c.l.b16 %v279
    %v380 = vunpack.c.l.b16 %v280
    %v381 = vunpack.c.l.b16 %v281
    %v382 = vunpack.c.l.b16 %v282
    %v383 = vunpack.c.l.b16 %v283
    %v384 = vunpack.c.l.b16 %v284
    %v385 = vunpack.c.l.b16 %v285
    %v386 = vunpack.c.l.b16 %v286
    %v387 = vunpack.c.l.b16 %v287
    %v388 = vunpack.c.l.b16 %v288
    %v389 = vunpack.c.l.b16 %v289
    %v390 = vunpack.c.l.b16 %v290
    %v391 = vunpack.c.l.b16 %v291
    %v392 = vunpack.c.l.b16 %v292
    %v393 = vunpack.c.l.b16 %v293
    %v394 = vunpack.c.l.b16 %v294
    %v395 = vunpack.c.l.b16 %v295
    %v396 = vunpack.c.l.b16 %v296
    %v397 = vunpack.c.l.b16 %v297
    %v398 = vunpack.c.l.b16 %v298
    %v399 = vunpack.c.l.b16 %v299
    %v400 = vunpack.c.l.b16 %v300
    %v401 = vpack.c.b16 %v354, %v353
    %v402 = vpack.c.b16 %v356, %v355
    %v403 = vpack.c.b16 %v358, %v357
    %v404 = vpack.c.b16 %v360, %v359
    %v405 = vpack.c.b16 %v362, %v361
    %v406 = vpack.c.b16 %v364, %v363
    %v407 = vpack.c.b16 %v366, %v365
    %v408 = vpack.c.b16 %v368, %v367
    %v409 = vpack.c.b16 %v370, %v369
    %v410 = vpack.c.b16 %v372, %v371
    %v411 = vpack.c.b16 %v374, %v373
    %v412 = vpack.c.b16 %v376, %v375
    %v413 = vpack.c.b16 %v378, %v377
    %v414 = vpack.c.b16 %v380, %v379
    %v415 = vpack.c.b16 %v382, %v381
    %v416 = vpack.c.b16 %v384, %v383
    %v417 = vpack.c.b16 %v386, %v385
    %v418 = vpack.c.b16 %v388, %v387
    %v419 = vpack.c.b16 %v390, %v389
    %v420 = vpack.c.b16 %v392, %v391
    %v421 = vpack.c.b16 %v394, %v393
    %v422 = vpack.c.b16 %v396, %v395
    %v423 = vpack.c.b16 %v398, %v397
    %v424 = vpack.c.b16 %v400, %v399
    %449 = vmatpush.bf16.msra.mxu0 %v408
    %450 = vmatpush.bf16.msra.mxu0 %v407
    %451 = vmatpush.bf16.msra.mxu0 %v406
    %452 = vmatpush.bf16.msra.mxu0 %v405
    %453 = vmatpush.bf16.msra.mxu0 %v404
    %454 = vmatpush.bf16.msra.mxu0 %v403
    %455 = vmatpush.bf16.msra.mxu0 %v402
    %456 = vmatpush.bf16.msra.mxu0 %v401
    %457 = vmatmul.bf16.gmra.mxu0 %v301
    %v458 = vpop.f32.mrf.mxu0
    %v459 = vadd.f32 %v304, %v458
    %v460 = vpop.f32.mrf.mxu0
    %v461 = vadd.f32 %v304, %v460
    %462 = vdwg.mxu0
    %463 = vmatpush.bf16.msra.mxu0 %v416
    %464 = vmatpush.bf16.msra.mxu0 %v415
    %465 = vmatpush.bf16.msra.mxu0 %v414
    %466 = vmatpush.bf16.msra.mxu0 %v413
    %467 = vmatpush.bf16.msra.mxu0 %v412
    %468 = vmatpush.bf16.msra.mxu0 %v411
    %469 = vmatpush.bf16.msra.mxu0 %v410
    %470 = vmatpush.bf16.msra.mxu0 %v409
    %471 = vmatmul.bf16.gmra.mxu0 %v302
    %v472 = vpop.f32.mrf.mxu0
    %v473 = vadd.f32 %v459, %v472
    %v474 = vpop.f32.mrf.mxu0
    %v475 = vadd.f32 %v461, %v474
    %476 = vdwg.mxu0
    %477 = vmatpush.bf16.msra.mxu0 %v424
    %478 = vmatpush.bf16.msra.mxu0 %v423
    %479 = vmatpush.bf16.msra.mxu0 %v422
    %480 = vmatpush.bf16.msra.mxu0 %v421
    %481 = vmatpush.bf16.msra.mxu0 %v420
    %482 = vmatpush.bf16.msra.mxu0 %v419
    %483 = vmatpush.bf16.msra.mxu0 %v418
    %484 = vmatpush.bf16.msra.mxu0 %v417
    %485 = vmatmul.bf16.gmra.mxu0 %v303
    %v486 = vpop.f32.mrf.mxu0
    %v487 = vadd.f32 %v473, %v486
    %v488 = vpop.f32.mrf.mxu0
    %v489 = vadd.f32 %v475, %v488
    %490 = vdwg.mxu0
    %v491 = vld [vmem:[#allocation4] sm:$0xff]
    %v492 = vld [vmem:[#allocation4 + $0x8] sm:$0xff]
    %v493 = vld [vmem:[#allocation4 + $0x10] sm:$0xff]
    %v494 = vld [vmem:[#allocation4 + $0x18] sm:$0xff]
    %v495 = vld [vmem:[#allocation4 + $0x20] sm:$0xff]
    %v496 = vld [vmem:[#allocation4 + $0x28] sm:$0xff]
    %v497 = vld [vmem:[#allocation4 + $0x30] sm:$0xff]
    %v498 = vld [vmem:[#allocation4 + $0x38] sm:$0xff]
    %v499 = vld [vmem:[#allocation4 + $0x40] sm:$0xff]
    %v500 = vld [vmem:[#allocation4 + $0x48] sm:$0xff]
    %v501 = vld [vmem:[#allocation4 + $0x50] sm:$0xff]
    %v502 = vld [vmem:[#allocation4 + $0x58] sm:$0xff]
    %s503 = scalar_lea.vmem [#allocation6], 192
    %v504 = vld [vmem:[%s503] sm:$0xf]
    %v505 = vld [vmem:[%s503 + $0x4] sm:$0xf]
    %v506 = vld [vmem:[%s503 + $0x8] sm:$0xf]
    %v507 = vld [vmem:[%s503 + $0xc] sm:$0xf]
    %v508 = vld [vmem:[%s503 + $0x10] sm:$0xf]
    %v509 = vld [vmem:[%s503 + $0x14] sm:$0xf]
    %v510 = vld [vmem:[%s503 + $0x18] sm:$0xf]
    %v511 = vld [vmem:[%s503 + $0x1c] sm:$0xf]
    %v512 = vld [vmem:[%s503 + $0x20] sm:$0xf]
    %v513 = vld [vmem:[%s503 + $0x24] sm:$0xf]
    %v514 = vld [vmem:[%s503 + $0x28] sm:$0xf]
    %v515 = vld [vmem:[%s503 + $0x2c] sm:$0xf]
    %v516 = vld [vmem:[%s503 + $0x30] sm:$0xf]
    %v517 = vld [vmem:[%s503 + $0x34] sm:$0xf]
    %v518 = vld [vmem:[%s503 + $0x38] sm:$0xf]
    %v519 = vld [vmem:[%s503 + $0x3c] sm:$0xf]
    %v520 = vld [vmem:[%s503 + $0x40] sm:$0xf]
    %v521 = vld [vmem:[%s503 + $0x44] sm:$0xf]
    %v522 = vld [vmem:[%s503 + $0x48] sm:$0xf]
    %v523 = vld [vmem:[%s503 + $0x4c] sm:$0xf]
    %v524 = vld [vmem:[%s503 + $0x50] sm:$0xf]
    %v525 = vld [vmem:[%s503 + $0x54] sm:$0xf]
    %v526 = vld [vmem:[%s503 + $0x58] sm:$0xf]
    %v527 = vld [vmem:[%s503 + $0x5c] sm:$0xf]
    %v528 = vld [vmem:[%s503 + $0x60] sm:$0xf]
    %v529 = vld [vmem:[%s503 + $0x64] sm:$0xf]
    %v530 = vld [vmem:[%s503 + $0x68] sm:$0xf]
    %v531 = vld [vmem:[%s503 + $0x6c] sm:$0xf]
    %v532 = vld [vmem:[%s503 + $0x70] sm:$0xf]
    %v533 = vld [vmem:[%s503 + $0x74] sm:$0xf]
    %v534 = vld [vmem:[%s503 + $0x78] sm:$0xf]
    %v535 = vld [vmem:[%s503 + $0x7c] sm:$0xf]
    %v536 = vld [vmem:[%s503 + $0x80] sm:$0xf]
    %v537 = vld [vmem:[%s503 + $0x84] sm:$0xf]
    %v538 = vld [vmem:[%s503 + $0x88] sm:$0xf]
    %v539 = vld [vmem:[%s503 + $0x8c] sm:$0xf]
    %v540 = vld [vmem:[%s503 + $0x90] sm:$0xf]
    %v541 = vld [vmem:[%s503 + $0x94] sm:$0xf]
    %v542 = vld [vmem:[%s503 + $0x98] sm:$0xf]
    %v543 = vld [vmem:[%s503 + $0x9c] sm:$0xf]
    %v544 = vld [vmem:[%s503 + $0xa0] sm:$0xf]
    %v545 = vld [vmem:[%s503 + $0xa4] sm:$0xf]
    %v546 = vld [vmem:[%s503 + $0xa8] sm:$0xf]
    %v547 = vld [vmem:[%s503 + $0xac] sm:$0xf]
    %v548 = vld [vmem:[%s503 + $0xb0] sm:$0xf]
    %v549 = vld [vmem:[%s503 + $0xb4] sm:$0xf]
    %v550 = vld [vmem:[%s503 + $0xb8] sm:$0xf]
    %v551 = vld [vmem:[%s503 + $0xbc] sm:$0xf]
    %v552 = vpack.c.bf16 %v494, %v491
    %v553 = vpack.c.bf16 %v495, %v492
    %v554 = vpack.c.bf16 %v496, %v493
    %v555 = vpack.c.bf16 %v500, %v497
    %v556 = vpack.c.bf16 %v501, %v498
    %v557 = vpack.c.bf16 %v502, %v499
    %v558 = vperm.slane %v180, 1
    %v607 = vunpack.c.l.b16 %v504
    %v608 = vunpack.c.l.b16 %v505
    %v609 = vunpack.c.l.b16 %v506
    %v610 = vunpack.c.l.b16 %v507
    %v611 = vunpack.c.l.b16 %v508
    %v612 = vunpack.c.l.b16 %v509
    %v613 = vunpack.c.l.b16 %v510
    %v614 = vunpack.c.l.b16 %v511
    %v615 = vunpack.c.l.b16 %v512
    %v616 = vunpack.c.l.b16 %v513
    %v617 = vunpack.c.l.b16 %v514
    %v618 = vunpack.c.l.b16 %v515
    %v619 = vunpack.c.l.b16 %v516
    %v620 = vunpack.c.l.b16 %v517
    %v621 = vunpack.c.l.b16 %v518
    %v622 = vunpack.c.l.b16 %v519
    %v623 = vunpack.c.l.b16 %v520
    %v624 = vunpack.c.l.b16 %v521
    %v625 = vunpack.c.l.b16 %v522
    %v626 = vunpack.c.l.b16 %v523
    %v627 = vunpack.c.l.b16 %v524
    %v628 = vunpack.c.l.b16 %v525
    %v629 = vunpack.c.l.b16 %v526
    %v630 = vunpack.c.l.b16 %v527
    %v631 = vunpack.c.l.b16 %v528
    %v632 = vunpack.c.l.b16 %v529
    %v633 = vunpack.c.l.b16 %v530
    %v634 = vunpack.c.l.b16 %v531
    %v635 = vunpack.c.l.b16 %v532
    %v636 = vunpack.c.l.b16 %v533
    %v637 = vunpack.c.l.b16 %v534
    %v638 = vunpack.c.l.b16 %v535
    %v639 = vunpack.c.l.b16 %v536
    %v640 = vunpack.c.l.b16 %v537
    %v641 = vunpack.c.l.b16 %v538
    %v642 = vunpack.c.l.b16 %v539
    %v643 = vunpack.c.l.b16 %v540
    %v644 = vunpack.c.l.b16 %v541
    %v645 = vunpack.c.l.b16 %v542
    %v646 = vunpack.c.l.b16 %v543
    %v647 = vunpack.c.l.b16 %v544
    %v648 = vunpack.c.l.b16 %v545
    %v649 = vunpack.c.l.b16 %v546
    %v650 = vunpack.c.l.b16 %v547
    %v651 = vunpack.c.l.b16 %v548
    %v652 = vunpack.c.l.b16 %v549
    %v653 = vunpack.c.l.b16 %v550
    %v654 = vunpack.c.l.b16 %v551
    %v655 = vpack.c.b16 %v608, %v607
    %v656 = vpack.c.b16 %v610, %v609
    %v657 = vpack.c.b16 %v612, %v611
    %v658 = vpack.c.b16 %v614, %v613
    %v659 = vpack.c.b16 %v616, %v615
    %v660 = vpack.c.b16 %v618, %v617
    %v661 = vpack.c.b16 %v620, %v619
    %v662 = vpack.c.b16 %v622, %v621
    %v663 = vpack.c.b16 %v624, %v623
    %v664 = vpack.c.b16 %v626, %v625
    %v665 = vpack.c.b16 %v628, %v627
    %v666 = vpack.c.b16 %v630, %v629
    %v667 = vpack.c.b16 %v632, %v631
    %v668 = vpack.c.b16 %v634, %v633
    %v669 = vpack.c.b16 %v636, %v635
    %v670 = vpack.c.b16 %v638, %v637
    %v671 = vpack.c.b16 %v640, %v639
    %v672 = vpack.c.b16 %v642, %v641
    %v673 = vpack.c.b16 %v644, %v643
    %v674 = vpack.c.b16 %v646, %v645
    %v675 = vpack.c.b16 %v648, %v647
    %v676 = vpack.c.b16 %v650, %v649
    %v677 = vpack.c.b16 %v652, %v651
    %v678 = vpack.c.b16 %v654, %v653
    %703 = vmatpush.bf16.msra.mxu0 %v662
    %704 = vmatpush.bf16.msra.mxu0 %v661
    %705 = vmatpush.bf16.msra.mxu0 %v660
    %706 = vmatpush.bf16.msra.mxu0 %v659
    %707 = vmatpush.bf16.msra.mxu0 %v658
    %708 = vmatpush.bf16.msra.mxu0 %v657
    %709 = vmatpush.bf16.msra.mxu0 %v656
    %710 = vmatpush.bf16.msra.mxu0 %v655
    %711 = vmatmul.bf16.gmra.mxu0 %v552
    %v712 = vpop.f32.mrf.mxu0
    %v713 = vadd.f32 %v558, %v712
    %v714 = vpop.f32.mrf.mxu0
    %v715 = vadd.f32 %v558, %v714
    %716 = vmatmul.bf16.gmra.mxu0 %v555
    %v717 = vpop.f32.mrf.mxu0
    %v718 = vadd.f32 %v558, %v717
    %v719 = vpop.f32.mrf.mxu0
    %v720 = vadd.f32 %v558, %v719
    %721 = vdwg.mxu0
    %722 = vmatpush.bf16.msra.mxu0 %v670
    %723 = vmatpush.bf16.msra.mxu0 %v669
    %724 = vmatpush.bf16.msra.mxu0 %v668
    %725 = vmatpush.bf16.msra.mxu0 %v667
    %726 = vmatpush.bf16.msra.mxu0 %v666
    %727 = vmatpush.bf16.msra.mxu0 %v665
    %728 = vmatpush.bf16.msra.mxu0 %v664
    %729 = vmatpush.bf16.msra.mxu0 %v663
    %730 = vmatmul.bf16.gmra.mxu0 %v553
    %v731 = vpop.f32.mrf.mxu0
    %v732 = vadd.f32 %v713, %v731
    %v733 = vpop.f32.mrf.mxu0
    %v734 = vadd.f32 %v715, %v733
    %735 = vmatmul.bf16.gmra.mxu0 %v556
    %v736 = vpop.f32.mrf.mxu0
    %v737 = vadd.f32 %v718, %v736
    %v738 = vpop.f32.mrf.mxu0
    %v739 = vadd.f32 %v720, %v738
    %740 = vdwg.mxu0
    %741 = vmatpush.bf16.msra.mxu0 %v678
    %742 = vmatpush.bf16.msra.mxu0 %v677
    %743 = vmatpush.bf16.msra.mxu0 %v676
    %744 = vmatpush.bf16.msra.mxu0 %v675
    %745 = vmatpush.bf16.msra.mxu0 %v674
    %746 = vmatpush.bf16.msra.mxu0 %v673
    %747 = vmatpush.bf16.msra.mxu0 %v672
    %748 = vmatpush.bf16.msra.mxu0 %v671
    %749 = vmatmul.bf16.gmra.mxu0 %v554
    %v750 = vpop.f32.mrf.mxu0
    %v751 = vadd.f32 %v732, %v750
    %v752 = vpop.f32.mrf.mxu0
    %v753 = vadd.f32 %v734, %v752
    %754 = vmatmul.bf16.gmra.mxu0 %v557
    %v755 = vpop.f32.mrf.mxu0
    %v756 = vadd.f32 %v737, %v755
    %v757 = vpop.f32.mrf.mxu0
    %v758 = vadd.f32 %v739, %v757
    %759 = vdwg.mxu0
    %760 = vadd.xlane.f32.xlu0 %v487
    %v761 = vpop.xlane.xlu0 %760
    %762 = vadd.xlane.f32.xlu0 %v489
    %v763 = vpop.xlane.xlu0 %762
    %764 = vadd.xlane.f32.xlu0 %v751
    %v765 = vpop.xlane.xlu0 %764
    %766 = vadd.xlane.f32.xlu0 %v753
    %v767 = vpop.xlane.xlu0 %766
    %768 = vadd.xlane.f32.xlu0 %v756
    %v769 = vpop.xlane.xlu0 %768
    %770 = vadd.xlane.f32.xlu0 %v758
    %v771 = vpop.xlane.xlu0 %770
    %v772 = vmul.f32 %v761, 0.020833334
    %v773 = vmul.f32 %v763, 0.020833334
    %v774 = vmul.f32 %v765, 0.020833334
    %v775 = vmul.f32 %v767, 0.020833334
    %v776 = vmul.f32 %v769, 0.020833334
    %v777 = vmul.f32 %v771, 0.020833334
    %v778 = vsub.f32 %v487, %v772
    %v779 = vsub.f32 %v489, %v773
    %v780 = vsub.f32 %v751, %v774
    %v781 = vsub.f32 %v753, %v775
    %v782 = vsub.f32 %v756, %v776
    %v783 = vsub.f32 %v758, %v777
    %v784 = vmul.f32 %v778, %v177
    %v785 = vmul.f32 %v779, %v177
    %v786 = vmul.f32 %v780, %v177
    %v787 = vmul.f32 %v781, %v177
    %v788 = vmul.f32 %v782, %v177
    %v789 = vmul.f32 %v783, %v177
    %v790 = vmul.f32 %v784, %v784
    %v791 = vmul.f32 %v785, %v785
    %v792 = vmul.f32 %v786, %v786
    %v793 = vmul.f32 %v787, %v787
    %v794 = vmul.f32 %v788, %v788
    %v795 = vmul.f32 %v789, %v789
    %796 = vadd.xlane.f32.xlu0 %v790
    %v797 = vpop.xlane.xlu0 %796
    %798 = vadd.xlane.f32.xlu0 %v791
    %v799 = vpop.xlane.xlu0 %798
    %800 = vadd.xlane.f32.xlu0 %v792
    %v801 = vpop.xlane.xlu0 %800
    %802 = vadd.xlane.f32.xlu0 %v793
    %v803 = vpop.xlane.xlu0 %802
    %804 = vadd.xlane.f32.xlu0 %v794
    %v805 = vpop.xlane.xlu0 %804
    %806 = vadd.xlane.f32.xlu0 %v795
    %v807 = vpop.xlane.xlu0 %806
    %v808 = vmul.f32 %v797, 0.020833334
    %v809 = vmul.f32 %v799, 0.020833334
    %v810 = vmul.f32 %v801, 0.020833334
    %v811 = vmul.f32 %v803, 0.020833334
    %v812 = vmul.f32 %v805, 0.020833334
    %v813 = vmul.f32 %v807, 0.020833334
    %v814 = vadd.f32 %v808, 1e-05
    %v815 = vadd.f32 %v809, 1e-05
    %v816 = vadd.f32 %v810, 1e-05
    %v817 = vadd.f32 %v811, 1e-05
    %v818 = vadd.f32 %v812, 1e-05
    %v819 = vadd.f32 %v813, 1e-05
    %v820 = vrsqrt.pop %v814
    %v821 = vmul.f32 %v820, %v814
    %v822 = vmul.f32 %v821, %v820
    %v823 = vmul.f32 0.5, %v822
    %v824 = vsub.f32 1.5, %v823
    %v825 = vmul.f32 %v820, %v824
    %vm826 = vweird.f32 %v814
    %vm827 = vweird.f32 %v820
    %vm828 = vmor %vm826, %vm827
    %v829 = vsel %vm828, %v820, %v825
    %v830 = vrsqrt.pop %v815
    %v831 = vmul.f32 %v830, %v815
    %v832 = vmul.f32 %v831, %v830
    %v833 = vmul.f32 0.5, %v832
    %v834 = vsub.f32 1.5, %v833
    %v835 = vmul.f32 %v830, %v834
    %vm836 = vweird.f32 %v815
    %vm837 = vweird.f32 %v830
    %vm838 = vmor %vm836, %vm837
    %v839 = vsel %vm838, %v830, %v835
    %v840 = vrsqrt.pop %v816
    %v841 = vmul.f32 %v840, %v816
    %v842 = vmul.f32 %v841, %v840
    %v843 = vmul.f32 0.5, %v842
    %v844 = vsub.f32 1.5, %v843
    %v845 = vmul.f32 %v840, %v844
    %vm846 = vweird.f32 %v816
    %vm847 = vweird.f32 %v840
    %vm848 = vmor %vm846, %vm847
    %v849 = vsel %vm848, %v840, %v845
    %v850 = vrsqrt.pop %v817
    %v851 = vmul.f32 %v850, %v817
    %v852 = vmul.f32 %v851, %v850
    %v853 = vmul.f32 0.5, %v852
    %v854 = vsub.f32 1.5, %v853
    %v855 = vmul.f32 %v850, %v854
    %vm856 = vweird.f32 %v817
    %vm857 = vweird.f32 %v850
    %vm858 = vmor %vm856, %vm857
    %v859 = vsel %vm858, %v850, %v855
    %v860 = vrsqrt.pop %v818
    %v861 = vmul.f32 %v860, %v818
    %v862 = vmul.f32 %v861, %v860
    %v863 = vmul.f32 0.5, %v862
    %v864 = vsub.f32 1.5, %v863
    %v865 = vmul.f32 %v860, %v864
    %vm866 = vweird.f32 %v818
    %vm867 = vweird.f32 %v860
    %vm868 = vmor %vm866, %vm867
    %v869 = vsel %vm868, %v860, %v865
    %v870 = vrsqrt.pop %v819
    %v871 = vmul.f32 %v870, %v819
    %v872 = vmul.f32 %v871, %v870
    %v873 = vmul.f32 0.5, %v872
    %v874 = vsub.f32 1.5, %v873
    %v875 = vmul.f32 %v870, %v874
    %vm876 = vweird.f32 %v819
    %vm877 = vweird.f32 %v870
    %vm878 = vmor %vm876, %vm877
    %v879 = vsel %vm878, %v870, %v875
    %v880 = vmul.f32 %v784, %v829
    %v881 = vmul.f32 %v785, %v839
    %v882 = vmul.f32 %v786, %v849
    %v883 = vmul.f32 %v787, %v859
    %v884 = vmul.f32 %v788, %v869
    %v885 = vmul.f32 %v789, %v879
    %v886 = vperm.slane %v178, 0
    %v887 = vmul.f32 %v880, %v886
    %v888 = vmul.f32 %v881, %v886
    %v889 = vmul.f32 %v882, %v886
    %v890 = vmul.f32 %v883, %v886
    %v891 = vmul.f32 %v884, %v886
    %v892 = vmul.f32 %v885, %v886
    %v893 = vperm.slane %v178, 1
    %v894 = vadd.f32 %v887, %v893
    %v895 = vadd.f32 %v888, %v893
    %v896 = vadd.f32 %v889, %v893
    %v897 = vadd.f32 %v890, %v893
    %v898 = vadd.f32 %v891, %v893
    %v899 = vadd.f32 %v892, %v893
    %v900 = vld [vmem:[#allocation7] sm:$0xff]
    %v901 = vld [vmem:[#allocation7 + $0x8] sm:$0xf]
    %v902 = vld [vmem:[#allocation7 + $0xc] sm:$0xff]
    %v903 = vld [vmem:[#allocation7 + $0x14] sm:$0xf]
    %v904 = vld [vmem:[#allocation7 + $0x18] sm:$0xff]
    %v905 = vld [vmem:[#allocation7 + $0x20] sm:$0xf]
    %v906 = vld [vmem:[#allocation7 + $0x24] sm:$0xff]
    %v907 = vld [vmem:[#allocation7 + $0x2c] sm:$0xf]
    %v908 = vld [vmem:[#allocation7 + $0x30] sm:$0xff]
    %v909 = vld [vmem:[#allocation7 + $0x38] sm:$0xf]
    %v910 = vld [vmem:[#allocation7 + $0x3c] sm:$0xff]
    %v911 = vld [vmem:[#allocation7 + $0x44] sm:$0xf]
    %v912 = vld [vmem:[#allocation7 + $0x48] sm:$0xff]
    %v913 = vld [vmem:[#allocation7 + $0x50] sm:$0xf]
    %v914 = vld [vmem:[#allocation7 + $0x54] sm:$0xff]
    %v915 = vld [vmem:[#allocation7 + $0x5c] sm:$0xf]
    %v916 = vld [vmem:[#allocation7 + $0x60] sm:$0xff]
    %v917 = vld [vmem:[#allocation7 + $0x68] sm:$0xf]
    %v918 = vld [vmem:[#allocation7 + $0x6c] sm:$0xff]
    %v919 = vld [vmem:[#allocation7 + $0x74] sm:$0xf]
    %v920 = vld [vmem:[#allocation7 + $0x78] sm:$0xff]
    %v921 = vld [vmem:[#allocation7 + $0x80] sm:$0xf]
    %v922 = vld [vmem:[#allocation7 + $0x84] sm:$0xff]
    %v923 = vld [vmem:[#allocation7 + $0x8c] sm:$0xf]
    %v924 = vld [vmem:[#allocation7 + $0x90] sm:$0xff]
    %v925 = vld [vmem:[#allocation7 + $0x98] sm:$0xf]
    %v926 = vld [vmem:[#allocation7 + $0x9c] sm:$0xff]
    %v927 = vld [vmem:[#allocation7 + $0xa4] sm:$0xf]
    %v928 = vld [vmem:[#allocation7 + $0xa8] sm:$0xff]
    %v929 = vld [vmem:[#allocation7 + $0xb0] sm:$0xf]
    %v930 = vld [vmem:[#allocation7 + $0xb4] sm:$0xff]
    %v931 = vld [vmem:[#allocation7 + $0xbc] sm:$0xf]
    %v932 = vpack.c.bf16 %v895, %v894
    %v933 = vpack.c.bf16 %v897, %v896
    %v934 = vpack.c.bf16 %v899, %v898
    %v935 = vperm.slane %v180, 2
    %v936 = vperm.slane %v181, 2
    %v937 = vperm.slane %v182, 2
    %v970 = vunpack.c.l.b16 %v900
    %v971 = vunpack.c.h.b16 %v900
    %v972 = vunpack.c.l.b16 %v901
    %v973 = vunpack.c.l.b16 %v902
    %v974 = vunpack.c.h.b16 %v902
    %v975 = vunpack.c.l.b16 %v903
    %v976 = vunpack.c.l.b16 %v904
    %v977 = vunpack.c.h.b16 %v904
    %v978 = vunpack.c.l.b16 %v905
    %v979 = vunpack.c.l.b16 %v906
    %v980 = vunpack.c.h.b16 %v906
    %v981 = vunpack.c.l.b16 %v907
    %v982 = vunpack.c.l.b16 %v908
    %v983 = vunpack.c.h.b16 %v908
    %v984 = vunpack.c.l.b16 %v909
    %v985 = vunpack.c.l.b16 %v910
    %v986 = vunpack.c.h.b16 %v910
    %v987 = vunpack.c.l.b16 %v911
    %v988 = vunpack.c.l.b16 %v912
    %v989 = vunpack.c.h.b16 %v912
    %v990 = vunpack.c.l.b16 %v913
    %v991 = vunpack.c.l.b16 %v914
    %v992 = vunpack.c.h.b16 %v914
    %v993 = vunpack.c.l.b16 %v915
    %v994 = vunpack.c.l.b16 %v916
    %v995 = vunpack.c.h.b16 %v916
    %v996 = vunpack.c.l.b16 %v917
    %v997 = vunpack.c.l.b16 %v918
    %v998 = vunpack.c.h.b16 %v918
    %v999 = vunpack.c.l.b16 %v919
    %v1000 = vunpack.c.l.b16 %v920
    %v1001 = vunpack.c.h.b16 %v920
    %v1002 = vunpack.c.l.b16 %v921
    %v1003 = vunpack.c.l.b16 %v922
    %v1004 = vunpack.c.h.b16 %v922
    %v1005 = vunpack.c.l.b16 %v923
    %v1006 = vunpack.c.l.b16 %v924
    %v1007 = vunpack.c.h.b16 %v924
    %v1008 = vunpack.c.l.b16 %v925
    %v1009 = vunpack.c.l.b16 %v926
    %v1010 = vunpack.c.h.b16 %v926
    %v1011 = vunpack.c.l.b16 %v927
    %v1012 = vunpack.c.l.b16 %v928
    %v1013 = vunpack.c.h.b16 %v928
    %v1014 = vunpack.c.l.b16 %v929
    %v1015 = vunpack.c.l.b16 %v930
    %v1016 = vunpack.c.h.b16 %v930
    %v1017 = vunpack.c.l.b16 %v931
    %v1018 = vpack.c.b16 %v973, %v970
    %v1019 = vpack.c.b16 %v974, %v971
    %v1020 = vpack.c.b16 %v975, %v972
    %v1021 = vpack.c.b16 %v979, %v976
    %v1022 = vpack.c.b16 %v980, %v977
    %v1023 = vpack.c.b16 %v981, %v978
    %v1024 = vpack.c.b16 %v985, %v982
    %v1025 = vpack.c.b16 %v986, %v983
    %v1026 = vpack.c.b16 %v987, %v984
    %v1027 = vpack.c.b16 %v991, %v988
    %v1028 = vpack.c.b16 %v992, %v989
    %v1029 = vpack.c.b16 %v993, %v990
    %v1030 = vpack.c.b16 %v997, %v994
    %v1031 = vpack.c.b16 %v998, %v995
    %v1032 = vpack.c.b16 %v999, %v996
    %v1033 = vpack.c.b16 %v1003, %v1000
    %v1034 = vpack.c.b16 %v1004, %v1001
    %v1035 = vpack.c.b16 %v1005, %v1002
    %v1036 = vpack.c.b16 %v1009, %v1006
    %v1037 = vpack.c.b16 %v1010, %v1007
    %v1038 = vpack.c.b16 %v1011, %v1008
    %v1039 = vpack.c.b16 %v1015, %v1012
    %v1040 = vpack.c.b16 %v1016, %v1013
    %v1041 = vpack.c.b16 %v1017, %v1014
    %1066 = vmatpush.bf16.msra.mxu0 %v1039
    %1067 = vmatpush.bf16.msra.mxu0 %v1036
    %1068 = vmatpush.bf16.msra.mxu0 %v1033
    %1069 = vmatpush.bf16.msra.mxu0 %v1030
    %1070 = vmatpush.bf16.msra.mxu0 %v1027
    %1071 = vmatpush.bf16.msra.mxu0 %v1024
    %1072 = vmatpush.bf16.msra.mxu0 %v1021
    %1073 = vmatpush.bf16.msra.mxu0 %v1018
    %1074 = vmatmul.bf16.gmra.mxu0 %v932
    %v1075 = vpop.f32.mrf.mxu0
    %v1076 = vadd.f32 %v935, %v1075
    %v1077 = vpop.f32.mrf.mxu0
    %v1078 = vadd.f32 %v935, %v1077
    %1079 = vmatmul.bf16.gmra.mxu0 %v933
    %v1080 = vpop.f32.mrf.mxu0
    %v1081 = vadd.f32 %v935, %v1080
    %v1082 = vpop.f32.mrf.mxu0
    %v1083 = vadd.f32 %v935, %v1082
    %1084 = vmatmul.bf16.gmra.mxu0 %v934
    %v1085 = vpop.f32.mrf.mxu0
    %v1086 = vadd.f32 %v935, %v1085
    %v1087 = vpop.f32.mrf.mxu0
    %v1088 = vadd.f32 %v935, %v1087
    %1089 = vdwg.mxu0
    %1090 = vmatpush.bf16.msra.mxu0 %v1040
    %1091 = vmatpush.bf16.msra.mxu0 %v1037
    %1092 = vmatpush.bf16.msra.mxu0 %v1034
    %1093 = vmatpush.bf16.msra.mxu0 %v1031
    %1094 = vmatpush.bf16.msra.mxu0 %v1028
    %1095 = vmatpush.bf16.msra.mxu0 %v1025
    %1096 = vmatpush.bf16.msra.mxu0 %v1022
    %1097 = vmatpush.bf16.msra.mxu0 %v1019
    %1098 = vmatmul.bf16.gmra.mxu0 %v932
    %v1099 = vpop.f32.mrf.mxu0
    %v1100 = vadd.f32 %v936, %v1099
    %v1101 = vpop.f32.mrf.mxu0
    %v1102 = vadd.f32 %v936, %v1101
    %1103 = vmatmul.bf16.gmra.mxu0 %v933
    %v1104 = vpop.f32.mrf.mxu0
    %v1105 = vadd.f32 %v936, %v1104
    %v1106 = vpop.f32.mrf.mxu0
    %v1107 = vadd.f32 %v936, %v1106
    %1108 = vmatmul.bf16.gmra.mxu0 %v934
    %v1109 = vpop.f32.mrf.mxu0
    %v1110 = vadd.f32 %v936, %v1109
    %v1111 = vpop.f32.mrf.mxu0
    %v1112 = vadd.f32 %v936, %v1111
    %1113 = vdwg.mxu0
    %1114 = vmatpush.bf16.msra.mxu0 %v1041
    %1115 = vmatpush.bf16.msra.mxu0 %v1038
    %1116 = vmatpush.bf16.msra.mxu0 %v1035
    %1117 = vmatpush.bf16.msra.mxu0 %v1032
    %1118 = vmatpush.bf16.msra.mxu0 %v1029
    %1119 = vmatpush.bf16.msra.mxu0 %v1026
    %1120 = vmatpush.bf16.msra.mxu0 %v1023
    %1121 = vmatpush.bf16.msra.mxu0 %v1020
    %1122 = vmatmul.bf16.gmra.mxu0 %v932
    %v1123 = vpop.f32.mrf.mxu0
    %v1124 = vadd.f32 %v937, %v1123
    %v1125 = vpop.f32.mrf.mxu0
    %v1126 = vadd.f32 %v937, %v1125
    %1127 = vmatmul.bf16.gmra.mxu0 %v933
    %v1128 = vpop.f32.mrf.mxu0
    %v1129 = vadd.f32 %v937, %v1128
    %v1130 = vpop.f32.mrf.mxu0
    %v1131 = vadd.f32 %v937, %v1130
    %1132 = vmatmul.bf16.gmra.mxu0 %v934
    %v1133 = vpop.f32.mrf.mxu0
    %v1134 = vadd.f32 %v937, %v1133
    %v1135 = vpop.f32.mrf.mxu0
    %v1136 = vadd.f32 %v937, %v1135
    %1137 = vdwg.mxu0
    %v1138 = vld [vmem:[#allocation9] sm:$0xf]
    %v1139 = vld [vmem:[#allocation9 + $0x4] sm:$0xf]
    %v1140 = vld [vmem:[#allocation9 + $0x8] sm:$0xf]
    %v1141 = vld [vmem:[#allocation9 + $0xc] sm:$0xf]
    %v1142 = vld [vmem:[#allocation9 + $0x10] sm:$0xf]
    %v1143 = vld [vmem:[#allocation9 + $0x14] sm:$0xf]
    %v1144 = vld [vmem:[#allocation9 + $0x18] sm:$0xf]
    %v1145 = vld [vmem:[#allocation9 + $0x1c] sm:$0xf]
    %v1146 = vld [vmem:[#allocation9 + $0x20] sm:$0xf]
    %v1147 = vld [vmem:[#allocation9 + $0x24] sm:$0xf]
    %v1148 = vld [vmem:[#allocation9 + $0x28] sm:$0xf]
    %v1149 = vld [vmem:[#allocation9 + $0x2c] sm:$0xf]
    %v1150 = vld [vmem:[#allocation9 + $0x30] sm:$0xf]
    %v1151 = vld [vmem:[#allocation9 + $0x34] sm:$0xf]
    %v1152 = vld [vmem:[#allocation9 + $0x38] sm:$0xf]
    %v1153 = vld [vmem:[#allocation9 + $0x3c] sm:$0xf]
    %1154 = vxpose.xlu0.b32.start [1/16] %v1100, 128
    %1155 = vxpose.xlu0.b32.cont [2/16] %v1102, 128
    %1156 = vxpose.xlu0.b32.cont [3/16] %v1105, 128
    %1157 = vxpose.xlu0.b32.cont [4/16] %v1107, 128
    %1158 = vxpose.xlu0.b32.cont [5/16] %v1110, 128
    %1159 = vxpose.xlu0.b32.cont [6/16] %v1112, 128
    %1160 = vxpose.xlu0.b32.cont [7/16] 0.0, 128
    %1161 = vxpose.xlu0.b32.cont [8/16] 0.0, 128
    %1162 = vxpose.xlu0.b32.cont [9/16] 0.0, 128
    %1163 = vxpose.xlu0.b32.cont [10/16] 0.0, 128
    %1164 = vxpose.xlu0.b32.cont [11/16] 0.0, 128
    %1165 = vxpose.xlu0.b32.cont [12/16] 0.0, 128
    %1166 = vxpose.xlu0.b32.cont [13/16] 0.0, 128
    %1167 = vxpose.xlu0.b32.cont [14/16] 0.0, 128
    %1168 = vxpose.xlu0.b32.cont [15/16] 0.0, 128
    %1169 = vxpose.xlu0.b32.end [16/16] 0.0, 128
    %v1170 = vpop.trf.xlu0
    %v1171 = vpop.trf.xlu0
    %v1172 = vpop.trf.xlu0
    %v1173 = vpop.trf.xlu0
    %v1174 = vpop.trf.xlu0
    %v1175 = vpop.trf.xlu0
    %v1176 = vpop.trf.xlu0
    %v1177 = vpop.trf.xlu0
    %v1178 = vpop.trf.xlu0
    %v1179 = vpop.trf.xlu0
    %v1180 = vpop.trf.xlu0
    %v1181 = vpop.trf.xlu0
    %v1182 = vpop.trf.xlu0
    %v1183 = vpop.trf.xlu0
    %v1184 = vpop.trf.xlu0
    %v1185 = vpop.trf.xlu0
    %v1186 = vpack.c.bf16 %v1078, %v1076
    %v1187 = vpack.c.bf16 %v1083, %v1081
    %v1188 = vpack.c.bf16 %v1088, %v1086
    %v1189 = vpack.c.bf16 %v1171, %v1170
    %v1190 = vpack.c.bf16 %v1173, %v1172
    %vm1191 = vcmask 261120
    %v1193 = vsel %vm1191, %v1186, 0
    %v1196 = vsel %vm1191, %v1187, 0
    %v1199 = vsel %vm1191, %v1188, 0
    %1201 = vmatpush.bf16.msra.mxu0 0
    %1202 = vmatpush.bf16.msra.mxu0 0
    %1203 = vmatpush.bf16.msra.mxu0 0
    %1204 = vmatpush.bf16.msra.mxu0 0
    %1205 = vmatpush.bf16.msra.mxu0 0
    %1206 = vmatpush.bf16.msra.mxu0 0
    %1207 = vmatpush.bf16.msra.mxu0 %v1190
    %1208 = vmatpush.bf16.msra.mxu0 %v1189
    %1209 = vmatmul.bf16.gmra.mxu0 %v1193
    %v1210 = vpop.f32.mrf.mxu0
    %v1211 = vadd.f32 0.0, %v1210
    %v1212 = vpop.f32.mrf.mxu0
    %v1213 = vadd.f32 0.0, %v1212
    %1214 = vmatmul.bf16.gmra.mxu0 %v1196
    %v1215 = vpop.f32.mrf.mxu0
    %v1216 = vadd.f32 0.0, %v1215
    %v1217 = vpop.f32.mrf.mxu0
    %v1218 = vadd.f32 0.0, %v1217
    %1219 = vmatmul.bf16.gmra.mxu0 %v1199
    %v1220 = vpop.f32.mrf.mxu0
    %v1221 = vadd.f32 0.0, %v1220
    %v1222 = vpop.f32.mrf.mxu0
    %v1223 = vadd.f32 0.0, %v1222
    %1224 = vdwg.mxu0
    %v1225 = vpack.c.bf16 %v1175, %v1174
    %v1226 = vpack.c.bf16 %v1177, %v1176
    %1230 = vrot.lane.b32.xlu0 %v1186, 96
    %v1231 = vpop.permute.xlu0 %1230
    %1232 = vrot.lane.b32.xlu0 %v1187, 96
    %v1233 = vpop.permute.xlu0 %1232
    %1234 = vrot.lane.b32.xlu0 %v1188, 96
    %v1235 = vpop.permute.xlu0 %1234
    %v1237 = vsel %vm1191, %v1231, 0
    %v1240 = vsel %vm1191, %v1233, 0
    %v1243 = vsel %vm1191, %v1235, 0
    %1245 = vmatpush.bf16.msra.mxu0 0
    %1246 = vmatpush.bf16.msra.mxu0 0
    %1247 = vmatpush.bf16.msra.mxu0 0
    %1248 = vmatpush.bf16.msra.mxu0 0
    %1249 = vmatpush.bf16.msra.mxu0 0
    %1250 = vmatpush.bf16.msra.mxu0 0
    %1251 = vmatpush.bf16.msra.mxu0 %v1226
    %1252 = vmatpush.bf16.msra.mxu0 %v1225
    %1253 = vmatmul.bf16.gmra.mxu0 %v1237
    %v1254 = vpop.f32.mrf.mxu0
    %v1255 = vadd.f32 0.0, %v1254
    %v1256 = vpop.f32.mrf.mxu0
    %v1257 = vadd.f32 0.0, %v1256
    %1258 = vmatmul.bf16.gmra.mxu0 %v1240
    %v1259 = vpop.f32.mrf.mxu0
    %v1260 = vadd.f32 0.0, %v1259
    %v1261 = vpop.f32.mrf.mxu0
    %v1262 = vadd.f32 0.0, %v1261
    %1263 = vmatmul.bf16.gmra.mxu0 %v1243
    %v1264 = vpop.f32.mrf.mxu0
    %v1265 = vadd.f32 0.0, %v1264
    %v1266 = vpop.f32.mrf.mxu0
    %v1267 = vadd.f32 0.0, %v1266
    %1268 = vdwg.mxu0
    %v1269 = vpack.c.bf16 %v1179, %v1178
    %v1270 = vpack.c.bf16 %v1181, %v1180
    %1271 = vrot.lane.b32.xlu0 %v1186, 64
    %v1272 = vpop.permute.xlu0 %1271
    %1273 = vrot.lane.b32.xlu0 %v1187, 64
    %v1274 = vpop.permute.xlu0 %1273
    %1275 = vrot.lane.b32.xlu0 %v1188, 64
    %v1276 = vpop.permute.xlu0 %1275
    %v1278 = vsel %vm1191, %v1272, 0
    %v1281 = vsel %vm1191, %v1274, 0
    %v1284 = vsel %vm1191, %v1276, 0
    %1286 = vmatpush.bf16.msra.mxu0 0
    %1287 = vmatpush.bf16.msra.mxu0 0
    %1288 = vmatpush.bf16.msra.mxu0 0
    %1289 = vmatpush.bf16.msra.mxu0 0
    %1290 = vmatpush.bf16.msra.mxu0 0
    %1291 = vmatpush.bf16.msra.mxu0 0
    %1292 = vmatpush.bf16.msra.mxu0 %v1270
    %1293 = vmatpush.bf16.msra.mxu0 %v1269
    %1294 = vmatmul.bf16.gmra.mxu0 %v1278
    %v1295 = vpop.f32.mrf.mxu0
    %v1296 = vadd.f32 0.0, %v1295
    %v1297 = vpop.f32.mrf.mxu0
    %v1298 = vadd.f32 0.0, %v1297
    %1299 = vmatmul.bf16.gmra.mxu0 %v1281
    %v1300 = vpop.f32.mrf.mxu0
    %v1301 = vadd.f32 0.0, %v1300
    %v1302 = vpop.f32.mrf.mxu0
    %v1303 = vadd.f32 0.0, %v1302
    %1304 = vmatmul.bf16.gmra.mxu0 %v1284
    %v1305 = vpop.f32.mrf.mxu0
    %v1306 = vadd.f32 0.0, %v1305
    %v1307 = vpop.f32.mrf.mxu0
    %v1308 = vadd.f32 0.0, %v1307
    %1309 = vdwg.mxu0
    %v1310 = vpack.c.bf16 %v1183, %v1182
    %v1311 = vpack.c.bf16 %v1185, %v1184
    %1312 = vrot.lane.b32.xlu0 %v1186, 32
    %v1313 = vpop.permute.xlu0 %1312
    %1314 = vrot.lane.b32.xlu0 %v1187, 32
    %v1315 = vpop.permute.xlu0 %1314
    %1316 = vrot.lane.b32.xlu0 %v1188, 32
    %v1317 = vpop.permute.xlu0 %1316
    %v1319 = vsel %vm1191, %v1313, 0
    %v1322 = vsel %vm1191, %v1315, 0
    %v1325 = vsel %vm1191, %v1317, 0
    %1327 = vmatpush.bf16.msra.mxu0 0
    %1328 = vmatpush.bf16.msra.mxu0 0
    %1329 = vmatpush.bf16.msra.mxu0 0
    %1330 = vmatpush.bf16.msra.mxu0 0
    %1331 = vmatpush.bf16.msra.mxu0 0
    %1332 = vmatpush.bf16.msra.mxu0 0
    %1333 = vmatpush.bf16.msra.mxu0 %v1311
    %1334 = vmatpush.bf16.msra.mxu0 %v1310
    %1335 = vmatmul.bf16.gmra.mxu0 %v1319
    %v1336 = vpop.f32.mrf.mxu0
    %v1337 = vadd.f32 0.0, %v1336
    %v1338 = vpop.f32.mrf.mxu0
    %v1339 = vadd.f32 0.0, %v1338
    %1340 = vmatmul.bf16.gmra.mxu0 %v1322
    %v1341 = vpop.f32.mrf.mxu0
    %v1342 = vadd.f32 0.0, %v1341
    %v1343 = vpop.f32.mrf.mxu0
    %v1344 = vadd.f32 0.0, %v1343
    %1345 = vmatmul.bf16.gmra.mxu0 %v1325
    %v1346 = vpop.f32.mrf.mxu0
    %v1347 = vadd.f32 0.0, %v1346
    %v1348 = vpop.f32.mrf.mxu0
    %v1349 = vadd.f32 0.0, %v1348
    %1350 = vdwg.mxu0
    %v1351 = vmul.f32 %v1211, 0.28867513
    %v1352 = vmul.f32 %v1213, 0.28867513
    %v1353 = vmul.f32 %v1216, 0.28867513
    %v1354 = vmul.f32 %v1218, 0.28867513
    %v1355 = vmul.f32 %v1221, 0.28867513
    %v1356 = vmul.f32 %v1223, 0.28867513
    %v1357 = vmul.f32 %v1255, 0.28867513
    %v1358 = vmul.f32 %v1257, 0.28867513
    %v1359 = vmul.f32 %v1260, 0.28867513
    %v1360 = vmul.f32 %v1262, 0.28867513
    %v1361 = vmul.f32 %v1265, 0.28867513
    %v1362 = vmul.f32 %v1267, 0.28867513
    %v1363 = vmul.f32 %v1296, 0.28867513
    %v1364 = vmul.f32 %v1298, 0.28867513
    %v1365 = vmul.f32 %v1301, 0.28867513
    %v1366 = vmul.f32 %v1303, 0.28867513
    %v1367 = vmul.f32 %v1306, 0.28867513
    %v1368 = vmul.f32 %v1308, 0.28867513
    %v1369 = vmul.f32 %v1337, 0.28867513
    %v1370 = vmul.f32 %v1339, 0.28867513
    %v1371 = vmul.f32 %v1342, 0.28867513
    %v1372 = vmul.f32 %v1344, 0.28867513
    %v1373 = vmul.f32 %v1347, 0.28867513
    %v1374 = vmul.f32 %v1349, 0.28867513
    %v1375 = vadd.f32 %v1351, %v241
    %v1376 = vadd.f32 %v1352, %v242
    %v1377 = vadd.f32 %v1353, %v243
    %v1378 = vadd.f32 %v1354, %v244
    %v1379 = vadd.f32 %v1355, %v245
    %v1380 = vadd.f32 %v1356, %v246
    %v1381 = vadd.f32 %v1357, %v241
    %v1382 = vadd.f32 %v1358, %v242
    %v1383 = vadd.f32 %v1359, %v243
    %v1384 = vadd.f32 %v1360, %v244
    %v1385 = vadd.f32 %v1361, %v245
    %v1386 = vadd.f32 %v1362, %v246
    %v1387 = vadd.f32 %v1363, %v241
    %v1388 = vadd.f32 %v1364, %v242
    %v1389 = vadd.f32 %v1365, %v243
    %v1390 = vadd.f32 %v1366, %v244
    %v1391 = vadd.f32 %v1367, %v245
    %v1392 = vadd.f32 %v1368, %v246
    %v1393 = vadd.f32 %v1369, %v241
    %v1394 = vadd.f32 %v1370, %v242
    %v1395 = vadd.f32 %v1371, %v243
    %v1396 = vadd.f32 %v1372, %v244
    %v1397 = vadd.f32 %v1373, %v245
    %v1398 = vadd.f32 %v1374, %v246
    %vm1399 = vcmask 392192
    %v1400 = vsel %vm1399, %v1375, -inf
    %1401 = vmax.xlane.f32.xlu0 %v1400
    %v1402 = vpop.xlane.xlu0 %1401
    %v1403 = vsel %vm1399, %v1376, -inf
    %1404 = vmax.xlane.f32.xlu0 %v1403
    %v1405 = vpop.xlane.xlu0 %1404
    %v1406 = vsel %vm1399, %v1377, -inf
    %1407 = vmax.xlane.f32.xlu0 %v1406
    %v1408 = vpop.xlane.xlu0 %1407
    %v1409 = vsel %vm1399, %v1378, -inf
    %1410 = vmax.xlane.f32.xlu0 %v1409
    %v1411 = vpop.xlane.xlu0 %1410
    %v1412 = vsel %vm1399, %v1379, -inf
    %1413 = vmax.xlane.f32.xlu0 %v1412
    %v1414 = vpop.xlane.xlu0 %1413
    %v1415 = vsel %vm1399, %v1380, -inf
    %1416 = vmax.xlane.f32.xlu0 %v1415
    %v1417 = vpop.xlane.xlu0 %1416
    %v1418 = vsel %vm1399, %v1381, -inf
    %1419 = vmax.xlane.f32.xlu0 %v1418
    %v1420 = vpop.xlane.xlu0 %1419
    %v1421 = vsel %vm1399, %v1382, -inf
    %1422 = vmax.xlane.f32.xlu0 %v1421
    %v1423 = vpop.xlane.xlu0 %1422
    %v1424 = vsel %vm1399, %v1383, -inf
    %1425 = vmax.xlane.f32.xlu0 %v1424
    %v1426 = vpop.xlane.xlu0 %1425
    %v1427 = vsel %vm1399, %v1384, -inf
    %1428 = vmax.xlane.f32.xlu0 %v1427
    %v1429 = vpop.xlane.xlu0 %1428
    %v1430 = vsel %vm1399, %v1385, -inf
    %1431 = vmax.xlane.f32.xlu0 %v1430
    %v1432 = vpop.xlane.xlu0 %1431
    %v1433 = vsel %vm1399, %v1386, -inf
    %1434 = vmax.xlane.f32.xlu0 %v1433
    %v1435 = vpop.xlane.xlu0 %1434
    %v1436 = vsel %vm1399, %v1387, -inf
    %1437 = vmax.xlane.f32.xlu0 %v1436
    %v1438 = vpop.xlane.xlu0 %1437
    %v1439 = vsel %vm1399, %v1388, -inf
    %1440 = vmax.xlane.f32.xlu0 %v1439
    %v1441 = vpop.xlane.xlu0 %1440
    %v1442 = vsel %vm1399, %v1389, -inf
    %1443 = vmax.xlane.f32.xlu0 %v1442
    %v1444 = vpop.xlane.xlu0 %1443
    %v1445 = vsel %vm1399, %v1390, -inf
    %1446 = vmax.xlane.f32.xlu0 %v1445
    %v1447 = vpop.xlane.xlu0 %1446
    %v1448 = vsel %vm1399, %v1391, -inf
    %1449 = vmax.xlane.f32.xlu0 %v1448
    %v1450 = vpop.xlane.xlu0 %1449
    %v1451 = vsel %vm1399, %v1392, -inf
    %1452 = vmax.xlane.f32.xlu0 %v1451
    %v1453 = vpop.xlane.xlu0 %1452
    %v1454 = vsel %vm1399, %v1393, -inf
    %1455 = vmax.xlane.f32.xlu0 %v1454
    %v1456 = vpop.xlane.xlu0 %1455
    %v1457 = vsel %vm1399, %v1394, -inf
    %1458 = vmax.xlane.f32.xlu0 %v1457
    %v1459 = vpop.xlane.xlu0 %1458
    %v1460 = vsel %vm1399, %v1395, -inf
    %1461 = vmax.xlane.f32.xlu0 %v1460
    %v1462 = vpop.xlane.xlu0 %1461
    %v1463 = vsel %vm1399, %v1396, -inf
    %1464 = vmax.xlane.f32.xlu0 %v1463
    %v1465 = vpop.xlane.xlu0 %1464
    %v1466 = vsel %vm1399, %v1397, -inf
    %1467 = vmax.xlane.f32.xlu0 %v1466
    %v1468 = vpop.xlane.xlu0 %1467
    %v1469 = vsel %vm1399, %v1398, -inf
    %1470 = vmax.xlane.f32.xlu0 %v1469
    %v1471 = vpop.xlane.xlu0 %1470
    %v1472 = vsub.f32 %v1375, %v1402
    %v1473 = vsub.f32 %v1376, %v1405
    %v1474 = vsub.f32 %v1377, %v1408
    %v1475 = vsub.f32 %v1378, %v1411
    %v1476 = vsub.f32 %v1379, %v1414
    %v1477 = vsub.f32 %v1380, %v1417
    %v1478 = vsub.f32 %v1381, %v1420
    %v1479 = vsub.f32 %v1382, %v1423
    %v1480 = vsub.f32 %v1383, %v1426
    %v1481 = vsub.f32 %v1384, %v1429
    %v1482 = vsub.f32 %v1385, %v1432
    %v1483 = vsub.f32 %v1386, %v1435
    %v1484 = vsub.f32 %v1387, %v1438
    %v1485 = vsub.f32 %v1388, %v1441
    %v1486 = vsub.f32 %v1389, %v1444
    %v1487 = vsub.f32 %v1390, %v1447
    %v1488 = vsub.f32 %v1391, %v1450
    %v1489 = vsub.f32 %v1392, %v1453
    %v1490 = vsub.f32 %v1393, %v1456
    %v1491 = vsub.f32 %v1394, %v1459
    %v1492 = vsub.f32 %v1395, %v1462
    %v1493 = vsub.f32 %v1396, %v1465
    %v1494 = vsub.f32 %v1397, %v1468
    %v1495 = vsub.f32 %v1398, %v1471
    %v1496 = vmul.f32 %v1472, 1.442695
    %v1497 = vpow.pop %v1496
    %v1498 = vmul.f32 %v1473, 1.442695
    %v1499 = vpow.pop %v1498
    %v1500 = vmul.f32 %v1474, 1.442695
    %v1501 = vpow.pop %v1500
    %v1502 = vmul.f32 %v1475, 1.442695
    %v1503 = vpow.pop %v1502
    %v1504 = vmul.f32 %v1476, 1.442695
    %v1505 = vpow.pop %v1504
    %v1506 = vmul.f32 %v1477, 1.442695
    %v1507 = vpow.pop %v1506
    %v1508 = vmul.f32 %v1478, 1.442695
    %v1509 = vpow.pop %v1508
    %v1510 = vmul.f32 %v1479, 1.442695
    %v1511 = vpow.pop %v1510
    %v1512 = vmul.f32 %v1480, 1.442695
    %v1513 = vpow.pop %v1512
    %v1514 = vmul.f32 %v1481, 1.442695
    %v1515 = vpow.pop %v1514
    %v1516 = vmul.f32 %v1482, 1.442695
    %v1517 = vpow.pop %v1516
    %v1518 = vmul.f32 %v1483, 1.442695
    %v1519 = vpow.pop %v1518
    %v1520 = vmul.f32 %v1484, 1.442695
    %v1521 = vpow.pop %v1520
    %v1522 = vmul.f32 %v1485, 1.442695
    %v1523 = vpow.pop %v1522
    %v1524 = vmul.f32 %v1486, 1.442695
    %v1525 = vpow.pop %v1524
    %v1526 = vmul.f32 %v1487, 1.442695
    %v1527 = vpow.pop %v1526
    %v1528 = vmul.f32 %v1488, 1.442695
    %v1529 = vpow.pop %v1528
    %v1530 = vmul.f32 %v1489, 1.442695
    %v1531 = vpow.pop %v1530
    %v1532 = vmul.f32 %v1490, 1.442695
    %v1533 = vpow.pop %v1532
    %v1534 = vmul.f32 %v1491, 1.442695
    %v1535 = vpow.pop %v1534
    %v1536 = vmul.f32 %v1492, 1.442695
    %v1537 = vpow.pop %v1536
    %v1538 = vmul.f32 %v1493, 1.442695
    %v1539 = vpow.pop %v1538
    %v1540 = vmul.f32 %v1494, 1.442695
    %v1541 = vpow.pop %v1540
    %v1542 = vmul.f32 %v1495, 1.442695
    %v1543 = vpow.pop %v1542
    %v1544 = vsel %vm1399, %v1497, 0.0
    %1545 = vadd.xlane.f32.xlu0 %v1544
    %v1546 = vpop.xlane.xlu0 %1545
    %v1547 = vsel %vm1399, %v1499, 0.0
    %1548 = vadd.xlane.f32.xlu0 %v1547
    %v1549 = vpop.xlane.xlu0 %1548
    %v1550 = vsel %vm1399, %v1501, 0.0
    %1551 = vadd.xlane.f32.xlu0 %v1550
    %v1552 = vpop.xlane.xlu0 %1551
    %v1553 = vsel %vm1399, %v1503, 0.0
    %1554 = vadd.xlane.f32.xlu0 %v1553
    %v1555 = vpop.xlane.xlu0 %1554
    %v1556 = vsel %vm1399, %v1505, 0.0
    %1557 = vadd.xlane.f32.xlu0 %v1556
    %v1558 = vpop.xlane.xlu0 %1557
    %v1559 = vsel %vm1399, %v1507, 0.0
    %1560 = vadd.xlane.f32.xlu0 %v1559
    %v1561 = vpop.xlane.xlu0 %1560
    %v1562 = vsel %vm1399, %v1509, 0.0
    %1563 = vadd.xlane.f32.xlu0 %v1562
    %v1564 = vpop.xlane.xlu0 %1563
    %v1565 = vsel %vm1399, %v1511, 0.0
    %1566 = vadd.xlane.f32.xlu0 %v1565
    %v1567 = vpop.xlane.xlu0 %1566
    %v1568 = vsel %vm1399, %v1513, 0.0
    %1569 = vadd.xlane.f32.xlu0 %v1568
    %v1570 = vpop.xlane.xlu0 %1569
    %v1571 = vsel %vm1399, %v1515, 0.0
    %1572 = vadd.xlane.f32.xlu0 %v1571
    %v1573 = vpop.xlane.xlu0 %1572
    %v1574 = vsel %vm1399, %v1517, 0.0
    %1575 = vadd.xlane.f32.xlu0 %v1574
    %v1576 = vpop.xlane.xlu0 %1575
    %v1577 = vsel %vm1399, %v1519, 0.0
    %1578 = vadd.xlane.f32.xlu0 %v1577
    %v1579 = vpop.xlane.xlu0 %1578
    %v1580 = vsel %vm1399, %v1521, 0.0
    %1581 = vadd.xlane.f32.xlu0 %v1580
    %v1582 = vpop.xlane.xlu0 %1581
    %v1583 = vsel %vm1399, %v1523, 0.0
    %1584 = vadd.xlane.f32.xlu0 %v1583
    %v1585 = vpop.xlane.xlu0 %1584
    %v1586 = vsel %vm1399, %v1525, 0.0
    %1587 = vadd.xlane.f32.xlu0 %v1586
    %v1588 = vpop.xlane.xlu0 %1587
    %v1589 = vsel %vm1399, %v1527, 0.0
    %1590 = vadd.xlane.f32.xlu0 %v1589
    %v1591 = vpop.xlane.xlu0 %1590
    %v1592 = vsel %vm1399, %v1529, 0.0
    %1593 = vadd.xlane.f32.xlu0 %v1592
    %v1594 = vpop.xlane.xlu0 %1593
    %v1595 = vsel %vm1399, %v1531, 0.0
    %1596 = vadd.xlane.f32.xlu0 %v1595
    %v1597 = vpop.xlane.xlu0 %1596
    %v1598 = vsel %vm1399, %v1533, 0.0
    %1599 = vadd.xlane.f32.xlu0 %v1598
    %v1600 = vpop.xlane.xlu0 %1599
    %v1601 = vsel %vm1399, %v1535, 0.0
    %1602 = vadd.xlane.f32.xlu0 %v1601
    %v1603 = vpop.xlane.xlu0 %1602
    %v1604 = vsel %vm1399, %v1537, 0.0
    %1605 = vadd.xlane.f32.xlu0 %v1604
    %v1606 = vpop.xlane.xlu0 %1605
    %v1607 = vsel %vm1399, %v1539, 0.0
    %1608 = vadd.xlane.f32.xlu0 %v1607
    %v1609 = vpop.xlane.xlu0 %1608
    %v1610 = vsel %vm1399, %v1541, 0.0
    %1611 = vadd.xlane.f32.xlu0 %v1610
    %v1612 = vpop.xlane.xlu0 %1611
    %v1613 = vsel %vm1399, %v1543, 0.0
    %1614 = vadd.xlane.f32.xlu0 %v1613
    %v1615 = vpop.xlane.xlu0 %1614
    %v1616 = vrcp.pop %v1546
    %v1617 = vrcp.pop %v1549
    %v1618 = vrcp.pop %v1552
    %v1619 = vrcp.pop %v1555
    %v1620 = vrcp.pop %v1558
    %v1621 = vrcp.pop %v1561
    %v1622 = vrcp.pop %v1564
    %v1623 = vrcp.pop %v1567
    %v1624 = vrcp.pop %v1570
    %v1625 = vrcp.pop %v1573
    %v1626 = vrcp.pop %v1576
    %v1627 = vrcp.pop %v1579
    %v1628 = vrcp.pop %v1582
    %v1629 = vrcp.pop %v1585
    %v1630 = vrcp.pop %v1588
    %v1631 = vrcp.pop %v1591
    %v1632 = vrcp.pop %v1594
    %v1633 = vrcp.pop %v1597
    %v1634 = vrcp.pop %v1600
    %v1635 = vrcp.pop %v1603
    %v1636 = vrcp.pop %v1606
    %v1637 = vrcp.pop %v1609
    %v1638 = vrcp.pop %v1612
    %v1639 = vrcp.pop %v1615
    %v1640 = vmul.f32 %v1497, %v1616
    %v1641 = vmul.f32 %v1499, %v1617
    %v1642 = vmul.f32 %v1501, %v1618
    %v1643 = vmul.f32 %v1503, %v1619
    %v1644 = vmul.f32 %v1505, %v1620
    %v1645 = vmul.f32 %v1507, %v1621
    %v1646 = vmul.f32 %v1509, %v1622
    %v1647 = vmul.f32 %v1511, %v1623
    %v1648 = vmul.f32 %v1513, %v1624
    %v1649 = vmul.f32 %v1515, %v1625
    %v1650 = vmul.f32 %v1517, %v1626
    %v1651 = vmul.f32 %v1519, %v1627
    %v1652 = vmul.f32 %v1521, %v1628
    %v1653 = vmul.f32 %v1523, %v1629
    %v1654 = vmul.f32 %v1525, %v1630
    %v1655 = vmul.f32 %v1527, %v1631
    %v1656 = vmul.f32 %v1529, %v1632
    %v1657 = vmul.f32 %v1531, %v1633
    %v1658 = vmul.f32 %v1533, %v1634
    %v1659 = vmul.f32 %v1535, %v1635
    %v1660 = vmul.f32 %v1537, %v1636
    %v1661 = vmul.f32 %v1539, %v1637
    %v1662 = vmul.f32 %v1541, %v1638
    %v1663 = vmul.f32 %v1543, %v1639
    %v1664 = vpack.c.bf16 %v1641, %v1640
    %v1665 = vpack.c.bf16 %v1643, %v1642
    %v1666 = vpack.c.bf16 %v1645, %v1644
    %v1667 = vpack.c.bf16 %v1126, %v1124
    %v1668 = vpack.c.bf16 %v1131, %v1129
    %v1669 = vpack.c.bf16 %v1136, %v1134
    %v1671 = vsel %vm1399, %v1664, 0
    %v1674 = vsel %vm1399, %v1665, 0
    %v1677 = vsel %vm1399, %v1666, 0
    %1679 = vmatpush.bf16.msra.mxu0 0
    %1680 = vmatpush.bf16.msra.mxu0 0
    %1681 = vmatpush.bf16.msra.mxu0 0
    %1682 = vmatpush.bf16.msra.mxu0 0
    %1683 = vmatpush.bf16.msra.mxu0 0
    %1684 = vmatpush.bf16.msra.mxu0 %v1669
    %1685 = vmatpush.bf16.msra.mxu0 %v1668
    %1686 = vmatpush.bf16.msra.mxu0 %v1667
    %1687 = vmatmul.bf16.gmra.mxu0 %v1671
    %v1688 = vpop.f32.mrf.mxu0
    %v1689 = vadd.f32 0.0, %v1688
    %v1690 = vpop.f32.mrf.mxu0
    %v1691 = vadd.f32 0.0, %v1690
    %1692 = vmatmul.bf16.gmra.mxu0 %v1674
    %v1693 = vpop.f32.mrf.mxu0
    %v1694 = vadd.f32 0.0, %v1693
    %v1695 = vpop.f32.mrf.mxu0
    %v1696 = vadd.f32 0.0, %v1695
    %1697 = vmatmul.bf16.gmra.mxu0 %v1677
    %v1698 = vpop.f32.mrf.mxu0
    %v1699 = vadd.f32 0.0, %v1698
    %v1700 = vpop.f32.mrf.mxu0
    %v1701 = vadd.f32 0.0, %v1700
    %1702 = vdwg.mxu0
    %v1703 = vpack.c.bf16 %v1647, %v1646
    %v1704 = vpack.c.bf16 %v1649, %v1648
    %v1705 = vpack.c.bf16 %v1651, %v1650
    %1709 = vrot.lane.b32.xlu0 %v1667, 96
    %v1710 = vpop.permute.xlu0 %1709
    %1711 = vrot.lane.b32.xlu0 %v1668, 96
    %v1712 = vpop.permute.xlu0 %1711
    %1713 = vrot.lane.b32.xlu0 %v1669, 96
    %v1714 = vpop.permute.xlu0 %1713
    %v1719 = vsel %vm1399, %v1703, 0
    %v1722 = vsel %vm1399, %v1704, 0
    %v1725 = vsel %vm1399, %v1705, 0
    %1727 = vmatpush.bf16.msra.mxu0 0
    %1728 = vmatpush.bf16.msra.mxu0 0
    %1729 = vmatpush.bf16.msra.mxu0 0
    %1730 = vmatpush.bf16.msra.mxu0 0
    %1731 = vmatpush.bf16.msra.mxu0 0
    %1732 = vmatpush.bf16.msra.mxu0 %v1714
    %1733 = vmatpush.bf16.msra.mxu0 %v1712
    %1734 = vmatpush.bf16.msra.mxu0 %v1710
    %1735 = vmatmul.bf16.gmra.mxu0 %v1719
    %v1736 = vpop.f32.mrf.mxu0
    %v1737 = vadd.f32 0.0, %v1736
    %v1738 = vpop.f32.mrf.mxu0
    %v1739 = vadd.f32 0.0, %v1738
    %1740 = vmatmul.bf16.gmra.mxu0 %v1722
    %v1741 = vpop.f32.mrf.mxu0
    %v1742 = vadd.f32 0.0, %v1741
    %v1743 = vpop.f32.mrf.mxu0
    %v1744 = vadd.f32 0.0, %v1743
    %1745 = vmatmul.bf16.gmra.mxu0 %v1725
    %v1746 = vpop.f32.mrf.mxu0
    %v1747 = vadd.f32 0.0, %v1746
    %v1748 = vpop.f32.mrf.mxu0
    %v1749 = vadd.f32 0.0, %v1748
    %1750 = vdwg.mxu0
    %v1751 = vpack.c.bf16 %v1653, %v1652
    %v1752 = vpack.c.bf16 %v1655, %v1654
    %v1753 = vpack.c.bf16 %v1657, %v1656
    %1754 = vrot.lane.b32.xlu0 %v1667, 64
    %v1755 = vpop.permute.xlu0 %1754
    %1756 = vrot.lane.b32.xlu0 %v1668, 64
    %v1757 = vpop.permute.xlu0 %1756
    %1758 = vrot.lane.b32.xlu0 %v1669, 64
    %v1759 = vpop.permute.xlu0 %1758
    %v1764 = vsel %vm1399, %v1751, 0
    %v1767 = vsel %vm1399, %v1752, 0
    %v1770 = vsel %vm1399, %v1753, 0
    %1772 = vmatpush.bf16.msra.mxu0 0
    %1773 = vmatpush.bf16.msra.mxu0 0
    %1774 = vmatpush.bf16.msra.mxu0 0
    %1775 = vmatpush.bf16.msra.mxu0 0
    %1776 = vmatpush.bf16.msra.mxu0 0
    %1777 = vmatpush.bf16.msra.mxu0 %v1759
    %1778 = vmatpush.bf16.msra.mxu0 %v1757
    %1779 = vmatpush.bf16.msra.mxu0 %v1755
    %1780 = vmatmul.bf16.gmra.mxu0 %v1764
    %v1781 = vpop.f32.mrf.mxu0
    %v1782 = vadd.f32 0.0, %v1781
    %v1783 = vpop.f32.mrf.mxu0
    %v1784 = vadd.f32 0.0, %v1783
    %1785 = vmatmul.bf16.gmra.mxu0 %v1767
    %v1786 = vpop.f32.mrf.mxu0
    %v1787 = vadd.f32 0.0, %v1786
    %v1788 = vpop.f32.mrf.mxu0
    %v1789 = vadd.f32 0.0, %v1788
    %1790 = vmatmul.bf16.gmra.mxu0 %v1770
    %v1791 = vpop.f32.mrf.mxu0
    %v1792 = vadd.f32 0.0, %v1791
    %v1793 = vpop.f32.mrf.mxu0
    %v1794 = vadd.f32 0.0, %v1793
    %1795 = vdwg.mxu0
    %v1796 = vpack.c.bf16 %v1659, %v1658
    %v1797 = vpack.c.bf16 %v1661, %v1660
    %v1798 = vpack.c.bf16 %v1663, %v1662
    %1799 = vrot.lane.b32.xlu0 %v1667, 32
    %v1800 = vpop.permute.xlu0 %1799
    %1801 = vrot.lane.b32.xlu0 %v1668, 32
    %v1802 = vpop.permute.xlu0 %1801
    %1803 = vrot.lane.b32.xlu0 %v1669, 32
    %v1804 = vpop.permute.xlu0 %1803
    %v1809 = vsel %vm1399, %v1796, 0
    %v1812 = vsel %vm1399, %v1797, 0
    %v1815 = vsel %vm1399, %v1798, 0
    %1817 = vmatpush.bf16.msra.mxu0 0
    %1818 = vmatpush.bf16.msra.mxu0 0
    %1819 = vmatpush.bf16.msra.mxu0 0
    %1820 = vmatpush.bf16.msra.mxu0 0
    %1821 = vmatpush.bf16.msra.mxu0 0
    %1822 = vmatpush.bf16.msra.mxu0 %v1804
    %1823 = vmatpush.bf16.msra.mxu0 %v1802
    %1824 = vmatpush.bf16.msra.mxu0 %v1800
    %1825 = vmatmul.bf16.gmra.mxu0 %v1809
    %v1826 = vpop.f32.mrf.mxu0
    %v1827 = vadd.f32 0.0, %v1826
    %v1828 = vpop.f32.mrf.mxu0
    %v1829 = vadd.f32 0.0, %v1828
    %1830 = vmatmul.bf16.gmra.mxu0 %v1812
    %v1831 = vpop.f32.mrf.mxu0
    %v1832 = vadd.f32 0.0, %v1831
    %v1833 = vpop.f32.mrf.mxu0
    %v1834 = vadd.f32 0.0, %v1833
    %1835 = vmatmul.bf16.gmra.mxu0 %v1815
    %v1836 = vpop.f32.mrf.mxu0
    %v1837 = vadd.f32 0.0, %v1836
    %v1838 = vpop.f32.mrf.mxu0
    %v1839 = vadd.f32 0.0, %v1838
    %1840 = vdwg.mxu0
    %1847 = vrot.lane.b32.xlu0 %v1737, 32
    %v1848 = vpop.permute.xlu0 %1847
    %1849 = vrot.lane.b32.xlu0 %v1739, 32
    %v1850 = vpop.permute.xlu0 %1849
    %1851 = vrot.lane.b32.xlu0 %v1742, 32
    %v1852 = vpop.permute.xlu0 %1851
    %1853 = vrot.lane.b32.xlu0 %v1744, 32
    %v1854 = vpop.permute.xlu0 %1853
    %1855 = vrot.lane.b32.xlu0 %v1747, 32
    %v1856 = vpop.permute.xlu0 %1855
    %1857 = vrot.lane.b32.xlu0 %v1749, 32
    %v1858 = vpop.permute.xlu0 %1857
    %1871 = vrot.lane.b32.xlu0 %v1782, 64
    %v1872 = vpop.permute.xlu0 %1871
    %1873 = vrot.lane.b32.xlu0 %v1784, 64
    %v1874 = vpop.permute.xlu0 %1873
    %1875 = vrot.lane.b32.xlu0 %v1787, 64
    %v1876 = vpop.permute.xlu0 %1875
    %1877 = vrot.lane.b32.xlu0 %v1789, 64
    %v1878 = vpop.permute.xlu0 %1877
    %1879 = vrot.lane.b32.xlu0 %v1792, 64
    %v1880 = vpop.permute.xlu0 %1879
    %1881 = vrot.lane.b32.xlu0 %v1794, 64
    %v1882 = vpop.permute.xlu0 %1881
    %1895 = vrot.lane.b32.xlu0 %v1827, 96
    %v1896 = vpop.permute.xlu0 %1895
    %1897 = vrot.lane.b32.xlu0 %v1829, 96
    %v1898 = vpop.permute.xlu0 %1897
    %1899 = vrot.lane.b32.xlu0 %v1832, 96
    %v1900 = vpop.permute.xlu0 %1899
    %1901 = vrot.lane.b32.xlu0 %v1834, 96
    %v1902 = vpop.permute.xlu0 %1901
    %1903 = vrot.lane.b32.xlu0 %v1837, 96
    %v1904 = vpop.permute.xlu0 %1903
    %1905 = vrot.lane.b32.xlu0 %v1839, 96
    %v1906 = vpop.permute.xlu0 %1905
    %v1913 = vsel %vm1191, %v1689, %v1848
    %v1914 = vsel %vm1191, %v1691, %v1850
    %v1915 = vsel %vm1191, %v1694, %v1852
    %v1916 = vsel %vm1191, %v1696, %v1854
    %v1917 = vsel %vm1191, %v1699, %v1856
    %v1918 = vsel %vm1191, %v1701, %v1858
    %vm1919 = vcmask 523264
    %v1920 = vsel %vm1919, %v1913, %v1872
    %v1921 = vsel %vm1919, %v1914, %v1874
    %v1922 = vsel %vm1919, %v1915, %v1876
    %v1923 = vsel %vm1919, %v1916, %v1878
    %v1924 = vsel %vm1919, %v1917, %v1880
    %v1925 = vsel %vm1919, %v1918, %v1882
    %vm1926 = vcmask 785408
    %v1927 = vsel %vm1926, %v1920, %v1896
    %v1928 = vsel %vm1926, %v1921, %v1898
    %v1929 = vsel %vm1926, %v1922, %v1900
    %v1930 = vsel %vm1926, %v1923, %v1902
    %v1931 = vsel %vm1926, %v1924, %v1904
    %v1932 = vsel %vm1926, %v1925, %v1906
    %v1933 = vpack.c.bf16 %v1928, %v1927
    %v1934 = vpack.c.bf16 %v1930, %v1929
    %v1935 = vpack.c.bf16 %v1932, %v1931
    %v1936 = vperm.slane %v180, 3
    %v1953 = vunpack.c.l.b16 %v1138
    %v1954 = vunpack.c.l.b16 %v1139
    %v1955 = vunpack.c.l.b16 %v1140
    %v1956 = vunpack.c.l.b16 %v1141
    %v1957 = vunpack.c.l.b16 %v1142
    %v1958 = vunpack.c.l.b16 %v1143
    %v1959 = vunpack.c.l.b16 %v1144
    %v1960 = vunpack.c.l.b16 %v1145
    %v1961 = vunpack.c.l.b16 %v1146
    %v1962 = vunpack.c.l.b16 %v1147
    %v1963 = vunpack.c.l.b16 %v1148
    %v1964 = vunpack.c.l.b16 %v1149
    %v1965 = vunpack.c.l.b16 %v1150
    %v1966 = vunpack.c.l.b16 %v1151
    %v1967 = vunpack.c.l.b16 %v1152
    %v1968 = vunpack.c.l.b16 %v1153
    %v1969 = vpack.c.b16 %v1954, %v1953
    %v1970 = vpack.c.b16 %v1956, %v1955
    %v1971 = vpack.c.b16 %v1958, %v1957
    %v1972 = vpack.c.b16 %v1960, %v1959
    %v1973 = vpack.c.b16 %v1962, %v1961
    %v1974 = vpack.c.b16 %v1964, %v1963
    %v1975 = vpack.c.b16 %v1966, %v1965
    %v1976 = vpack.c.b16 %v1968, %v1967
    %1985 = vmatpush.bf16.msra.mxu0 %v1976
    %1986 = vmatpush.bf16.msra.mxu0 %v1975
    %1987 = vmatpush.bf16.msra.mxu0 %v1974
    %1988 = vmatpush.bf16.msra.mxu0 %v1973
    %1989 = vmatpush.bf16.msra.mxu0 %v1972
    %1990 = vmatpush.bf16.msra.mxu0 %v1971
    %1991 = vmatpush.bf16.msra.mxu0 %v1970
    %1992 = vmatpush.bf16.msra.mxu0 %v1969
    %1993 = vmatmul.bf16.gmra.mxu0 %v1933
    %v1994 = vpop.f32.mrf.mxu0
    %v1995 = vadd.f32 %v1936, %v1994
    %v1996 = vpop.f32.mrf.mxu0
    %v1997 = vadd.f32 %v1936, %v1996
    %1998 = vmatmul.bf16.gmra.mxu0 %v1934
    %v1999 = vpop.f32.mrf.mxu0
    %v2000 = vadd.f32 %v1936, %v1999
    %v2001 = vpop.f32.mrf.mxu0
    %v2002 = vadd.f32 %v1936, %v2001
    %2003 = vmatmul.bf16.gmra.mxu0 %v1935
    %v2004 = vpop.f32.mrf.mxu0
    %v2005 = vadd.f32 %v1936, %v2004
    %v2006 = vpop.f32.mrf.mxu0
    %v2007 = vadd.f32 %v1936, %v2006
    %2008 = vdwg.mxu0
    %v2009 = vadd.f32 %v487, %v1995
    %v2010 = vadd.f32 %v489, %v1997
    %v2011 = vadd.f32 %v751, %v2000
    %v2012 = vadd.f32 %v753, %v2002
    %v2013 = vadd.f32 %v756, %v2005
    %v2014 = vadd.f32 %v758, %v2007
    %2015 = vadd.xlane.f32.xlu0 %v2009
    %v2016 = vpop.xlane.xlu0 %2015
    %2017 = vadd.xlane.f32.xlu0 %v2010
    %v2018 = vpop.xlane.xlu0 %2017
    %2019 = vadd.xlane.f32.xlu0 %v2011
    %v2020 = vpop.xlane.xlu0 %2019
    %2021 = vadd.xlane.f32.xlu0 %v2012
    %v2022 = vpop.xlane.xlu0 %2021
    %2023 = vadd.xlane.f32.xlu0 %v2013
    %v2024 = vpop.xlane.xlu0 %2023
    %2025 = vadd.xlane.f32.xlu0 %v2014
    %v2026 = vpop.xlane.xlu0 %2025
    %v2027 = vmul.f32 %v2016, 0.020833334
    %v2028 = vmul.f32 %v2018, 0.020833334
    %v2029 = vmul.f32 %v2020, 0.020833334
    %v2030 = vmul.f32 %v2022, 0.020833334
    %v2031 = vmul.f32 %v2024, 0.020833334
    %v2032 = vmul.f32 %v2026, 0.020833334
    %v2033 = vsub.f32 %v2009, %v2027
    %v2034 = vsub.f32 %v2010, %v2028
    %v2035 = vsub.f32 %v2011, %v2029
    %v2036 = vsub.f32 %v2012, %v2030
    %v2037 = vsub.f32 %v2013, %v2031
    %v2038 = vsub.f32 %v2014, %v2032
    %v2039 = vmul.f32 %v2033, %v177
    %v2040 = vmul.f32 %v2034, %v177
    %v2041 = vmul.f32 %v2035, %v177
    %v2042 = vmul.f32 %v2036, %v177
    %v2043 = vmul.f32 %v2037, %v177
    %v2044 = vmul.f32 %v2038, %v177
    %v2045 = vmul.f32 %v2039, %v2039
    %v2046 = vmul.f32 %v2040, %v2040
    %v2047 = vmul.f32 %v2041, %v2041
    %v2048 = vmul.f32 %v2042, %v2042
    %v2049 = vmul.f32 %v2043, %v2043
    %v2050 = vmul.f32 %v2044, %v2044
    %2051 = vadd.xlane.f32.xlu0 %v2045
    %v2052 = vpop.xlane.xlu0 %2051
    %2053 = vadd.xlane.f32.xlu0 %v2046
    %v2054 = vpop.xlane.xlu0 %2053
    %2055 = vadd.xlane.f32.xlu0 %v2047
    %v2056 = vpop.xlane.xlu0 %2055
    %2057 = vadd.xlane.f32.xlu0 %v2048
    %v2058 = vpop.xlane.xlu0 %2057
    %2059 = vadd.xlane.f32.xlu0 %v2049
    %v2060 = vpop.xlane.xlu0 %2059
    %2061 = vadd.xlane.f32.xlu0 %v2050
    %v2062 = vpop.xlane.xlu0 %2061
    %v2063 = vmul.f32 %v2052, 0.020833334
    %v2064 = vmul.f32 %v2054, 0.020833334
    %v2065 = vmul.f32 %v2056, 0.020833334
    %v2066 = vmul.f32 %v2058, 0.020833334
    %v2067 = vmul.f32 %v2060, 0.020833334
    %v2068 = vmul.f32 %v2062, 0.020833334
    %v2069 = vadd.f32 %v2063, 1e-05
    %v2070 = vadd.f32 %v2064, 1e-05
    %v2071 = vadd.f32 %v2065, 1e-05
    %v2072 = vadd.f32 %v2066, 1e-05
    %v2073 = vadd.f32 %v2067, 1e-05
    %v2074 = vadd.f32 %v2068, 1e-05
    %v2075 = vrsqrt.pop %v2069
    %v2076 = vmul.f32 %v2075, %v2069
    %v2077 = vmul.f32 %v2076, %v2075
    %v2078 = vmul.f32 0.5, %v2077
    %v2079 = vsub.f32 1.5, %v2078
    %v2080 = vmul.f32 %v2075, %v2079
    %vm2081 = vweird.f32 %v2069
    %vm2082 = vweird.f32 %v2075
    %vm2083 = vmor %vm2081, %vm2082
    %v2084 = vsel %vm2083, %v2075, %v2080
    %v2085 = vrsqrt.pop %v2070
    %v2086 = vmul.f32 %v2085, %v2070
    %v2087 = vmul.f32 %v2086, %v2085
    %v2088 = vmul.f32 0.5, %v2087
    %v2089 = vsub.f32 1.5, %v2088
    %v2090 = vmul.f32 %v2085, %v2089
    %vm2091 = vweird.f32 %v2070
    %vm2092 = vweird.f32 %v2085
    %vm2093 = vmor %vm2091, %vm2092
    %v2094 = vsel %vm2093, %v2085, %v2090
    %v2095 = vrsqrt.pop %v2071
    %v2096 = vmul.f32 %v2095, %v2071
    %v2097 = vmul.f32 %v2096, %v2095
    %v2098 = vmul.f32 0.5, %v2097
    %v2099 = vsub.f32 1.5, %v2098
    %v2100 = vmul.f32 %v2095, %v2099
    %vm2101 = vweird.f32 %v2071
    %vm2102 = vweird.f32 %v2095
    %vm2103 = vmor %vm2101, %vm2102
    %v2104 = vsel %vm2103, %v2095, %v2100
    %v2105 = vrsqrt.pop %v2072
    %v2106 = vmul.f32 %v2105, %v2072
    %v2107 = vmul.f32 %v2106, %v2105
    %v2108 = vmul.f32 0.5, %v2107
    %v2109 = vsub.f32 1.5, %v2108
    %v2110 = vmul.f32 %v2105, %v2109
    %vm2111 = vweird.f32 %v2072
    %vm2112 = vweird.f32 %v2105
    %vm2113 = vmor %vm2111, %vm2112
    %v2114 = vsel %vm2113, %v2105, %v2110
    %v2115 = vrsqrt.pop %v2073
    %v2116 = vmul.f32 %v2115, %v2073
    %v2117 = vmul.f32 %v2116, %v2115
    %v2118 = vmul.f32 0.5, %v2117
    %v2119 = vsub.f32 1.5, %v2118
    %v2120 = vmul.f32 %v2115, %v2119
    %vm2121 = vweird.f32 %v2073
    %vm2122 = vweird.f32 %v2115
    %vm2123 = vmor %vm2121, %vm2122
    %v2124 = vsel %vm2123, %v2115, %v2120
    %v2125 = vrsqrt.pop %v2074
    %v2126 = vmul.f32 %v2125, %v2074
    %v2127 = vmul.f32 %v2126, %v2125
    %v2128 = vmul.f32 0.5, %v2127
    %v2129 = vsub.f32 1.5, %v2128
    %v2130 = vmul.f32 %v2125, %v2129
    %vm2131 = vweird.f32 %v2074
    %vm2132 = vweird.f32 %v2125
    %vm2133 = vmor %vm2131, %vm2132
    %v2134 = vsel %vm2133, %v2125, %v2130
    %v2135 = vmul.f32 %v2039, %v2084
    %v2136 = vmul.f32 %v2040, %v2094
    %v2137 = vmul.f32 %v2041, %v2104
    %v2138 = vmul.f32 %v2042, %v2114
    %v2139 = vmul.f32 %v2043, %v2124
    %v2140 = vmul.f32 %v2044, %v2134
    %v2141 = vperm.slane %v178, 2
    %v2142 = vmul.f32 %v2135, %v2141
    %v2143 = vmul.f32 %v2136, %v2141
    %v2144 = vmul.f32 %v2137, %v2141
    %v2145 = vmul.f32 %v2138, %v2141
    %v2146 = vmul.f32 %v2139, %v2141
    %v2147 = vmul.f32 %v2140, %v2141
    %v2148 = vperm.slane %v178, 3
    %v2149 = vadd.f32 %v2142, %v2148
    %v2150 = vadd.f32 %v2143, %v2148
    %v2151 = vadd.f32 %v2144, %v2148
    %v2152 = vadd.f32 %v2145, %v2148
    %v2153 = vadd.f32 %v2146, %v2148
    %v2154 = vadd.f32 %v2147, %v2148
    %v2155 = vld [vmem:[#allocation10] sm:$0xff]
    %v2156 = vld [vmem:[#allocation10 + $0x8] sm:$0xff]
    %v2157 = vld [vmem:[#allocation10 + $0x10] sm:$0xff]
    %v2158 = vld [vmem:[#allocation10 + $0x18] sm:$0xff]
    %v2159 = vld [vmem:[#allocation10 + $0x20] sm:$0xff]
    %v2160 = vld [vmem:[#allocation10 + $0x28] sm:$0xff]
    %v2161 = vld [vmem:[#allocation10 + $0x30] sm:$0xff]
    %v2162 = vld [vmem:[#allocation10 + $0x38] sm:$0xff]
    %v2163 = vld [vmem:[#allocation10 + $0x40] sm:$0xff]
    %v2164 = vld [vmem:[#allocation10 + $0x48] sm:$0xff]
    %v2165 = vld [vmem:[#allocation10 + $0x50] sm:$0xff]
    %v2166 = vld [vmem:[#allocation10 + $0x58] sm:$0xff]
    %v2167 = vld [vmem:[#allocation10 + $0x60] sm:$0xff]
    %v2168 = vld [vmem:[#allocation10 + $0x68] sm:$0xff]
    %v2169 = vld [vmem:[#allocation10 + $0x70] sm:$0xff]
    %v2170 = vld [vmem:[#allocation10 + $0x78] sm:$0xff]
    %v2171 = vld [vmem:[#allocation12] sm:$0xf]
    %v2172 = vld [vmem:[#allocation12 + $0x4] sm:$0xf]
    %v2173 = vld [vmem:[#allocation12 + $0x8] sm:$0xf]
    %v2174 = vld [vmem:[#allocation12 + $0xc] sm:$0xf]
    %v2175 = vld [vmem:[#allocation12 + $0x10] sm:$0xf]
    %v2176 = vld [vmem:[#allocation12 + $0x14] sm:$0xf]
    %v2177 = vld [vmem:[#allocation12 + $0x18] sm:$0xf]
    %v2178 = vld [vmem:[#allocation12 + $0x1c] sm:$0xf]
    %v2179 = vld [vmem:[#allocation12 + $0x20] sm:$0xf]
    %v2180 = vld [vmem:[#allocation12 + $0x24] sm:$0xf]
    %v2181 = vld [vmem:[#allocation12 + $0x28] sm:$0xf]
    %v2182 = vld [vmem:[#allocation12 + $0x2c] sm:$0xf]
    %v2183 = vld [vmem:[#allocation12 + $0x30] sm:$0xf]
    %v2184 = vld [vmem:[#allocation12 + $0x34] sm:$0xf]
    %v2185 = vld [vmem:[#allocation12 + $0x38] sm:$0xf]
    %v2186 = vld [vmem:[#allocation12 + $0x3c] sm:$0xf]
    %v2187 = vld [vmem:[#allocation12 + $0x40] sm:$0xf]
    %v2188 = vld [vmem:[#allocation12 + $0x44] sm:$0xf]
    %v2189 = vld [vmem:[#allocation12 + $0x48] sm:$0xf]
    %v2190 = vld [vmem:[#allocation12 + $0x4c] sm:$0xf]
    %v2191 = vld [vmem:[#allocation12 + $0x50] sm:$0xf]
    %v2192 = vld [vmem:[#allocation12 + $0x54] sm:$0xf]
    %v2193 = vld [vmem:[#allocation12 + $0x58] sm:$0xf]
    %v2194 = vld [vmem:[#allocation12 + $0x5c] sm:$0xf]
    %v2195 = vld [vmem:[#allocation12 + $0x60] sm:$0xf]
    %v2196 = vld [vmem:[#allocation12 + $0x64] sm:$0xf]
    %v2197 = vld [vmem:[#allocation12 + $0x68] sm:$0xf]
    %v2198 = vld [vmem:[#allocation12 + $0x6c] sm:$0xf]
    %v2199 = vld [vmem:[#allocation12 + $0x70] sm:$0xf]
    %v2200 = vld [vmem:[#allocation12 + $0x74] sm:$0xf]
    %v2201 = vld [vmem:[#allocation12 + $0x78] sm:$0xf]
    %v2202 = vld [vmem:[#allocation12 + $0x7c] sm:$0xf]
    %v2203 = vpack.c.bf16 %v2150, %v2149
    %v2204 = vpack.c.bf16 %v2152, %v2151
    %v2205 = vpack.c.bf16 %v2154, %v2153
    %v2206 = vperm.slane %v180, 4
    %v2207 = vperm.slane %v181, 4
    %v2224 = vunpack.c.l.b16 %v2155
    %v2225 = vunpack.c.h.b16 %v2155
    %v2226 = vunpack.c.l.b16 %v2156
    %v2227 = vunpack.c.h.b16 %v2156
    %v2228 = vunpack.c.l.b16 %v2157
    %v2229 = vunpack.c.h.b16 %v2157
    %v2230 = vunpack.c.l.b16 %v2158
    %v2231 = vunpack.c.h.b16 %v2158
    %v2232 = vunpack.c.l.b16 %v2159
    %v2233 = vunpack.c.h.b16 %v2159
    %v2234 = vunpack.c.l.b16 %v2160
    %v2235 = vunpack.c.h.b16 %v2160
    %v2236 = vunpack.c.l.b16 %v2161
    %v2237 = vunpack.c.h.b16 %v2161
    %v2238 = vunpack.c.l.b16 %v2162
    %v2239 = vunpack.c.h.b16 %v2162
    %v2240 = vunpack.c.l.b16 %v2163
    %v2241 = vunpack.c.h.b16 %v2163
    %v2242 = vunpack.c.l.b16 %v2164
    %v2243 = vunpack.c.h.b16 %v2164
    %v2244 = vunpack.c.l.b16 %v2165
    %v2245 = vunpack.c.h.b16 %v2165
    %v2246 = vunpack.c.l.b16 %v2166
    %v2247 = vunpack.c.h.b16 %v2166
    %v2248 = vunpack.c.l.b16 %v2167
    %v2249 = vunpack.c.h.b16 %v2167
    %v2250 = vunpack.c.l.b16 %v2168
    %v2251 = vunpack.c.h.b16 %v2168
    %v2252 = vunpack.c.l.b16 %v2169
    %v2253 = vunpack.c.h.b16 %v2169
    %v2254 = vunpack.c.l.b16 %v2170
    %v2255 = vunpack.c.h.b16 %v2170
    %v2256 = vpack.c.b16 %v2226, %v2224
    %v2257 = vpack.c.b16 %v2227, %v2225
    %v2258 = vpack.c.b16 %v2230, %v2228
    %v2259 = vpack.c.b16 %v2231, %v2229
    %v2260 = vpack.c.b16 %v2234, %v2232
    %v2261 = vpack.c.b16 %v2235, %v2233
    %v2262 = vpack.c.b16 %v2238, %v2236
    %v2263 = vpack.c.b16 %v2239, %v2237
    %v2264 = vpack.c.b16 %v2242, %v2240
    %v2265 = vpack.c.b16 %v2243, %v2241
    %v2266 = vpack.c.b16 %v2246, %v2244
    %v2267 = vpack.c.b16 %v2247, %v2245
    %v2268 = vpack.c.b16 %v2250, %v2248
    %v2269 = vpack.c.b16 %v2251, %v2249
    %v2270 = vpack.c.b16 %v2254, %v2252
    %v2271 = vpack.c.b16 %v2255, %v2253
    %2288 = vmatpush.bf16.msra.mxu0 %v2270
    %2289 = vmatpush.bf16.msra.mxu0 %v2268
    %2290 = vmatpush.bf16.msra.mxu0 %v2266
    %2291 = vmatpush.bf16.msra.mxu0 %v2264
    %2292 = vmatpush.bf16.msra.mxu0 %v2262
    %2293 = vmatpush.bf16.msra.mxu0 %v2260
    %2294 = vmatpush.bf16.msra.mxu0 %v2258
    %2295 = vmatpush.bf16.msra.mxu0 %v2256
    %2296 = vmatmul.bf16.gmra.mxu0 %v2203
    %v2297 = vpop.f32.mrf.mxu0
    %v2298 = vadd.f32 %v2206, %v2297
    %v2299 = vpop.f32.mrf.mxu0
    %v2300 = vadd.f32 %v2206, %v2299
    %2301 = vmatmul.bf16.gmra.mxu0 %v2204
    %v2302 = vpop.f32.mrf.mxu0
    %v2303 = vadd.f32 %v2206, %v2302
    %v2304 = vpop.f32.mrf.mxu0
    %v2305 = vadd.f32 %v2206, %v2304
    %2306 = vmatmul.bf16.gmra.mxu0 %v2205
    %v2307 = vpop.f32.mrf.mxu0
    %v2308 = vadd.f32 %v2206, %v2307
    %v2309 = vpop.f32.mrf.mxu0
    %v2310 = vadd.f32 %v2206, %v2309
    %2311 = vdwg.mxu0
    %2312 = vmatpush.bf16.msra.mxu0 %v2271
    %2313 = vmatpush.bf16.msra.mxu0 %v2269
    %2314 = vmatpush.bf16.msra.mxu0 %v2267
    %2315 = vmatpush.bf16.msra.mxu0 %v2265
    %2316 = vmatpush.bf16.msra.mxu0 %v2263
    %2317 = vmatpush.bf16.msra.mxu0 %v2261
    %2318 = vmatpush.bf16.msra.mxu0 %v2259
    %2319 = vmatpush.bf16.msra.mxu0 %v2257
    %2320 = vmatmul.bf16.gmra.mxu0 %v2203
    %v2321 = vpop.f32.mrf.mxu0
    %v2322 = vadd.f32 %v2207, %v2321
    %v2323 = vpop.f32.mrf.mxu0
    %v2324 = vadd.f32 %v2207, %v2323
    %2325 = vmatmul.bf16.gmra.mxu0 %v2204
    %v2326 = vpop.f32.mrf.mxu0
    %v2327 = vadd.f32 %v2207, %v2326
    %v2328 = vpop.f32.mrf.mxu0
    %v2329 = vadd.f32 %v2207, %v2328
    %2330 = vmatmul.bf16.gmra.mxu0 %v2205
    %v2331 = vpop.f32.mrf.mxu0
    %v2332 = vadd.f32 %v2207, %v2331
    %v2333 = vpop.f32.mrf.mxu0
    %v2334 = vadd.f32 %v2207, %v2333
    %2335 = vdwg.mxu0
    %v2336 = vmul.f32 %v2298, 0.5
    %v2337 = vmul.f32 %v2322, 0.5
    %v2338 = vmul.f32 %v2300, 0.5
    %v2339 = vmul.f32 %v2324, 0.5
    %v2340 = vmul.f32 %v2303, 0.5
    %v2341 = vmul.f32 %v2327, 0.5
    %v2342 = vmul.f32 %v2305, 0.5
    %v2343 = vmul.f32 %v2329, 0.5
    %v2344 = vmul.f32 %v2308, 0.5
    %v2345 = vmul.f32 %v2332, 0.5
    %v2346 = vmul.f32 %v2310, 0.5
    %v2347 = vmul.f32 %v2334, 0.5
    %v2348 = vmul.f32 %v2298, 0.70710677
    %v2349 = vmul.f32 %v2322, 0.70710677
    %v2350 = vmul.f32 %v2300, 0.70710677
    %v2351 = vmul.f32 %v2324, 0.70710677
    %v2352 = vmul.f32 %v2303, 0.70710677
    %v2353 = vmul.f32 %v2327, 0.70710677
    %v2354 = vmul.f32 %v2305, 0.70710677
    %v2355 = vmul.f32 %v2329, 0.70710677
    %v2356 = vmul.f32 %v2308, 0.70710677
    %v2357 = vmul.f32 %v2332, 0.70710677
    %v2358 = vmul.f32 %v2310, 0.70710677
    %v2359 = vmul.f32 %v2334, 0.70710677
    %v2360 = vmul.f32 %v2348, %v2348
    %v2361 = vmin.f32 16.0, %v2360
    %v2362 = vmul.f32 %v2361, 2.1237322e-06
    %v2363 = vadd.f32 %v2362, 0.00028619796
    %v2364 = vmul.f32 %v2361, %v2363
    %v2365 = vadd.f32 %v2364, 0.0036580483
    %v2366 = vmul.f32 %v2361, %v2365
    %v2367 = vadd.f32 %v2366, 0.05243302
    %v2368 = vmul.f32 %v2361, %v2367
    %v2369 = vadd.f32 %v2368, 0.18741608
    %v2370 = vmul.f32 %v2361, %v2369
    %v2371 = vadd.f32 %v2370, 1.1283791
    %v2372 = vmul.f32 %v2348, %v2371
    %v2373 = vmul.f32 %v2361, 3.8918573e-05
    %v2374 = vadd.f32 %v2373, 0.001143296
    %v2375 = vmul.f32 %v2361, %v2374
    %v2376 = vadd.f32 %v2375, 0.014752088
    %v2377 = vmul.f32 %v2361, %v2376
    %v2378 = vadd.f32 %v2377, 0.112945676
    %v2379 = vmul.f32 %v2361, %v2378
    %v2380 = vadd.f32 %v2379, 0.4994258
    %v2381 = vmul.f32 %v2361, %v2380
    %v2382 = vadd.f32 %v2381, 1.0
    %v2383 = vrcp.pop %v2382
    %v2384 = vmul.f32 %v2382, %v2383
    %v2385 = vsub.f32 1.0, %v2384
    %v2386 = vmul.f32 %v2383, %v2385
    %v2387 = vadd.f32 %v2383, %v2386
    %vm2388 = vweird.f32 %v2382
    %vm2389 = vweird.f32 %v2383
    %vm2390 = vmor %vm2388, %vm2389
    %v2391 = vsel %vm2390, %v2383, %v2387
    %v2392 = vand.u32 2147483647, %v2382
    %vm2393 = vcmp.eq.f32.partialorder %v2392, 8.507059e+37
    %v2394 = vand.u32 %v2382, 2147483648
    %v2395 = vor.u32 1.1754944e-38, %v2394
    %v2396 = vsel %vm2393, %v2395, %v2391
    %v2397 = vmul.f32 %v2372, %v2396
    %v2398 = vmin.f32 %v2397, 1.0
    %v2399 = vmax.f32 %v2398, -1.0
    %v2400 = vmul.f32 %v2349, %v2349
    %v2401 = vmin.f32 16.0, %v2400
    %v2402 = vmul.f32 %v2401, 2.1237322e-06
    %v2403 = vadd.f32 %v2402, 0.00028619796
    %v2404 = vmul.f32 %v2401, %v2403
    %v2405 = vadd.f32 %v2404, 0.0036580483
    %v2406 = vmul.f32 %v2401, %v2405
    %v2407 = vadd.f32 %v2406, 0.05243302
    %v2408 = vmul.f32 %v2401, %v2407
    %v2409 = vadd.f32 %v2408, 0.18741608
    %v2410 = vmul.f32 %v2401, %v2409
    %v2411 = vadd.f32 %v2410, 1.1283791
    %v2412 = vmul.f32 %v2349, %v2411
    %v2413 = vmul.f32 %v2401, 3.8918573e-05
    %v2414 = vadd.f32 %v2413, 0.001143296
    %v2415 = vmul.f32 %v2401, %v2414
    %v2416 = vadd.f32 %v2415, 0.014752088
    %v2417 = vmul.f32 %v2401, %v2416
    %v2418 = vadd.f32 %v2417, 0.112945676
    %v2419 = vmul.f32 %v2401, %v2418
    %v2420 = vadd.f32 %v2419, 0.4994258
    %v2421 = vmul.f32 %v2401, %v2420
    %v2422 = vadd.f32 %v2421, 1.0
    %v2423 = vrcp.pop %v2422
    %v2424 = vmul.f32 %v2422, %v2423
    %v2425 = vsub.f32 1.0, %v2424
    %v2426 = vmul.f32 %v2423, %v2425
    %v2427 = vadd.f32 %v2423, %v2426
    %vm2428 = vweird.f32 %v2422
    %vm2429 = vweird.f32 %v2423
    %vm2430 = vmor %vm2428, %vm2429
    %v2431 = vsel %vm2430, %v2423, %v2427
    %v2432 = vand.u32 2147483647, %v2422
    %vm2433 = vcmp.eq.f32.partialorder %v2432, 8.507059e+37
    %v2434 = vand.u32 %v2422, 2147483648
    %v2435 = vor.u32 1.1754944e-38, %v2434
    %v2436 = vsel %vm2433, %v2435, %v2431
    %v2437 = vmul.f32 %v2412, %v2436
    %v2438 = vmin.f32 %v2437, 1.0
    %v2439 = vmax.f32 %v2438, -1.0
    %v2440 = vmul.f32 %v2350, %v2350
    %v2441 = vmin.f32 16.0, %v2440
    %v2442 = vmul.f32 %v2441, 2.1237322e-06
    %v2443 = vadd.f32 %v2442, 0.00028619796
    %v2444 = vmul.f32 %v2441, %v2443
    %v2445 = vadd.f32 %v2444, 0.0036580483
    %v2446 = vmul.f32 %v2441, %v2445
    %v2447 = vadd.f32 %v2446, 0.05243302
    %v2448 = vmul.f32 %v2441, %v2447
    %v2449 = vadd.f32 %v2448, 0.18741608
    %v2450 = vmul.f32 %v2441, %v2449
    %v2451 = vadd.f32 %v2450, 1.1283791
    %v2452 = vmul.f32 %v2350, %v2451
    %v2453 = vmul.f32 %v2441, 3.8918573e-05
    %v2454 = vadd.f32 %v2453, 0.001143296
    %v2455 = vmul.f32 %v2441, %v2454
    %v2456 = vadd.f32 %v2455, 0.014752088
    %v2457 = vmul.f32 %v2441, %v2456
    %v2458 = vadd.f32 %v2457, 0.112945676
    %v2459 = vmul.f32 %v2441, %v2458
    %v2460 = vadd.f32 %v2459, 0.4994258
    %v2461 = vmul.f32 %v2441, %v2460
    %v2462 = vadd.f32 %v2461, 1.0
    %v2463 = vrcp.pop %v2462
    %v2464 = vmul.f32 %v2462, %v2463
    %v2465 = vsub.f32 1.0, %v2464
    %v2466 = vmul.f32 %v2463, %v2465
    %v2467 = vadd.f32 %v2463, %v2466
    %vm2468 = vweird.f32 %v2462
    %vm2469 = vweird.f32 %v2463
    %vm2470 = vmor %vm2468, %vm2469
    %v2471 = vsel %vm2470, %v2463, %v2467
    %v2472 = vand.u32 2147483647, %v2462
    %vm2473 = vcmp.eq.f32.partialorder %v2472, 8.507059e+37
    %v2474 = vand.u32 %v2462, 2147483648
    %v2475 = vor.u32 1.1754944e-38, %v2474
    %v2476 = vsel %vm2473, %v2475, %v2471
    %v2477 = vmul.f32 %v2452, %v2476
    %v2478 = vmin.f32 %v2477, 1.0
    %v2479 = vmax.f32 %v2478, -1.0
    %v2480 = vmul.f32 %v2351, %v2351
    %v2481 = vmin.f32 16.0, %v2480
    %v2482 = vmul.f32 %v2481, 2.1237322e-06
    %v2483 = vadd.f32 %v2482, 0.00028619796
    %v2484 = vmul.f32 %v2481, %v2483
    %v2485 = vadd.f32 %v2484, 0.0036580483
    %v2486 = vmul.f32 %v2481, %v2485
    %v2487 = vadd.f32 %v2486, 0.05243302
    %v2488 = vmul.f32 %v2481, %v2487
    %v2489 = vadd.f32 %v2488, 0.18741608
    %v2490 = vmul.f32 %v2481, %v2489
    %v2491 = vadd.f32 %v2490, 1.1283791
    %v2492 = vmul.f32 %v2351, %v2491
    %v2493 = vmul.f32 %v2481, 3.8918573e-05
    %v2494 = vadd.f32 %v2493, 0.001143296
    %v2495 = vmul.f32 %v2481, %v2494
    %v2496 = vadd.f32 %v2495, 0.014752088
    %v2497 = vmul.f32 %v2481, %v2496
    %v2498 = vadd.f32 %v2497, 0.112945676
    %v2499 = vmul.f32 %v2481, %v2498
    %v2500 = vadd.f32 %v2499, 0.4994258
    %v2501 = vmul.f32 %v2481, %v2500
    %v2502 = vadd.f32 %v2501, 1.0
    %v2503 = vrcp.pop %v2502
    %v2504 = vmul.f32 %v2502, %v2503
    %v2505 = vsub.f32 1.0, %v2504
    %v2506 = vmul.f32 %v2503, %v2505
    %v2507 = vadd.f32 %v2503, %v2506
    %vm2508 = vweird.f32 %v2502
    %vm2509 = vweird.f32 %v2503
    %vm2510 = vmor %vm2508, %vm2509
    %v2511 = vsel %vm2510, %v2503, %v2507
    %v2512 = vand.u32 2147483647, %v2502
    %vm2513 = vcmp.eq.f32.partialorder %v2512, 8.507059e+37
    %v2514 = vand.u32 %v2502, 2147483648
    %v2515 = vor.u32 1.1754944e-38, %v2514
    %v2516 = vsel %vm2513, %v2515, %v2511
    %v2517 = vmul.f32 %v2492, %v2516
    %v2518 = vmin.f32 %v2517, 1.0
    %v2519 = vmax.f32 %v2518, -1.0
    %v2520 = vmul.f32 %v2352, %v2352
    %v2521 = vmin.f32 16.0, %v2520
    %v2522 = vmul.f32 %v2521, 2.1237322e-06
    %v2523 = vadd.f32 %v2522, 0.00028619796
    %v2524 = vmul.f32 %v2521, %v2523
    %v2525 = vadd.f32 %v2524, 0.0036580483
    %v2526 = vmul.f32 %v2521, %v2525
    %v2527 = vadd.f32 %v2526, 0.05243302
    %v2528 = vmul.f32 %v2521, %v2527
    %v2529 = vadd.f32 %v2528, 0.18741608
    %v2530 = vmul.f32 %v2521, %v2529
    %v2531 = vadd.f32 %v2530, 1.1283791
    %v2532 = vmul.f32 %v2352, %v2531
    %v2533 = vmul.f32 %v2521, 3.8918573e-05
    %v2534 = vadd.f32 %v2533, 0.001143296
    %v2535 = vmul.f32 %v2521, %v2534
    %v2536 = vadd.f32 %v2535, 0.014752088
    %v2537 = vmul.f32 %v2521, %v2536
    %v2538 = vadd.f32 %v2537, 0.112945676
    %v2539 = vmul.f32 %v2521, %v2538
    %v2540 = vadd.f32 %v2539, 0.4994258
    %v2541 = vmul.f32 %v2521, %v2540
    %v2542 = vadd.f32 %v2541, 1.0
    %v2543 = vrcp.pop %v2542
    %v2544 = vmul.f32 %v2542, %v2543
    %v2545 = vsub.f32 1.0, %v2544
    %v2546 = vmul.f32 %v2543, %v2545
    %v2547 = vadd.f32 %v2543, %v2546
    %vm2548 = vweird.f32 %v2542
    %vm2549 = vweird.f32 %v2543
    %vm2550 = vmor %vm2548, %vm2549
    %v2551 = vsel %vm2550, %v2543, %v2547
    %v2552 = vand.u32 2147483647, %v2542
    %vm2553 = vcmp.eq.f32.partialorder %v2552, 8.507059e+37
    %v2554 = vand.u32 %v2542, 2147483648
    %v2555 = vor.u32 1.1754944e-38, %v2554
    %v2556 = vsel %vm2553, %v2555, %v2551
    %v2557 = vmul.f32 %v2532, %v2556
    %v2558 = vmin.f32 %v2557, 1.0
    %v2559 = vmax.f32 %v2558, -1.0
    %v2560 = vmul.f32 %v2353, %v2353
    %v2561 = vmin.f32 16.0, %v2560
    %v2562 = vmul.f32 %v2561, 2.1237322e-06
    %v2563 = vadd.f32 %v2562, 0.00028619796
    %v2564 = vmul.f32 %v2561, %v2563
    %v2565 = vadd.f32 %v2564, 0.0036580483
    %v2566 = vmul.f32 %v2561, %v2565
    %v2567 = vadd.f32 %v2566, 0.05243302
    %v2568 = vmul.f32 %v2561, %v2567
    %v2569 = vadd.f32 %v2568, 0.18741608
    %v2570 = vmul.f32 %v2561, %v2569
    %v2571 = vadd.f32 %v2570, 1.1283791
    %v2572 = vmul.f32 %v2353, %v2571
    %v2573 = vmul.f32 %v2561, 3.8918573e-05
    %v2574 = vadd.f32 %v2573, 0.001143296
    %v2575 = vmul.f32 %v2561, %v2574
    %v2576 = vadd.f32 %v2575, 0.014752088
    %v2577 = vmul.f32 %v2561, %v2576
    %v2578 = vadd.f32 %v2577, 0.112945676
    %v2579 = vmul.f32 %v2561, %v2578
    %v2580 = vadd.f32 %v2579, 0.4994258
    %v2581 = vmul.f32 %v2561, %v2580
    %v2582 = vadd.f32 %v2581, 1.0
    %v2583 = vrcp.pop %v2582
    %v2584 = vmul.f32 %v2582, %v2583
    %v2585 = vsub.f32 1.0, %v2584
    %v2586 = vmul.f32 %v2583, %v2585
    %v2587 = vadd.f32 %v2583, %v2586
    %vm2588 = vweird.f32 %v2582
    %vm2589 = vweird.f32 %v2583
    %vm2590 = vmor %vm2588, %vm2589
    %v2591 = vsel %vm2590, %v2583, %v2587
    %v2592 = vand.u32 2147483647, %v2582
    %vm2593 = vcmp.eq.f32.partialorder %v2592, 8.507059e+37
    %v2594 = vand.u32 %v2582, 2147483648
    %v2595 = vor.u32 1.1754944e-38, %v2594
    %v2596 = vsel %vm2593, %v2595, %v2591
    %v2597 = vmul.f32 %v2572, %v2596
    %v2598 = vmin.f32 %v2597, 1.0
    %v2599 = vmax.f32 %v2598, -1.0
    %v2600 = vmul.f32 %v2354, %v2354
    %v2601 = vmin.f32 16.0, %v2600
    %v2602 = vmul.f32 %v2601, 2.1237322e-06
    %v2603 = vadd.f32 %v2602, 0.00028619796
    %v2604 = vmul.f32 %v2601, %v2603
    %v2605 = vadd.f32 %v2604, 0.0036580483
    %v2606 = vmul.f32 %v2601, %v2605
    %v2607 = vadd.f32 %v2606, 0.05243302
    %v2608 = vmul.f32 %v2601, %v2607
    %v2609 = vadd.f32 %v2608, 0.18741608
    %v2610 = vmul.f32 %v2601, %v2609
    %v2611 = vadd.f32 %v2610, 1.1283791
    %v2612 = vmul.f32 %v2354, %v2611
    %v2613 = vmul.f32 %v2601, 3.8918573e-05
    %v2614 = vadd.f32 %v2613, 0.001143296
    %v2615 = vmul.f32 %v2601, %v2614
    %v2616 = vadd.f32 %v2615, 0.014752088
    %v2617 = vmul.f32 %v2601, %v2616
    %v2618 = vadd.f32 %v2617, 0.112945676
    %v2619 = vmul.f32 %v2601, %v2618
    %v2620 = vadd.f32 %v2619, 0.4994258
    %v2621 = vmul.f32 %v2601, %v2620
    %v2622 = vadd.f32 %v2621, 1.0
    %v2623 = vrcp.pop %v2622
    %v2624 = vmul.f32 %v2622, %v2623
    %v2625 = vsub.f32 1.0, %v2624
    %v2626 = vmul.f32 %v2623, %v2625
    %v2627 = vadd.f32 %v2623, %v2626
    %vm2628 = vweird.f32 %v2622
    %vm2629 = vweird.f32 %v2623
    %vm2630 = vmor %vm2628, %vm2629
    %v2631 = vsel %vm2630, %v2623, %v2627
    %v2632 = vand.u32 2147483647, %v2622
    %vm2633 = vcmp.eq.f32.partialorder %v2632, 8.507059e+37
    %v2634 = vand.u32 %v2622, 2147483648
    %v2635 = vor.u32 1.1754944e-38, %v2634
    %v2636 = vsel %vm2633, %v2635, %v2631
    %v2637 = vmul.f32 %v2612, %v2636
    %v2638 = vmin.f32 %v2637, 1.0
    %v2639 = vmax.f32 %v2638, -1.0
    %v2640 = vmul.f32 %v2355, %v2355
    %v2641 = vmin.f32 16.0, %v2640
    %v2642 = vmul.f32 %v2641, 2.1237322e-06
    %v2643 = vadd.f32 %v2642, 0.00028619796
    %v2644 = vmul.f32 %v2641, %v2643
    %v2645 = vadd.f32 %v2644, 0.0036580483
    %v2646 = vmul.f32 %v2641, %v2645
    %v2647 = vadd.f32 %v2646, 0.05243302
    %v2648 = vmul.f32 %v2641, %v2647
    %v2649 = vadd.f32 %v2648, 0.18741608
    %v2650 = vmul.f32 %v2641, %v2649
    %v2651 = vadd.f32 %v2650, 1.1283791
    %v2652 = vmul.f32 %v2355, %v2651
    %v2653 = vmul.f32 %v2641, 3.8918573e-05
    %v2654 = vadd.f32 %v2653, 0.001143296
    %v2655 = vmul.f32 %v2641, %v2654
    %v2656 = vadd.f32 %v2655, 0.014752088
    %v2657 = vmul.f32 %v2641, %v2656
    %v2658 = vadd.f32 %v2657, 0.112945676
    %v2659 = vmul.f32 %v2641, %v2658
    %v2660 = vadd.f32 %v2659, 0.4994258
    %v2661 = vmul.f32 %v2641, %v2660
    %v2662 = vadd.f32 %v2661, 1.0
    %v2663 = vrcp.pop %v2662
    %v2664 = vmul.f32 %v2662, %v2663
    %v2665 = vsub.f32 1.0, %v2664
    %v2666 = vmul.f32 %v2663, %v2665
    %v2667 = vadd.f32 %v2663, %v2666
    %vm2668 = vweird.f32 %v2662
    %vm2669 = vweird.f32 %v2663
    %vm2670 = vmor %vm2668, %vm2669
    %v2671 = vsel %vm2670, %v2663, %v2667
    %v2672 = vand.u32 2147483647, %v2662
    %vm2673 = vcmp.eq.f32.partialorder %v2672, 8.507059e+37
    %v2674 = vand.u32 %v2662, 2147483648
    %v2675 = vor.u32 1.1754944e-38, %v2674
    %v2676 = vsel %vm2673, %v2675, %v2671
    %v2677 = vmul.f32 %v2652, %v2676
    %v2678 = vmin.f32 %v2677, 1.0
    %v2679 = vmax.f32 %v2678, -1.0
    %v2680 = vmul.f32 %v2356, %v2356
    %v2681 = vmin.f32 16.0, %v2680
    %v2682 = vmul.f32 %v2681, 2.1237322e-06
    %v2683 = vadd.f32 %v2682, 0.00028619796
    %v2684 = vmul.f32 %v2681, %v2683
    %v2685 = vadd.f32 %v2684, 0.0036580483
    %v2686 = vmul.f32 %v2681, %v2685
    %v2687 = vadd.f32 %v2686, 0.05243302
    %v2688 = vmul.f32 %v2681, %v2687
    %v2689 = vadd.f32 %v2688, 0.18741608
    %v2690 = vmul.f32 %v2681, %v2689
    %v2691 = vadd.f32 %v2690, 1.1283791
    %v2692 = vmul.f32 %v2356, %v2691
    %v2693 = vmul.f32 %v2681, 3.8918573e-05
    %v2694 = vadd.f32 %v2693, 0.001143296
    %v2695 = vmul.f32 %v2681, %v2694
    %v2696 = vadd.f32 %v2695, 0.014752088
    %v2697 = vmul.f32 %v2681, %v2696
    %v2698 = vadd.f32 %v2697, 0.112945676
    %v2699 = vmul.f32 %v2681, %v2698
    %v2700 = vadd.f32 %v2699, 0.4994258
    %v2701 = vmul.f32 %v2681, %v2700
    %v2702 = vadd.f32 %v2701, 1.0
    %v2703 = vrcp.pop %v2702
    %v2704 = vmul.f32 %v2702, %v2703
    %v2705 = vsub.f32 1.0, %v2704
    %v2706 = vmul.f32 %v2703, %v2705
    %v2707 = vadd.f32 %v2703, %v2706
    %vm2708 = vweird.f32 %v2702
    %vm2709 = vweird.f32 %v2703
    %vm2710 = vmor %vm2708, %vm2709
    %v2711 = vsel %vm2710, %v2703, %v2707
    %v2712 = vand.u32 2147483647, %v2702
    %vm2713 = vcmp.eq.f32.partialorder %v2712, 8.507059e+37
    %v2714 = vand.u32 %v2702, 2147483648
    %v2715 = vor.u32 1.1754944e-38, %v2714
    %v2716 = vsel %vm2713, %v2715, %v2711
    %v2717 = vmul.f32 %v2692, %v2716
    %v2718 = vmin.f32 %v2717, 1.0
    %v2719 = vmax.f32 %v2718, -1.0
    %v2720 = vmul.f32 %v2357, %v2357
    %v2721 = vmin.f32 16.0, %v2720
    %v2722 = vmul.f32 %v2721, 2.1237322e-06
    %v2723 = vadd.f32 %v2722, 0.00028619796
    %v2724 = vmul.f32 %v2721, %v2723
    %v2725 = vadd.f32 %v2724, 0.0036580483
    %v2726 = vmul.f32 %v2721, %v2725
    %v2727 = vadd.f32 %v2726, 0.05243302
    %v2728 = vmul.f32 %v2721, %v2727
    %v2729 = vadd.f32 %v2728, 0.18741608
    %v2730 = vmul.f32 %v2721, %v2729
    %v2731 = vadd.f32 %v2730, 1.1283791
    %v2732 = vmul.f32 %v2357, %v2731
    %v2733 = vmul.f32 %v2721, 3.8918573e-05
    %v2734 = vadd.f32 %v2733, 0.001143296
    %v2735 = vmul.f32 %v2721, %v2734
    %v2736 = vadd.f32 %v2735, 0.014752088
    %v2737 = vmul.f32 %v2721, %v2736
    %v2738 = vadd.f32 %v2737, 0.112945676
    %v2739 = vmul.f32 %v2721, %v2738
    %v2740 = vadd.f32 %v2739, 0.4994258
    %v2741 = vmul.f32 %v2721, %v2740
    %v2742 = vadd.f32 %v2741, 1.0
    %v2743 = vrcp.pop %v2742
    %v2744 = vmul.f32 %v2742, %v2743
    %v2745 = vsub.f32 1.0, %v2744
    %v2746 = vmul.f32 %v2743, %v2745
    %v2747 = vadd.f32 %v2743, %v2746
    %vm2748 = vweird.f32 %v2742
    %vm2749 = vweird.f32 %v2743
    %vm2750 = vmor %vm2748, %vm2749
    %v2751 = vsel %vm2750, %v2743, %v2747
    %v2752 = vand.u32 2147483647, %v2742
    %vm2753 = vcmp.eq.f32.partialorder %v2752, 8.507059e+37
    %v2754 = vand.u32 %v2742, 2147483648
    %v2755 = vor.u32 1.1754944e-38, %v2754
    %v2756 = vsel %vm2753, %v2755, %v2751
    %v2757 = vmul.f32 %v2732, %v2756
    %v2758 = vmin.f32 %v2757, 1.0
    %v2759 = vmax.f32 %v2758, -1.0
    %v2760 = vmul.f32 %v2358, %v2358
    %v2761 = vmin.f32 16.0, %v2760
    %v2762 = vmul.f32 %v2761, 2.1237322e-06
    %v2763 = vadd.f32 %v2762, 0.00028619796
    %v2764 = vmul.f32 %v2761, %v2763
    %v2765 = vadd.f32 %v2764, 0.0036580483
    %v2766 = vmul.f32 %v2761, %v2765
    %v2767 = vadd.f32 %v2766, 0.05243302
    %v2768 = vmul.f32 %v2761, %v2767
    %v2769 = vadd.f32 %v2768, 0.18741608
    %v2770 = vmul.f32 %v2761, %v2769
    %v2771 = vadd.f32 %v2770, 1.1283791
    %v2772 = vmul.f32 %v2358, %v2771
    %v2773 = vmul.f32 %v2761, 3.8918573e-05
    %v2774 = vadd.f32 %v2773, 0.001143296
    %v2775 = vmul.f32 %v2761, %v2774
    %v2776 = vadd.f32 %v2775, 0.014752088
    %v2777 = vmul.f32 %v2761, %v2776
    %v2778 = vadd.f32 %v2777, 0.112945676
    %v2779 = vmul.f32 %v2761, %v2778
    %v2780 = vadd.f32 %v2779, 0.4994258
    %v2781 = vmul.f32 %v2761, %v2780
    %v2782 = vadd.f32 %v2781, 1.0
    %v2783 = vrcp.pop %v2782
    %v2784 = vmul.f32 %v2782, %v2783
    %v2785 = vsub.f32 1.0, %v2784
    %v2786 = vmul.f32 %v2783, %v2785
    %v2787 = vadd.f32 %v2783, %v2786
    %vm2788 = vweird.f32 %v2782
    %vm2789 = vweird.f32 %v2783
    %vm2790 = vmor %vm2788, %vm2789
    %v2791 = vsel %vm2790, %v2783, %v2787
    %v2792 = vand.u32 2147483647, %v2782
    %vm2793 = vcmp.eq.f32.partialorder %v2792, 8.507059e+37
    %v2794 = vand.u32 %v2782, 2147483648
    %v2795 = vor.u32 1.1754944e-38, %v2794
    %v2796 = vsel %vm2793, %v2795, %v2791
    %v2797 = vmul.f32 %v2772, %v2796
    %v2798 = vmin.f32 %v2797, 1.0
    %v2799 = vmax.f32 %v2798, -1.0
    %v2800 = vmul.f32 %v2359, %v2359
    %v2801 = vmin.f32 16.0, %v2800
    %v2802 = vmul.f32 %v2801, 2.1237322e-06
    %v2803 = vadd.f32 %v2802, 0.00028619796
    %v2804 = vmul.f32 %v2801, %v2803
    %v2805 = vadd.f32 %v2804, 0.0036580483
    %v2806 = vmul.f32 %v2801, %v2805
    %v2807 = vadd.f32 %v2806, 0.05243302
    %v2808 = vmul.f32 %v2801, %v2807
    %v2809 = vadd.f32 %v2808, 0.18741608
    %v2810 = vmul.f32 %v2801, %v2809
    %v2811 = vadd.f32 %v2810, 1.1283791
    %v2812 = vmul.f32 %v2359, %v2811
    %v2813 = vmul.f32 %v2801, 3.8918573e-05
    %v2814 = vadd.f32 %v2813, 0.001143296
    %v2815 = vmul.f32 %v2801, %v2814
    %v2816 = vadd.f32 %v2815, 0.014752088
    %v2817 = vmul.f32 %v2801, %v2816
    %v2818 = vadd.f32 %v2817, 0.112945676
    %v2819 = vmul.f32 %v2801, %v2818
    %v2820 = vadd.f32 %v2819, 0.4994258
    %v2821 = vmul.f32 %v2801, %v2820
    %v2822 = vadd.f32 %v2821, 1.0
    %v2823 = vrcp.pop %v2822
    %v2824 = vmul.f32 %v2822, %v2823
    %v2825 = vsub.f32 1.0, %v2824
    %v2826 = vmul.f32 %v2823, %v2825
    %v2827 = vadd.f32 %v2823, %v2826
    %vm2828 = vweird.f32 %v2822
    %vm2829 = vweird.f32 %v2823
    %vm2830 = vmor %vm2828, %vm2829
    %v2831 = vsel %vm2830, %v2823, %v2827
    %v2832 = vand.u32 2147483647, %v2822
    %vm2833 = vcmp.eq.f32.partialorder %v2832, 8.507059e+37
    %v2834 = vand.u32 %v2822, 2147483648
    %v2835 = vor.u32 1.1754944e-38, %v2834
    %v2836 = vsel %vm2833, %v2835, %v2831
    %v2837 = vmul.f32 %v2812, %v2836
    %v2838 = vmin.f32 %v2837, 1.0
    %v2839 = vmax.f32 %v2838, -1.0
    %v2840 = vadd.f32 %v2399, 1.0
    %v2841 = vadd.f32 %v2439, 1.0
    %v2842 = vadd.f32 %v2479, 1.0
    %v2843 = vadd.f32 %v2519, 1.0
    %v2844 = vadd.f32 %v2559, 1.0
    %v2845 = vadd.f32 %v2599, 1.0
    %v2846 = vadd.f32 %v2639, 1.0
    %v2847 = vadd.f32 %v2679, 1.0
    %v2848 = vadd.f32 %v2719, 1.0
    %v2849 = vadd.f32 %v2759, 1.0
    %v2850 = vadd.f32 %v2799, 1.0
    %v2851 = vadd.f32 %v2839, 1.0
    %v2852 = vmul.f32 %v2336, %v2840
    %v2853 = vmul.f32 %v2337, %v2841
    %v2854 = vmul.f32 %v2338, %v2842
    %v2855 = vmul.f32 %v2339, %v2843
    %v2856 = vmul.f32 %v2340, %v2844
    %v2857 = vmul.f32 %v2341, %v2845
    %v2858 = vmul.f32 %v2342, %v2846
    %v2859 = vmul.f32 %v2343, %v2847
    %v2860 = vmul.f32 %v2344, %v2848
    %v2861 = vmul.f32 %v2345, %v2849
    %v2862 = vmul.f32 %v2346, %v2850
    %v2863 = vmul.f32 %v2347, %v2851
    %v2864 = vpack.c.bf16 %v2854, %v2852
    %v2865 = vpack.c.bf16 %v2855, %v2853
    %v2866 = vpack.c.bf16 %v2858, %v2856
    %v2867 = vpack.c.bf16 %v2859, %v2857
    %v2868 = vpack.c.bf16 %v2862, %v2860
    %v2869 = vpack.c.bf16 %v2863, %v2861
    %v2870 = vperm.slane %v180, 5
    %v2903 = vunpack.c.l.b16 %v2171
    %v2904 = vunpack.c.l.b16 %v2172
    %v2905 = vunpack.c.l.b16 %v2173
    %v2906 = vunpack.c.l.b16 %v2174
    %v2907 = vunpack.c.l.b16 %v2175
    %v2908 = vunpack.c.l.b16 %v2176
    %v2909 = vunpack.c.l.b16 %v2177
    %v2910 = vunpack.c.l.b16 %v2178
    %v2911 = vunpack.c.l.b16 %v2179
    %v2912 = vunpack.c.l.b16 %v2180
    %v2913 = vunpack.c.l.b16 %v2181
    %v2914 = vunpack.c.l.b16 %v2182
    %v2915 = vunpack.c.l.b16 %v2183
    %v2916 = vunpack.c.l.b16 %v2184
    %v2917 = vunpack.c.l.b16 %v2185
    %v2918 = vunpack.c.l.b16 %v2186
    %v2919 = vunpack.c.l.b16 %v2187
    %v2920 = vunpack.c.l.b16 %v2188
    %v2921 = vunpack.c.l.b16 %v2189
    %v2922 = vunpack.c.l.b16 %v2190
    %v2923 = vunpack.c.l.b16 %v2191
    %v2924 = vunpack.c.l.b16 %v2192
    %v2925 = vunpack.c.l.b16 %v2193
    %v2926 = vunpack.c.l.b16 %v2194
    %v2927 = vunpack.c.l.b16 %v2195
    %v2928 = vunpack.c.l.b16 %v2196
    %v2929 = vunpack.c.l.b16 %v2197
    %v2930 = vunpack.c.l.b16 %v2198
    %v2931 = vunpack.c.l.b16 %v2199
    %v2932 = vunpack.c.l.b16 %v2200
    %v2933 = vunpack.c.l.b16 %v2201
    %v2934 = vunpack.c.l.b16 %v2202
    %v2935 = vpack.c.b16 %v2904, %v2903
    %v2936 = vpack.c.b16 %v2906, %v2905
    %v2937 = vpack.c.b16 %v2908, %v2907
    %v2938 = vpack.c.b16 %v2910, %v2909
    %v2939 = vpack.c.b16 %v2912, %v2911
    %v2940 = vpack.c.b16 %v2914, %v2913
    %v2941 = vpack.c.b16 %v2916, %v2915
    %v2942 = vpack.c.b16 %v2918, %v2917
    %v2943 = vpack.c.b16 %v2920, %v2919
    %v2944 = vpack.c.b16 %v2922, %v2921
    %v2945 = vpack.c.b16 %v2924, %v2923
    %v2946 = vpack.c.b16 %v2926, %v2925
    %v2947 = vpack.c.b16 %v2928, %v2927
    %v2948 = vpack.c.b16 %v2930, %v2929
    %v2949 = vpack.c.b16 %v2932, %v2931
    %v2950 = vpack.c.b16 %v2934, %v2933
    %2967 = vmatpush.bf16.msra.mxu0 %v2942
    %2968 = vmatpush.bf16.msra.mxu0 %v2941
    %2969 = vmatpush.bf16.msra.mxu0 %v2940
    %2970 = vmatpush.bf16.msra.mxu0 %v2939
    %2971 = vmatpush.bf16.msra.mxu0 %v2938
    %2972 = vmatpush.bf16.msra.mxu0 %v2937
    %2973 = vmatpush.bf16.msra.mxu0 %v2936
    %2974 = vmatpush.bf16.msra.mxu0 %v2935
    %2975 = vmatmul.bf16.gmra.mxu0 %v2864
    %v2976 = vpop.f32.mrf.mxu0
    %v2977 = vadd.f32 %v2870, %v2976
    %v2978 = vpop.f32.mrf.mxu0
    %v2979 = vadd.f32 %v2870, %v2978
    %2980 = vmatmul.bf16.gmra.mxu0 %v2866
    %v2981 = vpop.f32.mrf.mxu0
    %v2982 = vadd.f32 %v2870, %v2981
    %v2983 = vpop.f32.mrf.mxu0
    %v2984 = vadd.f32 %v2870, %v2983
    %2985 = vmatmul.bf16.gmra.mxu0 %v2868
    %v2986 = vpop.f32.mrf.mxu0
    %v2987 = vadd.f32 %v2870, %v2986
    %v2988 = vpop.f32.mrf.mxu0
    %v2989 = vadd.f32 %v2870, %v2988
    %2990 = vdwg.mxu0
    %2991 = vmatpush.bf16.msra.mxu0 %v2950
    %2992 = vmatpush.bf16.msra.mxu0 %v2949
    %2993 = vmatpush.bf16.msra.mxu0 %v2948
    %2994 = vmatpush.bf16.msra.mxu0 %v2947
    %2995 = vmatpush.bf16.msra.mxu0 %v2946
    %2996 = vmatpush.bf16.msra.mxu0 %v2945
    %2997 = vmatpush.bf16.msra.mxu0 %v2944
    %2998 = vmatpush.bf16.msra.mxu0 %v2943
    %2999 = vmatmul.bf16.gmra.mxu0 %v2865
    %v3000 = vpop.f32.mrf.mxu0
    %v3001 = vadd.f32 %v2977, %v3000
    %v3002 = vpop.f32.mrf.mxu0
    %v3003 = vadd.f32 %v2979, %v3002
    %3004 = vmatmul.bf16.gmra.mxu0 %v2867
    %v3005 = vpop.f32.mrf.mxu0
    %v3006 = vadd.f32 %v2982, %v3005
    %v3007 = vpop.f32.mrf.mxu0
    %v3008 = vadd.f32 %v2984, %v3007
    %3009 = vmatmul.bf16.gmra.mxu0 %v2869
    %v3010 = vpop.f32.mrf.mxu0
    %v3011 = vadd.f32 %v2987, %v3010
    %v3012 = vpop.f32.mrf.mxu0
    %v3013 = vadd.f32 %v2989, %v3012
    %3014 = vdwg.mxu0
    %v3015 = vadd.f32 %v2009, %v3001
    %v3016 = vadd.f32 %v2010, %v3003
    %v3017 = vadd.f32 %v2011, %v3006
    %v3018 = vadd.f32 %v2012, %v3008
    %v3019 = vadd.f32 %v2013, %v3011
    %v3020 = vadd.f32 %v2014, %v3013
    %3021 = vadd.xlane.f32.xlu0 %v3015
    %v3022 = vpop.xlane.xlu0 %3021
    %3023 = vadd.xlane.f32.xlu0 %v3016
    %v3024 = vpop.xlane.xlu0 %3023
    %3025 = vadd.xlane.f32.xlu0 %v3017
    %v3026 = vpop.xlane.xlu0 %3025
    %3027 = vadd.xlane.f32.xlu0 %v3018
    %v3028 = vpop.xlane.xlu0 %3027
    %3029 = vadd.xlane.f32.xlu0 %v3019
    %v3030 = vpop.xlane.xlu0 %3029
    %3031 = vadd.xlane.f32.xlu0 %v3020
    %v3032 = vpop.xlane.xlu0 %3031
    %v3033 = vmul.f32 %v3022, 0.020833334
    %v3034 = vmul.f32 %v3024, 0.020833334
    %v3035 = vmul.f32 %v3026, 0.020833334
    %v3036 = vmul.f32 %v3028, 0.020833334
    %v3037 = vmul.f32 %v3030, 0.020833334
    %v3038 = vmul.f32 %v3032, 0.020833334
    %v3039 = vsub.f32 %v3015, %v3033
    %v3040 = vsub.f32 %v3016, %v3034
    %v3041 = vsub.f32 %v3017, %v3035
    %v3042 = vsub.f32 %v3018, %v3036
    %v3043 = vsub.f32 %v3019, %v3037
    %v3044 = vsub.f32 %v3020, %v3038
    %v3045 = vmul.f32 %v3039, %v177
    %v3046 = vmul.f32 %v3040, %v177
    %v3047 = vmul.f32 %v3041, %v177
    %v3048 = vmul.f32 %v3042, %v177
    %v3049 = vmul.f32 %v3043, %v177
    %v3050 = vmul.f32 %v3044, %v177
    %v3051 = vmul.f32 %v3045, %v3045
    %v3052 = vmul.f32 %v3046, %v3046
    %v3053 = vmul.f32 %v3047, %v3047
    %v3054 = vmul.f32 %v3048, %v3048
    %v3055 = vmul.f32 %v3049, %v3049
    %v3056 = vmul.f32 %v3050, %v3050
    %3057 = vadd.xlane.f32.xlu0 %v3051
    %v3058 = vpop.xlane.xlu0 %3057
    %3059 = vadd.xlane.f32.xlu0 %v3052
    %v3060 = vpop.xlane.xlu0 %3059
    %3061 = vadd.xlane.f32.xlu0 %v3053
    %v3062 = vpop.xlane.xlu0 %3061
    %3063 = vadd.xlane.f32.xlu0 %v3054
    %v3064 = vpop.xlane.xlu0 %3063
    %3065 = vadd.xlane.f32.xlu0 %v3055
    %v3066 = vpop.xlane.xlu0 %3065
    %3067 = vadd.xlane.f32.xlu0 %v3056
    %v3068 = vpop.xlane.xlu0 %3067
    %v3069 = vmul.f32 %v3058, 0.020833334
    %v3070 = vmul.f32 %v3060, 0.020833334
    %v3071 = vmul.f32 %v3062, 0.020833334
    %v3072 = vmul.f32 %v3064, 0.020833334
    %v3073 = vmul.f32 %v3066, 0.020833334
    %v3074 = vmul.f32 %v3068, 0.020833334
    %v3075 = vadd.f32 %v3069, 1e-05
    %v3076 = vadd.f32 %v3070, 1e-05
    %v3077 = vadd.f32 %v3071, 1e-05
    %v3078 = vadd.f32 %v3072, 1e-05
    %v3079 = vadd.f32 %v3073, 1e-05
    %v3080 = vadd.f32 %v3074, 1e-05
    %v3081 = vrsqrt.pop %v3075
    %v3082 = vmul.f32 %v3081, %v3075
    %v3083 = vmul.f32 %v3082, %v3081
    %v3084 = vmul.f32 0.5, %v3083
    %v3085 = vsub.f32 1.5, %v3084
    %v3086 = vmul.f32 %v3081, %v3085
    %vm3087 = vweird.f32 %v3075
    %vm3088 = vweird.f32 %v3081
    %vm3089 = vmor %vm3087, %vm3088
    %v3090 = vsel %vm3089, %v3081, %v3086
    %v3091 = vrsqrt.pop %v3076
    %v3092 = vmul.f32 %v3091, %v3076
    %v3093 = vmul.f32 %v3092, %v3091
    %v3094 = vmul.f32 0.5, %v3093
    %v3095 = vsub.f32 1.5, %v3094
    %v3096 = vmul.f32 %v3091, %v3095
    %vm3097 = vweird.f32 %v3076
    %vm3098 = vweird.f32 %v3091
    %vm3099 = vmor %vm3097, %vm3098
    %v3100 = vsel %vm3099, %v3091, %v3096
    %v3101 = vrsqrt.pop %v3077
    %v3102 = vmul.f32 %v3101, %v3077
    %v3103 = vmul.f32 %v3102, %v3101
    %v3104 = vmul.f32 0.5, %v3103
    %v3105 = vsub.f32 1.5, %v3104
    %v3106 = vmul.f32 %v3101, %v3105
    %vm3107 = vweird.f32 %v3077
    %vm3108 = vweird.f32 %v3101
    %vm3109 = vmor %vm3107, %vm3108
    %v3110 = vsel %vm3109, %v3101, %v3106
    %v3111 = vrsqrt.pop %v3078
    %v3112 = vmul.f32 %v3111, %v3078
    %v3113 = vmul.f32 %v3112, %v3111
    %v3114 = vmul.f32 0.5, %v3113
    %v3115 = vsub.f32 1.5, %v3114
    %v3116 = vmul.f32 %v3111, %v3115
    %vm3117 = vweird.f32 %v3078
    %vm3118 = vweird.f32 %v3111
    %vm3119 = vmor %vm3117, %vm3118
    %v3120 = vsel %vm3119, %v3111, %v3116
    %v3121 = vrsqrt.pop %v3079
    %v3122 = vmul.f32 %v3121, %v3079
    %v3123 = vmul.f32 %v3122, %v3121
    %v3124 = vmul.f32 0.5, %v3123
    %v3125 = vsub.f32 1.5, %v3124
    %v3126 = vmul.f32 %v3121, %v3125
    %vm3127 = vweird.f32 %v3079
    %vm3128 = vweird.f32 %v3121
    %vm3129 = vmor %vm3127, %vm3128
    %v3130 = vsel %vm3129, %v3121, %v3126
    %v3131 = vrsqrt.pop %v3080
    %v3132 = vmul.f32 %v3131, %v3080
    %v3133 = vmul.f32 %v3132, %v3131
    %v3134 = vmul.f32 0.5, %v3133
    %v3135 = vsub.f32 1.5, %v3134
    %v3136 = vmul.f32 %v3131, %v3135
    %vm3137 = vweird.f32 %v3080
    %vm3138 = vweird.f32 %v3131
    %vm3139 = vmor %vm3137, %vm3138
    %v3140 = vsel %vm3139, %v3131, %v3136
    %v3141 = vmul.f32 %v3045, %v3090
    %v3142 = vmul.f32 %v3046, %v3100
    %v3143 = vmul.f32 %v3047, %v3110
    %v3144 = vmul.f32 %v3048, %v3120
    %v3145 = vmul.f32 %v3049, %v3130
    %v3146 = vmul.f32 %v3050, %v3140
    %v3147 = vperm.slane %v178, 4
    %v3148 = vmul.f32 %v3141, %v3147
    %v3149 = vmul.f32 %v3142, %v3147
    %v3150 = vmul.f32 %v3143, %v3147
    %v3151 = vmul.f32 %v3144, %v3147
    %v3152 = vmul.f32 %v3145, %v3147
    %v3153 = vmul.f32 %v3146, %v3147
    %v3154 = vperm.slane %v178, 5
    %v3155 = vadd.f32 %v3148, %v3154
    %v3156 = vadd.f32 %v3149, %v3154
    %v3157 = vadd.f32 %v3150, %v3154
    %v3158 = vadd.f32 %v3151, %v3154
    %v3159 = vadd.f32 %v3152, %v3154
    %v3160 = vadd.f32 %v3153, %v3154
    %s3161 = scalar_lea.vmem [#allocation7], 192
    %v3162 = vld [vmem:[%s3161] sm:$0xff]
    %v3163 = vld [vmem:[%s3161 + $0x8] sm:$0xf]
    %v3164 = vld [vmem:[%s3161 + $0xc] sm:$0xff]
    %v3165 = vld [vmem:[%s3161 + $0x14] sm:$0xf]
    %v3166 = vld [vmem:[%s3161 + $0x18] sm:$0xff]
    %v3167 = vld [vmem:[%s3161 + $0x20] sm:$0xf]
    %v3168 = vld [vmem:[%s3161 + $0x24] sm:$0xff]
    %v3169 = vld [vmem:[%s3161 + $0x2c] sm:$0xf]
    %v3170 = vld [vmem:[%s3161 + $0x30] sm:$0xff]
    %v3171 = vld [vmem:[%s3161 + $0x38] sm:$0xf]
    %v3172 = vld [vmem:[%s3161 + $0x3c] sm:$0xff]
    %v3173 = vld [vmem:[%s3161 + $0x44] sm:$0xf]
    %v3174 = vld [vmem:[%s3161 + $0x48] sm:$0xff]
    %v3175 = vld [vmem:[%s3161 + $0x50] sm:$0xf]
    %v3176 = vld [vmem:[%s3161 + $0x54] sm:$0xff]
    %v3177 = vld [vmem:[%s3161 + $0x5c] sm:$0xf]
    %v3178 = vld [vmem:[%s3161 + $0x60] sm:$0xff]
    %v3179 = vld [vmem:[%s3161 + $0x68] sm:$0xf]
    %v3180 = vld [vmem:[%s3161 + $0x6c] sm:$0xff]
    %v3181 = vld [vmem:[%s3161 + $0x74] sm:$0xf]
    %v3182 = vld [vmem:[%s3161 + $0x78] sm:$0xff]
    %v3183 = vld [vmem:[%s3161 + $0x80] sm:$0xf]
    %v3184 = vld [vmem:[%s3161 + $0x84] sm:$0xff]
    %v3185 = vld [vmem:[%s3161 + $0x8c] sm:$0xf]
    %v3186 = vld [vmem:[%s3161 + $0x90] sm:$0xff]
    %v3187 = vld [vmem:[%s3161 + $0x98] sm:$0xf]
    %v3188 = vld [vmem:[%s3161 + $0x9c] sm:$0xff]
    %v3189 = vld [vmem:[%s3161 + $0xa4] sm:$0xf]
    %v3190 = vld [vmem:[%s3161 + $0xa8] sm:$0xff]
    %v3191 = vld [vmem:[%s3161 + $0xb0] sm:$0xf]
    %v3192 = vld [vmem:[%s3161 + $0xb4] sm:$0xff]
    %v3193 = vld [vmem:[%s3161 + $0xbc] sm:$0xf]
    %v3194 = vpack.c.bf16 %v3156, %v3155
    %v3195 = vpack.c.bf16 %v3158, %v3157
    %v3196 = vpack.c.bf16 %v3160, %v3159
    %v3197 = vperm.slane %v180, 6
    %v3198 = vperm.slane %v181, 6
    %v3199 = vperm.slane %v182, 6
    %v3232 = vunpack.c.l.b16 %v3162
    %v3233 = vunpack.c.h.b16 %v3162
    %v3234 = vunpack.c.l.b16 %v3163
    %v3235 = vunpack.c.l.b16 %v3164
    %v3236 = vunpack.c.h.b16 %v3164
    %v3237 = vunpack.c.l.b16 %v3165
    %v3238 = vunpack.c.l.b16 %v3166
    %v3239 = vunpack.c.h.b16 %v3166
    %v3240 = vunpack.c.l.b16 %v3167
    %v3241 = vunpack.c.l.b16 %v3168
    %v3242 = vunpack.c.h.b16 %v3168
    %v3243 = vunpack.c.l.b16 %v3169
    %v3244 = vunpack.c.l.b16 %v3170
    %v3245 = vunpack.c.h.b16 %v3170
    %v3246 = vunpack.c.l.b16 %v3171
    %v3247 = vunpack.c.l.b16 %v3172
    %v3248 = vunpack.c.h.b16 %v3172
    %v3249 = vunpack.c.l.b16 %v3173
    %v3250 = vunpack.c.l.b16 %v3174
    %v3251 = vunpack.c.h.b16 %v3174
    %v3252 = vunpack.c.l.b16 %v3175
    %v3253 = vunpack.c.l.b16 %v3176
    %v3254 = vunpack.c.h.b16 %v3176
    %v3255 = vunpack.c.l.b16 %v3177
    %v3256 = vunpack.c.l.b16 %v3178
    %v3257 = vunpack.c.h.b16 %v3178
    %v3258 = vunpack.c.l.b16 %v3179
    %v3259 = vunpack.c.l.b16 %v3180
    %v3260 = vunpack.c.h.b16 %v3180
    %v3261 = vunpack.c.l.b16 %v3181
    %v3262 = vunpack.c.l.b16 %v3182
    %v3263 = vunpack.c.h.b16 %v3182
    %v3264 = vunpack.c.l.b16 %v3183
    %v3265 = vunpack.c.l.b16 %v3184
    %v3266 = vunpack.c.h.b16 %v3184
    %v3267 = vunpack.c.l.b16 %v3185
    %v3268 = vunpack.c.l.b16 %v3186
    %v3269 = vunpack.c.h.b16 %v3186
    %v3270 = vunpack.c.l.b16 %v3187
    %v3271 = vunpack.c.l.b16 %v3188
    %v3272 = vunpack.c.h.b16 %v3188
    %v3273 = vunpack.c.l.b16 %v3189
    %v3274 = vunpack.c.l.b16 %v3190
    %v3275 = vunpack.c.h.b16 %v3190
    %v3276 = vunpack.c.l.b16 %v3191
    %v3277 = vunpack.c.l.b16 %v3192
    %v3278 = vunpack.c.h.b16 %v3192
    %v3279 = vunpack.c.l.b16 %v3193
    %v3280 = vpack.c.b16 %v3235, %v3232
    %v3281 = vpack.c.b16 %v3236, %v3233
    %v3282 = vpack.c.b16 %v3237, %v3234
    %v3283 = vpack.c.b16 %v3241, %v3238
    %v3284 = vpack.c.b16 %v3242, %v3239
    %v3285 = vpack.c.b16 %v3243, %v3240
    %v3286 = vpack.c.b16 %v3247, %v3244
    %v3287 = vpack.c.b16 %v3248, %v3245
    %v3288 = vpack.c.b16 %v3249, %v3246
    %v3289 = vpack.c.b16 %v3253, %v3250
    %v3290 = vpack.c.b16 %v3254, %v3251
    %v3291 = vpack.c.b16 %v3255, %v3252
    %v3292 = vpack.c.b16 %v3259, %v3256
    %v3293 = vpack.c.b16 %v3260, %v3257
    %v3294 = vpack.c.b16 %v3261, %v3258
    %v3295 = vpack.c.b16 %v3265, %v3262
    %v3296 = vpack.c.b16 %v3266, %v3263
    %v3297 = vpack.c.b16 %v3267, %v3264
    %v3298 = vpack.c.b16 %v3271, %v3268
    %v3299 = vpack.c.b16 %v3272, %v3269
    %v3300 = vpack.c.b16 %v3273, %v3270
    %v3301 = vpack.c.b16 %v3277, %v3274
    %v3302 = vpack.c.b16 %v3278, %v3275
    %v3303 = vpack.c.b16 %v3279, %v3276
    %3328 = vmatpush.bf16.msra.mxu0 %v3301
    %3329 = vmatpush.bf16.msra.mxu0 %v3298
    %3330 = vmatpush.bf16.msra.mxu0 %v3295
    %3331 = vmatpush.bf16.msra.mxu0 %v3292
    %3332 = vmatpush.bf16.msra.mxu0 %v3289
    %3333 = vmatpush.bf16.msra.mxu0 %v3286
    %3334 = vmatpush.bf16.msra.mxu0 %v3283
    %3335 = vmatpush.bf16.msra.mxu0 %v3280
    %3336 = vmatmul.bf16.gmra.mxu0 %v3194
    %v3337 = vpop.f32.mrf.mxu0
    %v3338 = vadd.f32 %v3197, %v3337
    %v3339 = vpop.f32.mrf.mxu0
    %v3340 = vadd.f32 %v3197, %v3339
    %3341 = vmatmul.bf16.gmra.mxu0 %v3195
    %v3342 = vpop.f32.mrf.mxu0
    %v3343 = vadd.f32 %v3197, %v3342
    %v3344 = vpop.f32.mrf.mxu0
    %v3345 = vadd.f32 %v3197, %v3344
    %3346 = vmatmul.bf16.gmra.mxu0 %v3196
    %v3347 = vpop.f32.mrf.mxu0
    %v3348 = vadd.f32 %v3197, %v3347
    %v3349 = vpop.f32.mrf.mxu0
    %v3350 = vadd.f32 %v3197, %v3349
    %3351 = vdwg.mxu0
    %3352 = vmatpush.bf16.msra.mxu0 %v3302
    %3353 = vmatpush.bf16.msra.mxu0 %v3299
    %3354 = vmatpush.bf16.msra.mxu0 %v3296
    %3355 = vmatpush.bf16.msra.mxu0 %v3293
    %3356 = vmatpush.bf16.msra.mxu0 %v3290
    %3357 = vmatpush.bf16.msra.mxu0 %v3287
    %3358 = vmatpush.bf16.msra.mxu0 %v3284
    %3359 = vmatpush.bf16.msra.mxu0 %v3281
    %3360 = vmatmul.bf16.gmra.mxu0 %v3194
    %v3361 = vpop.f32.mrf.mxu0
    %v3362 = vadd.f32 %v3198, %v3361
    %v3363 = vpop.f32.mrf.mxu0
    %v3364 = vadd.f32 %v3198, %v3363
    %3365 = vmatmul.bf16.gmra.mxu0 %v3195
    %v3366 = vpop.f32.mrf.mxu0
    %v3367 = vadd.f32 %v3198, %v3366
    %v3368 = vpop.f32.mrf.mxu0
    %v3369 = vadd.f32 %v3198, %v3368
    %3370 = vmatmul.bf16.gmra.mxu0 %v3196
    %v3371 = vpop.f32.mrf.mxu0
    %v3372 = vadd.f32 %v3198, %v3371
    %v3373 = vpop.f32.mrf.mxu0
    %v3374 = vadd.f32 %v3198, %v3373
    %3375 = vdwg.mxu0
    %3376 = vmatpush.bf16.msra.mxu0 %v3303
    %3377 = vmatpush.bf16.msra.mxu0 %v3300
    %3378 = vmatpush.bf16.msra.mxu0 %v3297
    %3379 = vmatpush.bf16.msra.mxu0 %v3294
    %3380 = vmatpush.bf16.msra.mxu0 %v3291
    %3381 = vmatpush.bf16.msra.mxu0 %v3288
    %3382 = vmatpush.bf16.msra.mxu0 %v3285
    %3383 = vmatpush.bf16.msra.mxu0 %v3282
    %3384 = vmatmul.bf16.gmra.mxu0 %v3194
    %v3385 = vpop.f32.mrf.mxu0
    %v3386 = vadd.f32 %v3199, %v3385
    %v3387 = vpop.f32.mrf.mxu0
    %v3388 = vadd.f32 %v3199, %v3387
    %3389 = vmatmul.bf16.gmra.mxu0 %v3195
    %v3390 = vpop.f32.mrf.mxu0
    %v3391 = vadd.f32 %v3199, %v3390
    %v3392 = vpop.f32.mrf.mxu0
    %v3393 = vadd.f32 %v3199, %v3392
    %3394 = vmatmul.bf16.gmra.mxu0 %v3196
    %v3395 = vpop.f32.mrf.mxu0
    %v3396 = vadd.f32 %v3199, %v3395
    %v3397 = vpop.f32.mrf.mxu0
    %v3398 = vadd.f32 %v3199, %v3397
    %3399 = vdwg.mxu0
    %s3400 = scalar_lea.vmem [#allocation9], 64
    %v3401 = vld [vmem:[%s3400] sm:$0xf]
    %v3402 = vld [vmem:[%s3400 + $0x4] sm:$0xf]
    %v3403 = vld [vmem:[%s3400 + $0x8] sm:$0xf]
    %v3404 = vld [vmem:[%s3400 + $0xc] sm:$0xf]
    %v3405 = vld [vmem:[%s3400 + $0x10] sm:$0xf]
    %v3406 = vld [vmem:[%s3400 + $0x14] sm:$0xf]
    %v3407 = vld [vmem:[%s3400 + $0x18] sm:$0xf]
    %v3408 = vld [vmem:[%s3400 + $0x1c] sm:$0xf]
    %v3409 = vld [vmem:[%s3400 + $0x20] sm:$0xf]
    %v3410 = vld [vmem:[%s3400 + $0x24] sm:$0xf]
    %v3411 = vld [vmem:[%s3400 + $0x28] sm:$0xf]
    %v3412 = vld [vmem:[%s3400 + $0x2c] sm:$0xf]
    %v3413 = vld [vmem:[%s3400 + $0x30] sm:$0xf]
    %v3414 = vld [vmem:[%s3400 + $0x34] sm:$0xf]
    %v3415 = vld [vmem:[%s3400 + $0x38] sm:$0xf]
    %v3416 = vld [vmem:[%s3400 + $0x3c] sm:$0xf]
    %3417 = vxpose.xlu0.b32.start [1/16] %v3362, 128
    %3418 = vxpose.xlu0.b32.cont [2/16] %v3364, 128
    %3419 = vxpose.xlu0.b32.cont [3/16] %v3367, 128
    %3420 = vxpose.xlu0.b32.cont [4/16] %v3369, 128
    %3421 = vxpose.xlu0.b32.cont [5/16] %v3372, 128
    %3422 = vxpose.xlu0.b32.cont [6/16] %v3374, 128
    %3423 = vxpose.xlu0.b32.cont [7/16] 0.0, 128
    %3424 = vxpose.xlu0.b32.cont [8/16] 0.0, 128
    %3425 = vxpose.xlu0.b32.cont [9/16] 0.0, 128
    %3426 = vxpose.xlu0.b32.cont [10/16] 0.0, 128
    %3427 = vxpose.xlu0.b32.cont [11/16] 0.0, 128
    %3428 = vxpose.xlu0.b32.cont [12/16] 0.0, 128
    %3429 = vxpose.xlu0.b32.cont [13/16] 0.0, 128
    %3430 = vxpose.xlu0.b32.cont [14/16] 0.0, 128
    %3431 = vxpose.xlu0.b32.cont [15/16] 0.0, 128
    %3432 = vxpose.xlu0.b32.end [16/16] 0.0, 128
    %v3433 = vpop.trf.xlu0
    %v3434 = vpop.trf.xlu0
    %v3435 = vpop.trf.xlu0
    %v3436 = vpop.trf.xlu0
    %v3437 = vpop.trf.xlu0
    %v3438 = vpop.trf.xlu0
    %v3439 = vpop.trf.xlu0
    %v3440 = vpop.trf.xlu0
    %v3441 = vpop.trf.xlu0
    %v3442 = vpop.trf.xlu0
    %v3443 = vpop.trf.xlu0
    %v3444 = vpop.trf.xlu0
    %v3445 = vpop.trf.xlu0
    %v3446 = vpop.trf.xlu0
    %v3447 = vpop.trf.xlu0
    %v3448 = vpop.trf.xlu0
    %v3449 = vpack.c.bf16 %v3340, %v3338
    %v3450 = vpack.c.bf16 %v3345, %v3343
    %v3451 = vpack.c.bf16 %v3350, %v3348
    %v3452 = vpack.c.bf16 %v3434, %v3433
    %v3453 = vpack.c.bf16 %v3436, %v3435
    %v3455 = vsel %vm1191, %v3449, 0
    %v3458 = vsel %vm1191, %v3450, 0
    %v3461 = vsel %vm1191, %v3451, 0
    %3463 = vmatpush.bf16.msra.mxu0 0
    %3464 = vmatpush.bf16.msra.mxu0 0
    %3465 = vmatpush.bf16.msra.mxu0 0
    %3466 = vmatpush.bf16.msra.mxu0 0
    %3467 = vmatpush.bf16.msra.mxu0 0
    %3468 = vmatpush.bf16.msra.mxu0 0
    %3469 = vmatpush.bf16.msra.mxu0 %v3453
    %3470 = vmatpush.bf16.msra.mxu0 %v3452
    %3471 = vmatmul.bf16.gmra.mxu0 %v3455
    %v3472 = vpop.f32.mrf.mxu0
    %v3473 = vadd.f32 0.0, %v3472
    %v3474 = vpop.f32.mrf.mxu0
    %v3475 = vadd.f32 0.0, %v3474
    %3476 = vmatmul.bf16.gmra.mxu0 %v3458
    %v3477 = vpop.f32.mrf.mxu0
    %v3478 = vadd.f32 0.0, %v3477
    %v3479 = vpop.f32.mrf.mxu0
    %v3480 = vadd.f32 0.0, %v3479
    %3481 = vmatmul.bf16.gmra.mxu0 %v3461
    %v3482 = vpop.f32.mrf.mxu0
    %v3483 = vadd.f32 0.0, %v3482
    %v3484 = vpop.f32.mrf.mxu0
    %v3485 = vadd.f32 0.0, %v3484
    %3486 = vdwg.mxu0
    %v3487 = vpack.c.bf16 %v3438, %v3437
    %v3488 = vpack.c.bf16 %v3440, %v3439
    %3492 = vrot.lane.b32.xlu0 %v3449, 96
    %v3493 = vpop.permute.xlu0 %3492
    %3494 = vrot.lane.b32.xlu0 %v3450, 96
    %v3495 = vpop.permute.xlu0 %3494
    %3496 = vrot.lane.b32.xlu0 %v3451, 96
    %v3497 = vpop.permute.xlu0 %3496
    %v3499 = vsel %vm1191, %v3493, 0
    %v3502 = vsel %vm1191, %v3495, 0
    %v3505 = vsel %vm1191, %v3497, 0
    %3507 = vmatpush.bf16.msra.mxu0 0
    %3508 = vmatpush.bf16.msra.mxu0 0
    %3509 = vmatpush.bf16.msra.mxu0 0
    %3510 = vmatpush.bf16.msra.mxu0 0
    %3511 = vmatpush.bf16.msra.mxu0 0
    %3512 = vmatpush.bf16.msra.mxu0 0
    %3513 = vmatpush.bf16.msra.mxu0 %v3488
    %3514 = vmatpush.bf16.msra.mxu0 %v3487
    %3515 = vmatmul.bf16.gmra.mxu0 %v3499
    %v3516 = vpop.f32.mrf.mxu0
    %v3517 = vadd.f32 0.0, %v3516
    %v3518 = vpop.f32.mrf.mxu0
    %v3519 = vadd.f32 0.0, %v3518
    %3520 = vmatmul.bf16.gmra.mxu0 %v3502
    %v3521 = vpop.f32.mrf.mxu0
    %v3522 = vadd.f32 0.0, %v3521
    %v3523 = vpop.f32.mrf.mxu0
    %v3524 = vadd.f32 0.0, %v3523
    %3525 = vmatmul.bf16.gmra.mxu0 %v3505
    %v3526 = vpop.f32.mrf.mxu0
    %v3527 = vadd.f32 0.0, %v3526
    %v3528 = vpop.f32.mrf.mxu0
    %v3529 = vadd.f32 0.0, %v3528
    %3530 = vdwg.mxu0
    %v3531 = vpack.c.bf16 %v3442, %v3441
    %v3532 = vpack.c.bf16 %v3444, %v3443
    %3533 = vrot.lane.b32.xlu0 %v3449, 64
    %v3534 = vpop.permute.xlu0 %3533
    %3535 = vrot.lane.b32.xlu0 %v3450, 64
    %v3536 = vpop.permute.xlu0 %3535
    %3537 = vrot.lane.b32.xlu0 %v3451, 64
    %v3538 = vpop.permute.xlu0 %3537
    %v3540 = vsel %vm1191, %v3534, 0
    %v3543 = vsel %vm1191, %v3536, 0
    %v3546 = vsel %vm1191, %v3538, 0
    %3548 = vmatpush.bf16.msra.mxu0 0
    %3549 = vmatpush.bf16.msra.mxu0 0
    %3550 = vmatpush.bf16.msra.mxu0 0
    %3551 = vmatpush.bf16.msra.mxu0 0
    %3552 = vmatpush.bf16.msra.mxu0 0
    %3553 = vmatpush.bf16.msra.mxu0 0
    %3554 = vmatpush.bf16.msra.mxu0 %v3532
    %3555 = vmatpush.bf16.msra.mxu0 %v3531
    %3556 = vmatmul.bf16.gmra.mxu0 %v3540
    %v3557 = vpop.f32.mrf.mxu0
    %v3558 = vadd.f32 0.0, %v3557
    %v3559 = vpop.f32.mrf.mxu0
    %v3560 = vadd.f32 0.0, %v3559
    %3561 = vmatmul.bf16.gmra.mxu0 %v3543
    %v3562 = vpop.f32.mrf.mxu0
    %v3563 = vadd.f32 0.0, %v3562
    %v3564 = vpop.f32.mrf.mxu0
    %v3565 = vadd.f32 0.0, %v3564
    %3566 = vmatmul.bf16.gmra.mxu0 %v3546
    %v3567 = vpop.f32.mrf.mxu0
    %v3568 = vadd.f32 0.0, %v3567
    %v3569 = vpop.f32.mrf.mxu0
    %v3570 = vadd.f32 0.0, %v3569
    %3571 = vdwg.mxu0
    %v3572 = vpack.c.bf16 %v3446, %v3445
    %v3573 = vpack.c.bf16 %v3448, %v3447
    %3574 = vrot.lane.b32.xlu0 %v3449, 32
    %v3575 = vpop.permute.xlu0 %3574
    %3576 = vrot.lane.b32.xlu0 %v3450, 32
    %v3577 = vpop.permute.xlu0 %3576
    %3578 = vrot.lane.b32.xlu0 %v3451, 32
    %v3579 = vpop.permute.xlu0 %3578
    %v3581 = vsel %vm1191, %v3575, 0
    %v3584 = vsel %vm1191, %v3577, 0
    %v3587 = vsel %vm1191, %v3579, 0
    %3589 = vmatpush.bf16.msra.mxu0 0
    %3590 = vmatpush.bf16.msra.mxu0 0
    %3591 = vmatpush.bf16.msra.mxu0 0
    %3592 = vmatpush.bf16.msra.mxu0 0
    %3593 = vmatpush.bf16.msra.mxu0 0
    %3594 = vmatpush.bf16.msra.mxu0 0
    %3595 = vmatpush.bf16.msra.mxu0 %v3573
    %3596 = vmatpush.bf16.msra.mxu0 %v3572
    %3597 = vmatmul.bf16.gmra.mxu0 %v3581
    %v3598 = vpop.f32.mrf.mxu0
    %v3599 = vadd.f32 0.0, %v3598
    %v3600 = vpop.f32.mrf.mxu0
    %v3601 = vadd.f32 0.0, %v3600
    %3602 = vmatmul.bf16.gmra.mxu0 %v3584
    %v3603 = vpop.f32.mrf.mxu0
    %v3604 = vadd.f32 0.0, %v3603
    %v3605 = vpop.f32.mrf.mxu0
    %v3606 = vadd.f32 0.0, %v3605
    %3607 = vmatmul.bf16.gmra.mxu0 %v3587
    %v3608 = vpop.f32.mrf.mxu0
    %v3609 = vadd.f32 0.0, %v3608
    %v3610 = vpop.f32.mrf.mxu0
    %v3611 = vadd.f32 0.0, %v3610
    %3612 = vdwg.mxu0
    %v3613 = vmul.f32 %v3473, 0.28867513
    %v3614 = vmul.f32 %v3475, 0.28867513
    %v3615 = vmul.f32 %v3478, 0.28867513
    %v3616 = vmul.f32 %v3480, 0.28867513
    %v3617 = vmul.f32 %v3483, 0.28867513
    %v3618 = vmul.f32 %v3485, 0.28867513
    %v3619 = vmul.f32 %v3517, 0.28867513
    %v3620 = vmul.f32 %v3519, 0.28867513
    %v3621 = vmul.f32 %v3522, 0.28867513
    %v3622 = vmul.f32 %v3524, 0.28867513
    %v3623 = vmul.f32 %v3527, 0.28867513
    %v3624 = vmul.f32 %v3529, 0.28867513
    %v3625 = vmul.f32 %v3558, 0.28867513
    %v3626 = vmul.f32 %v3560, 0.28867513
    %v3627 = vmul.f32 %v3563, 0.28867513
    %v3628 = vmul.f32 %v3565, 0.28867513
    %v3629 = vmul.f32 %v3568, 0.28867513
    %v3630 = vmul.f32 %v3570, 0.28867513
    %v3631 = vmul.f32 %v3599, 0.28867513
    %v3632 = vmul.f32 %v3601, 0.28867513
    %v3633 = vmul.f32 %v3604, 0.28867513
    %v3634 = vmul.f32 %v3606, 0.28867513
    %v3635 = vmul.f32 %v3609, 0.28867513
    %v3636 = vmul.f32 %v3611, 0.28867513
    %v3637 = vadd.f32 %v3613, %v241
    %v3638 = vadd.f32 %v3614, %v242
    %v3639 = vadd.f32 %v3615, %v243
    %v3640 = vadd.f32 %v3616, %v244
    %v3641 = vadd.f32 %v3617, %v245
    %v3642 = vadd.f32 %v3618, %v246
    %v3643 = vadd.f32 %v3619, %v241
    %v3644 = vadd.f32 %v3620, %v242
    %v3645 = vadd.f32 %v3621, %v243
    %v3646 = vadd.f32 %v3622, %v244
    %v3647 = vadd.f32 %v3623, %v245
    %v3648 = vadd.f32 %v3624, %v246
    %v3649 = vadd.f32 %v3625, %v241
    %v3650 = vadd.f32 %v3626, %v242
    %v3651 = vadd.f32 %v3627, %v243
    %v3652 = vadd.f32 %v3628, %v244
    %v3653 = vadd.f32 %v3629, %v245
    %v3654 = vadd.f32 %v3630, %v246
    %v3655 = vadd.f32 %v3631, %v241
    %v3656 = vadd.f32 %v3632, %v242
    %v3657 = vadd.f32 %v3633, %v243
    %v3658 = vadd.f32 %v3634, %v244
    %v3659 = vadd.f32 %v3635, %v245
    %v3660 = vadd.f32 %v3636, %v246
    %v3661 = vsel %vm1399, %v3637, -inf
    %3662 = vmax.xlane.f32.xlu0 %v3661
    %v3663 = vpop.xlane.xlu0 %3662
    %v3664 = vsel %vm1399, %v3638, -inf
    %3665 = vmax.xlane.f32.xlu0 %v3664
    %v3666 = vpop.xlane.xlu0 %3665
    %v3667 = vsel %vm1399, %v3639, -inf
    %3668 = vmax.xlane.f32.xlu0 %v3667
    %v3669 = vpop.xlane.xlu0 %3668
    %v3670 = vsel %vm1399, %v3640, -inf
    %3671 = vmax.xlane.f32.xlu0 %v3670
    %v3672 = vpop.xlane.xlu0 %3671
    %v3673 = vsel %vm1399, %v3641, -inf
    %3674 = vmax.xlane.f32.xlu0 %v3673
    %v3675 = vpop.xlane.xlu0 %3674
    %v3676 = vsel %vm1399, %v3642, -inf
    %3677 = vmax.xlane.f32.xlu0 %v3676
    %v3678 = vpop.xlane.xlu0 %3677
    %v3679 = vsel %vm1399, %v3643, -inf
    %3680 = vmax.xlane.f32.xlu0 %v3679
    %v3681 = vpop.xlane.xlu0 %3680
    %v3682 = vsel %vm1399, %v3644, -inf
    %3683 = vmax.xlane.f32.xlu0 %v3682
    %v3684 = vpop.xlane.xlu0 %3683
    %v3685 = vsel %vm1399, %v3645, -inf
    %3686 = vmax.xlane.f32.xlu0 %v3685
    %v3687 = vpop.xlane.xlu0 %3686
    %v3688 = vsel %vm1399, %v3646, -inf
    %3689 = vmax.xlane.f32.xlu0 %v3688
    %v3690 = vpop.xlane.xlu0 %3689
    %v3691 = vsel %vm1399, %v3647, -inf
    %3692 = vmax.xlane.f32.xlu0 %v3691
    %v3693 = vpop.xlane.xlu0 %3692
    %v3694 = vsel %vm1399, %v3648, -inf
    %3695 = vmax.xlane.f32.xlu0 %v3694
    %v3696 = vpop.xlane.xlu0 %3695
    %v3697 = vsel %vm1399, %v3649, -inf
    %3698 = vmax.xlane.f32.xlu0 %v3697
    %v3699 = vpop.xlane.xlu0 %3698
    %v3700 = vsel %vm1399, %v3650, -inf
    %3701 = vmax.xlane.f32.xlu0 %v3700
    %v3702 = vpop.xlane.xlu0 %3701
    %v3703 = vsel %vm1399, %v3651, -inf
    %3704 = vmax.xlane.f32.xlu0 %v3703
    %v3705 = vpop.xlane.xlu0 %3704
    %v3706 = vsel %vm1399, %v3652, -inf
    %3707 = vmax.xlane.f32.xlu0 %v3706
    %v3708 = vpop.xlane.xlu0 %3707
    %v3709 = vsel %vm1399, %v3653, -inf
    %3710 = vmax.xlane.f32.xlu0 %v3709
    %v3711 = vpop.xlane.xlu0 %3710
    %v3712 = vsel %vm1399, %v3654, -inf
    %3713 = vmax.xlane.f32.xlu0 %v3712
    %v3714 = vpop.xlane.xlu0 %3713
    %v3715 = vsel %vm1399, %v3655, -inf
    %3716 = vmax.xlane.f32.xlu0 %v3715
    %v3717 = vpop.xlane.xlu0 %3716
    %v3718 = vsel %vm1399, %v3656, -inf
    %3719 = vmax.xlane.f32.xlu0 %v3718
    %v3720 = vpop.xlane.xlu0 %3719
    %v3721 = vsel %vm1399, %v3657, -inf
    %3722 = vmax.xlane.f32.xlu0 %v3721
    %v3723 = vpop.xlane.xlu0 %3722
    %v3724 = vsel %vm1399, %v3658, -inf
    %3725 = vmax.xlane.f32.xlu0 %v3724
    %v3726 = vpop.xlane.xlu0 %3725
    %v3727 = vsel %vm1399, %v3659, -inf
    %3728 = vmax.xlane.f32.xlu0 %v3727
    %v3729 = vpop.xlane.xlu0 %3728
    %v3730 = vsel %vm1399, %v3660, -inf
    %3731 = vmax.xlane.f32.xlu0 %v3730
    %v3732 = vpop.xlane.xlu0 %3731
    %v3733 = vsub.f32 %v3637, %v3663
    %v3734 = vsub.f32 %v3638, %v3666
    %v3735 = vsub.f32 %v3639, %v3669
    %v3736 = vsub.f32 %v3640, %v3672
    %v3737 = vsub.f32 %v3641, %v3675
    %v3738 = vsub.f32 %v3642, %v3678
    %v3739 = vsub.f32 %v3643, %v3681
    %v3740 = vsub.f32 %v3644, %v3684
    %v3741 = vsub.f32 %v3645, %v3687
    %v3742 = vsub.f32 %v3646, %v3690
    %v3743 = vsub.f32 %v3647, %v3693
    %v3744 = vsub.f32 %v3648, %v3696
    %v3745 = vsub.f32 %v3649, %v3699
    %v3746 = vsub.f32 %v3650, %v3702
    %v3747 = vsub.f32 %v3651, %v3705
    %v3748 = vsub.f32 %v3652, %v3708
    %v3749 = vsub.f32 %v3653, %v3711
    %v3750 = vsub.f32 %v3654, %v3714
    %v3751 = vsub.f32 %v3655, %v3717
    %v3752 = vsub.f32 %v3656, %v3720
    %v3753 = vsub.f32 %v3657, %v3723
    %v3754 = vsub.f32 %v3658, %v3726
    %v3755 = vsub.f32 %v3659, %v3729
    %v3756 = vsub.f32 %v3660, %v3732
    %v3757 = vmul.f32 %v3733, 1.442695
    %v3758 = vpow.pop %v3757
    %v3759 = vmul.f32 %v3734, 1.442695
    %v3760 = vpow.pop %v3759
    %v3761 = vmul.f32 %v3735, 1.442695
    %v3762 = vpow.pop %v3761
    %v3763 = vmul.f32 %v3736, 1.442695
    %v3764 = vpow.pop %v3763
    %v3765 = vmul.f32 %v3737, 1.442695
    %v3766 = vpow.pop %v3765
    %v3767 = vmul.f32 %v3738, 1.442695
    %v3768 = vpow.pop %v3767
    %v3769 = vmul.f32 %v3739, 1.442695
    %v3770 = vpow.pop %v3769
    %v3771 = vmul.f32 %v3740, 1.442695
    %v3772 = vpow.pop %v3771
    %v3773 = vmul.f32 %v3741, 1.442695
    %v3774 = vpow.pop %v3773
    %v3775 = vmul.f32 %v3742, 1.442695
    %v3776 = vpow.pop %v3775
    %v3777 = vmul.f32 %v3743, 1.442695
    %v3778 = vpow.pop %v3777
    %v3779 = vmul.f32 %v3744, 1.442695
    %v3780 = vpow.pop %v3779
    %v3781 = vmul.f32 %v3745, 1.442695
    %v3782 = vpow.pop %v3781
    %v3783 = vmul.f32 %v3746, 1.442695
    %v3784 = vpow.pop %v3783
    %v3785 = vmul.f32 %v3747, 1.442695
    %v3786 = vpow.pop %v3785
    %v3787 = vmul.f32 %v3748, 1.442695
    %v3788 = vpow.pop %v3787
    %v3789 = vmul.f32 %v3749, 1.442695
    %v3790 = vpow.pop %v3789
    %v3791 = vmul.f32 %v3750, 1.442695
    %v3792 = vpow.pop %v3791
    %v3793 = vmul.f32 %v3751, 1.442695
    %v3794 = vpow.pop %v3793
    %v3795 = vmul.f32 %v3752, 1.442695
    %v3796 = vpow.pop %v3795
    %v3797 = vmul.f32 %v3753, 1.442695
    %v3798 = vpow.pop %v3797
    %v3799 = vmul.f32 %v3754, 1.442695
    %v3800 = vpow.pop %v3799
    %v3801 = vmul.f32 %v3755, 1.442695
    %v3802 = vpow.pop %v3801
    %v3803 = vmul.f32 %v3756, 1.442695
    %v3804 = vpow.pop %v3803
    %v3805 = vsel %vm1399, %v3758, 0.0
    %3806 = vadd.xlane.f32.xlu0 %v3805
    %v3807 = vpop.xlane.xlu0 %3806
    %v3808 = vsel %vm1399, %v3760, 0.0
    %3809 = vadd.xlane.f32.xlu0 %v3808
    %v3810 = vpop.xlane.xlu0 %3809
    %v3811 = vsel %vm1399, %v3762, 0.0
    %3812 = vadd.xlane.f32.xlu0 %v3811
    %v3813 = vpop.xlane.xlu0 %3812
    %v3814 = vsel %vm1399, %v3764, 0.0
    %3815 = vadd.xlane.f32.xlu0 %v3814
    %v3816 = vpop.xlane.xlu0 %3815
    %v3817 = vsel %vm1399, %v3766, 0.0
    %3818 = vadd.xlane.f32.xlu0 %v3817
    %v3819 = vpop.xlane.xlu0 %3818
    %v3820 = vsel %vm1399, %v3768, 0.0
    %3821 = vadd.xlane.f32.xlu0 %v3820
    %v3822 = vpop.xlane.xlu0 %3821
    %v3823 = vsel %vm1399, %v3770, 0.0
    %3824 = vadd.xlane.f32.xlu0 %v3823
    %v3825 = vpop.xlane.xlu0 %3824
    %v3826 = vsel %vm1399, %v3772, 0.0
    %3827 = vadd.xlane.f32.xlu0 %v3826
    %v3828 = vpop.xlane.xlu0 %3827
    %v3829 = vsel %vm1399, %v3774, 0.0
    %3830 = vadd.xlane.f32.xlu0 %v3829
    %v3831 = vpop.xlane.xlu0 %3830
    %v3832 = vsel %vm1399, %v3776, 0.0
    %3833 = vadd.xlane.f32.xlu0 %v3832
    %v3834 = vpop.xlane.xlu0 %3833
    %v3835 = vsel %vm1399, %v3778, 0.0
    %3836 = vadd.xlane.f32.xlu0 %v3835
    %v3837 = vpop.xlane.xlu0 %3836
    %v3838 = vsel %vm1399, %v3780, 0.0
    %3839 = vadd.xlane.f32.xlu0 %v3838
    %v3840 = vpop.xlane.xlu0 %3839
    %v3841 = vsel %vm1399, %v3782, 0.0
    %3842 = vadd.xlane.f32.xlu0 %v3841
    %v3843 = vpop.xlane.xlu0 %3842
    %v3844 = vsel %vm1399, %v3784, 0.0
    %3845 = vadd.xlane.f32.xlu0 %v3844
    %v3846 = vpop.xlane.xlu0 %3845
    %v3847 = vsel %vm1399, %v3786, 0.0
    %3848 = vadd.xlane.f32.xlu0 %v3847
    %v3849 = vpop.xlane.xlu0 %3848
    %v3850 = vsel %vm1399, %v3788, 0.0
    %3851 = vadd.xlane.f32.xlu0 %v3850
    %v3852 = vpop.xlane.xlu0 %3851
    %v3853 = vsel %vm1399, %v3790, 0.0
    %3854 = vadd.xlane.f32.xlu0 %v3853
    %v3855 = vpop.xlane.xlu0 %3854
    %v3856 = vsel %vm1399, %v3792, 0.0
    %3857 = vadd.xlane.f32.xlu0 %v3856
    %v3858 = vpop.xlane.xlu0 %3857
    %v3859 = vsel %vm1399, %v3794, 0.0
    %3860 = vadd.xlane.f32.xlu0 %v3859
    %v3861 = vpop.xlane.xlu0 %3860
    %v3862 = vsel %vm1399, %v3796, 0.0
    %3863 = vadd.xlane.f32.xlu0 %v3862
    %v3864 = vpop.xlane.xlu0 %3863
    %v3865 = vsel %vm1399, %v3798, 0.0
    %3866 = vadd.xlane.f32.xlu0 %v3865
    %v3867 = vpop.xlane.xlu0 %3866
    %v3868 = vsel %vm1399, %v3800, 0.0
    %3869 = vadd.xlane.f32.xlu0 %v3868
    %v3870 = vpop.xlane.xlu0 %3869
    %v3871 = vsel %vm1399, %v3802, 0.0
    %3872 = vadd.xlane.f32.xlu0 %v3871
    %v3873 = vpop.xlane.xlu0 %3872
    %v3874 = vsel %vm1399, %v3804, 0.0
    %3875 = vadd.xlane.f32.xlu0 %v3874
    %v3876 = vpop.xlane.xlu0 %3875
    %v3877 = vrcp.pop %v3807
    %v3878 = vrcp.pop %v3810
    %v3879 = vrcp.pop %v3813
    %v3880 = vrcp.pop %v3816
    %v3881 = vrcp.pop %v3819
    %v3882 = vrcp.pop %v3822
    %v3883 = vrcp.pop %v3825
    %v3884 = vrcp.pop %v3828
    %v3885 = vrcp.pop %v3831
    %v3886 = vrcp.pop %v3834
    %v3887 = vrcp.pop %v3837
    %v3888 = vrcp.pop %v3840
    %v3889 = vrcp.pop %v3843
    %v3890 = vrcp.pop %v3846
    %v3891 = vrcp.pop %v3849
    %v3892 = vrcp.pop %v3852
    %v3893 = vrcp.pop %v3855
    %v3894 = vrcp.pop %v3858
    %v3895 = vrcp.pop %v3861
    %v3896 = vrcp.pop %v3864
    %v3897 = vrcp.pop %v3867
    %v3898 = vrcp.pop %v3870
    %v3899 = vrcp.pop %v3873
    %v3900 = vrcp.pop %v3876
    %v3901 = vmul.f32 %v3758, %v3877
    %v3902 = vmul.f32 %v3760, %v3878
    %v3903 = vmul.f32 %v3762, %v3879
    %v3904 = vmul.f32 %v3764, %v3880
    %v3905 = vmul.f32 %v3766, %v3881
    %v3906 = vmul.f32 %v3768, %v3882
    %v3907 = vmul.f32 %v3770, %v3883
    %v3908 = vmul.f32 %v3772, %v3884
    %v3909 = vmul.f32 %v3774, %v3885
    %v3910 = vmul.f32 %v3776, %v3886
    %v3911 = vmul.f32 %v3778, %v3887
    %v3912 = vmul.f32 %v3780, %v3888
    %v3913 = vmul.f32 %v3782, %v3889
    %v3914 = vmul.f32 %v3784, %v3890
    %v3915 = vmul.f32 %v3786, %v3891
    %v3916 = vmul.f32 %v3788, %v3892
    %v3917 = vmul.f32 %v3790, %v3893
    %v3918 = vmul.f32 %v3792, %v3894
    %v3919 = vmul.f32 %v3794, %v3895
    %v3920 = vmul.f32 %v3796, %v3896
    %v3921 = vmul.f32 %v3798, %v3897
    %v3922 = vmul.f32 %v3800, %v3898
    %v3923 = vmul.f32 %v3802, %v3899
    %v3924 = vmul.f32 %v3804, %v3900
    %v3925 = vpack.c.bf16 %v3902, %v3901
    %v3926 = vpack.c.bf16 %v3904, %v3903
    %v3927 = vpack.c.bf16 %v3906, %v3905
    %v3928 = vpack.c.bf16 %v3388, %v3386
    %v3929 = vpack.c.bf16 %v3393, %v3391
    %v3930 = vpack.c.bf16 %v3398, %v3396
    %v3932 = vsel %vm1399, %v3925, 0
    %v3935 = vsel %vm1399, %v3926, 0
    %v3938 = vsel %vm1399, %v3927, 0
    %3940 = vmatpush.bf16.msra.mxu0 0
    %3941 = vmatpush.bf16.msra.mxu0 0
    %3942 = vmatpush.bf16.msra.mxu0 0
    %3943 = vmatpush.bf16.msra.mxu0 0
    %3944 = vmatpush.bf16.msra.mxu0 0
    %3945 = vmatpush.bf16.msra.mxu0 %v3930
    %3946 = vmatpush.bf16.msra.mxu0 %v3929
    %3947 = vmatpush.bf16.msra.mxu0 %v3928
    %3948 = vmatmul.bf16.gmra.mxu0 %v3932
    %v3949 = vpop.f32.mrf.mxu0
    %v3950 = vadd.f32 0.0, %v3949
    %v3951 = vpop.f32.mrf.mxu0
    %v3952 = vadd.f32 0.0, %v3951
    %3953 = vmatmul.bf16.gmra.mxu0 %v3935
    %v3954 = vpop.f32.mrf.mxu0
    %v3955 = vadd.f32 0.0, %v3954
    %v3956 = vpop.f32.mrf.mxu0
    %v3957 = vadd.f32 0.0, %v3956
    %3958 = vmatmul.bf16.gmra.mxu0 %v3938
    %v3959 = vpop.f32.mrf.mxu0
    %v3960 = vadd.f32 0.0, %v3959
    %v3961 = vpop.f32.mrf.mxu0
    %v3962 = vadd.f32 0.0, %v3961
    %3963 = vdwg.mxu0
    %v3964 = vpack.c.bf16 %v3908, %v3907
    %v3965 = vpack.c.bf16 %v3910, %v3909
    %v3966 = vpack.c.bf16 %v3912, %v3911
    %3970 = vrot.lane.b32.xlu0 %v3928, 96
    %v3971 = vpop.permute.xlu0 %3970
    %3972 = vrot.lane.b32.xlu0 %v3929, 96
    %v3973 = vpop.permute.xlu0 %3972
    %3974 = vrot.lane.b32.xlu0 %v3930, 96
    %v3975 = vpop.permute.xlu0 %3974
    %v3980 = vsel %vm1399, %v3964, 0
    %v3983 = vsel %vm1399, %v3965, 0
    %v3986 = vsel %vm1399, %v3966, 0
    %3988 = vmatpush.bf16.msra.mxu0 0
    %3989 = vmatpush.bf16.msra.mxu0 0
    %3990 = vmatpush.bf16.msra.mxu0 0
    %3991 = vmatpush.bf16.msra.mxu0 0
    %3992 = vmatpush.bf16.msra.mxu0 0
    %3993 = vmatpush.bf16.msra.mxu0 %v3975
    %3994 = vmatpush.bf16.msra.mxu0 %v3973
    %3995 = vmatpush.bf16.msra.mxu0 %v3971
    %3996 = vmatmul.bf16.gmra.mxu0 %v3980
    %v3997 = vpop.f32.mrf.mxu0
    %v3998 = vadd.f32 0.0, %v3997
    %v3999 = vpop.f32.mrf.mxu0
    %v4000 = vadd.f32 0.0, %v3999
    %4001 = vmatmul.bf16.gmra.mxu0 %v3983
    %v4002 = vpop.f32.mrf.mxu0
    %v4003 = vadd.f32 0.0, %v4002
    %v4004 = vpop.f32.mrf.mxu0
    %v4005 = vadd.f32 0.0, %v4004
    %4006 = vmatmul.bf16.gmra.mxu0 %v3986
    %v4007 = vpop.f32.mrf.mxu0
    %v4008 = vadd.f32 0.0, %v4007
    %v4009 = vpop.f32.mrf.mxu0
    %v4010 = vadd.f32 0.0, %v4009
    %4011 = vdwg.mxu0
    %v4012 = vpack.c.bf16 %v3914, %v3913
    %v4013 = vpack.c.bf16 %v3916, %v3915
    %v4014 = vpack.c.bf16 %v3918, %v3917
    %4015 = vrot.lane.b32.xlu0 %v3928, 64
    %v4016 = vpop.permute.xlu0 %4015
    %4017 = vrot.lane.b32.xlu0 %v3929, 64
    %v4018 = vpop.permute.xlu0 %4017
    %4019 = vrot.lane.b32.xlu0 %v3930, 64
    %v4020 = vpop.permute.xlu0 %4019
    %v4025 = vsel %vm1399, %v4012, 0
    %v4028 = vsel %vm1399, %v4013, 0
    %v4031 = vsel %vm1399, %v4014, 0
    %4033 = vmatpush.bf16.msra.mxu0 0
    %4034 = vmatpush.bf16.msra.mxu0 0
    %4035 = vmatpush.bf16.msra.mxu0 0
    %4036 = vmatpush.bf16.msra.mxu0 0
    %4037 = vmatpush.bf16.msra.mxu0 0
    %4038 = vmatpush.bf16.msra.mxu0 %v4020
    %4039 = vmatpush.bf16.msra.mxu0 %v4018
    %4040 = vmatpush.bf16.msra.mxu0 %v4016
    %4041 = vmatmul.bf16.gmra.mxu0 %v4025
    %v4042 = vpop.f32.mrf.mxu0
    %v4043 = vadd.f32 0.0, %v4042
    %v4044 = vpop.f32.mrf.mxu0
    %v4045 = vadd.f32 0.0, %v4044
    %4046 = vmatmul.bf16.gmra.mxu0 %v4028
    %v4047 = vpop.f32.mrf.mxu0
    %v4048 = vadd.f32 0.0, %v4047
    %v4049 = vpop.f32.mrf.mxu0
    %v4050 = vadd.f32 0.0, %v4049
    %4051 = vmatmul.bf16.gmra.mxu0 %v4031
    %v4052 = vpop.f32.mrf.mxu0
    %v4053 = vadd.f32 0.0, %v4052
    %v4054 = vpop.f32.mrf.mxu0
    %v4055 = vadd.f32 0.0, %v4054
    %4056 = vdwg.mxu0
    %v4057 = vpack.c.bf16 %v3920, %v3919
    %v4058 = vpack.c.bf16 %v3922, %v3921
    %v4059 = vpack.c.bf16 %v3924, %v3923
    %4060 = vrot.lane.b32.xlu0 %v3928, 32
    %v4061 = vpop.permute.xlu0 %4060
    %4062 = vrot.lane.b32.xlu0 %v3929, 32
    %v4063 = vpop.permute.xlu0 %4062
    %4064 = vrot.lane.b32.xlu0 %v3930, 32
    %v4065 = vpop.permute.xlu0 %4064
    %v4070 = vsel %vm1399, %v4057, 0
    %v4073 = vsel %vm1399, %v4058, 0
    %v4076 = vsel %vm1399, %v4059, 0
    %4078 = vmatpush.bf16.msra.mxu0 0
    %4079 = vmatpush.bf16.msra.mxu0 0
    %4080 = vmatpush.bf16.msra.mxu0 0
    %4081 = vmatpush.bf16.msra.mxu0 0
    %4082 = vmatpush.bf16.msra.mxu0 0
    %4083 = vmatpush.bf16.msra.mxu0 %v4065
    %4084 = vmatpush.bf16.msra.mxu0 %v4063
    %4085 = vmatpush.bf16.msra.mxu0 %v4061
    %4086 = vmatmul.bf16.gmra.mxu0 %v4070
    %v4087 = vpop.f32.mrf.mxu0
    %v4088 = vadd.f32 0.0, %v4087
    %v4089 = vpop.f32.mrf.mxu0
    %v4090 = vadd.f32 0.0, %v4089
    %4091 = vmatmul.bf16.gmra.mxu0 %v4073
    %v4092 = vpop.f32.mrf.mxu0
    %v4093 = vadd.f32 0.0, %v4092
    %v4094 = vpop.f32.mrf.mxu0
    %v4095 = vadd.f32 0.0, %v4094
    %4096 = vmatmul.bf16.gmra.mxu0 %v4076
    %v4097 = vpop.f32.mrf.mxu0
    %v4098 = vadd.f32 0.0, %v4097
    %v4099 = vpop.f32.mrf.mxu0
    %v4100 = vadd.f32 0.0, %v4099
    %4101 = vdwg.mxu0
    %4108 = vrot.lane.b32.xlu0 %v3998, 32
    %v4109 = vpop.permute.xlu0 %4108
    %4110 = vrot.lane.b32.xlu0 %v4000, 32
    %v4111 = vpop.permute.xlu0 %4110
    %4112 = vrot.lane.b32.xlu0 %v4003, 32
    %v4113 = vpop.permute.xlu0 %4112
    %4114 = vrot.lane.b32.xlu0 %v4005, 32
    %v4115 = vpop.permute.xlu0 %4114
    %4116 = vrot.lane.b32.xlu0 %v4008, 32
    %v4117 = vpop.permute.xlu0 %4116
    %4118 = vrot.lane.b32.xlu0 %v4010, 32
    %v4119 = vpop.permute.xlu0 %4118
    %4132 = vrot.lane.b32.xlu0 %v4043, 64
    %v4133 = vpop.permute.xlu0 %4132
    %4134 = vrot.lane.b32.xlu0 %v4045, 64
    %v4135 = vpop.permute.xlu0 %4134
    %4136 = vrot.lane.b32.xlu0 %v4048, 64
    %v4137 = vpop.permute.xlu0 %4136
    %4138 = vrot.lane.b32.xlu0 %v4050, 64
    %v4139 = vpop.permute.xlu0 %4138
    %4140 = vrot.lane.b32.xlu0 %v4053, 64
    %v4141 = vpop.permute.xlu0 %4140
    %4142 = vrot.lane.b32.xlu0 %v4055, 64
    %v4143 = vpop.permute.xlu0 %4142
    %4156 = vrot.lane.b32.xlu0 %v4088, 96
    %v4157 = vpop.permute.xlu0 %4156
    %4158 = vrot.lane.b32.xlu0 %v4090, 96
    %v4159 = vpop.permute.xlu0 %4158
    %4160 = vrot.lane.b32.xlu0 %v4093, 96
    %v4161 = vpop.permute.xlu0 %4160
    %4162 = vrot.lane.b32.xlu0 %v4095, 96
    %v4163 = vpop.permute.xlu0 %4162
    %4164 = vrot.lane.b32.xlu0 %v4098, 96
    %v4165 = vpop.permute.xlu0 %4164
    %4166 = vrot.lane.b32.xlu0 %v4100, 96
    %v4167 = vpop.permute.xlu0 %4166
    %v4174 = vsel %vm1191, %v3950, %v4109
    %v4175 = vsel %vm1191, %v3952, %v4111
    %v4176 = vsel %vm1191, %v3955, %v4113
    %v4177 = vsel %vm1191, %v3957, %v4115
    %v4178 = vsel %vm1191, %v3960, %v4117
    %v4179 = vsel %vm1191, %v3962, %v4119
    %v4180 = vsel %vm1919, %v4174, %v4133
    %v4181 = vsel %vm1919, %v4175, %v4135
    %v4182 = vsel %vm1919, %v4176, %v4137
    %v4183 = vsel %vm1919, %v4177, %v4139
    %v4184 = vsel %vm1919, %v4178, %v4141
    %v4185 = vsel %vm1919, %v4179, %v4143
    %v4186 = vsel %vm1926, %v4180, %v4157
    %v4187 = vsel %vm1926, %v4181, %v4159
    %v4188 = vsel %vm1926, %v4182, %v4161
    %v4189 = vsel %vm1926, %v4183, %v4163
    %v4190 = vsel %vm1926, %v4184, %v4165
    %v4191 = vsel %vm1926, %v4185, %v4167
    %v4192 = vpack.c.bf16 %v4187, %v4186
    %v4193 = vpack.c.bf16 %v4189, %v4188
    %v4194 = vpack.c.bf16 %v4191, %v4190
    %v4195 = vperm.slane %v180, 7
    %v4212 = vunpack.c.l.b16 %v3401
    %v4213 = vunpack.c.l.b16 %v3402
    %v4214 = vunpack.c.l.b16 %v3403
    %v4215 = vunpack.c.l.b16 %v3404
    %v4216 = vunpack.c.l.b16 %v3405
    %v4217 = vunpack.c.l.b16 %v3406
    %v4218 = vunpack.c.l.b16 %v3407
    %v4219 = vunpack.c.l.b16 %v3408
    %v4220 = vunpack.c.l.b16 %v3409
    %v4221 = vunpack.c.l.b16 %v3410
    %v4222 = vunpack.c.l.b16 %v3411
    %v4223 = vunpack.c.l.b16 %v3412
    %v4224 = vunpack.c.l.b16 %v3413
    %v4225 = vunpack.c.l.b16 %v3414
    %v4226 = vunpack.c.l.b16 %v3415
    %v4227 = vunpack.c.l.b16 %v3416
    %v4228 = vpack.c.b16 %v4213, %v4212
    %v4229 = vpack.c.b16 %v4215, %v4214
    %v4230 = vpack.c.b16 %v4217, %v4216
    %v4231 = vpack.c.b16 %v4219, %v4218
    %v4232 = vpack.c.b16 %v4221, %v4220
    %v4233 = vpack.c.b16 %v4223, %v4222
    %v4234 = vpack.c.b16 %v4225, %v4224
    %v4235 = vpack.c.b16 %v4227, %v4226
    %4244 = vmatpush.bf16.msra.mxu0 %v4235
    %4245 = vmatpush.bf16.msra.mxu0 %v4234
    %4246 = vmatpush.bf16.msra.mxu0 %v4233
    %4247 = vmatpush.bf16.msra.mxu0 %v4232
    %4248 = vmatpush.bf16.msra.mxu0 %v4231
    %4249 = vmatpush.bf16.msra.mxu0 %v4230
    %4250 = vmatpush.bf16.msra.mxu0 %v4229
    %4251 = vmatpush.bf16.msra.mxu0 %v4228
    %4252 = vmatmul.bf16.gmra.mxu0 %v4192
    %v4253 = vpop.f32.mrf.mxu0
    %v4254 = vadd.f32 %v4195, %v4253
    %v4255 = vpop.f32.mrf.mxu0
    %v4256 = vadd.f32 %v4195, %v4255
    %4257 = vmatmul.bf16.gmra.mxu0 %v4193
    %v4258 = vpop.f32.mrf.mxu0
    %v4259 = vadd.f32 %v4195, %v4258
    %v4260 = vpop.f32.mrf.mxu0
    %v4261 = vadd.f32 %v4195, %v4260
    %4262 = vmatmul.bf16.gmra.mxu0 %v4194
    %v4263 = vpop.f32.mrf.mxu0
    %v4264 = vadd.f32 %v4195, %v4263
    %v4265 = vpop.f32.mrf.mxu0
    %v4266 = vadd.f32 %v4195, %v4265
    %4267 = vdwg.mxu0
    %v4268 = vadd.f32 %v3015, %v4254
    %v4269 = vadd.f32 %v3016, %v4256
    %v4270 = vadd.f32 %v3017, %v4259
    %v4271 = vadd.f32 %v3018, %v4261
    %v4272 = vadd.f32 %v3019, %v4264
    %v4273 = vadd.f32 %v3020, %v4266
    %4274 = vadd.xlane.f32.xlu0 %v4268
    %v4275 = vpop.xlane.xlu0 %4274
    %4276 = vadd.xlane.f32.xlu0 %v4269
    %v4277 = vpop.xlane.xlu0 %4276
    %4278 = vadd.xlane.f32.xlu0 %v4270
    %v4279 = vpop.xlane.xlu0 %4278
    %4280 = vadd.xlane.f32.xlu0 %v4271
    %v4281 = vpop.xlane.xlu0 %4280
    %4282 = vadd.xlane.f32.xlu0 %v4272
    %v4283 = vpop.xlane.xlu0 %4282
    %4284 = vadd.xlane.f32.xlu0 %v4273
    %v4285 = vpop.xlane.xlu0 %4284
    %v4286 = vmul.f32 %v4275, 0.020833334
    %v4287 = vmul.f32 %v4277, 0.020833334
    %v4288 = vmul.f32 %v4279, 0.020833334
    %v4289 = vmul.f32 %v4281, 0.020833334
    %v4290 = vmul.f32 %v4283, 0.020833334
    %v4291 = vmul.f32 %v4285, 0.020833334
    %v4292 = vsub.f32 %v4268, %v4286
    %v4293 = vsub.f32 %v4269, %v4287
    %v4294 = vsub.f32 %v4270, %v4288
    %v4295 = vsub.f32 %v4271, %v4289
    %v4296 = vsub.f32 %v4272, %v4290
    %v4297 = vsub.f32 %v4273, %v4291
    %v4298 = vmul.f32 %v4292, %v177
    %v4299 = vmul.f32 %v4293, %v177
    %v4300 = vmul.f32 %v4294, %v177
    %v4301 = vmul.f32 %v4295, %v177
    %v4302 = vmul.f32 %v4296, %v177
    %v4303 = vmul.f32 %v4297, %v177
    %v4304 = vmul.f32 %v4298, %v4298
    %v4305 = vmul.f32 %v4299, %v4299
    %v4306 = vmul.f32 %v4300, %v4300
    %v4307 = vmul.f32 %v4301, %v4301
    %v4308 = vmul.f32 %v4302, %v4302
    %v4309 = vmul.f32 %v4303, %v4303
    %4310 = vadd.xlane.f32.xlu0 %v4304
    %v4311 = vpop.xlane.xlu0 %4310
    %4312 = vadd.xlane.f32.xlu0 %v4305
    %v4313 = vpop.xlane.xlu0 %4312
    %4314 = vadd.xlane.f32.xlu0 %v4306
    %v4315 = vpop.xlane.xlu0 %4314
    %4316 = vadd.xlane.f32.xlu0 %v4307
    %v4317 = vpop.xlane.xlu0 %4316
    %4318 = vadd.xlane.f32.xlu0 %v4308
    %v4319 = vpop.xlane.xlu0 %4318
    %4320 = vadd.xlane.f32.xlu0 %v4309
    %v4321 = vpop.xlane.xlu0 %4320
    %v4322 = vmul.f32 %v4311, 0.020833334
    %v4323 = vmul.f32 %v4313, 0.020833334
    %v4324 = vmul.f32 %v4315, 0.020833334
    %v4325 = vmul.f32 %v4317, 0.020833334
    %v4326 = vmul.f32 %v4319, 0.020833334
    %v4327 = vmul.f32 %v4321, 0.020833334
    %v4328 = vadd.f32 %v4322, 1e-05
    %v4329 = vadd.f32 %v4323, 1e-05
    %v4330 = vadd.f32 %v4324, 1e-05
    %v4331 = vadd.f32 %v4325, 1e-05
    %v4332 = vadd.f32 %v4326, 1e-05
    %v4333 = vadd.f32 %v4327, 1e-05
    %v4334 = vrsqrt.pop %v4328
    %v4335 = vmul.f32 %v4334, %v4328
    %v4336 = vmul.f32 %v4335, %v4334
    %v4337 = vmul.f32 0.5, %v4336
    %v4338 = vsub.f32 1.5, %v4337
    %v4339 = vmul.f32 %v4334, %v4338
    %vm4340 = vweird.f32 %v4328
    %vm4341 = vweird.f32 %v4334
    %vm4342 = vmor %vm4340, %vm4341
    %v4343 = vsel %vm4342, %v4334, %v4339
    %v4344 = vrsqrt.pop %v4329
    %v4345 = vmul.f32 %v4344, %v4329
    %v4346 = vmul.f32 %v4345, %v4344
    %v4347 = vmul.f32 0.5, %v4346
    %v4348 = vsub.f32 1.5, %v4347
    %v4349 = vmul.f32 %v4344, %v4348
    %vm4350 = vweird.f32 %v4329
    %vm4351 = vweird.f32 %v4344
    %vm4352 = vmor %vm4350, %vm4351
    %v4353 = vsel %vm4352, %v4344, %v4349
    %v4354 = vrsqrt.pop %v4330
    %v4355 = vmul.f32 %v4354, %v4330
    %v4356 = vmul.f32 %v4355, %v4354
    %v4357 = vmul.f32 0.5, %v4356
    %v4358 = vsub.f32 1.5, %v4357
    %v4359 = vmul.f32 %v4354, %v4358
    %vm4360 = vweird.f32 %v4330
    %vm4361 = vweird.f32 %v4354
    %vm4362 = vmor %vm4360, %vm4361
    %v4363 = vsel %vm4362, %v4354, %v4359
    %v4364 = vrsqrt.pop %v4331
    %v4365 = vmul.f32 %v4364, %v4331
    %v4366 = vmul.f32 %v4365, %v4364
    %v4367 = vmul.f32 0.5, %v4366
    %v4368 = vsub.f32 1.5, %v4367
    %v4369 = vmul.f32 %v4364, %v4368
    %vm4370 = vweird.f32 %v4331
    %vm4371 = vweird.f32 %v4364
    %vm4372 = vmor %vm4370, %vm4371
    %v4373 = vsel %vm4372, %v4364, %v4369
    %v4374 = vrsqrt.pop %v4332
    %v4375 = vmul.f32 %v4374, %v4332
    %v4376 = vmul.f32 %v4375, %v4374
    %v4377 = vmul.f32 0.5, %v4376
    %v4378 = vsub.f32 1.5, %v4377
    %v4379 = vmul.f32 %v4374, %v4378
    %vm4380 = vweird.f32 %v4332
    %vm4381 = vweird.f32 %v4374
    %vm4382 = vmor %vm4380, %vm4381
    %v4383 = vsel %vm4382, %v4374, %v4379
    %v4384 = vrsqrt.pop %v4333
    %v4385 = vmul.f32 %v4384, %v4333
    %v4386 = vmul.f32 %v4385, %v4384
    %v4387 = vmul.f32 0.5, %v4386
    %v4388 = vsub.f32 1.5, %v4387
    %v4389 = vmul.f32 %v4384, %v4388
    %vm4390 = vweird.f32 %v4333
    %vm4391 = vweird.f32 %v4384
    %vm4392 = vmor %vm4390, %vm4391
    %v4393 = vsel %vm4392, %v4384, %v4389
    %v4394 = vmul.f32 %v4298, %v4343
    %v4395 = vmul.f32 %v4299, %v4353
    %v4396 = vmul.f32 %v4300, %v4363
    %v4397 = vmul.f32 %v4301, %v4373
    %v4398 = vmul.f32 %v4302, %v4383
    %v4399 = vmul.f32 %v4303, %v4393
    %v4400 = vperm.slane %v178, 6
    %v4401 = vmul.f32 %v4394, %v4400
    %v4402 = vmul.f32 %v4395, %v4400
    %v4403 = vmul.f32 %v4396, %v4400
    %v4404 = vmul.f32 %v4397, %v4400
    %v4405 = vmul.f32 %v4398, %v4400
    %v4406 = vmul.f32 %v4399, %v4400
    %v4407 = vperm.slane %v178, 7
    %v4408 = vadd.f32 %v4401, %v4407
    %v4409 = vadd.f32 %v4402, %v4407
    %v4410 = vadd.f32 %v4403, %v4407
    %v4411 = vadd.f32 %v4404, %v4407
    %v4412 = vadd.f32 %v4405, %v4407
    %v4413 = vadd.f32 %v4406, %v4407
    %s4414 = scalar_lea.vmem [#allocation10], 128
    %v4415 = vld [vmem:[%s4414] sm:$0xff]
    %v4416 = vld [vmem:[%s4414 + $0x8] sm:$0xff]
    %v4417 = vld [vmem:[%s4414 + $0x10] sm:$0xff]
    %v4418 = vld [vmem:[%s4414 + $0x18] sm:$0xff]
    %v4419 = vld [vmem:[%s4414 + $0x20] sm:$0xff]
    %v4420 = vld [vmem:[%s4414 + $0x28] sm:$0xff]
    %v4421 = vld [vmem:[%s4414 + $0x30] sm:$0xff]
    %v4422 = vld [vmem:[%s4414 + $0x38] sm:$0xff]
    %v4423 = vld [vmem:[%s4414 + $0x40] sm:$0xff]
    %v4424 = vld [vmem:[%s4414 + $0x48] sm:$0xff]
    %v4425 = vld [vmem:[%s4414 + $0x50] sm:$0xff]
    %v4426 = vld [vmem:[%s4414 + $0x58] sm:$0xff]
    %v4427 = vld [vmem:[%s4414 + $0x60] sm:$0xff]
    %v4428 = vld [vmem:[%s4414 + $0x68] sm:$0xff]
    %v4429 = vld [vmem:[%s4414 + $0x70] sm:$0xff]
    %v4430 = vld [vmem:[%s4414 + $0x78] sm:$0xff]
    %s4431 = scalar_lea.vmem [#allocation12], 128
    %v4432 = vld [vmem:[%s4431] sm:$0xf]
    %v4433 = vld [vmem:[%s4431 + $0x4] sm:$0xf]
    %v4434 = vld [vmem:[%s4431 + $0x8] sm:$0xf]
    %v4435 = vld [vmem:[%s4431 + $0xc] sm:$0xf]
    %v4436 = vld [vmem:[%s4431 + $0x10] sm:$0xf]
    %v4437 = vld [vmem:[%s4431 + $0x14] sm:$0xf]
    %v4438 = vld [vmem:[%s4431 + $0x18] sm:$0xf]
    %v4439 = vld [vmem:[%s4431 + $0x1c] sm:$0xf]
    %v4440 = vld [vmem:[%s4431 + $0x20] sm:$0xf]
    %v4441 = vld [vmem:[%s4431 + $0x24] sm:$0xf]
    %v4442 = vld [vmem:[%s4431 + $0x28] sm:$0xf]
    %v4443 = vld [vmem:[%s4431 + $0x2c] sm:$0xf]
    %v4444 = vld [vmem:[%s4431 + $0x30] sm:$0xf]
    %v4445 = vld [vmem:[%s4431 + $0x34] sm:$0xf]
    %v4446 = vld [vmem:[%s4431 + $0x38] sm:$0xf]
    %v4447 = vld [vmem:[%s4431 + $0x3c] sm:$0xf]
    %v4448 = vld [vmem:[%s4431 + $0x40] sm:$0xf]
    %v4449 = vld [vmem:[%s4431 + $0x44] sm:$0xf]
    %v4450 = vld [vmem:[%s4431 + $0x48] sm:$0xf]
    %v4451 = vld [vmem:[%s4431 + $0x4c] sm:$0xf]
    %v4452 = vld [vmem:[%s4431 + $0x50] sm:$0xf]
    %v4453 = vld [vmem:[%s4431 + $0x54] sm:$0xf]
    %v4454 = vld [vmem:[%s4431 + $0x58] sm:$0xf]
    %v4455 = vld [vmem:[%s4431 + $0x5c] sm:$0xf]
    %v4456 = vld [vmem:[%s4431 + $0x60] sm:$0xf]
    %v4457 = vld [vmem:[%s4431 + $0x64] sm:$0xf]
    %v4458 = vld [vmem:[%s4431 + $0x68] sm:$0xf]
    %v4459 = vld [vmem:[%s4431 + $0x6c] sm:$0xf]
    %v4460 = vld [vmem:[%s4431 + $0x70] sm:$0xf]
    %v4461 = vld [vmem:[%s4431 + $0x74] sm:$0xf]
    %v4462 = vld [vmem:[%s4431 + $0x78] sm:$0xf]
    %v4463 = vld [vmem:[%s4431 + $0x7c] sm:$0xf]
    %v4464 = vpack.c.bf16 %v4409, %v4408
    %v4465 = vpack.c.bf16 %v4411, %v4410
    %v4466 = vpack.c.bf16 %v4413, %v4412
    %v4467 = vperm.slane %v183, 0
    %v4468 = vperm.slane %v184, 0
    %v4485 = vunpack.c.l.b16 %v4415
    %v4486 = vunpack.c.h.b16 %v4415
    %v4487 = vunpack.c.l.b16 %v4416
    %v4488 = vunpack.c.h.b16 %v4416
    %v4489 = vunpack.c.l.b16 %v4417
    %v4490 = vunpack.c.h.b16 %v4417
    %v4491 = vunpack.c.l.b16 %v4418
    %v4492 = vunpack.c.h.b16 %v4418
    %v4493 = vunpack.c.l.b16 %v4419
    %v4494 = vunpack.c.h.b16 %v4419
    %v4495 = vunpack.c.l.b16 %v4420
    %v4496 = vunpack.c.h.b16 %v4420
    %v4497 = vunpack.c.l.b16 %v4421
    %v4498 = vunpack.c.h.b16 %v4421
    %v4499 = vunpack.c.l.b16 %v4422
    %v4500 = vunpack.c.h.b16 %v4422
    %v4501 = vunpack.c.l.b16 %v4423
    %v4502 = vunpack.c.h.b16 %v4423
    %v4503 = vunpack.c.l.b16 %v4424
    %v4504 = vunpack.c.h.b16 %v4424
    %v4505 = vunpack.c.l.b16 %v4425
    %v4506 = vunpack.c.h.b16 %v4425
    %v4507 = vunpack.c.l.b16 %v4426
    %v4508 = vunpack.c.h.b16 %v4426
    %v4509 = vunpack.c.l.b16 %v4427
    %v4510 = vunpack.c.h.b16 %v4427
    %v4511 = vunpack.c.l.b16 %v4428
    %v4512 = vunpack.c.h.b16 %v4428
    %v4513 = vunpack.c.l.b16 %v4429
    %v4514 = vunpack.c.h.b16 %v4429
    %v4515 = vunpack.c.l.b16 %v4430
    %v4516 = vunpack.c.h.b16 %v4430
    %v4517 = vpack.c.b16 %v4487, %v4485
    %v4518 = vpack.c.b16 %v4488, %v4486
    %v4519 = vpack.c.b16 %v4491, %v4489
    %v4520 = vpack.c.b16 %v4492, %v4490
    %v4521 = vpack.c.b16 %v4495, %v4493
    %v4522 = vpack.c.b16 %v4496, %v4494
    %v4523 = vpack.c.b16 %v4499, %v4497
    %v4524 = vpack.c.b16 %v4500, %v4498
    %v4525 = vpack.c.b16 %v4503, %v4501
    %v4526 = vpack.c.b16 %v4504, %v4502
    %v4527 = vpack.c.b16 %v4507, %v4505
    %v4528 = vpack.c.b16 %v4508, %v4506
    %v4529 = vpack.c.b16 %v4511, %v4509
    %v4530 = vpack.c.b16 %v4512, %v4510
    %v4531 = vpack.c.b16 %v4515, %v4513
    %v4532 = vpack.c.b16 %v4516, %v4514
    %4549 = vmatpush.bf16.msra.mxu0 %v4531
    %4550 = vmatpush.bf16.msra.mxu0 %v4529
    %4551 = vmatpush.bf16.msra.mxu0 %v4527
    %4552 = vmatpush.bf16.msra.mxu0 %v4525
    %4553 = vmatpush.bf16.msra.mxu0 %v4523
    %4554 = vmatpush.bf16.msra.mxu0 %v4521
    %4555 = vmatpush.bf16.msra.mxu0 %v4519
    %4556 = vmatpush.bf16.msra.mxu0 %v4517
    %4557 = vmatmul.bf16.gmra.mxu0 %v4464
    %v4558 = vpop.f32.mrf.mxu0
    %v4559 = vadd.f32 %v4467, %v4558
    %v4560 = vpop.f32.mrf.mxu0
    %v4561 = vadd.f32 %v4467, %v4560
    %4562 = vmatmul.bf16.gmra.mxu0 %v4465
    %v4563 = vpop.f32.mrf.mxu0
    %v4564 = vadd.f32 %v4467, %v4563
    %v4565 = vpop.f32.mrf.mxu0
    %v4566 = vadd.f32 %v4467, %v4565
    %4567 = vmatmul.bf16.gmra.mxu0 %v4466
    %v4568 = vpop.f32.mrf.mxu0
    %v4569 = vadd.f32 %v4467, %v4568
    %v4570 = vpop.f32.mrf.mxu0
    %v4571 = vadd.f32 %v4467, %v4570
    %4572 = vdwg.mxu0
    %4573 = vmatpush.bf16.msra.mxu0 %v4532
    %4574 = vmatpush.bf16.msra.mxu0 %v4530
    %4575 = vmatpush.bf16.msra.mxu0 %v4528
    %4576 = vmatpush.bf16.msra.mxu0 %v4526
    %4577 = vmatpush.bf16.msra.mxu0 %v4524
    %4578 = vmatpush.bf16.msra.mxu0 %v4522
    %4579 = vmatpush.bf16.msra.mxu0 %v4520
    %4580 = vmatpush.bf16.msra.mxu0 %v4518
    %4581 = vmatmul.bf16.gmra.mxu0 %v4464
    %v4582 = vpop.f32.mrf.mxu0
    %v4583 = vadd.f32 %v4468, %v4582
    %v4584 = vpop.f32.mrf.mxu0
    %v4585 = vadd.f32 %v4468, %v4584
    %4586 = vmatmul.bf16.gmra.mxu0 %v4465
    %v4587 = vpop.f32.mrf.mxu0
    %v4588 = vadd.f32 %v4468, %v4587
    %v4589 = vpop.f32.mrf.mxu0
    %v4590 = vadd.f32 %v4468, %v4589
    %4591 = vmatmul.bf16.gmra.mxu0 %v4466
    %v4592 = vpop.f32.mrf.mxu0
    %v4593 = vadd.f32 %v4468, %v4592
    %v4594 = vpop.f32.mrf.mxu0
    %v4595 = vadd.f32 %v4468, %v4594
    %4596 = vdwg.mxu0
    %v4597 = vmul.f32 %v4559, 0.5
    %v4598 = vmul.f32 %v4583, 0.5
    %v4599 = vmul.f32 %v4561, 0.5
    %v4600 = vmul.f32 %v4585, 0.5
    %v4601 = vmul.f32 %v4564, 0.5
    %v4602 = vmul.f32 %v4588, 0.5
    %v4603 = vmul.f32 %v4566, 0.5
    %v4604 = vmul.f32 %v4590, 0.5
    %v4605 = vmul.f32 %v4569, 0.5
    %v4606 = vmul.f32 %v4593, 0.5
    %v4607 = vmul.f32 %v4571, 0.5
    %v4608 = vmul.f32 %v4595, 0.5
    %v4609 = vmul.f32 %v4559, 0.70710677
    %v4610 = vmul.f32 %v4583, 0.70710677
    %v4611 = vmul.f32 %v4561, 0.70710677
    %v4612 = vmul.f32 %v4585, 0.70710677
    %v4613 = vmul.f32 %v4564, 0.70710677
    %v4614 = vmul.f32 %v4588, 0.70710677
    %v4615 = vmul.f32 %v4566, 0.70710677
    %v4616 = vmul.f32 %v4590, 0.70710677
    %v4617 = vmul.f32 %v4569, 0.70710677
    %v4618 = vmul.f32 %v4593, 0.70710677
    %v4619 = vmul.f32 %v4571, 0.70710677
    %v4620 = vmul.f32 %v4595, 0.70710677
    %v4621 = vmul.f32 %v4609, %v4609
    %v4622 = vmin.f32 16.0, %v4621
    %v4623 = vmul.f32 %v4622, 2.1237322e-06
    %v4624 = vadd.f32 %v4623, 0.00028619796
    %v4625 = vmul.f32 %v4622, %v4624
    %v4626 = vadd.f32 %v4625, 0.0036580483
    %v4627 = vmul.f32 %v4622, %v4626
    %v4628 = vadd.f32 %v4627, 0.05243302
    %v4629 = vmul.f32 %v4622, %v4628
    %v4630 = vadd.f32 %v4629, 0.18741608
    %v4631 = vmul.f32 %v4622, %v4630
    %v4632 = vadd.f32 %v4631, 1.1283791
    %v4633 = vmul.f32 %v4609, %v4632
    %v4634 = vmul.f32 %v4622, 3.8918573e-05
    %v4635 = vadd.f32 %v4634, 0.001143296
    %v4636 = vmul.f32 %v4622, %v4635
    %v4637 = vadd.f32 %v4636, 0.014752088
    %v4638 = vmul.f32 %v4622, %v4637
    %v4639 = vadd.f32 %v4638, 0.112945676
    %v4640 = vmul.f32 %v4622, %v4639
    %v4641 = vadd.f32 %v4640, 0.4994258
    %v4642 = vmul.f32 %v4622, %v4641
    %v4643 = vadd.f32 %v4642, 1.0
    %v4644 = vrcp.pop %v4643
    %v4645 = vmul.f32 %v4643, %v4644
    %v4646 = vsub.f32 1.0, %v4645
    %v4647 = vmul.f32 %v4644, %v4646
    %v4648 = vadd.f32 %v4644, %v4647
    %vm4649 = vweird.f32 %v4643
    %vm4650 = vweird.f32 %v4644
    %vm4651 = vmor %vm4649, %vm4650
    %v4652 = vsel %vm4651, %v4644, %v4648
    %v4653 = vand.u32 2147483647, %v4643
    %vm4654 = vcmp.eq.f32.partialorder %v4653, 8.507059e+37
    %v4655 = vand.u32 %v4643, 2147483648
    %v4656 = vor.u32 1.1754944e-38, %v4655
    %v4657 = vsel %vm4654, %v4656, %v4652
    %v4658 = vmul.f32 %v4633, %v4657
    %v4659 = vmin.f32 %v4658, 1.0
    %v4660 = vmax.f32 %v4659, -1.0
    %v4661 = vmul.f32 %v4610, %v4610
    %v4662 = vmin.f32 16.0, %v4661
    %v4663 = vmul.f32 %v4662, 2.1237322e-06
    %v4664 = vadd.f32 %v4663, 0.00028619796
    %v4665 = vmul.f32 %v4662, %v4664
    %v4666 = vadd.f32 %v4665, 0.0036580483
    %v4667 = vmul.f32 %v4662, %v4666
    %v4668 = vadd.f32 %v4667, 0.05243302
    %v4669 = vmul.f32 %v4662, %v4668
    %v4670 = vadd.f32 %v4669, 0.18741608
    %v4671 = vmul.f32 %v4662, %v4670
    %v4672 = vadd.f32 %v4671, 1.1283791
    %v4673 = vmul.f32 %v4610, %v4672
    %v4674 = vmul.f32 %v4662, 3.8918573e-05
    %v4675 = vadd.f32 %v4674, 0.001143296
    %v4676 = vmul.f32 %v4662, %v4675
    %v4677 = vadd.f32 %v4676, 0.014752088
    %v4678 = vmul.f32 %v4662, %v4677
    %v4679 = vadd.f32 %v4678, 0.112945676
    %v4680 = vmul.f32 %v4662, %v4679
    %v4681 = vadd.f32 %v4680, 0.4994258
    %v4682 = vmul.f32 %v4662, %v4681
    %v4683 = vadd.f32 %v4682, 1.0
    %v4684 = vrcp.pop %v4683
    %v4685 = vmul.f32 %v4683, %v4684
    %v4686 = vsub.f32 1.0, %v4685
    %v4687 = vmul.f32 %v4684, %v4686
    %v4688 = vadd.f32 %v4684, %v4687
    %vm4689 = vweird.f32 %v4683
    %vm4690 = vweird.f32 %v4684
    %vm4691 = vmor %vm4689, %vm4690
    %v4692 = vsel %vm4691, %v4684, %v4688
    %v4693 = vand.u32 2147483647, %v4683
    %vm4694 = vcmp.eq.f32.partialorder %v4693, 8.507059e+37
    %v4695 = vand.u32 %v4683, 2147483648
    %v4696 = vor.u32 1.1754944e-38, %v4695
    %v4697 = vsel %vm4694, %v4696, %v4692
    %v4698 = vmul.f32 %v4673, %v4697
    %v4699 = vmin.f32 %v4698, 1.0
    %v4700 = vmax.f32 %v4699, -1.0
    %v4701 = vmul.f32 %v4611, %v4611
    %v4702 = vmin.f32 16.0, %v4701
    %v4703 = vmul.f32 %v4702, 2.1237322e-06
    %v4704 = vadd.f32 %v4703, 0.00028619796
    %v4705 = vmul.f32 %v4702, %v4704
    %v4706 = vadd.f32 %v4705, 0.0036580483
    %v4707 = vmul.f32 %v4702, %v4706
    %v4708 = vadd.f32 %v4707, 0.05243302
    %v4709 = vmul.f32 %v4702, %v4708
    %v4710 = vadd.f32 %v4709, 0.18741608
    %v4711 = vmul.f32 %v4702, %v4710
    %v4712 = vadd.f32 %v4711, 1.1283791
    %v4713 = vmul.f32 %v4611, %v4712
    %v4714 = vmul.f32 %v4702, 3.8918573e-05
    %v4715 = vadd.f32 %v4714, 0.001143296
    %v4716 = vmul.f32 %v4702, %v4715
    %v4717 = vadd.f32 %v4716, 0.014752088
    %v4718 = vmul.f32 %v4702, %v4717
    %v4719 = vadd.f32 %v4718, 0.112945676
    %v4720 = vmul.f32 %v4702, %v4719
    %v4721 = vadd.f32 %v4720, 0.4994258
    %v4722 = vmul.f32 %v4702, %v4721
    %v4723 = vadd.f32 %v4722, 1.0
    %v4724 = vrcp.pop %v4723
    %v4725 = vmul.f32 %v4723, %v4724
    %v4726 = vsub.f32 1.0, %v4725
    %v4727 = vmul.f32 %v4724, %v4726
    %v4728 = vadd.f32 %v4724, %v4727
    %vm4729 = vweird.f32 %v4723
    %vm4730 = vweird.f32 %v4724
    %vm4731 = vmor %vm4729, %vm4730
    %v4732 = vsel %vm4731, %v4724, %v4728
    %v4733 = vand.u32 2147483647, %v4723
    %vm4734 = vcmp.eq.f32.partialorder %v4733, 8.507059e+37
    %v4735 = vand.u32 %v4723, 2147483648
    %v4736 = vor.u32 1.1754944e-38, %v4735
    %v4737 = vsel %vm4734, %v4736, %v4732
    %v4738 = vmul.f32 %v4713, %v4737
    %v4739 = vmin.f32 %v4738, 1.0
    %v4740 = vmax.f32 %v4739, -1.0
    %v4741 = vmul.f32 %v4612, %v4612
    %v4742 = vmin.f32 16.0, %v4741
    %v4743 = vmul.f32 %v4742, 2.1237322e-06
    %v4744 = vadd.f32 %v4743, 0.00028619796
    %v4745 = vmul.f32 %v4742, %v4744
    %v4746 = vadd.f32 %v4745, 0.0036580483
    %v4747 = vmul.f32 %v4742, %v4746
    %v4748 = vadd.f32 %v4747, 0.05243302
    %v4749 = vmul.f32 %v4742, %v4748
    %v4750 = vadd.f32 %v4749, 0.18741608
    %v4751 = vmul.f32 %v4742, %v4750
    %v4752 = vadd.f32 %v4751, 1.1283791
    %v4753 = vmul.f32 %v4612, %v4752
    %v4754 = vmul.f32 %v4742, 3.8918573e-05
    %v4755 = vadd.f32 %v4754, 0.001143296
    %v4756 = vmul.f32 %v4742, %v4755
    %v4757 = vadd.f32 %v4756, 0.014752088
    %v4758 = vmul.f32 %v4742, %v4757
    %v4759 = vadd.f32 %v4758, 0.112945676
    %v4760 = vmul.f32 %v4742, %v4759
    %v4761 = vadd.f32 %v4760, 0.4994258
    %v4762 = vmul.f32 %v4742, %v4761
    %v4763 = vadd.f32 %v4762, 1.0
    %v4764 = vrcp.pop %v4763
    %v4765 = vmul.f32 %v4763, %v4764
    %v4766 = vsub.f32 1.0, %v4765
    %v4767 = vmul.f32 %v4764, %v4766
    %v4768 = vadd.f32 %v4764, %v4767
    %vm4769 = vweird.f32 %v4763
    %vm4770 = vweird.f32 %v4764
    %vm4771 = vmor %vm4769, %vm4770
    %v4772 = vsel %vm4771, %v4764, %v4768
    %v4773 = vand.u32 2147483647, %v4763
    %vm4774 = vcmp.eq.f32.partialorder %v4773, 8.507059e+37
    %v4775 = vand.u32 %v4763, 2147483648
    %v4776 = vor.u32 1.1754944e-38, %v4775
    %v4777 = vsel %vm4774, %v4776, %v4772
    %v4778 = vmul.f32 %v4753, %v4777
    %v4779 = vmin.f32 %v4778, 1.0
    %v4780 = vmax.f32 %v4779, -1.0
    %v4781 = vmul.f32 %v4613, %v4613
    %v4782 = vmin.f32 16.0, %v4781
    %v4783 = vmul.f32 %v4782, 2.1237322e-06
    %v4784 = vadd.f32 %v4783, 0.00028619796
    %v4785 = vmul.f32 %v4782, %v4784
    %v4786 = vadd.f32 %v4785, 0.0036580483
    %v4787 = vmul.f32 %v4782, %v4786
    %v4788 = vadd.f32 %v4787, 0.05243302
    %v4789 = vmul.f32 %v4782, %v4788
    %v4790 = vadd.f32 %v4789, 0.18741608
    %v4791 = vmul.f32 %v4782, %v4790
    %v4792 = vadd.f32 %v4791, 1.1283791
    %v4793 = vmul.f32 %v4613, %v4792
    %v4794 = vmul.f32 %v4782, 3.8918573e-05
    %v4795 = vadd.f32 %v4794, 0.001143296
    %v4796 = vmul.f32 %v4782, %v4795
    %v4797 = vadd.f32 %v4796, 0.014752088
    %v4798 = vmul.f32 %v4782, %v4797
    %v4799 = vadd.f32 %v4798, 0.112945676
    %v4800 = vmul.f32 %v4782, %v4799
    %v4801 = vadd.f32 %v4800, 0.4994258
    %v4802 = vmul.f32 %v4782, %v4801
    %v4803 = vadd.f32 %v4802, 1.0
    %v4804 = vrcp.pop %v4803
    %v4805 = vmul.f32 %v4803, %v4804
    %v4806 = vsub.f32 1.0, %v4805
    %v4807 = vmul.f32 %v4804, %v4806
    %v4808 = vadd.f32 %v4804, %v4807
    %vm4809 = vweird.f32 %v4803
    %vm4810 = vweird.f32 %v4804
    %vm4811 = vmor %vm4809, %vm4810
    %v4812 = vsel %vm4811, %v4804, %v4808
    %v4813 = vand.u32 2147483647, %v4803
    %vm4814 = vcmp.eq.f32.partialorder %v4813, 8.507059e+37
    %v4815 = vand.u32 %v4803, 2147483648
    %v4816 = vor.u32 1.1754944e-38, %v4815
    %v4817 = vsel %vm4814, %v4816, %v4812
    %v4818 = vmul.f32 %v4793, %v4817
    %v4819 = vmin.f32 %v4818, 1.0
    %v4820 = vmax.f32 %v4819, -1.0
    %v4821 = vmul.f32 %v4614, %v4614
    %v4822 = vmin.f32 16.0, %v4821
    %v4823 = vmul.f32 %v4822, 2.1237322e-06
    %v4824 = vadd.f32 %v4823, 0.00028619796
    %v4825 = vmul.f32 %v4822, %v4824
    %v4826 = vadd.f32 %v4825, 0.0036580483
    %v4827 = vmul.f32 %v4822, %v4826
    %v4828 = vadd.f32 %v4827, 0.05243302
    %v4829 = vmul.f32 %v4822, %v4828
    %v4830 = vadd.f32 %v4829, 0.18741608
    %v4831 = vmul.f32 %v4822, %v4830
    %v4832 = vadd.f32 %v4831, 1.1283791
    %v4833 = vmul.f32 %v4614, %v4832
    %v4834 = vmul.f32 %v4822, 3.8918573e-05
    %v4835 = vadd.f32 %v4834, 0.001143296
    %v4836 = vmul.f32 %v4822, %v4835
    %v4837 = vadd.f32 %v4836, 0.014752088
    %v4838 = vmul.f32 %v4822, %v4837
    %v4839 = vadd.f32 %v4838, 0.112945676
    %v4840 = vmul.f32 %v4822, %v4839
    %v4841 = vadd.f32 %v4840, 0.4994258
    %v4842 = vmul.f32 %v4822, %v4841
    %v4843 = vadd.f32 %v4842, 1.0
    %v4844 = vrcp.pop %v4843
    %v4845 = vmul.f32 %v4843, %v4844
    %v4846 = vsub.f32 1.0, %v4845
    %v4847 = vmul.f32 %v4844, %v4846
    %v4848 = vadd.f32 %v4844, %v4847
    %vm4849 = vweird.f32 %v4843
    %vm4850 = vweird.f32 %v4844
    %vm4851 = vmor %vm4849, %vm4850
    %v4852 = vsel %vm4851, %v4844, %v4848
    %v4853 = vand.u32 2147483647, %v4843
    %vm4854 = vcmp.eq.f32.partialorder %v4853, 8.507059e+37
    %v4855 = vand.u32 %v4843, 2147483648
    %v4856 = vor.u32 1.1754944e-38, %v4855
    %v4857 = vsel %vm4854, %v4856, %v4852
    %v4858 = vmul.f32 %v4833, %v4857
    %v4859 = vmin.f32 %v4858, 1.0
    %v4860 = vmax.f32 %v4859, -1.0
    %v4861 = vmul.f32 %v4615, %v4615
    %v4862 = vmin.f32 16.0, %v4861
    %v4863 = vmul.f32 %v4862, 2.1237322e-06
    %v4864 = vadd.f32 %v4863, 0.00028619796
    %v4865 = vmul.f32 %v4862, %v4864
    %v4866 = vadd.f32 %v4865, 0.0036580483
    %v4867 = vmul.f32 %v4862, %v4866
    %v4868 = vadd.f32 %v4867, 0.05243302
    %v4869 = vmul.f32 %v4862, %v4868
    %v4870 = vadd.f32 %v4869, 0.18741608
    %v4871 = vmul.f32 %v4862, %v4870
    %v4872 = vadd.f32 %v4871, 1.1283791
    %v4873 = vmul.f32 %v4615, %v4872
    %v4874 = vmul.f32 %v4862, 3.8918573e-05
    %v4875 = vadd.f32 %v4874, 0.001143296
    %v4876 = vmul.f32 %v4862, %v4875
    %v4877 = vadd.f32 %v4876, 0.014752088
    %v4878 = vmul.f32 %v4862, %v4877
    %v4879 = vadd.f32 %v4878, 0.112945676
    %v4880 = vmul.f32 %v4862, %v4879
    %v4881 = vadd.f32 %v4880, 0.4994258
    %v4882 = vmul.f32 %v4862, %v4881
    %v4883 = vadd.f32 %v4882, 1.0
    %v4884 = vrcp.pop %v4883
    %v4885 = vmul.f32 %v4883, %v4884
    %v4886 = vsub.f32 1.0, %v4885
    %v4887 = vmul.f32 %v4884, %v4886
    %v4888 = vadd.f32 %v4884, %v4887
    %vm4889 = vweird.f32 %v4883
    %vm4890 = vweird.f32 %v4884
    %vm4891 = vmor %vm4889, %vm4890
    %v4892 = vsel %vm4891, %v4884, %v4888
    %v4893 = vand.u32 2147483647, %v4883
    %vm4894 = vcmp.eq.f32.partialorder %v4893, 8.507059e+37
    %v4895 = vand.u32 %v4883, 2147483648
    %v4896 = vor.u32 1.1754944e-38, %v4895
    %v4897 = vsel %vm4894, %v4896, %v4892
    %v4898 = vmul.f32 %v4873, %v4897
    %v4899 = vmin.f32 %v4898, 1.0
    %v4900 = vmax.f32 %v4899, -1.0
    %v4901 = vmul.f32 %v4616, %v4616
    %v4902 = vmin.f32 16.0, %v4901
    %v4903 = vmul.f32 %v4902, 2.1237322e-06
    %v4904 = vadd.f32 %v4903, 0.00028619796
    %v4905 = vmul.f32 %v4902, %v4904
    %v4906 = vadd.f32 %v4905, 0.0036580483
    %v4907 = vmul.f32 %v4902, %v4906
    %v4908 = vadd.f32 %v4907, 0.05243302
    %v4909 = vmul.f32 %v4902, %v4908
    %v4910 = vadd.f32 %v4909, 0.18741608
    %v4911 = vmul.f32 %v4902, %v4910
    %v4912 = vadd.f32 %v4911, 1.1283791
    %v4913 = vmul.f32 %v4616, %v4912
    %v4914 = vmul.f32 %v4902, 3.8918573e-05
    %v4915 = vadd.f32 %v4914, 0.001143296
    %v4916 = vmul.f32 %v4902, %v4915
    %v4917 = vadd.f32 %v4916, 0.014752088
    %v4918 = vmul.f32 %v4902, %v4917
    %v4919 = vadd.f32 %v4918, 0.112945676
    %v4920 = vmul.f32 %v4902, %v4919
    %v4921 = vadd.f32 %v4920, 0.4994258
    %v4922 = vmul.f32 %v4902, %v4921
    %v4923 = vadd.f32 %v4922, 1.0
    %v4924 = vrcp.pop %v4923
    %v4925 = vmul.f32 %v4923, %v4924
    %v4926 = vsub.f32 1.0, %v4925
    %v4927 = vmul.f32 %v4924, %v4926
    %v4928 = vadd.f32 %v4924, %v4927
    %vm4929 = vweird.f32 %v4923
    %vm4930 = vweird.f32 %v4924
    %vm4931 = vmor %vm4929, %vm4930
    %v4932 = vsel %vm4931, %v4924, %v4928
    %v4933 = vand.u32 2147483647, %v4923
    %vm4934 = vcmp.eq.f32.partialorder %v4933, 8.507059e+37
    %v4935 = vand.u32 %v4923, 2147483648
    %v4936 = vor.u32 1.1754944e-38, %v4935
    %v4937 = vsel %vm4934, %v4936, %v4932
    %v4938 = vmul.f32 %v4913, %v4937
    %v4939 = vmin.f32 %v4938, 1.0
    %v4940 = vmax.f32 %v4939, -1.0
    %v4941 = vmul.f32 %v4617, %v4617
    %v4942 = vmin.f32 16.0, %v4941
    %v4943 = vmul.f32 %v4942, 2.1237322e-06
    %v4944 = vadd.f32 %v4943, 0.00028619796
    %v4945 = vmul.f32 %v4942, %v4944
    %v4946 = vadd.f32 %v4945, 0.0036580483
    %v4947 = vmul.f32 %v4942, %v4946
    %v4948 = vadd.f32 %v4947, 0.05243302
    %v4949 = vmul.f32 %v4942, %v4948
    %v4950 = vadd.f32 %v4949, 0.18741608
    %v4951 = vmul.f32 %v4942, %v4950
    %v4952 = vadd.f32 %v4951, 1.1283791
    %v4953 = vmul.f32 %v4617, %v4952
    %v4954 = vmul.f32 %v4942, 3.8918573e-05
    %v4955 = vadd.f32 %v4954, 0.001143296
    %v4956 = vmul.f32 %v4942, %v4955
    %v4957 = vadd.f32 %v4956, 0.014752088
    %v4958 = vmul.f32 %v4942, %v4957
    %v4959 = vadd.f32 %v4958, 0.112945676
    %v4960 = vmul.f32 %v4942, %v4959
    %v4961 = vadd.f32 %v4960, 0.4994258
    %v4962 = vmul.f32 %v4942, %v4961
    %v4963 = vadd.f32 %v4962, 1.0
    %v4964 = vrcp.pop %v4963
    %v4965 = vmul.f32 %v4963, %v4964
    %v4966 = vsub.f32 1.0, %v4965
    %v4967 = vmul.f32 %v4964, %v4966
    %v4968 = vadd.f32 %v4964, %v4967
    %vm4969 = vweird.f32 %v4963
    %vm4970 = vweird.f32 %v4964
    %vm4971 = vmor %vm4969, %vm4970
    %v4972 = vsel %vm4971, %v4964, %v4968
    %v4973 = vand.u32 2147483647, %v4963
    %vm4974 = vcmp.eq.f32.partialorder %v4973, 8.507059e+37
    %v4975 = vand.u32 %v4963, 2147483648
    %v4976 = vor.u32 1.1754944e-38, %v4975
    %v4977 = vsel %vm4974, %v4976, %v4972
    %v4978 = vmul.f32 %v4953, %v4977
    %v4979 = vmin.f32 %v4978, 1.0
    %v4980 = vmax.f32 %v4979, -1.0
    %v4981 = vmul.f32 %v4618, %v4618
    %v4982 = vmin.f32 16.0, %v4981
    %v4983 = vmul.f32 %v4982, 2.1237322e-06
    %v4984 = vadd.f32 %v4983, 0.00028619796
    %v4985 = vmul.f32 %v4982, %v4984
    %v4986 = vadd.f32 %v4985, 0.0036580483
    %v4987 = vmul.f32 %v4982, %v4986
    %v4988 = vadd.f32 %v4987, 0.05243302
    %v4989 = vmul.f32 %v4982, %v4988
    %v4990 = vadd.f32 %v4989, 0.18741608
    %v4991 = vmul.f32 %v4982, %v4990
    %v4992 = vadd.f32 %v4991, 1.1283791
    %v4993 = vmul.f32 %v4618, %v4992
    %v4994 = vmul.f32 %v4982, 3.8918573e-05
    %v4995 = vadd.f32 %v4994, 0.001143296
    %v4996 = vmul.f32 %v4982, %v4995
    %v4997 = vadd.f32 %v4996, 0.014752088
    %v4998 = vmul.f32 %v4982, %v4997
    %v4999 = vadd.f32 %v4998, 0.112945676
    %v5000 = vmul.f32 %v4982, %v4999
    %v5001 = vadd.f32 %v5000, 0.4994258
    %v5002 = vmul.f32 %v4982, %v5001
    %v5003 = vadd.f32 %v5002, 1.0
    %v5004 = vrcp.pop %v5003
    %v5005 = vmul.f32 %v5003, %v5004
    %v5006 = vsub.f32 1.0, %v5005
    %v5007 = vmul.f32 %v5004, %v5006
    %v5008 = vadd.f32 %v5004, %v5007
    %vm5009 = vweird.f32 %v5003
    %vm5010 = vweird.f32 %v5004
    %vm5011 = vmor %vm5009, %vm5010
    %v5012 = vsel %vm5011, %v5004, %v5008
    %v5013 = vand.u32 2147483647, %v5003
    %vm5014 = vcmp.eq.f32.partialorder %v5013, 8.507059e+37
    %v5015 = vand.u32 %v5003, 2147483648
    %v5016 = vor.u32 1.1754944e-38, %v5015
    %v5017 = vsel %vm5014, %v5016, %v5012
    %v5018 = vmul.f32 %v4993, %v5017
    %v5019 = vmin.f32 %v5018, 1.0
    %v5020 = vmax.f32 %v5019, -1.0
    %v5021 = vmul.f32 %v4619, %v4619
    %v5022 = vmin.f32 16.0, %v5021
    %v5023 = vmul.f32 %v5022, 2.1237322e-06
    %v5024 = vadd.f32 %v5023, 0.00028619796
    %v5025 = vmul.f32 %v5022, %v5024
    %v5026 = vadd.f32 %v5025, 0.0036580483
    %v5027 = vmul.f32 %v5022, %v5026
    %v5028 = vadd.f32 %v5027, 0.05243302
    %v5029 = vmul.f32 %v5022, %v5028
    %v5030 = vadd.f32 %v5029, 0.18741608
    %v5031 = vmul.f32 %v5022, %v5030
    %v5032 = vadd.f32 %v5031, 1.1283791
    %v5033 = vmul.f32 %v4619, %v5032
    %v5034 = vmul.f32 %v5022, 3.8918573e-05
    %v5035 = vadd.f32 %v5034, 0.001143296
    %v5036 = vmul.f32 %v5022, %v5035
    %v5037 = vadd.f32 %v5036, 0.014752088
    %v5038 = vmul.f32 %v5022, %v5037
    %v5039 = vadd.f32 %v5038, 0.112945676
    %v5040 = vmul.f32 %v5022, %v5039
    %v5041 = vadd.f32 %v5040, 0.4994258
    %v5042 = vmul.f32 %v5022, %v5041
    %v5043 = vadd.f32 %v5042, 1.0
    %v5044 = vrcp.pop %v5043
    %v5045 = vmul.f32 %v5043, %v5044
    %v5046 = vsub.f32 1.0, %v5045
    %v5047 = vmul.f32 %v5044, %v5046
    %v5048 = vadd.f32 %v5044, %v5047
    %vm5049 = vweird.f32 %v5043
    %vm5050 = vweird.f32 %v5044
    %vm5051 = vmor %vm5049, %vm5050
    %v5052 = vsel %vm5051, %v5044, %v5048
    %v5053 = vand.u32 2147483647, %v5043
    %vm5054 = vcmp.eq.f32.partialorder %v5053, 8.507059e+37
    %v5055 = vand.u32 %v5043, 2147483648
    %v5056 = vor.u32 1.1754944e-38, %v5055
    %v5057 = vsel %vm5054, %v5056, %v5052
    %v5058 = vmul.f32 %v5033, %v5057
    %v5059 = vmin.f32 %v5058, 1.0
    %v5060 = vmax.f32 %v5059, -1.0
    %v5061 = vmul.f32 %v4620, %v4620
    %v5062 = vmin.f32 16.0, %v5061
    %v5063 = vmul.f32 %v5062, 2.1237322e-06
    %v5064 = vadd.f32 %v5063, 0.00028619796
    %v5065 = vmul.f32 %v5062, %v5064
    %v5066 = vadd.f32 %v5065, 0.0036580483
    %v5067 = vmul.f32 %v5062, %v5066
    %v5068 = vadd.f32 %v5067, 0.05243302
    %v5069 = vmul.f32 %v5062, %v5068
    %v5070 = vadd.f32 %v5069, 0.18741608
    %v5071 = vmul.f32 %v5062, %v5070
    %v5072 = vadd.f32 %v5071, 1.1283791
    %v5073 = vmul.f32 %v4620, %v5072
    %v5074 = vmul.f32 %v5062, 3.8918573e-05
    %v5075 = vadd.f32 %v5074, 0.001143296
    %v5076 = vmul.f32 %v5062, %v5075
    %v5077 = vadd.f32 %v5076, 0.014752088
    %v5078 = vmul.f32 %v5062, %v5077
    %v5079 = vadd.f32 %v5078, 0.112945676
    %v5080 = vmul.f32 %v5062, %v5079
    %v5081 = vadd.f32 %v5080, 0.4994258
    %v5082 = vmul.f32 %v5062, %v5081
    %v5083 = vadd.f32 %v5082, 1.0
    %v5084 = vrcp.pop %v5083
    %v5085 = vmul.f32 %v5083, %v5084
    %v5086 = vsub.f32 1.0, %v5085
    %v5087 = vmul.f32 %v5084, %v5086
    %v5088 = vadd.f32 %v5084, %v5087
    %vm5089 = vweird.f32 %v5083
    %vm5090 = vweird.f32 %v5084
    %vm5091 = vmor %vm5089, %vm5090
    %v5092 = vsel %vm5091, %v5084, %v5088
    %v5093 = vand.u32 2147483647, %v5083
    %vm5094 = vcmp.eq.f32.partialorder %v5093, 8.507059e+37
    %v5095 = vand.u32 %v5083, 2147483648
    %v5096 = vor.u32 1.1754944e-38, %v5095
    %v5097 = vsel %vm5094, %v5096, %v5092
    %v5098 = vmul.f32 %v5073, %v5097
    %v5099 = vmin.f32 %v5098, 1.0
    %v5100 = vmax.f32 %v5099, -1.0
    %v5101 = vadd.f32 %v4660, 1.0
    %v5102 = vadd.f32 %v4700, 1.0
    %v5103 = vadd.f32 %v4740, 1.0
    %v5104 = vadd.f32 %v4780, 1.0
    %v5105 = vadd.f32 %v4820, 1.0
    %v5106 = vadd.f32 %v4860, 1.0
    %v5107 = vadd.f32 %v4900, 1.0
    %v5108 = vadd.f32 %v4940, 1.0
    %v5109 = vadd.f32 %v4980, 1.0
    %v5110 = vadd.f32 %v5020, 1.0
    %v5111 = vadd.f32 %v5060, 1.0
    %v5112 = vadd.f32 %v5100, 1.0
    %v5113 = vmul.f32 %v4597, %v5101
    %v5114 = vmul.f32 %v4598, %v5102
    %v5115 = vmul.f32 %v4599, %v5103
    %v5116 = vmul.f32 %v4600, %v5104
    %v5117 = vmul.f32 %v4601, %v5105
    %v5118 = vmul.f32 %v4602, %v5106
    %v5119 = vmul.f32 %v4603, %v5107
    %v5120 = vmul.f32 %v4604, %v5108
    %v5121 = vmul.f32 %v4605, %v5109
    %v5122 = vmul.f32 %v4606, %v5110
    %v5123 = vmul.f32 %v4607, %v5111
    %v5124 = vmul.f32 %v4608, %v5112
    %v5125 = vpack.c.bf16 %v5115, %v5113
    %v5126 = vpack.c.bf16 %v5116, %v5114
    %v5127 = vpack.c.bf16 %v5119, %v5117
    %v5128 = vpack.c.bf16 %v5120, %v5118
    %v5129 = vpack.c.bf16 %v5123, %v5121
    %v5130 = vpack.c.bf16 %v5124, %v5122
    %v5131 = vperm.slane %v183, 1
    %v5164 = vunpack.c.l.b16 %v4432
    %v5165 = vunpack.c.l.b16 %v4433
    %v5166 = vunpack.c.l.b16 %v4434
    %v5167 = vunpack.c.l.b16 %v4435
    %v5168 = vunpack.c.l.b16 %v4436
    %v5169 = vunpack.c.l.b16 %v4437
    %v5170 = vunpack.c.l.b16 %v4438
    %v5171 = vunpack.c.l.b16 %v4439
    %v5172 = vunpack.c.l.b16 %v4440
    %v5173 = vunpack.c.l.b16 %v4441
    %v5174 = vunpack.c.l.b16 %v4442
    %v5175 = vunpack.c.l.b16 %v4443
    %v5176 = vunpack.c.l.b16 %v4444
    %v5177 = vunpack.c.l.b16 %v4445
    %v5178 = vunpack.c.l.b16 %v4446
    %v5179 = vunpack.c.l.b16 %v4447
    %v5180 = vunpack.c.l.b16 %v4448
    %v5181 = vunpack.c.l.b16 %v4449
    %v5182 = vunpack.c.l.b16 %v4450
    %v5183 = vunpack.c.l.b16 %v4451
    %v5184 = vunpack.c.l.b16 %v4452
    %v5185 = vunpack.c.l.b16 %v4453
    %v5186 = vunpack.c.l.b16 %v4454
    %v5187 = vunpack.c.l.b16 %v4455
    %v5188 = vunpack.c.l.b16 %v4456
    %v5189 = vunpack.c.l.b16 %v4457
    %v5190 = vunpack.c.l.b16 %v4458
    %v5191 = vunpack.c.l.b16 %v4459
    %v5192 = vunpack.c.l.b16 %v4460
    %v5193 = vunpack.c.l.b16 %v4461
    %v5194 = vunpack.c.l.b16 %v4462
    %v5195 = vunpack.c.l.b16 %v4463
    %v5196 = vpack.c.b16 %v5165, %v5164
    %v5197 = vpack.c.b16 %v5167, %v5166
    %v5198 = vpack.c.b16 %v5169, %v5168
    %v5199 = vpack.c.b16 %v5171, %v5170
    %v5200 = vpack.c.b16 %v5173, %v5172
    %v5201 = vpack.c.b16 %v5175, %v5174
    %v5202 = vpack.c.b16 %v5177, %v5176
    %v5203 = vpack.c.b16 %v5179, %v5178
    %v5204 = vpack.c.b16 %v5181, %v5180
    %v5205 = vpack.c.b16 %v5183, %v5182
    %v5206 = vpack.c.b16 %v5185, %v5184
    %v5207 = vpack.c.b16 %v5187, %v5186
    %v5208 = vpack.c.b16 %v5189, %v5188
    %v5209 = vpack.c.b16 %v5191, %v5190
    %v5210 = vpack.c.b16 %v5193, %v5192
    %v5211 = vpack.c.b16 %v5195, %v5194
    %5228 = vmatpush.bf16.msra.mxu0 %v5203
    %5229 = vmatpush.bf16.msra.mxu0 %v5202
    %5230 = vmatpush.bf16.msra.mxu0 %v5201
    %5231 = vmatpush.bf16.msra.mxu0 %v5200
    %5232 = vmatpush.bf16.msra.mxu0 %v5199
    %5233 = vmatpush.bf16.msra.mxu0 %v5198
    %5234 = vmatpush.bf16.msra.mxu0 %v5197
    %5235 = vmatpush.bf16.msra.mxu0 %v5196
    %5236 = vmatmul.bf16.gmra.mxu0 %v5125
    %v5237 = vpop.f32.mrf.mxu0
    %v5238 = vadd.f32 %v5131, %v5237
    %v5239 = vpop.f32.mrf.mxu0
    %v5240 = vadd.f32 %v5131, %v5239
    %5241 = vmatmul.bf16.gmra.mxu0 %v5127
    %v5242 = vpop.f32.mrf.mxu0
    %v5243 = vadd.f32 %v5131, %v5242
    %v5244 = vpop.f32.mrf.mxu0
    %v5245 = vadd.f32 %v5131, %v5244
    %5246 = vmatmul.bf16.gmra.mxu0 %v5129
    %v5247 = vpop.f32.mrf.mxu0
    %v5248 = vadd.f32 %v5131, %v5247
    %v5249 = vpop.f32.mrf.mxu0
    %v5250 = vadd.f32 %v5131, %v5249
    %5251 = vdwg.mxu0
    %5252 = vmatpush.bf16.msra.mxu0 %v5211
    %5253 = vmatpush.bf16.msra.mxu0 %v5210
    %5254 = vmatpush.bf16.msra.mxu0 %v5209
    %5255 = vmatpush.bf16.msra.mxu0 %v5208
    %5256 = vmatpush.bf16.msra.mxu0 %v5207
    %5257 = vmatpush.bf16.msra.mxu0 %v5206
    %5258 = vmatpush.bf16.msra.mxu0 %v5205
    %5259 = vmatpush.bf16.msra.mxu0 %v5204
    %5260 = vmatmul.bf16.gmra.mxu0 %v5126
    %v5261 = vpop.f32.mrf.mxu0
    %v5262 = vadd.f32 %v5238, %v5261
    %v5263 = vpop.f32.mrf.mxu0
    %v5264 = vadd.f32 %v5240, %v5263
    %5265 = vmatmul.bf16.gmra.mxu0 %v5128
    %v5266 = vpop.f32.mrf.mxu0
    %v5267 = vadd.f32 %v5243, %v5266
    %v5268 = vpop.f32.mrf.mxu0
    %v5269 = vadd.f32 %v5245, %v5268
    %5270 = vmatmul.bf16.gmra.mxu0 %v5130
    %v5271 = vpop.f32.mrf.mxu0
    %v5272 = vadd.f32 %v5248, %v5271
    %v5273 = vpop.f32.mrf.mxu0
    %v5274 = vadd.f32 %v5250, %v5273
    %5275 = vdwg.mxu0
    %v5276 = vadd.f32 %v4268, %v5262
    %v5277 = vadd.f32 %v4269, %v5264
    %v5278 = vadd.f32 %v4270, %v5267
    %v5279 = vadd.f32 %v4271, %v5269
    %v5280 = vadd.f32 %v4272, %v5272
    %v5281 = vadd.f32 %v4273, %v5274
    %5282 = vadd.xlane.f32.xlu0 %v5276
    %v5283 = vpop.xlane.xlu0 %5282
    %5284 = vadd.xlane.f32.xlu0 %v5277
    %v5285 = vpop.xlane.xlu0 %5284
    %5286 = vadd.xlane.f32.xlu0 %v5278
    %v5287 = vpop.xlane.xlu0 %5286
    %5288 = vadd.xlane.f32.xlu0 %v5279
    %v5289 = vpop.xlane.xlu0 %5288
    %5290 = vadd.xlane.f32.xlu0 %v5280
    %v5291 = vpop.xlane.xlu0 %5290
    %5292 = vadd.xlane.f32.xlu0 %v5281
    %v5293 = vpop.xlane.xlu0 %5292
    %v5294 = vmul.f32 %v5283, 0.020833334
    %v5295 = vmul.f32 %v5285, 0.020833334
    %v5296 = vmul.f32 %v5287, 0.020833334
    %v5297 = vmul.f32 %v5289, 0.020833334
    %v5298 = vmul.f32 %v5291, 0.020833334
    %v5299 = vmul.f32 %v5293, 0.020833334
    %v5300 = vsub.f32 %v5276, %v5294
    %v5301 = vsub.f32 %v5277, %v5295
    %v5302 = vsub.f32 %v5278, %v5296
    %v5303 = vsub.f32 %v5279, %v5297
    %v5304 = vsub.f32 %v5280, %v5298
    %v5305 = vsub.f32 %v5281, %v5299
    %v5306 = vmul.f32 %v5300, %v177
    %v5307 = vmul.f32 %v5301, %v177
    %v5308 = vmul.f32 %v5302, %v177
    %v5309 = vmul.f32 %v5303, %v177
    %v5310 = vmul.f32 %v5304, %v177
    %v5311 = vmul.f32 %v5305, %v177
    %v5312 = vmul.f32 %v5306, %v5306
    %v5313 = vmul.f32 %v5307, %v5307
    %v5314 = vmul.f32 %v5308, %v5308
    %v5315 = vmul.f32 %v5309, %v5309
    %v5316 = vmul.f32 %v5310, %v5310
    %v5317 = vmul.f32 %v5311, %v5311
    %5318 = vadd.xlane.f32.xlu0 %v5312
    %v5319 = vpop.xlane.xlu0 %5318
    %5320 = vadd.xlane.f32.xlu0 %v5313
    %v5321 = vpop.xlane.xlu0 %5320
    %5322 = vadd.xlane.f32.xlu0 %v5314
    %v5323 = vpop.xlane.xlu0 %5322
    %5324 = vadd.xlane.f32.xlu0 %v5315
    %v5325 = vpop.xlane.xlu0 %5324
    %5326 = vadd.xlane.f32.xlu0 %v5316
    %v5327 = vpop.xlane.xlu0 %5326
    %5328 = vadd.xlane.f32.xlu0 %v5317
    %v5329 = vpop.xlane.xlu0 %5328
    %v5330 = vmul.f32 %v5319, 0.020833334
    %v5331 = vmul.f32 %v5321, 0.020833334
    %v5332 = vmul.f32 %v5323, 0.020833334
    %v5333 = vmul.f32 %v5325, 0.020833334
    %v5334 = vmul.f32 %v5327, 0.020833334
    %v5335 = vmul.f32 %v5329, 0.020833334
    %v5336 = vadd.f32 %v5330, 1e-05
    %v5337 = vadd.f32 %v5331, 1e-05
    %v5338 = vadd.f32 %v5332, 1e-05
    %v5339 = vadd.f32 %v5333, 1e-05
    %v5340 = vadd.f32 %v5334, 1e-05
    %v5341 = vadd.f32 %v5335, 1e-05
    %v5342 = vrsqrt.pop %v5336
    %v5343 = vmul.f32 %v5342, %v5336
    %v5344 = vmul.f32 %v5343, %v5342
    %v5345 = vmul.f32 0.5, %v5344
    %v5346 = vsub.f32 1.5, %v5345
    %v5347 = vmul.f32 %v5342, %v5346
    %vm5348 = vweird.f32 %v5336
    %vm5349 = vweird.f32 %v5342
    %vm5350 = vmor %vm5348, %vm5349
    %v5351 = vsel %vm5350, %v5342, %v5347
    %v5352 = vrsqrt.pop %v5337
    %v5353 = vmul.f32 %v5352, %v5337
    %v5354 = vmul.f32 %v5353, %v5352
    %v5355 = vmul.f32 0.5, %v5354
    %v5356 = vsub.f32 1.5, %v5355
    %v5357 = vmul.f32 %v5352, %v5356
    %vm5358 = vweird.f32 %v5337
    %vm5359 = vweird.f32 %v5352
    %vm5360 = vmor %vm5358, %vm5359
    %v5361 = vsel %vm5360, %v5352, %v5357
    %v5362 = vrsqrt.pop %v5338
    %v5363 = vmul.f32 %v5362, %v5338
    %v5364 = vmul.f32 %v5363, %v5362
    %v5365 = vmul.f32 0.5, %v5364
    %v5366 = vsub.f32 1.5, %v5365
    %v5367 = vmul.f32 %v5362, %v5366
    %vm5368 = vweird.f32 %v5338
    %vm5369 = vweird.f32 %v5362
    %vm5370 = vmor %vm5368, %vm5369
    %v5371 = vsel %vm5370, %v5362, %v5367
    %v5372 = vrsqrt.pop %v5339
    %v5373 = vmul.f32 %v5372, %v5339
    %v5374 = vmul.f32 %v5373, %v5372
    %v5375 = vmul.f32 0.5, %v5374
    %v5376 = vsub.f32 1.5, %v5375
    %v5377 = vmul.f32 %v5372, %v5376
    %vm5378 = vweird.f32 %v5339
    %vm5379 = vweird.f32 %v5372
    %vm5380 = vmor %vm5378, %vm5379
    %v5381 = vsel %vm5380, %v5372, %v5377
    %v5382 = vrsqrt.pop %v5340
    %v5383 = vmul.f32 %v5382, %v5340
    %v5384 = vmul.f32 %v5383, %v5382
    %v5385 = vmul.f32 0.5, %v5384
    %v5386 = vsub.f32 1.5, %v5385
    %v5387 = vmul.f32 %v5382, %v5386
    %vm5388 = vweird.f32 %v5340
    %vm5389 = vweird.f32 %v5382
    %vm5390 = vmor %vm5388, %vm5389
    %v5391 = vsel %vm5390, %v5382, %v5387
    %v5392 = vrsqrt.pop %v5341
    %v5393 = vmul.f32 %v5392, %v5341
    %v5394 = vmul.f32 %v5393, %v5392
    %v5395 = vmul.f32 0.5, %v5394
    %v5396 = vsub.f32 1.5, %v5395
    %v5397 = vmul.f32 %v5392, %v5396
    %vm5398 = vweird.f32 %v5341
    %vm5399 = vweird.f32 %v5392
    %vm5400 = vmor %vm5398, %vm5399
    %v5401 = vsel %vm5400, %v5392, %v5397
    %v5402 = vmul.f32 %v5306, %v5351
    %v5403 = vmul.f32 %v5307, %v5361
    %v5404 = vmul.f32 %v5308, %v5371
    %v5405 = vmul.f32 %v5309, %v5381
    %v5406 = vmul.f32 %v5310, %v5391
    %v5407 = vmul.f32 %v5311, %v5401
    %v5408 = vperm.slane %v179, 0
    %v5409 = vmul.f32 %v5402, %v5408
    %v5410 = vmul.f32 %v5403, %v5408
    %v5411 = vmul.f32 %v5404, %v5408
    %v5412 = vmul.f32 %v5405, %v5408
    %v5413 = vmul.f32 %v5406, %v5408
    %v5414 = vmul.f32 %v5407, %v5408
    %v5415 = vperm.slane %v179, 1
    %v5416 = vadd.f32 %v5409, %v5415
    %v5417 = vadd.f32 %v5410, %v5415
    %v5418 = vadd.f32 %v5411, %v5415
    %v5419 = vadd.f32 %v5412, %v5415
    %v5420 = vadd.f32 %v5413, %v5415
    %v5421 = vadd.f32 %v5414, %v5415
    %v5422 = vperm.slane %v179, 2
    %v5423 = vmul.f32 %v5402, %v5422
    %v5424 = vmul.f32 %v5403, %v5422
    %v5425 = vmul.f32 %v5404, %v5422
    %v5426 = vmul.f32 %v5405, %v5422
    %v5427 = vmul.f32 %v5406, %v5422
    %v5428 = vmul.f32 %v5407, %v5422
    %v5429 = vperm.slane %v179, 3
    %v5430 = vadd.f32 %v5423, %v5429
    %v5431 = vadd.f32 %v5424, %v5429
    %v5432 = vadd.f32 %v5425, %v5429
    %v5433 = vadd.f32 %v5426, %v5429
    %v5434 = vadd.f32 %v5427, %v5429
    %v5435 = vadd.f32 %v5428, %v5429
    %s5436 = scalar_lea.vmem [#allocation7], 384
    %v5437 = vld [vmem:[%s5436] sm:$0xff]
    %v5438 = vld [vmem:[%s5436 + $0x8] sm:$0xf]
    %v5439 = vld [vmem:[%s5436 + $0xc] sm:$0xff]
    %v5440 = vld [vmem:[%s5436 + $0x14] sm:$0xf]
    %v5441 = vld [vmem:[%s5436 + $0x18] sm:$0xff]
    %v5442 = vld [vmem:[%s5436 + $0x20] sm:$0xf]
    %v5443 = vld [vmem:[%s5436 + $0x24] sm:$0xff]
    %v5444 = vld [vmem:[%s5436 + $0x2c] sm:$0xf]
    %v5445 = vld [vmem:[%s5436 + $0x30] sm:$0xff]
    %v5446 = vld [vmem:[%s5436 + $0x38] sm:$0xf]
    %v5447 = vld [vmem:[%s5436 + $0x3c] sm:$0xff]
    %v5448 = vld [vmem:[%s5436 + $0x44] sm:$0xf]
    %v5449 = vld [vmem:[%s5436 + $0x48] sm:$0xff]
    %v5450 = vld [vmem:[%s5436 + $0x50] sm:$0xf]
    %v5451 = vld [vmem:[%s5436 + $0x54] sm:$0xff]
    %v5452 = vld [vmem:[%s5436 + $0x5c] sm:$0xf]
    %v5453 = vld [vmem:[%s5436 + $0x60] sm:$0xff]
    %v5454 = vld [vmem:[%s5436 + $0x68] sm:$0xf]
    %v5455 = vld [vmem:[%s5436 + $0x6c] sm:$0xff]
    %v5456 = vld [vmem:[%s5436 + $0x74] sm:$0xf]
    %v5457 = vld [vmem:[%s5436 + $0x78] sm:$0xff]
    %v5458 = vld [vmem:[%s5436 + $0x80] sm:$0xf]
    %v5459 = vld [vmem:[%s5436 + $0x84] sm:$0xff]
    %v5460 = vld [vmem:[%s5436 + $0x8c] sm:$0xf]
    %v5461 = vld [vmem:[%s5436 + $0x90] sm:$0xff]
    %v5462 = vld [vmem:[%s5436 + $0x98] sm:$0xf]
    %v5463 = vld [vmem:[%s5436 + $0x9c] sm:$0xff]
    %v5464 = vld [vmem:[%s5436 + $0xa4] sm:$0xf]
    %v5465 = vld [vmem:[%s5436 + $0xa8] sm:$0xff]
    %v5466 = vld [vmem:[%s5436 + $0xb0] sm:$0xf]
    %v5467 = vld [vmem:[%s5436 + $0xb4] sm:$0xff]
    %v5468 = vld [vmem:[%s5436 + $0xbc] sm:$0xf]
    %v5469 = vpack.c.bf16 %v5417, %v5416
    %v5470 = vpack.c.bf16 %v5419, %v5418
    %v5471 = vpack.c.bf16 %v5421, %v5420
    %v5472 = vperm.slane %v183, 2
    %v5489 = vunpack.c.l.b16 %v5437
    %v5490 = vunpack.c.l.b16 %v5439
    %v5491 = vunpack.c.l.b16 %v5441
    %v5492 = vunpack.c.l.b16 %v5443
    %v5493 = vunpack.c.l.b16 %v5445
    %v5494 = vunpack.c.l.b16 %v5447
    %v5495 = vunpack.c.l.b16 %v5449
    %v5496 = vunpack.c.l.b16 %v5451
    %v5497 = vunpack.c.l.b16 %v5453
    %v5498 = vunpack.c.l.b16 %v5455
    %v5499 = vunpack.c.l.b16 %v5457
    %v5500 = vunpack.c.l.b16 %v5459
    %v5501 = vunpack.c.l.b16 %v5461
    %v5502 = vunpack.c.l.b16 %v5463
    %v5503 = vunpack.c.l.b16 %v5465
    %v5504 = vunpack.c.l.b16 %v5467
    %v5505 = vpack.c.b16 %v5490, %v5489
    %v5506 = vpack.c.b16 %v5492, %v5491
    %v5507 = vpack.c.b16 %v5494, %v5493
    %v5508 = vpack.c.b16 %v5496, %v5495
    %v5509 = vpack.c.b16 %v5498, %v5497
    %v5510 = vpack.c.b16 %v5500, %v5499
    %v5511 = vpack.c.b16 %v5502, %v5501
    %v5512 = vpack.c.b16 %v5504, %v5503
    %5521 = vmatpush.bf16.msra.mxu0 %v5512
    %5522 = vmatpush.bf16.msra.mxu0 %v5511
    %5523 = vmatpush.bf16.msra.mxu0 %v5510
    %5524 = vmatpush.bf16.msra.mxu0 %v5509
    %5525 = vmatpush.bf16.msra.mxu0 %v5508
    %5526 = vmatpush.bf16.msra.mxu0 %v5507
    %5527 = vmatpush.bf16.msra.mxu0 %v5506
    %5528 = vmatpush.bf16.msra.mxu0 %v5505
    %5529 = vmatmul.bf16.gmra.mxu0 %v5469
    %v5530 = vpop.f32.mrf.mxu0
    %v5531 = vadd.f32 %v5472, %v5530
    %v5532 = vpop.f32.mrf.mxu0
    %v5533 = vadd.f32 %v5472, %v5532
    %5534 = vmatmul.bf16.gmra.mxu0 %v5470
    %v5535 = vpop.f32.mrf.mxu0
    %v5536 = vadd.f32 %v5472, %v5535
    %v5537 = vpop.f32.mrf.mxu0
    %v5538 = vadd.f32 %v5472, %v5537
    %5539 = vmatmul.bf16.gmra.mxu0 %v5471
    %v5540 = vpop.f32.mrf.mxu0
    %v5541 = vadd.f32 %v5472, %v5540
    %v5542 = vpop.f32.mrf.mxu0
    %v5543 = vadd.f32 %v5472, %v5542
    %5544 = vdwg.mxu0
    %v5545 = vpack.c.bf16 %v5431, %v5430
    %v5546 = vpack.c.bf16 %v5433, %v5432
    %v5547 = vpack.c.bf16 %v5435, %v5434
    %v5548 = vperm.slane %v184, 2
    %v5549 = vperm.slane %v185, 2
    %v5566 = vunpack.c.h.b16 %v5437
    %v5567 = vunpack.c.l.b16 %v5438
    %v5568 = vunpack.c.h.b16 %v5439
    %v5569 = vunpack.c.l.b16 %v5440
    %v5570 = vunpack.c.h.b16 %v5441
    %v5571 = vunpack.c.l.b16 %v5442
    %v5572 = vunpack.c.h.b16 %v5443
    %v5573 = vunpack.c.l.b16 %v5444
    %v5574 = vunpack.c.h.b16 %v5445
    %v5575 = vunpack.c.l.b16 %v5446
    %v5576 = vunpack.c.h.b16 %v5447
    %v5577 = vunpack.c.l.b16 %v5448
    %v5578 = vunpack.c.h.b16 %v5449
    %v5579 = vunpack.c.l.b16 %v5450
    %v5580 = vunpack.c.h.b16 %v5451
    %v5581 = vunpack.c.l.b16 %v5452
    %v5582 = vunpack.c.h.b16 %v5453
    %v5583 = vunpack.c.l.b16 %v5454
    %v5584 = vunpack.c.h.b16 %v5455
    %v5585 = vunpack.c.l.b16 %v5456
    %v5586 = vunpack.c.h.b16 %v5457
    %v5587 = vunpack.c.l.b16 %v5458
    %v5588 = vunpack.c.h.b16 %v5459
    %v5589 = vunpack.c.l.b16 %v5460
    %v5590 = vunpack.c.h.b16 %v5461
    %v5591 = vunpack.c.l.b16 %v5462
    %v5592 = vunpack.c.h.b16 %v5463
    %v5593 = vunpack.c.l.b16 %v5464
    %v5594 = vunpack.c.h.b16 %v5465
    %v5595 = vunpack.c.l.b16 %v5466
    %v5596 = vunpack.c.h.b16 %v5467
    %v5597 = vunpack.c.l.b16 %v5468
    %v5598 = vpack.c.b16 %v5568, %v5566
    %v5599 = vpack.c.b16 %v5569, %v5567
    %v5600 = vpack.c.b16 %v5572, %v5570
    %v5601 = vpack.c.b16 %v5573, %v5571
    %v5602 = vpack.c.b16 %v5576, %v5574
    %v5603 = vpack.c.b16 %v5577, %v5575
    %v5604 = vpack.c.b16 %v5580, %v5578
    %v5605 = vpack.c.b16 %v5581, %v5579
    %v5606 = vpack.c.b16 %v5584, %v5582
    %v5607 = vpack.c.b16 %v5585, %v5583
    %v5608 = vpack.c.b16 %v5588, %v5586
    %v5609 = vpack.c.b16 %v5589, %v5587
    %v5610 = vpack.c.b16 %v5592, %v5590
    %v5611 = vpack.c.b16 %v5593, %v5591
    %v5612 = vpack.c.b16 %v5596, %v5594
    %v5613 = vpack.c.b16 %v5597, %v5595
    %5630 = vmatpush.bf16.msra.mxu0 %v5612
    %5631 = vmatpush.bf16.msra.mxu0 %v5610
    %5632 = vmatpush.bf16.msra.mxu0 %v5608
    %5633 = vmatpush.bf16.msra.mxu0 %v5606
    %5634 = vmatpush.bf16.msra.mxu0 %v5604
    %5635 = vmatpush.bf16.msra.mxu0 %v5602
    %5636 = vmatpush.bf16.msra.mxu0 %v5600
    %5637 = vmatpush.bf16.msra.mxu0 %v5598
    %5638 = vmatmul.bf16.gmra.mxu0 %v5545
    %v5639 = vpop.f32.mrf.mxu0
    %v5640 = vadd.f32 %v5548, %v5639
    %v5641 = vpop.f32.mrf.mxu0
    %v5642 = vadd.f32 %v5548, %v5641
    %5643 = vmatmul.bf16.gmra.mxu0 %v5546
    %v5644 = vpop.f32.mrf.mxu0
    %v5645 = vadd.f32 %v5548, %v5644
    %v5646 = vpop.f32.mrf.mxu0
    %v5647 = vadd.f32 %v5548, %v5646
    %5648 = vmatmul.bf16.gmra.mxu0 %v5547
    %v5649 = vpop.f32.mrf.mxu0
    %v5650 = vadd.f32 %v5548, %v5649
    %v5651 = vpop.f32.mrf.mxu0
    %v5652 = vadd.f32 %v5548, %v5651
    %5653 = vdwg.mxu0
    %5654 = vmatpush.bf16.msra.mxu0 %v5613
    %5655 = vmatpush.bf16.msra.mxu0 %v5611
    %5656 = vmatpush.bf16.msra.mxu0 %v5609
    %5657 = vmatpush.bf16.msra.mxu0 %v5607
    %5658 = vmatpush.bf16.msra.mxu0 %v5605
    %5659 = vmatpush.bf16.msra.mxu0 %v5603
    %5660 = vmatpush.bf16.msra.mxu0 %v5601
    %5661 = vmatpush.bf16.msra.mxu0 %v5599
    %5662 = vmatmul.bf16.gmra.mxu0 %v5545
    %v5663 = vpop.f32.mrf.mxu0
    %v5664 = vadd.f32 %v5549, %v5663
    %v5665 = vpop.f32.mrf.mxu0
    %v5666 = vadd.f32 %v5549, %v5665
    %5667 = vmatmul.bf16.gmra.mxu0 %v5546
    %v5668 = vpop.f32.mrf.mxu0
    %v5669 = vadd.f32 %v5549, %v5668
    %v5670 = vpop.f32.mrf.mxu0
    %v5671 = vadd.f32 %v5549, %v5670
    %5672 = vmatmul.bf16.gmra.mxu0 %v5547
    %v5673 = vpop.f32.mrf.mxu0
    %v5674 = vadd.f32 %v5549, %v5673
    %v5675 = vpop.f32.mrf.mxu0
    %v5676 = vadd.f32 %v5549, %v5675
    %5677 = vdwg.mxu0
    %s5678 = scalar_lea.vmem [#allocation9], 128
    %v5679 = vld [vmem:[%s5678] sm:$0xf]
    %v5680 = vld [vmem:[%s5678 + $0x4] sm:$0xf]
    %v5681 = vld [vmem:[%s5678 + $0x8] sm:$0xf]
    %v5682 = vld [vmem:[%s5678 + $0xc] sm:$0xf]
    %v5683 = vld [vmem:[%s5678 + $0x10] sm:$0xf]
    %v5684 = vld [vmem:[%s5678 + $0x14] sm:$0xf]
    %v5685 = vld [vmem:[%s5678 + $0x18] sm:$0xf]
    %v5686 = vld [vmem:[%s5678 + $0x1c] sm:$0xf]
    %v5687 = vld [vmem:[%s5678 + $0x20] sm:$0xf]
    %v5688 = vld [vmem:[%s5678 + $0x24] sm:$0xf]
    %v5689 = vld [vmem:[%s5678 + $0x28] sm:$0xf]
    %v5690 = vld [vmem:[%s5678 + $0x2c] sm:$0xf]
    %v5691 = vld [vmem:[%s5678 + $0x30] sm:$0xf]
    %v5692 = vld [vmem:[%s5678 + $0x34] sm:$0xf]
    %v5693 = vld [vmem:[%s5678 + $0x38] sm:$0xf]
    %v5694 = vld [vmem:[%s5678 + $0x3c] sm:$0xf]
    %5695 = vxpose.xlu0.b32.start [1/16] %v5640, 128
    %5696 = vxpose.xlu0.b32.cont [2/16] %v5642, 128
    %5697 = vxpose.xlu0.b32.cont [3/16] %v5645, 128
    %5698 = vxpose.xlu0.b32.cont [4/16] %v5647, 128
    %5699 = vxpose.xlu0.b32.cont [5/16] %v5650, 128
    %5700 = vxpose.xlu0.b32.cont [6/16] %v5652, 128
    %5701 = vxpose.xlu0.b32.cont [7/16] 0.0, 128
    %5702 = vxpose.xlu0.b32.cont [8/16] 0.0, 128
    %5703 = vxpose.xlu0.b32.cont [9/16] 0.0, 128
    %5704 = vxpose.xlu0.b32.cont [10/16] 0.0, 128
    %5705 = vxpose.xlu0.b32.cont [11/16] 0.0, 128
    %5706 = vxpose.xlu0.b32.cont [12/16] 0.0, 128
    %5707 = vxpose.xlu0.b32.cont [13/16] 0.0, 128
    %5708 = vxpose.xlu0.b32.cont [14/16] 0.0, 128
    %5709 = vxpose.xlu0.b32.cont [15/16] 0.0, 128
    %5710 = vxpose.xlu0.b32.end [16/16] 0.0, 128
    %v5711 = vpop.trf.xlu0
    %v5712 = vpop.trf.xlu0
    %v5713 = vpop.trf.xlu0
    %v5714 = vpop.trf.xlu0
    %v5715 = vpop.trf.xlu0
    %v5716 = vpop.trf.xlu0
    %v5717 = vpop.trf.xlu0
    %v5718 = vpop.trf.xlu0
    %v5719 = vpop.trf.xlu0
    %v5720 = vpop.trf.xlu0
    %v5721 = vpop.trf.xlu0
    %v5722 = vpop.trf.xlu0
    %v5723 = vpop.trf.xlu0
    %v5724 = vpop.trf.xlu0
    %v5725 = vpop.trf.xlu0
    %v5726 = vpop.trf.xlu0
    %v5727 = vpack.c.bf16 %v5533, %v5531
    %v5728 = vpack.c.bf16 %v5538, %v5536
    %v5729 = vpack.c.bf16 %v5543, %v5541
    %v5730 = vpack.c.bf16 %v5712, %v5711
    %v5731 = vpack.c.bf16 %v5714, %v5713
    %v5733 = vsel %vm1191, %v5727, 0
    %v5736 = vsel %vm1191, %v5728, 0
    %v5739 = vsel %vm1191, %v5729, 0
    %5741 = vmatpush.bf16.msra.mxu0 0
    %5742 = vmatpush.bf16.msra.mxu0 0
    %5743 = vmatpush.bf16.msra.mxu0 0
    %5744 = vmatpush.bf16.msra.mxu0 0
    %5745 = vmatpush.bf16.msra.mxu0 0
    %5746 = vmatpush.bf16.msra.mxu0 0
    %5747 = vmatpush.bf16.msra.mxu0 %v5731
    %5748 = vmatpush.bf16.msra.mxu0 %v5730
    %5749 = vmatmul.bf16.gmra.mxu0 %v5733
    %v5750 = vpop.f32.mrf.mxu0
    %v5751 = vadd.f32 0.0, %v5750
    %v5752 = vpop.f32.mrf.mxu0
    %v5753 = vadd.f32 0.0, %v5752
    %5754 = vmatmul.bf16.gmra.mxu0 %v5736
    %v5755 = vpop.f32.mrf.mxu0
    %v5756 = vadd.f32 0.0, %v5755
    %v5757 = vpop.f32.mrf.mxu0
    %v5758 = vadd.f32 0.0, %v5757
    %5759 = vmatmul.bf16.gmra.mxu0 %v5739
    %v5760 = vpop.f32.mrf.mxu0
    %v5761 = vadd.f32 0.0, %v5760
    %v5762 = vpop.f32.mrf.mxu0
    %v5763 = vadd.f32 0.0, %v5762
    %5764 = vdwg.mxu0
    %v5765 = vpack.c.bf16 %v5716, %v5715
    %v5766 = vpack.c.bf16 %v5718, %v5717
    %5770 = vrot.lane.b32.xlu0 %v5727, 96
    %v5771 = vpop.permute.xlu0 %5770
    %5772 = vrot.lane.b32.xlu0 %v5728, 96
    %v5773 = vpop.permute.xlu0 %5772
    %5774 = vrot.lane.b32.xlu0 %v5729, 96
    %v5775 = vpop.permute.xlu0 %5774
    %v5777 = vsel %vm1191, %v5771, 0
    %v5780 = vsel %vm1191, %v5773, 0
    %v5783 = vsel %vm1191, %v5775, 0
    %5785 = vmatpush.bf16.msra.mxu0 0
    %5786 = vmatpush.bf16.msra.mxu0 0
    %5787 = vmatpush.bf16.msra.mxu0 0
    %5788 = vmatpush.bf16.msra.mxu0 0
    %5789 = vmatpush.bf16.msra.mxu0 0
    %5790 = vmatpush.bf16.msra.mxu0 0
    %5791 = vmatpush.bf16.msra.mxu0 %v5766
    %5792 = vmatpush.bf16.msra.mxu0 %v5765
    %5793 = vmatmul.bf16.gmra.mxu0 %v5777
    %v5794 = vpop.f32.mrf.mxu0
    %v5795 = vadd.f32 0.0, %v5794
    %v5796 = vpop.f32.mrf.mxu0
    %v5797 = vadd.f32 0.0, %v5796
    %5798 = vmatmul.bf16.gmra.mxu0 %v5780
    %v5799 = vpop.f32.mrf.mxu0
    %v5800 = vadd.f32 0.0, %v5799
    %v5801 = vpop.f32.mrf.mxu0
    %v5802 = vadd.f32 0.0, %v5801
    %5803 = vmatmul.bf16.gmra.mxu0 %v5783
    %v5804 = vpop.f32.mrf.mxu0
    %v5805 = vadd.f32 0.0, %v5804
    %v5806 = vpop.f32.mrf.mxu0
    %v5807 = vadd.f32 0.0, %v5806
    %5808 = vdwg.mxu0
    %v5809 = vpack.c.bf16 %v5720, %v5719
    %v5810 = vpack.c.bf16 %v5722, %v5721
    %5811 = vrot.lane.b32.xlu0 %v5727, 64
    %v5812 = vpop.permute.xlu0 %5811
    %5813 = vrot.lane.b32.xlu0 %v5728, 64
    %v5814 = vpop.permute.xlu0 %5813
    %5815 = vrot.lane.b32.xlu0 %v5729, 64
    %v5816 = vpop.permute.xlu0 %5815
    %v5818 = vsel %vm1191, %v5812, 0
    %v5821 = vsel %vm1191, %v5814, 0
    %v5824 = vsel %vm1191, %v5816, 0
    %5826 = vmatpush.bf16.msra.mxu0 0
    %5827 = vmatpush.bf16.msra.mxu0 0
    %5828 = vmatpush.bf16.msra.mxu0 0
    %5829 = vmatpush.bf16.msra.mxu0 0
    %5830 = vmatpush.bf16.msra.mxu0 0
    %5831 = vmatpush.bf16.msra.mxu0 0
    %5832 = vmatpush.bf16.msra.mxu0 %v5810
    %5833 = vmatpush.bf16.msra.mxu0 %v5809
    %5834 = vmatmul.bf16.gmra.mxu0 %v5818
    %v5835 = vpop.f32.mrf.mxu0
    %v5836 = vadd.f32 0.0, %v5835
    %v5837 = vpop.f32.mrf.mxu0
    %v5838 = vadd.f32 0.0, %v5837
    %5839 = vmatmul.bf16.gmra.mxu0 %v5821
    %v5840 = vpop.f32.mrf.mxu0
    %v5841 = vadd.f32 0.0, %v5840
    %v5842 = vpop.f32.mrf.mxu0
    %v5843 = vadd.f32 0.0, %v5842
    %5844 = vmatmul.bf16.gmra.mxu0 %v5824
    %v5845 = vpop.f32.mrf.mxu0
    %v5846 = vadd.f32 0.0, %v5845
    %v5847 = vpop.f32.mrf.mxu0
    %v5848 = vadd.f32 0.0, %v5847
    %5849 = vdwg.mxu0
    %v5850 = vpack.c.bf16 %v5724, %v5723
    %v5851 = vpack.c.bf16 %v5726, %v5725
    %5852 = vrot.lane.b32.xlu0 %v5727, 32
    %v5853 = vpop.permute.xlu0 %5852
    %5854 = vrot.lane.b32.xlu0 %v5728, 32
    %v5855 = vpop.permute.xlu0 %5854
    %5856 = vrot.lane.b32.xlu0 %v5729, 32
    %v5857 = vpop.permute.xlu0 %5856
    %v5859 = vsel %vm1191, %v5853, 0
    %v5862 = vsel %vm1191, %v5855, 0
    %v5865 = vsel %vm1191, %v5857, 0
    %5867 = vmatpush.bf16.msra.mxu0 0
    %5868 = vmatpush.bf16.msra.mxu0 0
    %5869 = vmatpush.bf16.msra.mxu0 0
    %5870 = vmatpush.bf16.msra.mxu0 0
    %5871 = vmatpush.bf16.msra.mxu0 0
    %5872 = vmatpush.bf16.msra.mxu0 0
    %5873 = vmatpush.bf16.msra.mxu0 %v5851
    %5874 = vmatpush.bf16.msra.mxu0 %v5850
    %5875 = vmatmul.bf16.gmra.mxu0 %v5859
    %v5876 = vpop.f32.mrf.mxu0
    %v5877 = vadd.f32 0.0, %v5876
    %v5878 = vpop.f32.mrf.mxu0
    %v5879 = vadd.f32 0.0, %v5878
    %5880 = vmatmul.bf16.gmra.mxu0 %v5862
    %v5881 = vpop.f32.mrf.mxu0
    %v5882 = vadd.f32 0.0, %v5881
    %v5883 = vpop.f32.mrf.mxu0
    %v5884 = vadd.f32 0.0, %v5883
    %5885 = vmatmul.bf16.gmra.mxu0 %v5865
    %v5886 = vpop.f32.mrf.mxu0
    %v5887 = vadd.f32 0.0, %v5886
    %v5888 = vpop.f32.mrf.mxu0
    %v5889 = vadd.f32 0.0, %v5888
    %5890 = vdwg.mxu0
    %v5891 = vmul.f32 %v5751, 0.28867513
    %v5892 = vmul.f32 %v5753, 0.28867513
    %v5893 = vmul.f32 %v5756, 0.28867513
    %v5894 = vmul.f32 %v5758, 0.28867513
    %v5895 = vmul.f32 %v5761, 0.28867513
    %v5896 = vmul.f32 %v5763, 0.28867513
    %v5897 = vmul.f32 %v5795, 0.28867513
    %v5898 = vmul.f32 %v5797, 0.28867513
    %v5899 = vmul.f32 %v5800, 0.28867513
    %v5900 = vmul.f32 %v5802, 0.28867513
    %v5901 = vmul.f32 %v5805, 0.28867513
    %v5902 = vmul.f32 %v5807, 0.28867513
    %v5903 = vmul.f32 %v5836, 0.28867513
    %v5904 = vmul.f32 %v5838, 0.28867513
    %v5905 = vmul.f32 %v5841, 0.28867513
    %v5906 = vmul.f32 %v5843, 0.28867513
    %v5907 = vmul.f32 %v5846, 0.28867513
    %v5908 = vmul.f32 %v5848, 0.28867513
    %v5909 = vmul.f32 %v5877, 0.28867513
    %v5910 = vmul.f32 %v5879, 0.28867513
    %v5911 = vmul.f32 %v5882, 0.28867513
    %v5912 = vmul.f32 %v5884, 0.28867513
    %v5913 = vmul.f32 %v5887, 0.28867513
    %v5914 = vmul.f32 %v5889, 0.28867513
    %v5915 = vadd.f32 %v5891, %v241
    %v5916 = vadd.f32 %v5892, %v242
    %v5917 = vadd.f32 %v5893, %v243
    %v5918 = vadd.f32 %v5894, %v244
    %v5919 = vadd.f32 %v5895, %v245
    %v5920 = vadd.f32 %v5896, %v246
    %v5921 = vadd.f32 %v5897, %v241
    %v5922 = vadd.f32 %v5898, %v242
    %v5923 = vadd.f32 %v5899, %v243
    %v5924 = vadd.f32 %v5900, %v244
    %v5925 = vadd.f32 %v5901, %v245
    %v5926 = vadd.f32 %v5902, %v246
    %v5927 = vadd.f32 %v5903, %v241
    %v5928 = vadd.f32 %v5904, %v242
    %v5929 = vadd.f32 %v5905, %v243
    %v5930 = vadd.f32 %v5906, %v244
    %v5931 = vadd.f32 %v5907, %v245
    %v5932 = vadd.f32 %v5908, %v246
    %v5933 = vadd.f32 %v5909, %v241
    %v5934 = vadd.f32 %v5910, %v242
    %v5935 = vadd.f32 %v5911, %v243
    %v5936 = vadd.f32 %v5912, %v244
    %v5937 = vadd.f32 %v5913, %v245
    %v5938 = vadd.f32 %v5914, %v246
    %v5939 = vsel %vm1399, %v5915, -inf
    %5940 = vmax.xlane.f32.xlu0 %v5939
    %v5941 = vpop.xlane.xlu0 %5940
    %v5942 = vsel %vm1399, %v5916, -inf
    %5943 = vmax.xlane.f32.xlu0 %v5942
    %v5944 = vpop.xlane.xlu0 %5943
    %v5945 = vsel %vm1399, %v5917, -inf
    %5946 = vmax.xlane.f32.xlu0 %v5945
    %v5947 = vpop.xlane.xlu0 %5946
    %v5948 = vsel %vm1399, %v5918, -inf
    %5949 = vmax.xlane.f32.xlu0 %v5948
    %v5950 = vpop.xlane.xlu0 %5949
    %v5951 = vsel %vm1399, %v5919, -inf
    %5952 = vmax.xlane.f32.xlu0 %v5951
    %v5953 = vpop.xlane.xlu0 %5952
    %v5954 = vsel %vm1399, %v5920, -inf
    %5955 = vmax.xlane.f32.xlu0 %v5954
    %v5956 = vpop.xlane.xlu0 %5955
    %v5957 = vsel %vm1399, %v5921, -inf
    %5958 = vmax.xlane.f32.xlu0 %v5957
    %v5959 = vpop.xlane.xlu0 %5958
    %v5960 = vsel %vm1399, %v5922, -inf
    %5961 = vmax.xlane.f32.xlu0 %v5960
    %v5962 = vpop.xlane.xlu0 %5961
    %v5963 = vsel %vm1399, %v5923, -inf
    %5964 = vmax.xlane.f32.xlu0 %v5963
    %v5965 = vpop.xlane.xlu0 %5964
    %v5966 = vsel %vm1399, %v5924, -inf
    %5967 = vmax.xlane.f32.xlu0 %v5966
    %v5968 = vpop.xlane.xlu0 %5967
    %v5969 = vsel %vm1399, %v5925, -inf
    %5970 = vmax.xlane.f32.xlu0 %v5969
    %v5971 = vpop.xlane.xlu0 %5970
    %v5972 = vsel %vm1399, %v5926, -inf
    %5973 = vmax.xlane.f32.xlu0 %v5972
    %v5974 = vpop.xlane.xlu0 %5973
    %v5975 = vsel %vm1399, %v5927, -inf
    %5976 = vmax.xlane.f32.xlu0 %v5975
    %v5977 = vpop.xlane.xlu0 %5976
    %v5978 = vsel %vm1399, %v5928, -inf
    %5979 = vmax.xlane.f32.xlu0 %v5978
    %v5980 = vpop.xlane.xlu0 %5979
    %v5981 = vsel %vm1399, %v5929, -inf
    %5982 = vmax.xlane.f32.xlu0 %v5981
    %v5983 = vpop.xlane.xlu0 %5982
    %v5984 = vsel %vm1399, %v5930, -inf
    %5985 = vmax.xlane.f32.xlu0 %v5984
    %v5986 = vpop.xlane.xlu0 %5985
    %v5987 = vsel %vm1399, %v5931, -inf
    %5988 = vmax.xlane.f32.xlu0 %v5987
    %v5989 = vpop.xlane.xlu0 %5988
    %v5990 = vsel %vm1399, %v5932, -inf
    %5991 = vmax.xlane.f32.xlu0 %v5990
    %v5992 = vpop.xlane.xlu0 %5991
    %v5993 = vsel %vm1399, %v5933, -inf
    %5994 = vmax.xlane.f32.xlu0 %v5993
    %v5995 = vpop.xlane.xlu0 %5994
    %v5996 = vsel %vm1399, %v5934, -inf
    %5997 = vmax.xlane.f32.xlu0 %v5996
    %v5998 = vpop.xlane.xlu0 %5997
    %v5999 = vsel %vm1399, %v5935, -inf
    %6000 = vmax.xlane.f32.xlu0 %v5999
    %v6001 = vpop.xlane.xlu0 %6000
    %v6002 = vsel %vm1399, %v5936, -inf
    %6003 = vmax.xlane.f32.xlu0 %v6002
    %v6004 = vpop.xlane.xlu0 %6003
    %v6005 = vsel %vm1399, %v5937, -inf
    %6006 = vmax.xlane.f32.xlu0 %v6005
    %v6007 = vpop.xlane.xlu0 %6006
    %v6008 = vsel %vm1399, %v5938, -inf
    %6009 = vmax.xlane.f32.xlu0 %v6008
    %v6010 = vpop.xlane.xlu0 %6009
    %v6011 = vsub.f32 %v5915, %v5941
    %v6012 = vsub.f32 %v5916, %v5944
    %v6013 = vsub.f32 %v5917, %v5947
    %v6014 = vsub.f32 %v5918, %v5950
    %v6015 = vsub.f32 %v5919, %v5953
    %v6016 = vsub.f32 %v5920, %v5956
    %v6017 = vsub.f32 %v5921, %v5959
    %v6018 = vsub.f32 %v5922, %v5962
    %v6019 = vsub.f32 %v5923, %v5965
    %v6020 = vsub.f32 %v5924, %v5968
    %v6021 = vsub.f32 %v5925, %v5971
    %v6022 = vsub.f32 %v5926, %v5974
    %v6023 = vsub.f32 %v5927, %v5977
    %v6024 = vsub.f32 %v5928, %v5980
    %v6025 = vsub.f32 %v5929, %v5983
    %v6026 = vsub.f32 %v5930, %v5986
    %v6027 = vsub.f32 %v5931, %v5989
    %v6028 = vsub.f32 %v5932, %v5992
    %v6029 = vsub.f32 %v5933, %v5995
    %v6030 = vsub.f32 %v5934, %v5998
    %v6031 = vsub.f32 %v5935, %v6001
    %v6032 = vsub.f32 %v5936, %v6004
    %v6033 = vsub.f32 %v5937, %v6007
    %v6034 = vsub.f32 %v5938, %v6010
    %v6035 = vmul.f32 %v6011, 1.442695
    %v6036 = vpow.pop %v6035
    %v6037 = vmul.f32 %v6012, 1.442695
    %v6038 = vpow.pop %v6037
    %v6039 = vmul.f32 %v6013, 1.442695
    %v6040 = vpow.pop %v6039
    %v6041 = vmul.f32 %v6014, 1.442695
    %v6042 = vpow.pop %v6041
    %v6043 = vmul.f32 %v6015, 1.442695
    %v6044 = vpow.pop %v6043
    %v6045 = vmul.f32 %v6016, 1.442695
    %v6046 = vpow.pop %v6045
    %v6047 = vmul.f32 %v6017, 1.442695
    %v6048 = vpow.pop %v6047
    %v6049 = vmul.f32 %v6018, 1.442695
    %v6050 = vpow.pop %v6049
    %v6051 = vmul.f32 %v6019, 1.442695
    %v6052 = vpow.pop %v6051
    %v6053 = vmul.f32 %v6020, 1.442695
    %v6054 = vpow.pop %v6053
    %v6055 = vmul.f32 %v6021, 1.442695
    %v6056 = vpow.pop %v6055
    %v6057 = vmul.f32 %v6022, 1.442695
    %v6058 = vpow.pop %v6057
    %v6059 = vmul.f32 %v6023, 1.442695
    %v6060 = vpow.pop %v6059
    %v6061 = vmul.f32 %v6024, 1.442695
    %v6062 = vpow.pop %v6061
    %v6063 = vmul.f32 %v6025, 1.442695
    %v6064 = vpow.pop %v6063
    %v6065 = vmul.f32 %v6026, 1.442695
    %v6066 = vpow.pop %v6065
    %v6067 = vmul.f32 %v6027, 1.442695
    %v6068 = vpow.pop %v6067
    %v6069 = vmul.f32 %v6028, 1.442695
    %v6070 = vpow.pop %v6069
    %v6071 = vmul.f32 %v6029, 1.442695
    %v6072 = vpow.pop %v6071
    %v6073 = vmul.f32 %v6030, 1.442695
    %v6074 = vpow.pop %v6073
    %v6075 = vmul.f32 %v6031, 1.442695
    %v6076 = vpow.pop %v6075
    %v6077 = vmul.f32 %v6032, 1.442695
    %v6078 = vpow.pop %v6077
    %v6079 = vmul.f32 %v6033, 1.442695
    %v6080 = vpow.pop %v6079
    %v6081 = vmul.f32 %v6034, 1.442695
    %v6082 = vpow.pop %v6081
    %v6083 = vsel %vm1399, %v6036, 0.0
    %6084 = vadd.xlane.f32.xlu0 %v6083
    %v6085 = vpop.xlane.xlu0 %6084
    %v6086 = vsel %vm1399, %v6038, 0.0
    %6087 = vadd.xlane.f32.xlu0 %v6086
    %v6088 = vpop.xlane.xlu0 %6087
    %v6089 = vsel %vm1399, %v6040, 0.0
    %6090 = vadd.xlane.f32.xlu0 %v6089
    %v6091 = vpop.xlane.xlu0 %6090
    %v6092 = vsel %vm1399, %v6042, 0.0
    %6093 = vadd.xlane.f32.xlu0 %v6092
    %v6094 = vpop.xlane.xlu0 %6093
    %v6095 = vsel %vm1399, %v6044, 0.0
    %6096 = vadd.xlane.f32.xlu0 %v6095
    %v6097 = vpop.xlane.xlu0 %6096
    %v6098 = vsel %vm1399, %v6046, 0.0
    %6099 = vadd.xlane.f32.xlu0 %v6098
    %v6100 = vpop.xlane.xlu0 %6099
    %v6101 = vsel %vm1399, %v6048, 0.0
    %6102 = vadd.xlane.f32.xlu0 %v6101
    %v6103 = vpop.xlane.xlu0 %6102
    %v6104 = vsel %vm1399, %v6050, 0.0
    %6105 = vadd.xlane.f32.xlu0 %v6104
    %v6106 = vpop.xlane.xlu0 %6105
    %v6107 = vsel %vm1399, %v6052, 0.0
    %6108 = vadd.xlane.f32.xlu0 %v6107
    %v6109 = vpop.xlane.xlu0 %6108
    %v6110 = vsel %vm1399, %v6054, 0.0
    %6111 = vadd.xlane.f32.xlu0 %v6110
    %v6112 = vpop.xlane.xlu0 %6111
    %v6113 = vsel %vm1399, %v6056, 0.0
    %6114 = vadd.xlane.f32.xlu0 %v6113
    %v6115 = vpop.xlane.xlu0 %6114
    %v6116 = vsel %vm1399, %v6058, 0.0
    %6117 = vadd.xlane.f32.xlu0 %v6116
    %v6118 = vpop.xlane.xlu0 %6117
    %v6119 = vsel %vm1399, %v6060, 0.0
    %6120 = vadd.xlane.f32.xlu0 %v6119
    %v6121 = vpop.xlane.xlu0 %6120
    %v6122 = vsel %vm1399, %v6062, 0.0
    %6123 = vadd.xlane.f32.xlu0 %v6122
    %v6124 = vpop.xlane.xlu0 %6123
    %v6125 = vsel %vm1399, %v6064, 0.0
    %6126 = vadd.xlane.f32.xlu0 %v6125
    %v6127 = vpop.xlane.xlu0 %6126
    %v6128 = vsel %vm1399, %v6066, 0.0
    %6129 = vadd.xlane.f32.xlu0 %v6128
    %v6130 = vpop.xlane.xlu0 %6129
    %v6131 = vsel %vm1399, %v6068, 0.0
    %6132 = vadd.xlane.f32.xlu0 %v6131
    %v6133 = vpop.xlane.xlu0 %6132
    %v6134 = vsel %vm1399, %v6070, 0.0
    %6135 = vadd.xlane.f32.xlu0 %v6134
    %v6136 = vpop.xlane.xlu0 %6135
    %v6137 = vsel %vm1399, %v6072, 0.0
    %6138 = vadd.xlane.f32.xlu0 %v6137
    %v6139 = vpop.xlane.xlu0 %6138
    %v6140 = vsel %vm1399, %v6074, 0.0
    %6141 = vadd.xlane.f32.xlu0 %v6140
    %v6142 = vpop.xlane.xlu0 %6141
    %v6143 = vsel %vm1399, %v6076, 0.0
    %6144 = vadd.xlane.f32.xlu0 %v6143
    %v6145 = vpop.xlane.xlu0 %6144
    %v6146 = vsel %vm1399, %v6078, 0.0
    %6147 = vadd.xlane.f32.xlu0 %v6146
    %v6148 = vpop.xlane.xlu0 %6147
    %v6149 = vsel %vm1399, %v6080, 0.0
    %6150 = vadd.xlane.f32.xlu0 %v6149
    %v6151 = vpop.xlane.xlu0 %6150
    %v6152 = vsel %vm1399, %v6082, 0.0
    %6153 = vadd.xlane.f32.xlu0 %v6152
    %v6154 = vpop.xlane.xlu0 %6153
    %v6155 = vrcp.pop %v6085
    %v6156 = vrcp.pop %v6088
    %v6157 = vrcp.pop %v6091
    %v6158 = vrcp.pop %v6094
    %v6159 = vrcp.pop %v6097
    %v6160 = vrcp.pop %v6100
    %v6161 = vrcp.pop %v6103
    %v6162 = vrcp.pop %v6106
    %v6163 = vrcp.pop %v6109
    %v6164 = vrcp.pop %v6112
    %v6165 = vrcp.pop %v6115
    %v6166 = vrcp.pop %v6118
    %v6167 = vrcp.pop %v6121
    %v6168 = vrcp.pop %v6124
    %v6169 = vrcp.pop %v6127
    %v6170 = vrcp.pop %v6130
    %v6171 = vrcp.pop %v6133
    %v6172 = vrcp.pop %v6136
    %v6173 = vrcp.pop %v6139
    %v6174 = vrcp.pop %v6142
    %v6175 = vrcp.pop %v6145
    %v6176 = vrcp.pop %v6148
    %v6177 = vrcp.pop %v6151
    %v6178 = vrcp.pop %v6154
    %v6179 = vmul.f32 %v6036, %v6155
    %v6180 = vmul.f32 %v6038, %v6156
    %v6181 = vmul.f32 %v6040, %v6157
    %v6182 = vmul.f32 %v6042, %v6158
    %v6183 = vmul.f32 %v6044, %v6159
    %v6184 = vmul.f32 %v6046, %v6160
    %v6185 = vmul.f32 %v6048, %v6161
    %v6186 = vmul.f32 %v6050, %v6162
    %v6187 = vmul.f32 %v6052, %v6163
    %v6188 = vmul.f32 %v6054, %v6164
    %v6189 = vmul.f32 %v6056, %v6165
    %v6190 = vmul.f32 %v6058, %v6166
    %v6191 = vmul.f32 %v6060, %v6167
    %v6192 = vmul.f32 %v6062, %v6168
    %v6193 = vmul.f32 %v6064, %v6169
    %v6194 = vmul.f32 %v6066, %v6170
    %v6195 = vmul.f32 %v6068, %v6171
    %v6196 = vmul.f32 %v6070, %v6172
    %v6197 = vmul.f32 %v6072, %v6173
    %v6198 = vmul.f32 %v6074, %v6174
    %v6199 = vmul.f32 %v6076, %v6175
    %v6200 = vmul.f32 %v6078, %v6176
    %v6201 = vmul.f32 %v6080, %v6177
    %v6202 = vmul.f32 %v6082, %v6178
    %v6203 = vpack.c.bf16 %v6180, %v6179
    %v6204 = vpack.c.bf16 %v6182, %v6181
    %v6205 = vpack.c.bf16 %v6184, %v6183
    %v6206 = vpack.c.bf16 %v5666, %v5664
    %v6207 = vpack.c.bf16 %v5671, %v5669
    %v6208 = vpack.c.bf16 %v5676, %v5674
    %v6210 = vsel %vm1399, %v6203, 0
    %v6213 = vsel %vm1399, %v6204, 0
    %v6216 = vsel %vm1399, %v6205, 0
    %6218 = vmatpush.bf16.msra.mxu0 0
    %6219 = vmatpush.bf16.msra.mxu0 0
    %6220 = vmatpush.bf16.msra.mxu0 0
    %6221 = vmatpush.bf16.msra.mxu0 0
    %6222 = vmatpush.bf16.msra.mxu0 0
    %6223 = vmatpush.bf16.msra.mxu0 %v6208
    %6224 = vmatpush.bf16.msra.mxu0 %v6207
    %6225 = vmatpush.bf16.msra.mxu0 %v6206
    %6226 = vmatmul.bf16.gmra.mxu0 %v6210
    %v6227 = vpop.f32.mrf.mxu0
    %v6228 = vadd.f32 0.0, %v6227
    %v6229 = vpop.f32.mrf.mxu0
    %v6230 = vadd.f32 0.0, %v6229
    %6231 = vmatmul.bf16.gmra.mxu0 %v6213
    %v6232 = vpop.f32.mrf.mxu0
    %v6233 = vadd.f32 0.0, %v6232
    %v6234 = vpop.f32.mrf.mxu0
    %v6235 = vadd.f32 0.0, %v6234
    %6236 = vmatmul.bf16.gmra.mxu0 %v6216
    %v6237 = vpop.f32.mrf.mxu0
    %v6238 = vadd.f32 0.0, %v6237
    %v6239 = vpop.f32.mrf.mxu0
    %v6240 = vadd.f32 0.0, %v6239
    %6241 = vdwg.mxu0
    %v6242 = vpack.c.bf16 %v6186, %v6185
    %v6243 = vpack.c.bf16 %v6188, %v6187
    %v6244 = vpack.c.bf16 %v6190, %v6189
    %6248 = vrot.lane.b32.xlu0 %v6206, 96
    %v6249 = vpop.permute.xlu0 %6248
    %6250 = vrot.lane.b32.xlu0 %v6207, 96
    %v6251 = vpop.permute.xlu0 %6250
    %6252 = vrot.lane.b32.xlu0 %v6208, 96
    %v6253 = vpop.permute.xlu0 %6252
    %v6258 = vsel %vm1399, %v6242, 0
    %v6261 = vsel %vm1399, %v6243, 0
    %v6264 = vsel %vm1399, %v6244, 0
    %6266 = vmatpush.bf16.msra.mxu0 0
    %6267 = vmatpush.bf16.msra.mxu0 0
    %6268 = vmatpush.bf16.msra.mxu0 0
    %6269 = vmatpush.bf16.msra.mxu0 0
    %6270 = vmatpush.bf16.msra.mxu0 0
    %6271 = vmatpush.bf16.msra.mxu0 %v6253
    %6272 = vmatpush.bf16.msra.mxu0 %v6251
    %6273 = vmatpush.bf16.msra.mxu0 %v6249
    %6274 = vmatmul.bf16.gmra.mxu0 %v6258
    %v6275 = vpop.f32.mrf.mxu0
    %v6276 = vadd.f32 0.0, %v6275
    %v6277 = vpop.f32.mrf.mxu0
    %v6278 = vadd.f32 0.0, %v6277
    %6279 = vmatmul.bf16.gmra.mxu0 %v6261
    %v6280 = vpop.f32.mrf.mxu0
    %v6281 = vadd.f32 0.0, %v6280
    %v6282 = vpop.f32.mrf.mxu0
    %v6283 = vadd.f32 0.0, %v6282
    %6284 = vmatmul.bf16.gmra.mxu0 %v6264
    %v6285 = vpop.f32.mrf.mxu0
    %v6286 = vadd.f32 0.0, %v6285
    %v6287 = vpop.f32.mrf.mxu0
    %v6288 = vadd.f32 0.0, %v6287
    %6289 = vdwg.mxu0
    %v6290 = vpack.c.bf16 %v6192, %v6191
    %v6291 = vpack.c.bf16 %v6194, %v6193
    %v6292 = vpack.c.bf16 %v6196, %v6195
    %6293 = vrot.lane.b32.xlu0 %v6206, 64
    %v6294 = vpop.permute.xlu0 %6293
    %6295 = vrot.lane.b32.xlu0 %v6207, 64
    %v6296 = vpop.permute.xlu0 %6295
    %6297 = vrot.lane.b32.xlu0 %v6208, 64
    %v6298 = vpop.permute.xlu0 %6297
    %v6303 = vsel %vm1399, %v6290, 0
    %v6306 = vsel %vm1399, %v6291, 0
    %v6309 = vsel %vm1399, %v6292, 0
    %6311 = vmatpush.bf16.msra.mxu0 0
    %6312 = vmatpush.bf16.msra.mxu0 0
    %6313 = vmatpush.bf16.msra.mxu0 0
    %6314 = vmatpush.bf16.msra.mxu0 0
    %6315 = vmatpush.bf16.msra.mxu0 0
    %6316 = vmatpush.bf16.msra.mxu0 %v6298
    %6317 = vmatpush.bf16.msra.mxu0 %v6296
    %6318 = vmatpush.bf16.msra.mxu0 %v6294
    %6319 = vmatmul.bf16.gmra.mxu0 %v6303
    %v6320 = vpop.f32.mrf.mxu0
    %v6321 = vadd.f32 0.0, %v6320
    %v6322 = vpop.f32.mrf.mxu0
    %v6323 = vadd.f32 0.0, %v6322
    %6324 = vmatmul.bf16.gmra.mxu0 %v6306
    %v6325 = vpop.f32.mrf.mxu0
    %v6326 = vadd.f32 0.0, %v6325
    %v6327 = vpop.f32.mrf.mxu0
    %v6328 = vadd.f32 0.0, %v6327
    %6329 = vmatmul.bf16.gmra.mxu0 %v6309
    %v6330 = vpop.f32.mrf.mxu0
    %v6331 = vadd.f32 0.0, %v6330
    %v6332 = vpop.f32.mrf.mxu0
    %v6333 = vadd.f32 0.0, %v6332
    %6334 = vdwg.mxu0
    %v6335 = vpack.c.bf16 %v6198, %v6197
    %v6336 = vpack.c.bf16 %v6200, %v6199
    %v6337 = vpack.c.bf16 %v6202, %v6201
    %6338 = vrot.lane.b32.xlu0 %v6206, 32
    %v6339 = vpop.permute.xlu0 %6338
    %6340 = vrot.lane.b32.xlu0 %v6207, 32
    %v6341 = vpop.permute.xlu0 %6340
    %6342 = vrot.lane.b32.xlu0 %v6208, 32
    %v6343 = vpop.permute.xlu0 %6342
    %v6348 = vsel %vm1399, %v6335, 0
    %v6351 = vsel %vm1399, %v6336, 0
    %v6354 = vsel %vm1399, %v6337, 0
    %6356 = vmatpush.bf16.msra.mxu0 0
    %6357 = vmatpush.bf16.msra.mxu0 0
    %6358 = vmatpush.bf16.msra.mxu0 0
    %6359 = vmatpush.bf16.msra.mxu0 0
    %6360 = vmatpush.bf16.msra.mxu0 0
    %6361 = vmatpush.bf16.msra.mxu0 %v6343
    %6362 = vmatpush.bf16.msra.mxu0 %v6341
    %6363 = vmatpush.bf16.msra.mxu0 %v6339
    %6364 = vmatmul.bf16.gmra.mxu0 %v6348
    %v6365 = vpop.f32.mrf.mxu0
    %v6366 = vadd.f32 0.0, %v6365
    %v6367 = vpop.f32.mrf.mxu0
    %v6368 = vadd.f32 0.0, %v6367
    %6369 = vmatmul.bf16.gmra.mxu0 %v6351
    %v6370 = vpop.f32.mrf.mxu0
    %v6371 = vadd.f32 0.0, %v6370
    %v6372 = vpop.f32.mrf.mxu0
    %v6373 = vadd.f32 0.0, %v6372
    %6374 = vmatmul.bf16.gmra.mxu0 %v6354
    %v6375 = vpop.f32.mrf.mxu0
    %v6376 = vadd.f32 0.0, %v6375
    %v6377 = vpop.f32.mrf.mxu0
    %v6378 = vadd.f32 0.0, %v6377
    %6379 = vdwg.mxu0
    %6386 = vrot.lane.b32.xlu0 %v6276, 32
    %v6387 = vpop.permute.xlu0 %6386
    %6388 = vrot.lane.b32.xlu0 %v6278, 32
    %v6389 = vpop.permute.xlu0 %6388
    %6390 = vrot.lane.b32.xlu0 %v6281, 32
    %v6391 = vpop.permute.xlu0 %6390
    %6392 = vrot.lane.b32.xlu0 %v6283, 32
    %v6393 = vpop.permute.xlu0 %6392
    %6394 = vrot.lane.b32.xlu0 %v6286, 32
    %v6395 = vpop.permute.xlu0 %6394
    %6396 = vrot.lane.b32.xlu0 %v6288, 32
    %v6397 = vpop.permute.xlu0 %6396
    %6410 = vrot.lane.b32.xlu0 %v6321, 64
    %v6411 = vpop.permute.xlu0 %6410
    %6412 = vrot.lane.b32.xlu0 %v6323, 64
    %v6413 = vpop.permute.xlu0 %6412
    %6414 = vrot.lane.b32.xlu0 %v6326, 64
    %v6415 = vpop.permute.xlu0 %6414
    %6416 = vrot.lane.b32.xlu0 %v6328, 64
    %v6417 = vpop.permute.xlu0 %6416
    %6418 = vrot.lane.b32.xlu0 %v6331, 64
    %v6419 = vpop.permute.xlu0 %6418
    %6420 = vrot.lane.b32.xlu0 %v6333, 64
    %v6421 = vpop.permute.xlu0 %6420
    %6434 = vrot.lane.b32.xlu0 %v6366, 96
    %v6435 = vpop.permute.xlu0 %6434
    %6436 = vrot.lane.b32.xlu0 %v6368, 96
    %v6437 = vpop.permute.xlu0 %6436
    %6438 = vrot.lane.b32.xlu0 %v6371, 96
    %v6439 = vpop.permute.xlu0 %6438
    %6440 = vrot.lane.b32.xlu0 %v6373, 96
    %v6441 = vpop.permute.xlu0 %6440
    %6442 = vrot.lane.b32.xlu0 %v6376, 96
    %v6443 = vpop.permute.xlu0 %6442
    %6444 = vrot.lane.b32.xlu0 %v6378, 96
    %v6445 = vpop.permute.xlu0 %6444
    %v6452 = vsel %vm1191, %v6228, %v6387
    %v6453 = vsel %vm1191, %v6230, %v6389
    %v6454 = vsel %vm1191, %v6233, %v6391
    %v6455 = vsel %vm1191, %v6235, %v6393
    %v6456 = vsel %vm1191, %v6238, %v6395
    %v6457 = vsel %vm1191, %v6240, %v6397
    %v6458 = vsel %vm1919, %v6452, %v6411
    %v6459 = vsel %vm1919, %v6453, %v6413
    %v6460 = vsel %vm1919, %v6454, %v6415
    %v6461 = vsel %vm1919, %v6455, %v6417
    %v6462 = vsel %vm1919, %v6456, %v6419
    %v6463 = vsel %vm1919, %v6457, %v6421
    %v6464 = vsel %vm1926, %v6458, %v6435
    %v6465 = vsel %vm1926, %v6459, %v6437
    %v6466 = vsel %vm1926, %v6460, %v6439
    %v6467 = vsel %vm1926, %v6461, %v6441
    %v6468 = vsel %vm1926, %v6462, %v6443
    %v6469 = vsel %vm1926, %v6463, %v6445
    %v6470 = vpack.c.bf16 %v6465, %v6464
    %v6471 = vpack.c.bf16 %v6467, %v6466
    %v6472 = vpack.c.bf16 %v6469, %v6468
    %v6473 = vperm.slane %v183, 3
    %v6490 = vunpack.c.l.b16 %v5679
    %v6491 = vunpack.c.l.b16 %v5680
    %v6492 = vunpack.c.l.b16 %v5681
    %v6493 = vunpack.c.l.b16 %v5682
    %v6494 = vunpack.c.l.b16 %v5683
    %v6495 = vunpack.c.l.b16 %v5684
    %v6496 = vunpack.c.l.b16 %v5685
    %v6497 = vunpack.c.l.b16 %v5686
    %v6498 = vunpack.c.l.b16 %v5687
    %v6499 = vunpack.c.l.b16 %v5688
    %v6500 = vunpack.c.l.b16 %v5689
    %v6501 = vunpack.c.l.b16 %v5690
    %v6502 = vunpack.c.l.b16 %v5691
    %v6503 = vunpack.c.l.b16 %v5692
    %v6504 = vunpack.c.l.b16 %v5693
    %v6505 = vunpack.c.l.b16 %v5694
    %v6506 = vpack.c.b16 %v6491, %v6490
    %v6507 = vpack.c.b16 %v6493, %v6492
    %v6508 = vpack.c.b16 %v6495, %v6494
    %v6509 = vpack.c.b16 %v6497, %v6496
    %v6510 = vpack.c.b16 %v6499, %v6498
    %v6511 = vpack.c.b16 %v6501, %v6500
    %v6512 = vpack.c.b16 %v6503, %v6502
    %v6513 = vpack.c.b16 %v6505, %v6504
    %6522 = vmatpush.bf16.msra.mxu0 %v6513
    %6523 = vmatpush.bf16.msra.mxu0 %v6512
    %6524 = vmatpush.bf16.msra.mxu0 %v6511
    %6525 = vmatpush.bf16.msra.mxu0 %v6510
    %6526 = vmatpush.bf16.msra.mxu0 %v6509
    %6527 = vmatpush.bf16.msra.mxu0 %v6508
    %6528 = vmatpush.bf16.msra.mxu0 %v6507
    %6529 = vmatpush.bf16.msra.mxu0 %v6506
    %6530 = vmatmul.bf16.gmra.mxu0 %v6470
    %v6531 = vpop.f32.mrf.mxu0
    %v6532 = vadd.f32 %v6473, %v6531
    %v6533 = vpop.f32.mrf.mxu0
    %v6534 = vadd.f32 %v6473, %v6533
    %6535 = vmatmul.bf16.gmra.mxu0 %v6471
    %v6536 = vpop.f32.mrf.mxu0
    %v6537 = vadd.f32 %v6473, %v6536
    %v6538 = vpop.f32.mrf.mxu0
    %v6539 = vadd.f32 %v6473, %v6538
    %6540 = vmatmul.bf16.gmra.mxu0 %v6472
    %v6541 = vpop.f32.mrf.mxu0
    %v6542 = vadd.f32 %v6473, %v6541
    %v6543 = vpop.f32.mrf.mxu0
    %v6544 = vadd.f32 %v6473, %v6543
    %6545 = vdwg.mxu0
    %v6546 = vadd.f32 %v5276, %v6532
    %v6547 = vadd.f32 %v5277, %v6534
    %v6548 = vadd.f32 %v5278, %v6537
    %v6549 = vadd.f32 %v5279, %v6539
    %v6550 = vadd.f32 %v5280, %v6542
    %v6551 = vadd.f32 %v5281, %v6544
    %6552 = vadd.xlane.f32.xlu0 %v6546
    %v6553 = vpop.xlane.xlu0 %6552
    %6554 = vadd.xlane.f32.xlu0 %v6547
    %v6555 = vpop.xlane.xlu0 %6554
    %6556 = vadd.xlane.f32.xlu0 %v6548
    %v6557 = vpop.xlane.xlu0 %6556
    %6558 = vadd.xlane.f32.xlu0 %v6549
    %v6559 = vpop.xlane.xlu0 %6558
    %6560 = vadd.xlane.f32.xlu0 %v6550
    %v6561 = vpop.xlane.xlu0 %6560
    %6562 = vadd.xlane.f32.xlu0 %v6551
    %v6563 = vpop.xlane.xlu0 %6562
    %v6564 = vmul.f32 %v6553, 0.020833334
    %v6565 = vmul.f32 %v6555, 0.020833334
    %v6566 = vmul.f32 %v6557, 0.020833334
    %v6567 = vmul.f32 %v6559, 0.020833334
    %v6568 = vmul.f32 %v6561, 0.020833334
    %v6569 = vmul.f32 %v6563, 0.020833334
    %v6570 = vsub.f32 %v6546, %v6564
    %v6571 = vsub.f32 %v6547, %v6565
    %v6572 = vsub.f32 %v6548, %v6566
    %v6573 = vsub.f32 %v6549, %v6567
    %v6574 = vsub.f32 %v6550, %v6568
    %v6575 = vsub.f32 %v6551, %v6569
    %v6576 = vmul.f32 %v6570, %v177
    %v6577 = vmul.f32 %v6571, %v177
    %v6578 = vmul.f32 %v6572, %v177
    %v6579 = vmul.f32 %v6573, %v177
    %v6580 = vmul.f32 %v6574, %v177
    %v6581 = vmul.f32 %v6575, %v177
    %v6582 = vmul.f32 %v6576, %v6576
    %v6583 = vmul.f32 %v6577, %v6577
    %v6584 = vmul.f32 %v6578, %v6578
    %v6585 = vmul.f32 %v6579, %v6579
    %v6586 = vmul.f32 %v6580, %v6580
    %v6587 = vmul.f32 %v6581, %v6581
    %6588 = vadd.xlane.f32.xlu0 %v6582
    %v6589 = vpop.xlane.xlu0 %6588
    %6590 = vadd.xlane.f32.xlu0 %v6583
    %v6591 = vpop.xlane.xlu0 %6590
    %6592 = vadd.xlane.f32.xlu0 %v6584
    %v6593 = vpop.xlane.xlu0 %6592
    %6594 = vadd.xlane.f32.xlu0 %v6585
    %v6595 = vpop.xlane.xlu0 %6594
    %6596 = vadd.xlane.f32.xlu0 %v6586
    %v6597 = vpop.xlane.xlu0 %6596
    %6598 = vadd.xlane.f32.xlu0 %v6587
    %v6599 = vpop.xlane.xlu0 %6598
    %v6600 = vmul.f32 %v6589, 0.020833334
    %v6601 = vmul.f32 %v6591, 0.020833334
    %v6602 = vmul.f32 %v6593, 0.020833334
    %v6603 = vmul.f32 %v6595, 0.020833334
    %v6604 = vmul.f32 %v6597, 0.020833334
    %v6605 = vmul.f32 %v6599, 0.020833334
    %v6606 = vadd.f32 %v6600, 1e-05
    %v6607 = vadd.f32 %v6601, 1e-05
    %v6608 = vadd.f32 %v6602, 1e-05
    %v6609 = vadd.f32 %v6603, 1e-05
    %v6610 = vadd.f32 %v6604, 1e-05
    %v6611 = vadd.f32 %v6605, 1e-05
    %v6612 = vrsqrt.pop %v6606
    %v6613 = vmul.f32 %v6612, %v6606
    %v6614 = vmul.f32 %v6613, %v6612
    %v6615 = vmul.f32 0.5, %v6614
    %v6616 = vsub.f32 1.5, %v6615
    %v6617 = vmul.f32 %v6612, %v6616
    %vm6618 = vweird.f32 %v6606
    %vm6619 = vweird.f32 %v6612
    %vm6620 = vmor %vm6618, %vm6619
    %v6621 = vsel %vm6620, %v6612, %v6617
    %v6622 = vrsqrt.pop %v6607
    %v6623 = vmul.f32 %v6622, %v6607
    %v6624 = vmul.f32 %v6623, %v6622
    %v6625 = vmul.f32 0.5, %v6624
    %v6626 = vsub.f32 1.5, %v6625
    %v6627 = vmul.f32 %v6622, %v6626
    %vm6628 = vweird.f32 %v6607
    %vm6629 = vweird.f32 %v6622
    %vm6630 = vmor %vm6628, %vm6629
    %v6631 = vsel %vm6630, %v6622, %v6627
    %v6632 = vrsqrt.pop %v6608
    %v6633 = vmul.f32 %v6632, %v6608
    %v6634 = vmul.f32 %v6633, %v6632
    %v6635 = vmul.f32 0.5, %v6634
    %v6636 = vsub.f32 1.5, %v6635
    %v6637 = vmul.f32 %v6632, %v6636
    %vm6638 = vweird.f32 %v6608
    %vm6639 = vweird.f32 %v6632
    %vm6640 = vmor %vm6638, %vm6639
    %v6641 = vsel %vm6640, %v6632, %v6637
    %v6642 = vrsqrt.pop %v6609
    %v6643 = vmul.f32 %v6642, %v6609
    %v6644 = vmul.f32 %v6643, %v6642
    %v6645 = vmul.f32 0.5, %v6644
    %v6646 = vsub.f32 1.5, %v6645
    %v6647 = vmul.f32 %v6642, %v6646
    %vm6648 = vweird.f32 %v6609
    %vm6649 = vweird.f32 %v6642
    %vm6650 = vmor %vm6648, %vm6649
    %v6651 = vsel %vm6650, %v6642, %v6647
    %v6652 = vrsqrt.pop %v6610
    %v6653 = vmul.f32 %v6652, %v6610
    %v6654 = vmul.f32 %v6653, %v6652
    %v6655 = vmul.f32 0.5, %v6654
    %v6656 = vsub.f32 1.5, %v6655
    %v6657 = vmul.f32 %v6652, %v6656
    %vm6658 = vweird.f32 %v6610
    %vm6659 = vweird.f32 %v6652
    %vm6660 = vmor %vm6658, %vm6659
    %v6661 = vsel %vm6660, %v6652, %v6657
    %v6662 = vrsqrt.pop %v6611
    %v6663 = vmul.f32 %v6662, %v6611
    %v6664 = vmul.f32 %v6663, %v6662
    %v6665 = vmul.f32 0.5, %v6664
    %v6666 = vsub.f32 1.5, %v6665
    %v6667 = vmul.f32 %v6662, %v6666
    %vm6668 = vweird.f32 %v6611
    %vm6669 = vweird.f32 %v6662
    %vm6670 = vmor %vm6668, %vm6669
    %v6671 = vsel %vm6670, %v6662, %v6667
    %v6672 = vmul.f32 %v6576, %v6621
    %v6673 = vmul.f32 %v6577, %v6631
    %v6674 = vmul.f32 %v6578, %v6641
    %v6675 = vmul.f32 %v6579, %v6651
    %v6676 = vmul.f32 %v6580, %v6661
    %v6677 = vmul.f32 %v6581, %v6671
    %v6678 = vperm.slane %v179, 4
    %v6679 = vmul.f32 %v6672, %v6678
    %v6680 = vmul.f32 %v6673, %v6678
    %v6681 = vmul.f32 %v6674, %v6678
    %v6682 = vmul.f32 %v6675, %v6678
    %v6683 = vmul.f32 %v6676, %v6678
    %v6684 = vmul.f32 %v6677, %v6678
    %v6685 = vperm.slane %v179, 5
    %v6686 = vadd.f32 %v6679, %v6685
    %v6687 = vadd.f32 %v6680, %v6685
    %v6688 = vadd.f32 %v6681, %v6685
    %v6689 = vadd.f32 %v6682, %v6685
    %v6690 = vadd.f32 %v6683, %v6685
    %v6691 = vadd.f32 %v6684, %v6685
    %s6692 = scalar_lea.vmem [#allocation10], 256
    %v6693 = vld [vmem:[%s6692] sm:$0xff]
    %v6694 = vld [vmem:[%s6692 + $0x8] sm:$0xff]
    %v6695 = vld [vmem:[%s6692 + $0x10] sm:$0xff]
    %v6696 = vld [vmem:[%s6692 + $0x18] sm:$0xff]
    %v6697 = vld [vmem:[%s6692 + $0x20] sm:$0xff]
    %v6698 = vld [vmem:[%s6692 + $0x28] sm:$0xff]
    %v6699 = vld [vmem:[%s6692 + $0x30] sm:$0xff]
    %v6700 = vld [vmem:[%s6692 + $0x38] sm:$0xff]
    %v6701 = vld [vmem:[%s6692 + $0x40] sm:$0xff]
    %v6702 = vld [vmem:[%s6692 + $0x48] sm:$0xff]
    %v6703 = vld [vmem:[%s6692 + $0x50] sm:$0xff]
    %v6704 = vld [vmem:[%s6692 + $0x58] sm:$0xff]
    %v6705 = vld [vmem:[%s6692 + $0x60] sm:$0xff]
    %v6706 = vld [vmem:[%s6692 + $0x68] sm:$0xff]
    %v6707 = vld [vmem:[%s6692 + $0x70] sm:$0xff]
    %v6708 = vld [vmem:[%s6692 + $0x78] sm:$0xff]
    %s6709 = scalar_lea.vmem [#allocation12], 256
    %v6710 = vld [vmem:[%s6709] sm:$0xf]
    %v6711 = vld [vmem:[%s6709 + $0x4] sm:$0xf]
    %v6712 = vld [vmem:[%s6709 + $0x8] sm:$0xf]
    %v6713 = vld [vmem:[%s6709 + $0xc] sm:$0xf]
    %v6714 = vld [vmem:[%s6709 + $0x10] sm:$0xf]
    %v6715 = vld [vmem:[%s6709 + $0x14] sm:$0xf]
    %v6716 = vld [vmem:[%s6709 + $0x18] sm:$0xf]
    %v6717 = vld [vmem:[%s6709 + $0x1c] sm:$0xf]
    %v6718 = vld [vmem:[%s6709 + $0x20] sm:$0xf]
    %v6719 = vld [vmem:[%s6709 + $0x24] sm:$0xf]
    %v6720 = vld [vmem:[%s6709 + $0x28] sm:$0xf]
    %v6721 = vld [vmem:[%s6709 + $0x2c] sm:$0xf]
    %v6722 = vld [vmem:[%s6709 + $0x30] sm:$0xf]
    %v6723 = vld [vmem:[%s6709 + $0x34] sm:$0xf]
    %v6724 = vld [vmem:[%s6709 + $0x38] sm:$0xf]
    %v6725 = vld [vmem:[%s6709 + $0x3c] sm:$0xf]
    %v6726 = vld [vmem:[%s6709 + $0x40] sm:$0xf]
    %v6727 = vld [vmem:[%s6709 + $0x44] sm:$0xf]
    %v6728 = vld [vmem:[%s6709 + $0x48] sm:$0xf]
    %v6729 = vld [vmem:[%s6709 + $0x4c] sm:$0xf]
    %v6730 = vld [vmem:[%s6709 + $0x50] sm:$0xf]
    %v6731 = vld [vmem:[%s6709 + $0x54] sm:$0xf]
    %v6732 = vld [vmem:[%s6709 + $0x58] sm:$0xf]
    %v6733 = vld [vmem:[%s6709 + $0x5c] sm:$0xf]
    %v6734 = vld [vmem:[%s6709 + $0x60] sm:$0xf]
    %v6735 = vld [vmem:[%s6709 + $0x64] sm:$0xf]
    %v6736 = vld [vmem:[%s6709 + $0x68] sm:$0xf]
    %v6737 = vld [vmem:[%s6709 + $0x6c] sm:$0xf]
    %v6738 = vld [vmem:[%s6709 + $0x70] sm:$0xf]
    %v6739 = vld [vmem:[%s6709 + $0x74] sm:$0xf]
    %v6740 = vld [vmem:[%s6709 + $0x78] sm:$0xf]
    %v6741 = vld [vmem:[%s6709 + $0x7c] sm:$0xf]
    %v6742 = vpack.c.bf16 %v6687, %v6686
    %v6743 = vpack.c.bf16 %v6689, %v6688
    %v6744 = vpack.c.bf16 %v6691, %v6690
    %v6745 = vperm.slane %v183, 4
    %v6746 = vperm.slane %v184, 4
    %v6763 = vunpack.c.l.b16 %v6693
    %v6764 = vunpack.c.h.b16 %v6693
    %v6765 = vunpack.c.l.b16 %v6694
    %v6766 = vunpack.c.h.b16 %v6694
    %v6767 = vunpack.c.l.b16 %v6695
    %v6768 = vunpack.c.h.b16 %v6695
    %v6769 = vunpack.c.l.b16 %v6696
    %v6770 = vunpack.c.h.b16 %v6696
    %v6771 = vunpack.c.l.b16 %v6697
    %v6772 = vunpack.c.h.b16 %v6697
    %v6773 = vunpack.c.l.b16 %v6698
    %v6774 = vunpack.c.h.b16 %v6698
    %v6775 = vunpack.c.l.b16 %v6699
    %v6776 = vunpack.c.h.b16 %v6699
    %v6777 = vunpack.c.l.b16 %v6700
    %v6778 = vunpack.c.h.b16 %v6700
    %v6779 = vunpack.c.l.b16 %v6701
    %v6780 = vunpack.c.h.b16 %v6701
    %v6781 = vunpack.c.l.b16 %v6702
    %v6782 = vunpack.c.h.b16 %v6702
    %v6783 = vunpack.c.l.b16 %v6703
    %v6784 = vunpack.c.h.b16 %v6703
    %v6785 = vunpack.c.l.b16 %v6704
    %v6786 = vunpack.c.h.b16 %v6704
    %v6787 = vunpack.c.l.b16 %v6705
    %v6788 = vunpack.c.h.b16 %v6705
    %v6789 = vunpack.c.l.b16 %v6706
    %v6790 = vunpack.c.h.b16 %v6706
    %v6791 = vunpack.c.l.b16 %v6707
    %v6792 = vunpack.c.h.b16 %v6707
    %v6793 = vunpack.c.l.b16 %v6708
    %v6794 = vunpack.c.h.b16 %v6708
    %v6795 = vpack.c.b16 %v6765, %v6763
    %v6796 = vpack.c.b16 %v6766, %v6764
    %v6797 = vpack.c.b16 %v6769, %v6767
    %v6798 = vpack.c.b16 %v6770, %v6768
    %v6799 = vpack.c.b16 %v6773, %v6771
    %v6800 = vpack.c.b16 %v6774, %v6772
    %v6801 = vpack.c.b16 %v6777, %v6775
    %v6802 = vpack.c.b16 %v6778, %v6776
    %v6803 = vpack.c.b16 %v6781, %v6779
    %v6804 = vpack.c.b16 %v6782, %v6780
    %v6805 = vpack.c.b16 %v6785, %v6783
    %v6806 = vpack.c.b16 %v6786, %v6784
    %v6807 = vpack.c.b16 %v6789, %v6787
    %v6808 = vpack.c.b16 %v6790, %v6788
    %v6809 = vpack.c.b16 %v6793, %v6791
    %v6810 = vpack.c.b16 %v6794, %v6792
    %6827 = vmatpush.bf16.msra.mxu0 %v6809
    %6828 = vmatpush.bf16.msra.mxu0 %v6807
    %6829 = vmatpush.bf16.msra.mxu0 %v6805
    %6830 = vmatpush.bf16.msra.mxu0 %v6803
    %6831 = vmatpush.bf16.msra.mxu0 %v6801
    %6832 = vmatpush.bf16.msra.mxu0 %v6799
    %6833 = vmatpush.bf16.msra.mxu0 %v6797
    %6834 = vmatpush.bf16.msra.mxu0 %v6795
    %6835 = vmatmul.bf16.gmra.mxu0 %v6742
    %v6836 = vpop.f32.mrf.mxu0
    %v6837 = vadd.f32 %v6745, %v6836
    %v6838 = vpop.f32.mrf.mxu0
    %v6839 = vadd.f32 %v6745, %v6838
    %6840 = vmatmul.bf16.gmra.mxu0 %v6743
    %v6841 = vpop.f32.mrf.mxu0
    %v6842 = vadd.f32 %v6745, %v6841
    %v6843 = vpop.f32.mrf.mxu0
    %v6844 = vadd.f32 %v6745, %v6843
    %6845 = vmatmul.bf16.gmra.mxu0 %v6744
    %v6846 = vpop.f32.mrf.mxu0
    %v6847 = vadd.f32 %v6745, %v6846
    %v6848 = vpop.f32.mrf.mxu0
    %v6849 = vadd.f32 %v6745, %v6848
    %6850 = vdwg.mxu0
    %6851 = vmatpush.bf16.msra.mxu0 %v6810
    %6852 = vmatpush.bf16.msra.mxu0 %v6808
    %6853 = vmatpush.bf16.msra.mxu0 %v6806
    %6854 = vmatpush.bf16.msra.mxu0 %v6804
    %6855 = vmatpush.bf16.msra.mxu0 %v6802
    %6856 = vmatpush.bf16.msra.mxu0 %v6800
    %6857 = vmatpush.bf16.msra.mxu0 %v6798
    %6858 = vmatpush.bf16.msra.mxu0 %v6796
    %6859 = vmatmul.bf16.gmra.mxu0 %v6742
    %v6860 = vpop.f32.mrf.mxu0
    %v6861 = vadd.f32 %v6746, %v6860
    %v6862 = vpop.f32.mrf.mxu0
    %v6863 = vadd.f32 %v6746, %v6862
    %6864 = vmatmul.bf16.gmra.mxu0 %v6743
    %v6865 = vpop.f32.mrf.mxu0
    %v6866 = vadd.f32 %v6746, %v6865
    %v6867 = vpop.f32.mrf.mxu0
    %v6868 = vadd.f32 %v6746, %v6867
    %6869 = vmatmul.bf16.gmra.mxu0 %v6744
    %v6870 = vpop.f32.mrf.mxu0
    %v6871 = vadd.f32 %v6746, %v6870
    %v6872 = vpop.f32.mrf.mxu0
    %v6873 = vadd.f32 %v6746, %v6872
    %6874 = vdwg.mxu0
    %v6875 = vmul.f32 %v6837, 0.5
    %v6876 = vmul.f32 %v6861, 0.5
    %v6877 = vmul.f32 %v6839, 0.5
    %v6878 = vmul.f32 %v6863, 0.5
    %v6879 = vmul.f32 %v6842, 0.5
    %v6880 = vmul.f32 %v6866, 0.5
    %v6881 = vmul.f32 %v6844, 0.5
    %v6882 = vmul.f32 %v6868, 0.5
    %v6883 = vmul.f32 %v6847, 0.5
    %v6884 = vmul.f32 %v6871, 0.5
    %v6885 = vmul.f32 %v6849, 0.5
    %v6886 = vmul.f32 %v6873, 0.5
    %v6887 = vmul.f32 %v6837, 0.70710677
    %v6888 = vmul.f32 %v6861, 0.70710677
    %v6889 = vmul.f32 %v6839, 0.70710677
    %v6890 = vmul.f32 %v6863, 0.70710677
    %v6891 = vmul.f32 %v6842, 0.70710677
    %v6892 = vmul.f32 %v6866, 0.70710677
    %v6893 = vmul.f32 %v6844, 0.70710677
    %v6894 = vmul.f32 %v6868, 0.70710677
    %v6895 = vmul.f32 %v6847, 0.70710677
    %v6896 = vmul.f32 %v6871, 0.70710677
    %v6897 = vmul.f32 %v6849, 0.70710677
    %v6898 = vmul.f32 %v6873, 0.70710677
    %v6899 = vmul.f32 %v6887, %v6887
    %v6900 = vmin.f32 16.0, %v6899
    %v6901 = vmul.f32 %v6900, 2.1237322e-06
    %v6902 = vadd.f32 %v6901, 0.00028619796
    %v6903 = vmul.f32 %v6900, %v6902
    %v6904 = vadd.f32 %v6903, 0.0036580483
    %v6905 = vmul.f32 %v6900, %v6904
    %v6906 = vadd.f32 %v6905, 0.05243302
    %v6907 = vmul.f32 %v6900, %v6906
    %v6908 = vadd.f32 %v6907, 0.18741608
    %v6909 = vmul.f32 %v6900, %v6908
    %v6910 = vadd.f32 %v6909, 1.1283791
    %v6911 = vmul.f32 %v6887, %v6910
    %v6912 = vmul.f32 %v6900, 3.8918573e-05
    %v6913 = vadd.f32 %v6912, 0.001143296
    %v6914 = vmul.f32 %v6900, %v6913
    %v6915 = vadd.f32 %v6914, 0.014752088
    %v6916 = vmul.f32 %v6900, %v6915
    %v6917 = vadd.f32 %v6916, 0.112945676
    %v6918 = vmul.f32 %v6900, %v6917
    %v6919 = vadd.f32 %v6918, 0.4994258
    %v6920 = vmul.f32 %v6900, %v6919
    %v6921 = vadd.f32 %v6920, 1.0
    %v6922 = vrcp.pop %v6921
    %v6923 = vmul.f32 %v6921, %v6922
    %v6924 = vsub.f32 1.0, %v6923
    %v6925 = vmul.f32 %v6922, %v6924
    %v6926 = vadd.f32 %v6922, %v6925
    %vm6927 = vweird.f32 %v6921
    %vm6928 = vweird.f32 %v6922
    %vm6929 = vmor %vm6927, %vm6928
    %v6930 = vsel %vm6929, %v6922, %v6926
    %v6931 = vand.u32 2147483647, %v6921
    %vm6932 = vcmp.eq.f32.partialorder %v6931, 8.507059e+37
    %v6933 = vand.u32 %v6921, 2147483648
    %v6934 = vor.u32 1.1754944e-38, %v6933
    %v6935 = vsel %vm6932, %v6934, %v6930
    %v6936 = vmul.f32 %v6911, %v6935
    %v6937 = vmin.f32 %v6936, 1.0
    %v6938 = vmax.f32 %v6937, -1.0
    %v6939 = vmul.f32 %v6888, %v6888
    %v6940 = vmin.f32 16.0, %v6939
    %v6941 = vmul.f32 %v6940, 2.1237322e-06
    %v6942 = vadd.f32 %v6941, 0.00028619796
    %v6943 = vmul.f32 %v6940, %v6942
    %v6944 = vadd.f32 %v6943, 0.0036580483
    %v6945 = vmul.f32 %v6940, %v6944
    %v6946 = vadd.f32 %v6945, 0.05243302
    %v6947 = vmul.f32 %v6940, %v6946
    %v6948 = vadd.f32 %v6947, 0.18741608
    %v6949 = vmul.f32 %v6940, %v6948
    %v6950 = vadd.f32 %v6949, 1.1283791
    %v6951 = vmul.f32 %v6888, %v6950
    %v6952 = vmul.f32 %v6940, 3.8918573e-05
    %v6953 = vadd.f32 %v6952, 0.001143296
    %v6954 = vmul.f32 %v6940, %v6953
    %v6955 = vadd.f32 %v6954, 0.014752088
    %v6956 = vmul.f32 %v6940, %v6955
    %v6957 = vadd.f32 %v6956, 0.112945676
    %v6958 = vmul.f32 %v6940, %v6957
    %v6959 = vadd.f32 %v6958, 0.4994258
    %v6960 = vmul.f32 %v6940, %v6959
    %v6961 = vadd.f32 %v6960, 1.0
    %v6962 = vrcp.pop %v6961
    %v6963 = vmul.f32 %v6961, %v6962
    %v6964 = vsub.f32 1.0, %v6963
    %v6965 = vmul.f32 %v6962, %v6964
    %v6966 = vadd.f32 %v6962, %v6965
    %vm6967 = vweird.f32 %v6961
    %vm6968 = vweird.f32 %v6962
    %vm6969 = vmor %vm6967, %vm6968
    %v6970 = vsel %vm6969, %v6962, %v6966
    %v6971 = vand.u32 2147483647, %v6961
    %vm6972 = vcmp.eq.f32.partialorder %v6971, 8.507059e+37
    %v6973 = vand.u32 %v6961, 2147483648
    %v6974 = vor.u32 1.1754944e-38, %v6973
    %v6975 = vsel %vm6972, %v6974, %v6970
    %v6976 = vmul.f32 %v6951, %v6975
    %v6977 = vmin.f32 %v6976, 1.0
    %v6978 = vmax.f32 %v6977, -1.0
    %v6979 = vmul.f32 %v6889, %v6889
    %v6980 = vmin.f32 16.0, %v6979
    %v6981 = vmul.f32 %v6980, 2.1237322e-06
    %v6982 = vadd.f32 %v6981, 0.00028619796
    %v6983 = vmul.f32 %v6980, %v6982
    %v6984 = vadd.f32 %v6983, 0.0036580483
    %v6985 = vmul.f32 %v6980, %v6984
    %v6986 = vadd.f32 %v6985, 0.05243302
    %v6987 = vmul.f32 %v6980, %v6986
    %v6988 = vadd.f32 %v6987, 0.18741608
    %v6989 = vmul.f32 %v6980, %v6988
    %v6990 = vadd.f32 %v6989, 1.1283791
    %v6991 = vmul.f32 %v6889, %v6990
    %v6992 = vmul.f32 %v6980, 3.8918573e-05
    %v6993 = vadd.f32 %v6992, 0.001143296
    %v6994 = vmul.f32 %v6980, %v6993
    %v6995 = vadd.f32 %v6994, 0.014752088
    %v6996 = vmul.f32 %v6980, %v6995
    %v6997 = vadd.f32 %v6996, 0.112945676
    %v6998 = vmul.f32 %v6980, %v6997
    %v6999 = vadd.f32 %v6998, 0.4994258
    %v7000 = vmul.f32 %v6980, %v6999
    %v7001 = vadd.f32 %v7000, 1.0
    %v7002 = vrcp.pop %v7001
    %v7003 = vmul.f32 %v7001, %v7002
    %v7004 = vsub.f32 1.0, %v7003
    %v7005 = vmul.f32 %v7002, %v7004
    %v7006 = vadd.f32 %v7002, %v7005
    %vm7007 = vweird.f32 %v7001
    %vm7008 = vweird.f32 %v7002
    %vm7009 = vmor %vm7007, %vm7008
    %v7010 = vsel %vm7009, %v7002, %v7006
    %v7011 = vand.u32 2147483647, %v7001
    %vm7012 = vcmp.eq.f32.partialorder %v7011, 8.507059e+37
    %v7013 = vand.u32 %v7001, 2147483648
    %v7014 = vor.u32 1.1754944e-38, %v7013
    %v7015 = vsel %vm7012, %v7014, %v7010
    %v7016 = vmul.f32 %v6991, %v7015
    %v7017 = vmin.f32 %v7016, 1.0
    %v7018 = vmax.f32 %v7017, -1.0
    %v7019 = vmul.f32 %v6890, %v6890
    %v7020 = vmin.f32 16.0, %v7019
    %v7021 = vmul.f32 %v7020, 2.1237322e-06
    %v7022 = vadd.f32 %v7021, 0.00028619796
    %v7023 = vmul.f32 %v7020, %v7022
    %v7024 = vadd.f32 %v7023, 0.0036580483
    %v7025 = vmul.f32 %v7020, %v7024
    %v7026 = vadd.f32 %v7025, 0.05243302
    %v7027 = vmul.f32 %v7020, %v7026
    %v7028 = vadd.f32 %v7027, 0.18741608
    %v7029 = vmul.f32 %v7020, %v7028
    %v7030 = vadd.f32 %v7029, 1.1283791
    %v7031 = vmul.f32 %v6890, %v7030
    %v7032 = vmul.f32 %v7020, 3.8918573e-05
    %v7033 = vadd.f32 %v7032, 0.001143296
    %v7034 = vmul.f32 %v7020, %v7033
    %v7035 = vadd.f32 %v7034, 0.014752088
    %v7036 = vmul.f32 %v7020, %v7035
    %v7037 = vadd.f32 %v7036, 0.112945676
    %v7038 = vmul.f32 %v7020, %v7037
    %v7039 = vadd.f32 %v7038, 0.4994258
    %v7040 = vmul.f32 %v7020, %v7039
    %v7041 = vadd.f32 %v7040, 1.0
    %v7042 = vrcp.pop %v7041
    %v7043 = vmul.f32 %v7041, %v7042
    %v7044 = vsub.f32 1.0, %v7043
    %v7045 = vmul.f32 %v7042, %v7044
    %v7046 = vadd.f32 %v7042, %v7045
    %vm7047 = vweird.f32 %v7041
    %vm7048 = vweird.f32 %v7042
    %vm7049 = vmor %vm7047, %vm7048
    %v7050 = vsel %vm7049, %v7042, %v7046
    %v7051 = vand.u32 2147483647, %v7041
    %vm7052 = vcmp.eq.f32.partialorder %v7051, 8.507059e+37
    %v7053 = vand.u32 %v7041, 2147483648
    %v7054 = vor.u32 1.1754944e-38, %v7053
    %v7055 = vsel %vm7052, %v7054, %v7050
    %v7056 = vmul.f32 %v7031, %v7055
    %v7057 = vmin.f32 %v7056, 1.0
    %v7058 = vmax.f32 %v7057, -1.0
    %v7059 = vmul.f32 %v6891, %v6891
    %v7060 = vmin.f32 16.0, %v7059
    %v7061 = vmul.f32 %v7060, 2.1237322e-06
    %v7062 = vadd.f32 %v7061, 0.00028619796
    %v7063 = vmul.f32 %v7060, %v7062
    %v7064 = vadd.f32 %v7063, 0.0036580483
    %v7065 = vmul.f32 %v7060, %v7064
    %v7066 = vadd.f32 %v7065, 0.05243302
    %v7067 = vmul.f32 %v7060, %v7066
    %v7068 = vadd.f32 %v7067, 0.18741608
    %v7069 = vmul.f32 %v7060, %v7068
    %v7070 = vadd.f32 %v7069, 1.1283791
    %v7071 = vmul.f32 %v6891, %v7070
    %v7072 = vmul.f32 %v7060, 3.8918573e-05
    %v7073 = vadd.f32 %v7072, 0.001143296
    %v7074 = vmul.f32 %v7060, %v7073
    %v7075 = vadd.f32 %v7074, 0.014752088
    %v7076 = vmul.f32 %v7060, %v7075
    %v7077 = vadd.f32 %v7076, 0.112945676
    %v7078 = vmul.f32 %v7060, %v7077
    %v7079 = vadd.f32 %v7078, 0.4994258
    %v7080 = vmul.f32 %v7060, %v7079
    %v7081 = vadd.f32 %v7080, 1.0
    %v7082 = vrcp.pop %v7081
    %v7083 = vmul.f32 %v7081, %v7082
    %v7084 = vsub.f32 1.0, %v7083
    %v7085 = vmul.f32 %v7082, %v7084
    %v7086 = vadd.f32 %v7082, %v7085
    %vm7087 = vweird.f32 %v7081
    %vm7088 = vweird.f32 %v7082
    %vm7089 = vmor %vm7087, %vm7088
    %v7090 = vsel %vm7089, %v7082, %v7086
    %v7091 = vand.u32 2147483647, %v7081
    %vm7092 = vcmp.eq.f32.partialorder %v7091, 8.507059e+37
    %v7093 = vand.u32 %v7081, 2147483648
    %v7094 = vor.u32 1.1754944e-38, %v7093
    %v7095 = vsel %vm7092, %v7094, %v7090
    %v7096 = vmul.f32 %v7071, %v7095
    %v7097 = vmin.f32 %v7096, 1.0
    %v7098 = vmax.f32 %v7097, -1.0
    %v7099 = vmul.f32 %v6892, %v6892
    %v7100 = vmin.f32 16.0, %v7099
    %v7101 = vmul.f32 %v7100, 2.1237322e-06
    %v7102 = vadd.f32 %v7101, 0.00028619796
    %v7103 = vmul.f32 %v7100, %v7102
    %v7104 = vadd.f32 %v7103, 0.0036580483
    %v7105 = vmul.f32 %v7100, %v7104
    %v7106 = vadd.f32 %v7105, 0.05243302
    %v7107 = vmul.f32 %v7100, %v7106
    %v7108 = vadd.f32 %v7107, 0.18741608
    %v7109 = vmul.f32 %v7100, %v7108
    %v7110 = vadd.f32 %v7109, 1.1283791
    %v7111 = vmul.f32 %v6892, %v7110
    %v7112 = vmul.f32 %v7100, 3.8918573e-05
    %v7113 = vadd.f32 %v7112, 0.001143296
    %v7114 = vmul.f32 %v7100, %v7113
    %v7115 = vadd.f32 %v7114, 0.014752088
    %v7116 = vmul.f32 %v7100, %v7115
    %v7117 = vadd.f32 %v7116, 0.112945676
    %v7118 = vmul.f32 %v7100, %v7117
    %v7119 = vadd.f32 %v7118, 0.4994258
    %v7120 = vmul.f32 %v7100, %v7119
    %v7121 = vadd.f32 %v7120, 1.0
    %v7122 = vrcp.pop %v7121
    %v7123 = vmul.f32 %v7121, %v7122
    %v7124 = vsub.f32 1.0, %v7123
    %v7125 = vmul.f32 %v7122, %v7124
    %v7126 = vadd.f32 %v7122, %v7125
    %vm7127 = vweird.f32 %v7121
    %vm7128 = vweird.f32 %v7122
    %vm7129 = vmor %vm7127, %vm7128
    %v7130 = vsel %vm7129, %v7122, %v7126
    %v7131 = vand.u32 2147483647, %v7121
    %vm7132 = vcmp.eq.f32.partialorder %v7131, 8.507059e+37
    %v7133 = vand.u32 %v7121, 2147483648
    %v7134 = vor.u32 1.1754944e-38, %v7133
    %v7135 = vsel %vm7132, %v7134, %v7130
    %v7136 = vmul.f32 %v7111, %v7135
    %v7137 = vmin.f32 %v7136, 1.0
    %v7138 = vmax.f32 %v7137, -1.0
    %v7139 = vmul.f32 %v6893, %v6893
    %v7140 = vmin.f32 16.0, %v7139
    %v7141 = vmul.f32 %v7140, 2.1237322e-06
    %v7142 = vadd.f32 %v7141, 0.00028619796
    %v7143 = vmul.f32 %v7140, %v7142
    %v7144 = vadd.f32 %v7143, 0.0036580483
    %v7145 = vmul.f32 %v7140, %v7144
    %v7146 = vadd.f32 %v7145, 0.05243302
    %v7147 = vmul.f32 %v7140, %v7146
    %v7148 = vadd.f32 %v7147, 0.18741608
    %v7149 = vmul.f32 %v7140, %v7148
    %v7150 = vadd.f32 %v7149, 1.1283791
    %v7151 = vmul.f32 %v6893, %v7150
    %v7152 = vmul.f32 %v7140, 3.8918573e-05
    %v7153 = vadd.f32 %v7152, 0.001143296
    %v7154 = vmul.f32 %v7140, %v7153
    %v7155 = vadd.f32 %v7154, 0.014752088
    %v7156 = vmul.f32 %v7140, %v7155
    %v7157 = vadd.f32 %v7156, 0.112945676
    %v7158 = vmul.f32 %v7140, %v7157
    %v7159 = vadd.f32 %v7158, 0.4994258
    %v7160 = vmul.f32 %v7140, %v7159
    %v7161 = vadd.f32 %v7160, 1.0
    %v7162 = vrcp.pop %v7161
    %v7163 = vmul.f32 %v7161, %v7162
    %v7164 = vsub.f32 1.0, %v7163
    %v7165 = vmul.f32 %v7162, %v7164
    %v7166 = vadd.f32 %v7162, %v7165
    %vm7167 = vweird.f32 %v7161
    %vm7168 = vweird.f32 %v7162
    %vm7169 = vmor %vm7167, %vm7168
    %v7170 = vsel %vm7169, %v7162, %v7166
    %v7171 = vand.u32 2147483647, %v7161
    %vm7172 = vcmp.eq.f32.partialorder %v7171, 8.507059e+37
    %v7173 = vand.u32 %v7161, 2147483648
    %v7174 = vor.u32 1.1754944e-38, %v7173
    %v7175 = vsel %vm7172, %v7174, %v7170
    %v7176 = vmul.f32 %v7151, %v7175
    %v7177 = vmin.f32 %v7176, 1.0
    %v7178 = vmax.f32 %v7177, -1.0
    %v7179 = vmul.f32 %v6894, %v6894
    %v7180 = vmin.f32 16.0, %v7179
    %v7181 = vmul.f32 %v7180, 2.1237322e-06
    %v7182 = vadd.f32 %v7181, 0.00028619796
    %v7183 = vmul.f32 %v7180, %v7182
    %v7184 = vadd.f32 %v7183, 0.0036580483
    %v7185 = vmul.f32 %v7180, %v7184
    %v7186 = vadd.f32 %v7185, 0.05243302
    %v7187 = vmul.f32 %v7180, %v7186
    %v7188 = vadd.f32 %v7187, 0.18741608
    %v7189 = vmul.f32 %v7180, %v7188
    %v7190 = vadd.f32 %v7189, 1.1283791
    %v7191 = vmul.f32 %v6894, %v7190
    %v7192 = vmul.f32 %v7180, 3.8918573e-05
    %v7193 = vadd.f32 %v7192, 0.001143296
    %v7194 = vmul.f32 %v7180, %v7193
    %v7195 = vadd.f32 %v7194, 0.014752088
    %v7196 = vmul.f32 %v7180, %v7195
    %v7197 = vadd.f32 %v7196, 0.112945676
    %v7198 = vmul.f32 %v7180, %v7197
    %v7199 = vadd.f32 %v7198, 0.4994258
    %v7200 = vmul.f32 %v7180, %v7199
    %v7201 = vadd.f32 %v7200, 1.0
    %v7202 = vrcp.pop %v7201
    %v7203 = vmul.f32 %v7201, %v7202
    %v7204 = vsub.f32 1.0, %v7203
    %v7205 = vmul.f32 %v7202, %v7204
    %v7206 = vadd.f32 %v7202, %v7205
    %vm7207 = vweird.f32 %v7201
    %vm7208 = vweird.f32 %v7202
    %vm7209 = vmor %vm7207, %vm7208
    %v7210 = vsel %vm7209, %v7202, %v7206
    %v7211 = vand.u32 2147483647, %v7201
    %vm7212 = vcmp.eq.f32.partialorder %v7211, 8.507059e+37
    %v7213 = vand.u32 %v7201, 2147483648
    %v7214 = vor.u32 1.1754944e-38, %v7213
    %v7215 = vsel %vm7212, %v7214, %v7210
    %v7216 = vmul.f32 %v7191, %v7215
    %v7217 = vmin.f32 %v7216, 1.0
    %v7218 = vmax.f32 %v7217, -1.0
    %v7219 = vmul.f32 %v6895, %v6895
    %v7220 = vmin.f32 16.0, %v7219
    %v7221 = vmul.f32 %v7220, 2.1237322e-06
    %v7222 = vadd.f32 %v7221, 0.00028619796
    %v7223 = vmul.f32 %v7220, %v7222
    %v7224 = vadd.f32 %v7223, 0.0036580483
    %v7225 = vmul.f32 %v7220, %v7224
    %v7226 = vadd.f32 %v7225, 0.05243302
    %v7227 = vmul.f32 %v7220, %v7226
    %v7228 = vadd.f32 %v7227, 0.18741608
    %v7229 = vmul.f32 %v7220, %v7228
    %v7230 = vadd.f32 %v7229, 1.1283791
    %v7231 = vmul.f32 %v6895, %v7230
    %v7232 = vmul.f32 %v7220, 3.8918573e-05
    %v7233 = vadd.f32 %v7232, 0.001143296
    %v7234 = vmul.f32 %v7220, %v7233
    %v7235 = vadd.f32 %v7234, 0.014752088
    %v7236 = vmul.f32 %v7220, %v7235
    %v7237 = vadd.f32 %v7236, 0.112945676
    %v7238 = vmul.f32 %v7220, %v7237
    %v7239 = vadd.f32 %v7238, 0.4994258
    %v7240 = vmul.f32 %v7220, %v7239
    %v7241 = vadd.f32 %v7240, 1.0
    %v7242 = vrcp.pop %v7241
    %v7243 = vmul.f32 %v7241, %v7242
    %v7244 = vsub.f32 1.0, %v7243
    %v7245 = vmul.f32 %v7242, %v7244
    %v7246 = vadd.f32 %v7242, %v7245
    %vm7247 = vweird.f32 %v7241
    %vm7248 = vweird.f32 %v7242
    %vm7249 = vmor %vm7247, %vm7248
    %v7250 = vsel %vm7249, %v7242, %v7246
    %v7251 = vand.u32 2147483647, %v7241
    %vm7252 = vcmp.eq.f32.partialorder %v7251, 8.507059e+37
    %v7253 = vand.u32 %v7241, 2147483648
    %v7254 = vor.u32 1.1754944e-38, %v7253
    %v7255 = vsel %vm7252, %v7254, %v7250
    %v7256 = vmul.f32 %v7231, %v7255
    %v7257 = vmin.f32 %v7256, 1.0
    %v7258 = vmax.f32 %v7257, -1.0
    %v7259 = vmul.f32 %v6896, %v6896
    %v7260 = vmin.f32 16.0, %v7259
    %v7261 = vmul.f32 %v7260, 2.1237322e-06
    %v7262 = vadd.f32 %v7261, 0.00028619796
    %v7263 = vmul.f32 %v7260, %v7262
    %v7264 = vadd.f32 %v7263, 0.0036580483
    %v7265 = vmul.f32 %v7260, %v7264
    %v7266 = vadd.f32 %v7265, 0.05243302
    %v7267 = vmul.f32 %v7260, %v7266
    %v7268 = vadd.f32 %v7267, 0.18741608
    %v7269 = vmul.f32 %v7260, %v7268
    %v7270 = vadd.f32 %v7269, 1.1283791
    %v7271 = vmul.f32 %v6896, %v7270
    %v7272 = vmul.f32 %v7260, 3.8918573e-05
    %v7273 = vadd.f32 %v7272, 0.001143296
    %v7274 = vmul.f32 %v7260, %v7273
    %v7275 = vadd.f32 %v7274, 0.014752088
    %v7276 = vmul.f32 %v7260, %v7275
    %v7277 = vadd.f32 %v7276, 0.112945676
    %v7278 = vmul.f32 %v7260, %v7277
    %v7279 = vadd.f32 %v7278, 0.4994258
    %v7280 = vmul.f32 %v7260, %v7279
    %v7281 = vadd.f32 %v7280, 1.0
    %v7282 = vrcp.pop %v7281
    %v7283 = vmul.f32 %v7281, %v7282
    %v7284 = vsub.f32 1.0, %v7283
    %v7285 = vmul.f32 %v7282, %v7284
    %v7286 = vadd.f32 %v7282, %v7285
    %vm7287 = vweird.f32 %v7281
    %vm7288 = vweird.f32 %v7282
    %vm7289 = vmor %vm7287, %vm7288
    %v7290 = vsel %vm7289, %v7282, %v7286
    %v7291 = vand.u32 2147483647, %v7281
    %vm7292 = vcmp.eq.f32.partialorder %v7291, 8.507059e+37
    %v7293 = vand.u32 %v7281, 2147483648
    %v7294 = vor.u32 1.1754944e-38, %v7293
    %v7295 = vsel %vm7292, %v7294, %v7290
    %v7296 = vmul.f32 %v7271, %v7295
    %v7297 = vmin.f32 %v7296, 1.0
    %v7298 = vmax.f32 %v7297, -1.0
    %v7299 = vmul.f32 %v6897, %v6897
    %v7300 = vmin.f32 16.0, %v7299
    %v7301 = vmul.f32 %v7300, 2.1237322e-06
    %v7302 = vadd.f32 %v7301, 0.00028619796
    %v7303 = vmul.f32 %v7300, %v7302
    %v7304 = vadd.f32 %v7303, 0.0036580483
    %v7305 = vmul.f32 %v7300, %v7304
    %v7306 = vadd.f32 %v7305, 0.05243302
    %v7307 = vmul.f32 %v7300, %v7306
    %v7308 = vadd.f32 %v7307, 0.18741608
    %v7309 = vmul.f32 %v7300, %v7308
    %v7310 = vadd.f32 %v7309, 1.1283791
    %v7311 = vmul.f32 %v6897, %v7310
    %v7312 = vmul.f32 %v7300, 3.8918573e-05
    %v7313 = vadd.f32 %v7312, 0.001143296
    %v7314 = vmul.f32 %v7300, %v7313
    %v7315 = vadd.f32 %v7314, 0.014752088
    %v7316 = vmul.f32 %v7300, %v7315
    %v7317 = vadd.f32 %v7316, 0.112945676
    %v7318 = vmul.f32 %v7300, %v7317
    %v7319 = vadd.f32 %v7318, 0.4994258
    %v7320 = vmul.f32 %v7300, %v7319
    %v7321 = vadd.f32 %v7320, 1.0
    %v7322 = vrcp.pop %v7321
    %v7323 = vmul.f32 %v7321, %v7322
    %v7324 = vsub.f32 1.0, %v7323
    %v7325 = vmul.f32 %v7322, %v7324
    %v7326 = vadd.f32 %v7322, %v7325
    %vm7327 = vweird.f32 %v7321
    %vm7328 = vweird.f32 %v7322
    %vm7329 = vmor %vm7327, %vm7328
    %v7330 = vsel %vm7329, %v7322, %v7326
    %v7331 = vand.u32 2147483647, %v7321
    %vm7332 = vcmp.eq.f32.partialorder %v7331, 8.507059e+37
    %v7333 = vand.u32 %v7321, 2147483648
    %v7334 = vor.u32 1.1754944e-38, %v7333
    %v7335 = vsel %vm7332, %v7334, %v7330
    %v7336 = vmul.f32 %v7311, %v7335
    %v7337 = vmin.f32 %v7336, 1.0
    %v7338 = vmax.f32 %v7337, -1.0
    %v7339 = vmul.f32 %v6898, %v6898
    %v7340 = vmin.f32 16.0, %v7339
    %v7341 = vmul.f32 %v7340, 2.1237322e-06
    %v7342 = vadd.f32 %v7341, 0.00028619796
    %v7343 = vmul.f32 %v7340, %v7342
    %v7344 = vadd.f32 %v7343, 0.0036580483
    %v7345 = vmul.f32 %v7340, %v7344
    %v7346 = vadd.f32 %v7345, 0.05243302
    %v7347 = vmul.f32 %v7340, %v7346
    %v7348 = vadd.f32 %v7347, 0.18741608
    %v7349 = vmul.f32 %v7340, %v7348
    %v7350 = vadd.f32 %v7349, 1.1283791
    %v7351 = vmul.f32 %v6898, %v7350
    %v7352 = vmul.f32 %v7340, 3.8918573e-05
    %v7353 = vadd.f32 %v7352, 0.001143296
    %v7354 = vmul.f32 %v7340, %v7353
    %v7355 = vadd.f32 %v7354, 0.014752088
    %v7356 = vmul.f32 %v7340, %v7355
    %v7357 = vadd.f32 %v7356, 0.112945676
    %v7358 = vmul.f32 %v7340, %v7357
    %v7359 = vadd.f32 %v7358, 0.4994258
    %v7360 = vmul.f32 %v7340, %v7359
    %v7361 = vadd.f32 %v7360, 1.0
    %v7362 = vrcp.pop %v7361
    %v7363 = vmul.f32 %v7361, %v7362
    %v7364 = vsub.f32 1.0, %v7363
    %v7365 = vmul.f32 %v7362, %v7364
    %v7366 = vadd.f32 %v7362, %v7365
    %vm7367 = vweird.f32 %v7361
    %vm7368 = vweird.f32 %v7362
    %vm7369 = vmor %vm7367, %vm7368
    %v7370 = vsel %vm7369, %v7362, %v7366
    %v7371 = vand.u32 2147483647, %v7361
    %vm7372 = vcmp.eq.f32.partialorder %v7371, 8.507059e+37
    %v7373 = vand.u32 %v7361, 2147483648
    %v7374 = vor.u32 1.1754944e-38, %v7373
    %v7375 = vsel %vm7372, %v7374, %v7370
    %v7376 = vmul.f32 %v7351, %v7375
    %v7377 = vmin.f32 %v7376, 1.0
    %v7378 = vmax.f32 %v7377, -1.0
    %v7379 = vadd.f32 %v6938, 1.0
    %v7380 = vadd.f32 %v6978, 1.0
    %v7381 = vadd.f32 %v7018, 1.0
    %v7382 = vadd.f32 %v7058, 1.0
    %v7383 = vadd.f32 %v7098, 1.0
    %v7384 = vadd.f32 %v7138, 1.0
    %v7385 = vadd.f32 %v7178, 1.0
    %v7386 = vadd.f32 %v7218, 1.0
    %v7387 = vadd.f32 %v7258, 1.0
    %v7388 = vadd.f32 %v7298, 1.0
    %v7389 = vadd.f32 %v7338, 1.0
    %v7390 = vadd.f32 %v7378, 1.0
    %v7391 = vmul.f32 %v6875, %v7379
    %v7392 = vmul.f32 %v6876, %v7380
    %v7393 = vmul.f32 %v6877, %v7381
    %v7394 = vmul.f32 %v6878, %v7382
    %v7395 = vmul.f32 %v6879, %v7383
    %v7396 = vmul.f32 %v6880, %v7384
    %v7397 = vmul.f32 %v6881, %v7385
    %v7398 = vmul.f32 %v6882, %v7386
    %v7399 = vmul.f32 %v6883, %v7387
    %v7400 = vmul.f32 %v6884, %v7388
    %v7401 = vmul.f32 %v6885, %v7389
    %v7402 = vmul.f32 %v6886, %v7390
    %v7403 = vpack.c.bf16 %v7393, %v7391
    %v7404 = vpack.c.bf16 %v7394, %v7392
    %v7405 = vpack.c.bf16 %v7397, %v7395
    %v7406 = vpack.c.bf16 %v7398, %v7396
    %v7407 = vpack.c.bf16 %v7401, %v7399
    %v7408 = vpack.c.bf16 %v7402, %v7400
    %v7409 = vperm.slane %v183, 5
    %v7442 = vunpack.c.l.b16 %v6710
    %v7443 = vunpack.c.l.b16 %v6711
    %v7444 = vunpack.c.l.b16 %v6712
    %v7445 = vunpack.c.l.b16 %v6713
    %v7446 = vunpack.c.l.b16 %v6714
    %v7447 = vunpack.c.l.b16 %v6715
    %v7448 = vunpack.c.l.b16 %v6716
    %v7449 = vunpack.c.l.b16 %v6717
    %v7450 = vunpack.c.l.b16 %v6718
    %v7451 = vunpack.c.l.b16 %v6719
    %v7452 = vunpack.c.l.b16 %v6720
    %v7453 = vunpack.c.l.b16 %v6721
    %v7454 = vunpack.c.l.b16 %v6722
    %v7455 = vunpack.c.l.b16 %v6723
    %v7456 = vunpack.c.l.b16 %v6724
    %v7457 = vunpack.c.l.b16 %v6725
    %v7458 = vunpack.c.l.b16 %v6726
    %v7459 = vunpack.c.l.b16 %v6727
    %v7460 = vunpack.c.l.b16 %v6728
    %v7461 = vunpack.c.l.b16 %v6729
    %v7462 = vunpack.c.l.b16 %v6730
    %v7463 = vunpack.c.l.b16 %v6731
    %v7464 = vunpack.c.l.b16 %v6732
    %v7465 = vunpack.c.l.b16 %v6733
    %v7466 = vunpack.c.l.b16 %v6734
    %v7467 = vunpack.c.l.b16 %v6735
    %v7468 = vunpack.c.l.b16 %v6736
    %v7469 = vunpack.c.l.b16 %v6737
    %v7470 = vunpack.c.l.b16 %v6738
    %v7471 = vunpack.c.l.b16 %v6739
    %v7472 = vunpack.c.l.b16 %v6740
    %v7473 = vunpack.c.l.b16 %v6741
    %v7474 = vpack.c.b16 %v7443, %v7442
    %v7475 = vpack.c.b16 %v7445, %v7444
    %v7476 = vpack.c.b16 %v7447, %v7446
    %v7477 = vpack.c.b16 %v7449, %v7448
    %v7478 = vpack.c.b16 %v7451, %v7450
    %v7479 = vpack.c.b16 %v7453, %v7452
    %v7480 = vpack.c.b16 %v7455, %v7454
    %v7481 = vpack.c.b16 %v7457, %v7456
    %v7482 = vpack.c.b16 %v7459, %v7458
    %v7483 = vpack.c.b16 %v7461, %v7460
    %v7484 = vpack.c.b16 %v7463, %v7462
    %v7485 = vpack.c.b16 %v7465, %v7464
    %v7486 = vpack.c.b16 %v7467, %v7466
    %v7487 = vpack.c.b16 %v7469, %v7468
    %v7488 = vpack.c.b16 %v7471, %v7470
    %v7489 = vpack.c.b16 %v7473, %v7472
    %7506 = vmatpush.bf16.msra.mxu0 %v7481
    %7507 = vmatpush.bf16.msra.mxu0 %v7480
    %7508 = vmatpush.bf16.msra.mxu0 %v7479
    %7509 = vmatpush.bf16.msra.mxu0 %v7478
    %7510 = vmatpush.bf16.msra.mxu0 %v7477
    %7511 = vmatpush.bf16.msra.mxu0 %v7476
    %7512 = vmatpush.bf16.msra.mxu0 %v7475
    %7513 = vmatpush.bf16.msra.mxu0 %v7474
    %7514 = vmatmul.bf16.gmra.mxu0 %v7403
    %v7515 = vpop.f32.mrf.mxu0
    %v7516 = vadd.f32 %v7409, %v7515
    %v7517 = vpop.f32.mrf.mxu0
    %v7518 = vadd.f32 %v7409, %v7517
    %7519 = vmatmul.bf16.gmra.mxu0 %v7405
    %v7520 = vpop.f32.mrf.mxu0
    %v7521 = vadd.f32 %v7409, %v7520
    %v7522 = vpop.f32.mrf.mxu0
    %v7523 = vadd.f32 %v7409, %v7522
    %7524 = vmatmul.bf16.gmra.mxu0 %v7407
    %v7525 = vpop.f32.mrf.mxu0
    %v7526 = vadd.f32 %v7409, %v7525
    %v7527 = vpop.f32.mrf.mxu0
    %v7528 = vadd.f32 %v7409, %v7527
    %7529 = vdwg.mxu0
    %7530 = vmatpush.bf16.msra.mxu0 %v7489
    %7531 = vmatpush.bf16.msra.mxu0 %v7488
    %7532 = vmatpush.bf16.msra.mxu0 %v7487
    %7533 = vmatpush.bf16.msra.mxu0 %v7486
    %7534 = vmatpush.bf16.msra.mxu0 %v7485
    %7535 = vmatpush.bf16.msra.mxu0 %v7484
    %7536 = vmatpush.bf16.msra.mxu0 %v7483
    %7537 = vmatpush.bf16.msra.mxu0 %v7482
    %7538 = vmatmul.bf16.gmra.mxu0 %v7404
    %v7539 = vpop.f32.mrf.mxu0
    %v7540 = vadd.f32 %v7516, %v7539
    %v7541 = vpop.f32.mrf.mxu0
    %v7542 = vadd.f32 %v7518, %v7541
    %7543 = vmatmul.bf16.gmra.mxu0 %v7406
    %v7544 = vpop.f32.mrf.mxu0
    %v7545 = vadd.f32 %v7521, %v7544
    %v7546 = vpop.f32.mrf.mxu0
    %v7547 = vadd.f32 %v7523, %v7546
    %7548 = vmatmul.bf16.gmra.mxu0 %v7408
    %v7549 = vpop.f32.mrf.mxu0
    %v7550 = vadd.f32 %v7526, %v7549
    %v7551 = vpop.f32.mrf.mxu0
    %v7552 = vadd.f32 %v7528, %v7551
    %7553 = vdwg.mxu0
    %v7554 = vadd.f32 %v6546, %v7540
    %v7555 = vadd.f32 %v6547, %v7542
    %v7556 = vadd.f32 %v6548, %v7545
    %v7557 = vadd.f32 %v6549, %v7547
    %v7558 = vadd.f32 %v6550, %v7550
    %v7559 = vadd.f32 %v6551, %v7552
    %7560 = vadd.xlane.f32.xlu0 %v7554
    %v7561 = vpop.xlane.xlu0 %7560
    %7562 = vadd.xlane.f32.xlu0 %v7555
    %v7563 = vpop.xlane.xlu0 %7562
    %7564 = vadd.xlane.f32.xlu0 %v7556
    %v7565 = vpop.xlane.xlu0 %7564
    %7566 = vadd.xlane.f32.xlu0 %v7557
    %v7567 = vpop.xlane.xlu0 %7566
    %7568 = vadd.xlane.f32.xlu0 %v7558
    %v7569 = vpop.xlane.xlu0 %7568
    %7570 = vadd.xlane.f32.xlu0 %v7559
    %v7571 = vpop.xlane.xlu0 %7570
    %v7572 = vmul.f32 %v7561, 0.020833334
    %v7573 = vmul.f32 %v7563, 0.020833334
    %v7574 = vmul.f32 %v7565, 0.020833334
    %v7575 = vmul.f32 %v7567, 0.020833334
    %v7576 = vmul.f32 %v7569, 0.020833334
    %v7577 = vmul.f32 %v7571, 0.020833334
    %v7578 = vsub.f32 %v7554, %v7572
    %v7579 = vsub.f32 %v7555, %v7573
    %v7580 = vsub.f32 %v7556, %v7574
    %v7581 = vsub.f32 %v7557, %v7575
    %v7582 = vsub.f32 %v7558, %v7576
    %v7583 = vsub.f32 %v7559, %v7577
    %v7584 = vmul.f32 %v7578, %v177
    %v7585 = vmul.f32 %v7579, %v177
    %v7586 = vmul.f32 %v7580, %v177
    %v7587 = vmul.f32 %v7581, %v177
    %v7588 = vmul.f32 %v7582, %v177
    %v7589 = vmul.f32 %v7583, %v177
    %v7590 = vmul.f32 %v7584, %v7584
    %v7591 = vmul.f32 %v7585, %v7585
    %v7592 = vmul.f32 %v7586, %v7586
    %v7593 = vmul.f32 %v7587, %v7587
    %v7594 = vmul.f32 %v7588, %v7588
    %v7595 = vmul.f32 %v7589, %v7589
    %7596 = vadd.xlane.f32.xlu0 %v7590
    %v7597 = vpop.xlane.xlu0 %7596
    %7598 = vadd.xlane.f32.xlu0 %v7591
    %v7599 = vpop.xlane.xlu0 %7598
    %7600 = vadd.xlane.f32.xlu0 %v7592
    %v7601 = vpop.xlane.xlu0 %7600
    %7602 = vadd.xlane.f32.xlu0 %v7593
    %v7603 = vpop.xlane.xlu0 %7602
    %7604 = vadd.xlane.f32.xlu0 %v7594
    %v7605 = vpop.xlane.xlu0 %7604
    %7606 = vadd.xlane.f32.xlu0 %v7595
    %v7607 = vpop.xlane.xlu0 %7606
    %v7608 = vmul.f32 %v7597, 0.020833334
    %v7609 = vmul.f32 %v7599, 0.020833334
    %v7610 = vmul.f32 %v7601, 0.020833334
    %v7611 = vmul.f32 %v7603, 0.020833334
    %v7612 = vmul.f32 %v7605, 0.020833334
    %v7613 = vmul.f32 %v7607, 0.020833334
    %v7614 = vadd.f32 %v7608, 1e-05
    %v7615 = vadd.f32 %v7609, 1e-05
    %v7616 = vadd.f32 %v7610, 1e-05
    %v7617 = vadd.f32 %v7611, 1e-05
    %v7618 = vadd.f32 %v7612, 1e-05
    %v7619 = vadd.f32 %v7613, 1e-05
    %v7620 = vrsqrt.pop %v7614
    %v7621 = vmul.f32 %v7620, %v7614
    %v7622 = vmul.f32 %v7621, %v7620
    %v7623 = vmul.f32 0.5, %v7622
    %v7624 = vsub.f32 1.5, %v7623
    %v7625 = vmul.f32 %v7620, %v7624
    %vm7626 = vweird.f32 %v7614
    %vm7627 = vweird.f32 %v7620
    %vm7628 = vmor %vm7626, %vm7627
    %v7629 = vsel %vm7628, %v7620, %v7625
    %v7630 = vrsqrt.pop %v7615
    %v7631 = vmul.f32 %v7630, %v7615
    %v7632 = vmul.f32 %v7631, %v7630
    %v7633 = vmul.f32 0.5, %v7632
    %v7634 = vsub.f32 1.5, %v7633
    %v7635 = vmul.f32 %v7630, %v7634
    %vm7636 = vweird.f32 %v7615
    %vm7637 = vweird.f32 %v7630
    %vm7638 = vmor %vm7636, %vm7637
    %v7639 = vsel %vm7638, %v7630, %v7635
    %v7640 = vrsqrt.pop %v7616
    %v7641 = vmul.f32 %v7640, %v7616
    %v7642 = vmul.f32 %v7641, %v7640
    %v7643 = vmul.f32 0.5, %v7642
    %v7644 = vsub.f32 1.5, %v7643
    %v7645 = vmul.f32 %v7640, %v7644
    %vm7646 = vweird.f32 %v7616
    %vm7647 = vweird.f32 %v7640
    %vm7648 = vmor %vm7646, %vm7647
    %v7649 = vsel %vm7648, %v7640, %v7645
    %v7650 = vrsqrt.pop %v7617
    %v7651 = vmul.f32 %v7650, %v7617
    %v7652 = vmul.f32 %v7651, %v7650
    %v7653 = vmul.f32 0.5, %v7652
    %v7654 = vsub.f32 1.5, %v7653
    %v7655 = vmul.f32 %v7650, %v7654
    %vm7656 = vweird.f32 %v7617
    %vm7657 = vweird.f32 %v7650
    %vm7658 = vmor %vm7656, %vm7657
    %v7659 = vsel %vm7658, %v7650, %v7655
    %v7660 = vrsqrt.pop %v7618
    %v7661 = vmul.f32 %v7660, %v7618
    %v7662 = vmul.f32 %v7661, %v7660
    %v7663 = vmul.f32 0.5, %v7662
    %v7664 = vsub.f32 1.5, %v7663
    %v7665 = vmul.f32 %v7660, %v7664
    %vm7666 = vweird.f32 %v7618
    %vm7667 = vweird.f32 %v7660
    %vm7668 = vmor %vm7666, %vm7667
    %v7669 = vsel %vm7668, %v7660, %v7665
    %v7670 = vrsqrt.pop %v7619
    %v7671 = vmul.f32 %v7670, %v7619
    %v7672 = vmul.f32 %v7671, %v7670
    %v7673 = vmul.f32 0.5, %v7672
    %v7674 = vsub.f32 1.5, %v7673
    %v7675 = vmul.f32 %v7670, %v7674
    %vm7676 = vweird.f32 %v7619
    %vm7677 = vweird.f32 %v7670
    %vm7678 = vmor %vm7676, %vm7677
    %v7679 = vsel %vm7678, %v7670, %v7675
    %v7680 = vmul.f32 %v7584, %v7629
    %v7681 = vmul.f32 %v7585, %v7639
    %v7682 = vmul.f32 %v7586, %v7649
    %v7683 = vmul.f32 %v7587, %v7659
    %v7684 = vmul.f32 %v7588, %v7669
    %v7685 = vmul.f32 %v7589, %v7679
    %v7686 = vperm.slane %v179, 6
    %v7687 = vmul.f32 %v7680, %v7686
    %v7688 = vmul.f32 %v7681, %v7686
    %v7689 = vmul.f32 %v7682, %v7686
    %v7690 = vmul.f32 %v7683, %v7686
    %v7691 = vmul.f32 %v7684, %v7686
    %v7692 = vmul.f32 %v7685, %v7686
    %v7693 = vperm.slane %v179, 7
    %v7694 = vadd.f32 %v7687, %v7693
    %v7695 = vadd.f32 %v7688, %v7693
    %v7696 = vadd.f32 %v7689, %v7693
    %v7697 = vadd.f32 %v7690, %v7693
    %v7698 = vadd.f32 %v7691, %v7693
    %v7699 = vadd.f32 %v7692, %v7693
    %s7700 = scalar_lea.vmem [#allocation9], 192
    %v7701 = vld [vmem:[%s7700] sm:$0xf]
    %v7702 = vld [vmem:[%s7700 + $0x4] sm:$0xf]
    %v7703 = vld [vmem:[%s7700 + $0x8] sm:$0xf]
    %v7704 = vld [vmem:[%s7700 + $0xc] sm:$0xf]
    %v7705 = vld [vmem:[%s7700 + $0x10] sm:$0xf]
    %v7706 = vld [vmem:[%s7700 + $0x14] sm:$0xf]
    %v7707 = vld [vmem:[%s7700 + $0x18] sm:$0xf]
    %v7708 = vld [vmem:[%s7700 + $0x1c] sm:$0xf]
    %v7709 = vld [vmem:[%s7700 + $0x20] sm:$0xf]
    %v7710 = vld [vmem:[%s7700 + $0x24] sm:$0xf]
    %v7711 = vld [vmem:[%s7700 + $0x28] sm:$0xf]
    %v7712 = vld [vmem:[%s7700 + $0x2c] sm:$0xf]
    %v7713 = vld [vmem:[%s7700 + $0x30] sm:$0xf]
    %v7714 = vld [vmem:[%s7700 + $0x34] sm:$0xf]
    %v7715 = vld [vmem:[%s7700 + $0x38] sm:$0xf]
    %v7716 = vld [vmem:[%s7700 + $0x3c] sm:$0xf]
    %v7717 = vpack.c.bf16 %v7695, %v7694
    %v7718 = vpack.c.bf16 %v7697, %v7696
    %v7719 = vpack.c.bf16 %v7699, %v7698
    %v7720 = vperm.slane %v183, 6
    %v7737 = vunpack.c.l.b16 %v7701
    %v7738 = vunpack.c.l.b16 %v7702
    %v7739 = vunpack.c.l.b16 %v7703
    %v7740 = vunpack.c.l.b16 %v7704
    %v7741 = vunpack.c.l.b16 %v7705
    %v7742 = vunpack.c.l.b16 %v7706
    %v7743 = vunpack.c.l.b16 %v7707
    %v7744 = vunpack.c.l.b16 %v7708
    %v7745 = vunpack.c.l.b16 %v7709
    %v7746 = vunpack.c.l.b16 %v7710
    %v7747 = vunpack.c.l.b16 %v7711
    %v7748 = vunpack.c.l.b16 %v7712
    %v7749 = vunpack.c.l.b16 %v7713
    %v7750 = vunpack.c.l.b16 %v7714
    %v7751 = vunpack.c.l.b16 %v7715
    %v7752 = vunpack.c.l.b16 %v7716
    %v7753 = vpack.c.b16 %v7738, %v7737
    %v7754 = vpack.c.b16 %v7740, %v7739
    %v7755 = vpack.c.b16 %v7742, %v7741
    %v7756 = vpack.c.b16 %v7744, %v7743
    %v7757 = vpack.c.b16 %v7746, %v7745
    %v7758 = vpack.c.b16 %v7748, %v7747
    %v7759 = vpack.c.b16 %v7750, %v7749
    %v7760 = vpack.c.b16 %v7752, %v7751
    %7769 = vmatpush.bf16.msra.mxu0 %v7760
    %7770 = vmatpush.bf16.msra.mxu0 %v7759
    %7771 = vmatpush.bf16.msra.mxu0 %v7758
    %7772 = vmatpush.bf16.msra.mxu0 %v7757
    %7773 = vmatpush.bf16.msra.mxu0 %v7756
    %7774 = vmatpush.bf16.msra.mxu0 %v7755
    %7775 = vmatpush.bf16.msra.mxu0 %v7754
    %7776 = vmatpush.bf16.msra.mxu0 %v7753
    %7777 = vmatmul.bf16.gmra.mxu0 %v7717
    %v7778 = vpop.f32.mrf.mxu0
    %v7779 = vadd.f32 %v7720, %v7778
    %v7780 = vpop.f32.mrf.mxu0
    %v7781 = vadd.f32 %v7720, %v7780
    %7782 = vmatmul.bf16.gmra.mxu0 %v7718
    %v7783 = vpop.f32.mrf.mxu0
    %v7784 = vadd.f32 %v7720, %v7783
    %v7785 = vpop.f32.mrf.mxu0
    %v7786 = vadd.f32 %v7720, %v7785
    %7787 = vmatmul.bf16.gmra.mxu0 %v7719
    %v7788 = vpop.f32.mrf.mxu0
    %v7789 = vadd.f32 %v7720, %v7788
    %v7790 = vpop.f32.mrf.mxu0
    %v7791 = vadd.f32 %v7720, %v7790
    %7792 = vdwg.mxu0
    %7793 = vst [vmem:[%s9] sm:$0xff] %v7779
    %7794 = vst [vmem:[%s9 + $0x8] sm:$0xff] %v7781
    %7795 = vst [vmem:[%s9 + $0x10] sm:$0xff] %v7784
    %7796 = vst [vmem:[%s9 + $0x18] sm:$0xff] %v7786
    %7797 = vst [vmem:[%s9 + $0x20] sm:$0xff] %v7789
    %7798 = vst [vmem:[%s9 + $0x28] sm:$0xff] %v7791
    // Predicated region
    $region74: #{swintrack_forward.1} parent=1 // pred_check
      _
    $region75: #{swintrack_forward.1} parent=1 // pred_check_branch
      %7800 = sbr.rel (0) target = $region77
    $region76: #{swintrack_forward.1} parent=1 // pred_region
      _
    $region77: #{swintrack_forward.1} parent=1 // pred_fallthru
      _
    // Predicated region
    $region78: #{swintrack_forward.1} parent=1 // pred_check
      _
    $region79: #{swintrack_forward.1} parent=1 // pred_check_branch
      %7802 = sbr.rel (0) target = $region81
    $region80: #{swintrack_forward.1} parent=1 // pred_region
      _
    $region81: #{swintrack_forward.1} parent=1 // pred_fallthru
      _
    %7803 = vsyncpa [#allocation3], 1
    %7804 = vsyncpa [#allocation5], 1
    %7805 = vsyncpa [#allocation8], 1
    %7806 = vsyncpa [#allocation11], 1
    %7807 = vsyncpa [#allocation14], 1

</llo_original>
